<compile_context>
chip_gen: v7x
topology: tpu7x:2x2x1
jax: 0.10.0
libtpu: 0.0.40
codegen_flags: <defaults>
</compile_context>

<pallas_src>
import functools
import math

import jax
import jax.numpy as jnp
from jax.experimental import pallas as pl
from jax.experimental.pallas import tpu as pltpu


_VMEM = pl.BlockSpec(memory_space=pltpu.MemorySpace.VMEM)


# ----------------------------------------------------------------------------
# Shared GRU cell math (f32)
# ----------------------------------------------------------------------------
def _gru_gates(g_i, g_h, h, H):
    """PyTorch GRU update from pre-computed input / hidden gate projections.
    g_i, g_h: (B, 3H) with gate layout [r | z | n];  h: (B, H)."""
    r = jax.nn.sigmoid(g_i[:, :H] + g_h[:, :H])
    z = jax.nn.sigmoid(g_i[:, H:2 * H] + g_h[:, H:2 * H])
    n = jnp.tanh(g_i[:, 2 * H:] + r * g_h[:, 2 * H:])
    return (1.0 - z) * n + z * h


# ----------------------------------------------------------------------------
# Kernel 1: whole encoder (L layers, fwd+bwd fused, masking, fc_hidden fused)
# ----------------------------------------------------------------------------
def _encoder_kernel(x_ref, len_ref, wi_ref, wh_ref, bi_ref, bh_ref,
                    fcf_ref, fcb_ref, fc_bias_ref, ctx_ref, raw_ref,
                    *, seq_len, batch):
    """
    x_ref   : (S*B, H)    layer-0 input (fwd emb ++ batch-flipped emb), rows (t,b)
    len_ref : (B, 1) i32  lengths (same lengths mask both halves, as in the ref)
    wi/wh   : (L, H, 3H)  block-diagonal gate-fused weights (bf16)
    bi/bh   : (L, 1, 3H)  biases (f32)
    fcf/fcb : (H, 2Hh)    fc_hidden weight with fwd/bwd row blocks zero-padded
    ctx_ref : (L, S*B, 2Hh) output context
    raw_ref : (L, S*B, H)   scratch: masked per-layer GRU outputs
    """
    layers = wi_ref.shape[0]
    H = x_ref.shape[-1]
    lengths = len_ref[...]                                   # (B, 1) int32

    x = x_ref[...]
    for l in range(layers):
        wi = wi_ref[l]
        wh = wh_ref[l]
        bh = bh_ref[l]
        # Hoisted input projection: one wide matmul, out of the serial path.
        gi = jnp.dot(x.astype(wi.dtype), wi,
                     preferred_element_type=jnp.float32) + bi_ref[l]
        h = jnp.zeros((batch, H), jnp.float32)
        for t in range(seq_len):                             # fully unrolled
            g_h = jnp.dot(h.astype(wh.dtype), wh,
                          preferred_element_type=jnp.float32) + bh
            cand = _gru_gates(gi[t * batch:(t + 1) * batch, :], g_h, h, H)
            valid = lengths > t                              # (B, 1)
            h = jnp.where(valid, cand, h)                    # freeze past length
            raw_ref[l, t * batch:(t + 1) * batch, :] = jnp.where(valid, cand, 0.0)
        x = raw_ref[l]                                       # next layer input

    # fc_hidden epilogue: context[l] = [fwd(l) | bwd(L-1-l)] @ fc_w + b
    for l in range(layers):
        hf = raw_ref[l].astype(fcf_ref.dtype)
        hb = raw_ref[layers - 1 - l].astype(fcb_ref.dtype)
        ctx = (jnp.dot(hf, fcf_ref[...], preferred_element_type=jnp.float32)
               + jnp.dot(hb, fcb_ref[...], preferred_element_type=jnp.float32)
               + fc_bias_ref[...])
        ctx_ref[l] = ctx.astype(ctx_ref.dtype)


# ----------------------------------------------------------------------------
# Kernel 2: decoder GRU (full length, single layer)
# ----------------------------------------------------------------------------
def _gru_kernel(x_ref, wi_ref, wh_ref, bi_ref, bh_ref, out_ref, *, seq_len, batch):
    """x_ref / out_ref: (S*B, H), rows ordered (t, b); gate-fused (H, 3H) weights."""
    H = x_ref.shape[-1]
    wi = wi_ref[...]
    wh = wh_ref[...]
    bh = bh_ref[...]
    gi = jnp.dot(x_ref[...].astype(wi.dtype), wi,
                 preferred_element_type=jnp.float32) + bi_ref[...]
    h = jnp.zeros((batch, H), jnp.float32)
    for t in range(seq_len):
        g_h = jnp.dot(h.astype(wh.dtype), wh,
                      preferred_element_type=jnp.float32) + bh
        h = _gru_gates(gi[t * batch:(t + 1) * batch, :], g_h, h, H)
        out_ref[t * batch:(t + 1) * batch, :] = h.astype(out_ref.dtype)


# ----------------------------------------------------------------------------
# Kernel 3: all L multi-head attentions + predict linear (fused epilogue)
# ----------------------------------------------------------------------------
def _attn_predict_kernel(rnn_ref, ctx_ref, wq_ref, bq_ref, wkv_ref, bkv_ref,
                         wo_ref, bo_ref, wp_ref, bp_ref, out_ref, *, heads):
    """
    rnn_ref : (B, S, E)        ctx_ref : (L, B, S, E)
    wq_ref  : (E, L*E)  all-layer Q projection, 1/sqrt(dh) pre-folded
    wkv_ref : (L, E, 2E) fused K|V projection     wo_ref : (L, E, E)
    wp_ref  : (L+1, E, 4) predict weight split per concat segment
    out_ref : (B*S, 4)
    """
    L, B, S, E = ctx_ref.shape
    dh = E // heads
    cdt = wq_ref.dtype

    q2 = rnn_ref[...].reshape(B * S, E).astype(cdt)
    qp = jnp.dot(q2, wq_ref[...], preferred_element_type=jnp.float32) + bq_ref[...]
    # predict(concat(attn_0..attn_{L-1}, rnn_out)) accumulated segment-wise:
    # the (B, S, (L+1)*E) concat never materializes.
    pred = jnp.dot(q2, wp_ref[L], preferred_element_type=jnp.float32) + bp_ref[...]

    for l in range(L):
        kv2 = ctx_ref[l].reshape(B * S, E).astype(cdt)
        kvp = jnp.dot(kv2, wkv_ref[l],
                      preferred_element_type=jnp.float32) + bkv_ref[l]
        heads_out = []
        for hd in range(heads):
            qh = qp[:, l * E + hd * dh:l * E + (hd + 1) * dh].reshape(B, S, dh)
            kh = kvp[:, hd * dh:(hd + 1) * dh].reshape(B, S, dh)
            vh = kvp[:, E + hd * dh:E + (hd + 1) * dh].reshape(B, S, dh)
            s = jnp.einsum('bqd,bkd->bqk', qh.astype(cdt), kh.astype(cdt),
                           preferred_element_type=jnp.float32)
            s = s - jnp.max(s, axis=-1, keepdims=True)
            e = jnp.exp(s)
            p = e * pl.reciprocal(jnp.sum(e, axis=-1, keepdims=True), approx=True)
            heads_out.append(
                jnp.einsum('bqk,bkd->bqd', p.astype(cdt), vh.astype(cdt),
                           preferred_element_type=jnp.float32))
        ctx_cat = jnp.concatenate(heads_out, axis=-1).reshape(B * S, E)
        attn_l = (jnp.dot(ctx_cat.astype(cdt), wo_ref[l],
                          preferred_element_type=jnp.float32) + bo_ref[l])
        pred = pred + jnp.dot(attn_l.astype(cdt), wp_ref[l],
                              preferred_element_type=jnp.float32)

    out_ref[...] = pred.astype(out_ref.dtype)


# ----------------------------------------------------------------------------
# Forward (mirrors Encoder.forward / Seq2Seq.forward, eval mode)
# ----------------------------------------------------------------------------
def seq2seq_forward(params, source, lengths, num_layers, heads):
    L = num_layers
    B, S = source.shape
    h2 = params['fc_b'].shape[-1]              # hidden_size * 2
    e2 = params['enc_wi'].shape[1]             # embedding_size * 2

    # --- XLA glue: embedding gather, batch flip, seq-major layout -----------
    emb = params['embedding'][source]                              # (B, S, E)
    x0 = jnp.concatenate([emb, jnp.flip(emb, axis=0)], axis=-1)    # fwd ++ flipped
    x0 = jnp.transpose(x0, (1, 0, 2)).reshape(S * B, e2)           # rows (t, b)
    len_col = lengths.reshape(B, 1).astype(jnp.int32)

    context = pl.pallas_call(
        functools.partial(_encoder_kernel, seq_len=S, batch=B),
        out_shape=jax.ShapeDtypeStruct((L, S * B, h2), jnp.float32),
        in_specs=[_VMEM] * 9,
        out_specs=_VMEM,
        scratch_shapes=[pltpu.VMEM((L, S * B, e2), jnp.float32)],
    )(x0, len_col, params['enc_wi'], params['enc_wh'], params['enc_bi'],
      params['enc_bh'], params['fc_w_f'], params['fc_w_b'], params['fc_b'])

    rnn_out = pl.pallas_call(
        functools.partial(_gru_kernel, seq_len=S, batch=B),
        out_shape=jax.ShapeDtypeStruct((S * B, h2), jnp.float32),
        in_specs=[_VMEM] * 5,
        out_specs=_VMEM,
    )(context[L - 1], params['rnn_wi'], params['rnn_wh'],
      params['rnn_bi'], params['rnn_bh'])

    # batch-major views for the fused attention + predict kernel (XLA glue)
    ctx_b = jnp.transpose(context.reshape(L, S, B, h2), (0, 2, 1, 3))  # (L,B,S,E)
    rnn_b = jnp.transpose(rnn_out.reshape(S, B, h2), (1, 0, 2))        # (B,S,E)

    out = pl.pallas_call(
        functools.partial(_attn_predict_kernel, heads=heads),
        out_shape=jax.ShapeDtypeStruct((B * S, 4), jnp.float32),
        in_specs=[_VMEM] * 10,
        out_specs=_VMEM,
    )(rnn_b, ctx_b, params['attn_wq'], params['attn_bq'], params['attn_wkv'],
      params['attn_bkv'], params['attn_wo'], params['attn_bo'],
      params['pred_w'], params['pred_b'])
    return out.reshape(B, S, 4)


# ----------------------------------------------------------------------------
# Deterministic parameter init (xavier weights, zero biases, kernel-ready layout)
# ----------------------------------------------------------------------------
def init_params(key, vocab, emb, hidden, num_layers, heads):
    keys = iter(jax.random.split(key, 128))
    wdt = jnp.bfloat16          # matmul-operand dtype (accumulation stays f32)

    def xav(shape, dtype=wdt):
        fan_in, fan_out = shape[-2], shape[-1]
        lim = math.sqrt(6.0 / (fan_in + fan_out))
        return jax.random.uniform(next(keys), shape, jnp.float32,
                                  -lim, lim).astype(dtype)

    def gru_fused(d):
        """Single GRU, gates fused along columns: Wi/Wh = [Wr | Wz | Wn]."""
        wi = jnp.concatenate([xav((d, d)) for _ in range(3)], axis=1)
        wh = jnp.concatenate([xav((d, d)) for _ in range(3)], axis=1)
        zb = jnp.zeros((1, 3 * d), jnp.float32)
        return wi, wh, zb, zb

    def gru_bidir(d):
        """fwd + (batch-flipped) bwd GRU fused along features: block-diagonal."""
        wi_f, wh_f, _, _ = gru_fused(d)
        wi_b, wh_b, _, _ = gru_fused(d)
        z = jnp.zeros((d, d), wdt)

        def blk(wf, wb):
            gates = []
            for g in range(3):
                top = jnp.concatenate([wf[:, g * d:(g + 1) * d], z], axis=1)
                bot = jnp.concatenate([z, wb[:, g * d:(g + 1) * d]], axis=1)
                gates.append(jnp.concatenate([top, bot], axis=0))
            return jnp.concatenate(gates, axis=1)            # (2d, 6d)

        zb = jnp.zeros((1, 6 * d), jnp.float32)
        return blk(wi_f, wi_b), blk(wh_f, wh_b), zb, zb

    e2, h2 = 2 * emb, 2 * hidden
    enc = [gru_bidir(emb) for _ in range(num_layers)]
    fc_w = xav((e2, h2))
    zrow = jnp.zeros((emb, h2), wdt)
    rnn_wi, rnn_wh, rnn_bi, rnn_bh = gru_fused(h2)

    dh = h2 // heads
    scale = 1.0 / math.sqrt(dh)
    attn_wq = (jnp.concatenate([xav((h2, h2), jnp.float32)
                                for _ in range(num_layers)], axis=1)
               * scale).astype(wdt)
    pred_full = xav((h2 * (num_layers + 1), 4))

    return {
        'embedding': xav((vocab, emb), jnp.float32),
        'enc_wi': jnp.stack([p[0] for p in enc]),
        'enc_wh': jnp.stack([p[1] for p in enc]),
        'enc_bi': jnp.stack([p[2] for p in enc]),
        'enc_bh': jnp.stack([p[3] for p in enc]),
        'fc_w_f': jnp.concatenate([fc_w[:emb], zrow], axis=0),
        'fc_w_b': jnp.concatenate([zrow, fc_w[emb:]], axis=0),
        'fc_b': jnp.zeros((1, h2), jnp.float32),
        'rnn_wi': rnn_wi, 'rnn_wh': rnn_wh, 'rnn_bi': rnn_bi, 'rnn_bh': rnn_bh,
        'attn_wq': attn_wq,
        'attn_bq': jnp.zeros((1, num_layers * h2), jnp.float32),
        'attn_wkv': jnp.stack(
            [jnp.concatenate([xav((h2, h2)), xav((h2, h2))], axis=1)
             for _ in range(num_layers)]),
        'attn_bkv': jnp.zeros((num_layers, 1, 2 * h2), jnp.float32),
        'attn_wo': jnp.stack([xav((h2, h2)) for _ in range(num_layers)]),
        'attn_bo': jnp.zeros((num_layers, 1, h2), jnp.float32),
        'pred_w': jnp.stack([pred_full[i * h2:(i + 1) * h2]
                             for i in range(num_layers + 1)]),
        'pred_b': jnp.zeros((1, 4), jnp.float32),
    }


# ----------------------------------------------------------------------------
if __name__ == "__main__":
    VOCAB, EMB, HIDDEN, LAYERS, HEADS = 50, 32, 32, 2, 4
    B, S = 2, 8

    params = init_params(jax.random.PRNGKey(0), VOCAB, EMB, HIDDEN, LAYERS, HEADS)
    source = jax.random.randint(jax.random.PRNGKey(1), (B, S), 0, VOCAB,
                                dtype=jnp.int32)
    # pack_padded_sequence requires sorted (decreasing) lengths.
    lengths = jnp.array([S, S - 2], dtype=jnp.int32)

    fwd = jax.jit(functools.partial(seq2seq_forward,
                                    num_layers=LAYERS, heads=HEADS))
    out = fwd(params, source, lengths)
    out = jax.block_until_ready(out)
    assert out.shape == (B, S, 4) and out.dtype == jnp.float32
    assert bool(jnp.all(jnp.isfinite(out)))
    print("KERNEL_OK")
</pallas_src>

<mosaic_0001>
module attributes {stable_mosaic.version = 11 : i64} {
  func.func @_gru_kernel(%arg0: memref<16x64xf32, #tpu.memory_space<vmem>>, %arg1: memref<64x192xbf16, #tpu.memory_space<vmem>>, %arg2: memref<64x192xbf16, #tpu.memory_space<vmem>>, %arg3: memref<1x192xf32, #tpu.memory_space<vmem>>, %arg4: memref<1x192xf32, #tpu.memory_space<vmem>>, %arg5: memref<16x64xf32, #tpu.memory_space<vmem>>) attributes {dimension_semantics = [], scalar_prefetch = 0 : i64, scratch_operands = 0 : i64, tpu.core_type = #tpu.core_type<tc>} {
    %c0 = arith.constant 0 : index
    %c0_0 = arith.constant 0 : index
    %0 = vector.load %arg1[%c0, %c0_0] : memref<64x192xbf16, #tpu.memory_space<vmem>>, vector<64x192xbf16>
    %c0_1 = arith.constant 0 : index
    %c0_2 = arith.constant 0 : index
    %1 = vector.load %arg2[%c0_1, %c0_2] : memref<64x192xbf16, #tpu.memory_space<vmem>>, vector<64x192xbf16>
    %c0_3 = arith.constant 0 : index
    %c0_4 = arith.constant 0 : index
    %2 = vector.load %arg4[%c0_3, %c0_4] : memref<1x192xf32, #tpu.memory_space<vmem>>, vector<1x192xf32>
    %c0_5 = arith.constant 0 : index
    %c0_6 = arith.constant 0 : index
    %3 = vector.load %arg0[%c0_5, %c0_6] : memref<16x64xf32, #tpu.memory_space<vmem>>, vector<16x64xf32>
    %4 = arith.truncf %3 : vector<16x64xf32> to vector<16x64xbf16>
    %cst = arith.constant dense<0.000000e+00> : vector<16x192xf32>
    %5 = tpu.matmul %4, %0, %cst {dimension_numbers = #tpu.dot_dimension_numbers<[1], [0], [0], [1], [0, 0, 1, 1], [], []>} : vector<16x64xbf16>, vector<64x192xbf16>, vector<16x192xf32> -> vector<16x192xf32>
    %c0_7 = arith.constant 0 : index
    %c0_8 = arith.constant 0 : index
    %6 = vector.load %arg3[%c0_7, %c0_8] : memref<1x192xf32, #tpu.memory_space<vmem>>, vector<1x192xf32>
    %7 = vector.broadcast %6 : vector<1x192xf32> to vector<16x192xf32>
    %8 = arith.addf %5, %7 : vector<16x192xf32>
    %cst_9 = arith.constant 0.000000e+00 : f32
    %9 = vector.broadcast %cst_9 : f32 to vector<2x64xf32>
    %10 = arith.truncf %9 : vector<2x64xf32> to vector<2x64xbf16>
    %cst_10 = arith.constant dense<0.000000e+00> : vector<2x192xf32>
    %11 = tpu.matmul %10, %1, %cst_10 {dimension_numbers = #tpu.dot_dimension_numbers<[1], [0], [0], [1], [0, 0, 1, 1], [], []>} : vector<2x64xbf16>, vector<64x192xbf16>, vector<2x192xf32> -> vector<2x192xf32>
    %12 = vector.broadcast %2 : vector<1x192xf32> to vector<2x192xf32>
    %13 = arith.addf %11, %12 : vector<2x192xf32>
    %14 = vector.extract_strided_slice %8 {offsets = [0, 0], sizes = [2, 192], strides = [1, 1]} : vector<16x192xf32> to vector<2x192xf32>
    %15 = vector.extract_strided_slice %14 {offsets = [0, 0], sizes = [2, 64], strides = [1, 1]} : vector<2x192xf32> to vector<2x64xf32>
    %16 = vector.extract_strided_slice %13 {offsets = [0, 0], sizes = [2, 64], strides = [1, 1]} : vector<2x192xf32> to vector<2x64xf32>
    %17 = arith.addf %15, %16 : vector<2x64xf32>
    %18 = arith.negf %17 : vector<2x64xf32>
    %19 = math.exp %18 : vector<2x64xf32>
    %cst_11 = arith.constant 1.000000e+00 : f32
    %20 = vector.broadcast %cst_11 : f32 to vector<2x64xf32>
    %21 = arith.addf %20, %19 : vector<2x64xf32>
    %22 = arith.divf %20, %21 : vector<2x64xf32>
    %23 = vector.extract_strided_slice %14 {offsets = [0, 64], sizes = [2, 64], strides = [1, 1]} : vector<2x192xf32> to vector<2x64xf32>
    %24 = vector.extract_strided_slice %13 {offsets = [0, 64], sizes = [2, 64], strides = [1, 1]} : vector<2x192xf32> to vector<2x64xf32>
    %25 = arith.addf %23, %24 : vector<2x64xf32>
    %26 = arith.negf %25 : vector<2x64xf32>
    %27 = math.exp %26 : vector<2x64xf32>
    %cst_12 = arith.constant 1.000000e+00 : f32
    %28 = vector.broadcast %cst_12 : f32 to vector<2x64xf32>
    %29 = arith.addf %28, %27 : vector<2x64xf32>
    %30 = arith.divf %28, %29 : vector<2x64xf32>
    %31 = vector.extract_strided_slice %14 {offsets = [0, 128], sizes = [2, 64], strides = [1, 1]} : vector<2x192xf32> to vector<2x64xf32>
    %32 = vector.extract_strided_slice %13 {offsets = [0, 128], sizes = [2, 64], strides = [1, 1]} : vector<2x192xf32> to vector<2x64xf32>
    %33 = arith.mulf %22, %32 : vector<2x64xf32>
    %34 = arith.addf %31, %33 : vector<2x64xf32>
    %35 = math.tanh %34 : vector<2x64xf32>
    %cst_13 = arith.constant 1.000000e+00 : f32
    %36 = vector.broadcast %cst_13 : f32 to vector<2x64xf32>
    %37 = arith.subf %36, %30 : vector<2x64xf32>
    %38 = arith.mulf %37, %35 : vector<2x64xf32>
    %39 = arith.mulf %30, %9 : vector<2x64xf32>
    %40 = arith.addf %38, %39 : vector<2x64xf32>
    %c0_14 = arith.constant 0 : index
    %c0_15 = arith.constant 0 : index
    %41 = vector.load %arg5[%c0_14, %c0_15] : memref<16x64xf32, #tpu.memory_space<vmem>>, vector<2x64xf32>
    tpu.vector_store %arg5[%c0_14, %c0_15], %40 {strides = array<i32>} : memref<16x64xf32, #tpu.memory_space<vmem>>, vector<2x64xf32>,
    %42 = arith.truncf %40 : vector<2x64xf32> to vector<2x64xbf16>
    %cst_16 = arith.constant dense<0.000000e+00> : vector<2x192xf32>
    %43 = tpu.matmul %42, %1, %cst_16 {dimension_numbers = #tpu.dot_dimension_numbers<[1], [0], [0], [1], [0, 0, 1, 1], [], []>} : vector<2x64xbf16>, vector<64x192xbf16>, vector<2x192xf32> -> vector<2x192xf32>
    %44 = vector.broadcast %2 : vector<1x192xf32> to vector<2x192xf32>
    %45 = arith.addf %43, %44 : vector<2x192xf32>
    %46 = vector.extract_strided_slice %8 {offsets = [2, 0], sizes = [2, 192], strides = [1, 1]} : vector<16x192xf32> to vector<2x192xf32>
    %47 = vector.extract_strided_slice %46 {offsets = [0, 0], sizes = [2, 64], strides = [1, 1]} : vector<2x192xf32> to vector<2x64xf32>
    %48 = vector.extract_strided_slice %45 {offsets = [0, 0], sizes = [2, 64], strides = [1, 1]} : vector<2x192xf32> to vector<2x64xf32>
    %49 = arith.addf %47, %48 : vector<2x64xf32>
    %50 = arith.negf %49 : vector<2x64xf32>
    %51 = math.exp %50 : vector<2x64xf32>
    %cst_17 = arith.constant 1.000000e+00 : f32
    %52 = vector.broadcast %cst_17 : f32 to vector<2x64xf32>
    %53 = arith.addf %52, %51 : vector<2x64xf32>
    %54 = arith.divf %52, %53 : vector<2x64xf32>
    %55 = vector.extract_strided_slice %46 {offsets = [0, 64], sizes = [2, 64], strides = [1, 1]} : vector<2x192xf32> to vector<2x64xf32>
    %56 = vector.extract_strided_slice %45 {offsets = [0, 64], sizes = [2, 64], strides = [1, 1]} : vector<2x192xf32> to vector<2x64xf32>
    %57 = arith.addf %55, %56 : vector<2x64xf32>
    %58 = arith.negf %57 : vector<2x64xf32>
    %59 = math.exp %58 : vector<2x64xf32>
    %cst_18 = arith.constant 1.000000e+00 : f32
    %60 = vector.broadcast %cst_18 : f32 to vector<2x64xf32>
    %61 = arith.addf %60, %59 : vector<2x64xf32>
    %62 = arith.divf %60, %61 : vector<2x64xf32>
    %63 = vector.extract_strided_slice %46 {offsets = [0, 128], sizes = [2, 64], strides = [1, 1]} : vector<2x192xf32> to vector<2x64xf32>
    %64 = vector.extract_strided_slice %45 {offsets = [0, 128], sizes = [2, 64], strides = [1, 1]} : vector<2x192xf32> to vector<2x64xf32>
    %65 = arith.mulf %54, %64 : vector<2x64xf32>
    %66 = arith.addf %63, %65 : vector<2x64xf32>
    %67 = math.tanh %66 : vector<2x64xf32>
    %cst_19 = arith.constant 1.000000e+00 : f32
    %68 = vector.broadcast %cst_19 : f32 to vector<2x64xf32>
    %69 = arith.subf %68, %62 : vector<2x64xf32>
    %70 = arith.mulf %69, %67 : vector<2x64xf32>
    %71 = arith.mulf %62, %40 : vector<2x64xf32>
    %72 = arith.addf %70, %71 : vector<2x64xf32>
    %c2 = arith.constant 2 : index
    %c0_20 = arith.constant 0 : index
    %73 = vector.load %arg5[%c2, %c0_20] : memref<16x64xf32, #tpu.memory_space<vmem>>, vector<2x64xf32>
    tpu.vector_store %arg5[%c2, %c0_20], %72 {strides = array<i32>} : memref<16x64xf32, #tpu.memory_space<vmem>>, vector<2x64xf32>,
    %74 = arith.truncf %72 : vector<2x64xf32> to vector<2x64xbf16>
    %cst_21 = arith.constant dense<0.000000e+00> : vector<2x192xf32>
    %75 = tpu.matmul %74, %1, %cst_21 {dimension_numbers = #tpu.dot_dimension_numbers<[1], [0], [0], [1], [0, 0, 1, 1], [], []>} : vector<2x64xbf16>, vector<64x192xbf16>, vector<2x192xf32> -> vector<2x192xf32>
    %76 = vector.broadcast %2 : vector<1x192xf32> to vector<2x192xf32>
    %77 = arith.addf %75, %76 : vector<2x192xf32>
    %78 = vector.extract_strided_slice %8 {offsets = [4, 0], sizes = [2, 192], strides = [1, 1]} : vector<16x192xf32> to vector<2x192xf32>
    %79 = vector.extract_strided_slice %78 {offsets = [0, 0], sizes = [2, 64], strides = [1, 1]} : vector<2x192xf32> to vector<2x64xf32>
    %80 = vector.extract_strided_slice %77 {offsets = [0, 0], sizes = [2, 64], strides = [1, 1]} : vector<2x192xf32> to vector<2x64xf32>
    %81 = arith.addf %79, %80 : vector<2x64xf32>
    %82 = arith.negf %81 : vector<2x64xf32>
    %83 = math.exp %82 : vector<2x64xf32>
    %cst_22 = arith.constant 1.000000e+00 : f32
    %84 = vector.broadcast %cst_22 : f32 to vector<2x64xf32>
    %85 = arith.addf %84, %83 : vector<2x64xf32>
    %86 = arith.divf %84, %85 : vector<2x64xf32>
    %87 = vector.extract_strided_slice %78 {offsets = [0, 64], sizes = [2, 64], strides = [1, 1]} : vector<2x192xf32> to vector<2x64xf32>
    %88 = vector.extract_strided_slice %77 {offsets = [0, 64], sizes = [2, 64], strides = [1, 1]} : vector<2x192xf32> to vector<2x64xf32>
    %89 = arith.addf %87, %88 : vector<2x64xf32>
    %90 = arith.negf %89 : vector<2x64xf32>
    %91 = math.exp %90 : vector<2x64xf32>
    %cst_23 = arith.constant 1.000000e+00 : f32
    %92 = vector.broadcast %cst_23 : f32 to vector<2x64xf32>
    %93 = arith.addf %92, %91 : vector<2x64xf32>
    %94 = arith.divf %92, %93 : vector<2x64xf32>
    %95 = vector.extract_strided_slice %78 {offsets = [0, 128], sizes = [2, 64], strides = [1, 1]} : vector<2x192xf32> to vector<2x64xf32>
    %96 = vector.extract_strided_slice %77 {offsets = [0, 128], sizes = [2, 64], strides = [1, 1]} : vector<2x192xf32> to vector<2x64xf32>
    %97 = arith.mulf %86, %96 : vector<2x64xf32>
    %98 = arith.addf %95, %97 : vector<2x64xf32>
    %99 = math.tanh %98 : vector<2x64xf32>
    %cst_24 = arith.constant 1.000000e+00 : f32
    %100 = vector.broadcast %cst_24 : f32 to vector<2x64xf32>
    %101 = arith.subf %100, %94 : vector<2x64xf32>
    %102 = arith.mulf %101, %99 : vector<2x64xf32>
    %103 = arith.mulf %94, %72 : vector<2x64xf32>
    %104 = arith.addf %102, %103 : vector<2x64xf32>
    %c4 = arith.constant 4 : index
    %c0_25 = arith.constant 0 : index
    %105 = vector.load %arg5[%c4, %c0_25] : memref<16x64xf32, #tpu.memory_space<vmem>>, vector<2x64xf32>
    tpu.vector_store %arg5[%c4, %c0_25], %104 {strides = array<i32>} : memref<16x64xf32, #tpu.memory_space<vmem>>, vector<2x64xf32>,
    %106 = arith.truncf %104 : vector<2x64xf32> to vector<2x64xbf16>
    %cst_26 = arith.constant dense<0.000000e+00> : vector<2x192xf32>
    %107 = tpu.matmul %106, %1, %cst_26 {dimension_numbers = #tpu.dot_dimension_numbers<[1], [0], [0], [1], [0, 0, 1, 1], [], []>} : vector<2x64xbf16>, vector<64x192xbf16>, vector<2x192xf32> -> vector<2x192xf32>
    %108 = vector.broadcast %2 : vector<1x192xf32> to vector<2x192xf32>
    %109 = arith.addf %107, %108 : vector<2x192xf32>
    %110 = vector.extract_strided_slice %8 {offsets = [6, 0], sizes = [2, 192], strides = [1, 1]} : vector<16x192xf32> to vector<2x192xf32>
    %111 = vector.extract_strided_slice %110 {offsets = [0, 0], sizes = [2, 64], strides = [1, 1]} : vector<2x192xf32> to vector<2x64xf32>
    %112 = vector.extract_strided_slice %109 {offsets = [0, 0], sizes = [2, 64], strides = [1, 1]} : vector<2x192xf32> to vector<2x64xf32>
    %113 = arith.addf %111, %112 : vector<2x64xf32>
    %114 = arith.negf %113 : vector<2x64xf32>
    %115 = math.exp %114 : vector<2x64xf32>
    %cst_27 = arith.constant 1.000000e+00 : f32
    %116 = vector.broadcast %cst_27 : f32 to vector<2x64xf32>
    %117 = arith.addf %116, %115 : vector<2x64xf32>
    %118 = arith.divf %116, %117 : vector<2x64xf32>
    %119 = vector.extract_strided_slice %110 {offsets = [0, 64], sizes = [2, 64], strides = [1, 1]} : vector<2x192xf32> to vector<2x64xf32>
    %120 = vector.extract_strided_slice %109 {offsets = [0, 64], sizes = [2, 64], strides = [1, 1]} : vector<2x192xf32> to vector<2x64xf32>
    %121 = arith.addf %119, %120 : vector<2x64xf32>
    %122 = arith.negf %121 : vector<2x64xf32>
    %123 = math.exp %122 : vector<2x64xf32>
    %cst_28 = arith.constant 1.000000e+00 : f32
    %124 = vector.broadcast %cst_28 : f32 to vector<2x64xf32>
    %125 = arith.addf %124, %123 : vector<2x64xf32>
    %126 = arith.divf %124, %125 : vector<2x64xf32>
    %127 = vector.extract_strided_slice %110 {offsets = [0, 128], sizes = [2, 64], strides = [1, 1]} : vector<2x192xf32> to vector<2x64xf32>
    %128 = vector.extract_strided_slice %109 {offsets = [0, 128], sizes = [2, 64], strides = [1, 1]} : vector<2x192xf32> to vector<2x64xf32>
    %129 = arith.mulf %118, %128 : vector<2x64xf32>
    %130 = arith.addf %127, %129 : vector<2x64xf32>
    %131 = math.tanh %130 : vector<2x64xf32>
    %cst_29 = arith.constant 1.000000e+00 : f32
    %132 = vector.broadcast %cst_29 : f32 to vector<2x64xf32>
    %133 = arith.subf %132, %126 : vector<2x64xf32>
    %134 = arith.mulf %133, %131 : vector<2x64xf32>
    %135 = arith.mulf %126, %104 : vector<2x64xf32>
    %136 = arith.addf %134, %135 : vector<2x64xf32>
    %c6 = arith.constant 6 : index
    %c0_30 = arith.constant 0 : index
    %137 = vector.load %arg5[%c6, %c0_30] : memref<16x64xf32, #tpu.memory_space<vmem>>, vector<2x64xf32>
    tpu.vector_store %arg5[%c6, %c0_30], %136 {strides = array<i32>} : memref<16x64xf32, #tpu.memory_space<vmem>>, vector<2x64xf32>,
    %138 = arith.truncf %136 : vector<2x64xf32> to vector<2x64xbf16>
    %cst_31 = arith.constant dense<0.000000e+00> : vector<2x192xf32>
    %139 = tpu.matmul %138, %1, %cst_31 {dimension_numbers = #tpu.dot_dimension_numbers<[1], [0], [0], [1], [0, 0, 1, 1], [], []>} : vector<2x64xbf16>, vector<64x192xbf16>, vector<2x192xf32> -> vector<2x192xf32>
    %140 = vector.broadcast %2 : vector<1x192xf32> to vector<2x192xf32>
    %141 = arith.addf %139, %140 : vector<2x192xf32>
    %142 = vector.extract_strided_slice %8 {offsets = [8, 0], sizes = [2, 192], strides = [1, 1]} : vector<16x192xf32> to vector<2x192xf32>
    %143 = vector.extract_strided_slice %142 {offsets = [0, 0], sizes = [2, 64], strides = [1, 1]} : vector<2x192xf32> to vector<2x64xf32>
    %144 = vector.extract_strided_slice %141 {offsets = [0, 0], sizes = [2, 64], strides = [1, 1]} : vector<2x192xf32> to vector<2x64xf32>
    %145 = arith.addf %143, %144 : vector<2x64xf32>
    %146 = arith.negf %145 : vector<2x64xf32>
    %147 = math.exp %146 : vector<2x64xf32>
    %cst_32 = arith.constant 1.000000e+00 : f32
    %148 = vector.broadcast %cst_32 : f32 to vector<2x64xf32>
    %149 = arith.addf %148, %147 : vector<2x64xf32>
    %150 = arith.divf %148, %149 : vector<2x64xf32>
    %151 = vector.extract_strided_slice %142 {offsets = [0, 64], sizes = [2, 64], strides = [1, 1]} : vector<2x192xf32> to vector<2x64xf32>
    %152 = vector.extract_strided_slice %141 {offsets = [0, 64], sizes = [2, 64], strides = [1, 1]} : vector<2x192xf32> to vector<2x64xf32>
    %153 = arith.addf %151, %152 : vector<2x64xf32>
    %154 = arith.negf %153 : vector<2x64xf32>
    %155 = math.exp %154 : vector<2x64xf32>
    %cst_33 = arith.constant 1.000000e+00 : f32
    %156 = vector.broadcast %cst_33 : f32 to vector<2x64xf32>
    %157 = arith.addf %156, %155 : vector<2x64xf32>
    %158 = arith.divf %156, %157 : vector<2x64xf32>
    %159 = vector.extract_strided_slice %142 {offsets = [0, 128], sizes = [2, 64], strides = [1, 1]} : vector<2x192xf32> to vector<2x64xf32>
    %160 = vector.extract_strided_slice %141 {offsets = [0, 128], sizes = [2, 64], strides = [1, 1]} : vector<2x192xf32> to vector<2x64xf32>
    %161 = arith.mulf %150, %160 : vector<2x64xf32>
    %162 = arith.addf %159, %161 : vector<2x64xf32>
    %163 = math.tanh %162 : vector<2x64xf32>
    %cst_34 = arith.constant 1.000000e+00 : f32
    %164 = vector.broadcast %cst_34 : f32 to vector<2x64xf32>
    %165 = arith.subf %164, %158 : vector<2x64xf32>
    %166 = arith.mulf %165, %163 : vector<2x64xf32>
    %167 = arith.mulf %158, %136 : vector<2x64xf32>
    %168 = arith.addf %166, %167 : vector<2x64xf32>
    %c8 = arith.constant 8 : index
    %c0_35 = arith.constant 0 : index
    %169 = vector.load %arg5[%c8, %c0_35] : memref<16x64xf32, #tpu.memory_space<vmem>>, vector<2x64xf32>
    tpu.vector_store %arg5[%c8, %c0_35], %168 {strides = array<i32>} : memref<16x64xf32, #tpu.memory_space<vmem>>, vector<2x64xf32>,
    %170 = arith.truncf %168 : vector<2x64xf32> to vector<2x64xbf16>
    %cst_36 = arith.constant dense<0.000000e+00> : vector<2x192xf32>
    %171 = tpu.matmul %170, %1, %cst_36 {dimension_numbers = #tpu.dot_dimension_numbers<[1], [0], [0], [1], [0, 0, 1, 1], [], []>} : vector<2x64xbf16>, vector<64x192xbf16>, vector<2x192xf32> -> vector<2x192xf32>
    %172 = vector.broadcast %2 : vector<1x192xf32> to vector<2x192xf32>
    %173 = arith.addf %171, %172 : vector<2x192xf32>
    %174 = vector.extract_strided_slice %8 {offsets = [10, 0], sizes = [2, 192], strides = [1, 1]} : vector<16x192xf32> to vector<2x192xf32>
    %175 = vector.extract_strided_slice %174 {offsets = [0, 0], sizes = [2, 64], strides = [1, 1]} : vector<2x192xf32> to vector<2x64xf32>
    %176 = vector.extract_strided_slice %173 {offsets = [0, 0], sizes = [2, 64], strides = [1, 1]} : vector<2x192xf32> to vector<2x64xf32>
    %177 = arith.addf %175, %176 : vector<2x64xf32>
    %178 = arith.negf %177 : vector<2x64xf32>
    %179 = math.exp %178 : vector<2x64xf32>
    %cst_37 = arith.constant 1.000000e+00 : f32
    %180 = vector.broadcast %cst_37 : f32 to vector<2x64xf32>
    %181 = arith.addf %180, %179 : vector<2x64xf32>
    %182 = arith.divf %180, %181 : vector<2x64xf32>
    %183 = vector.extract_strided_slice %174 {offsets = [0, 64], sizes = [2, 64], strides = [1, 1]} : vector<2x192xf32> to vector<2x64xf32>
    %184 = vector.extract_strided_slice %173 {offsets = [0, 64], sizes = [2, 64], strides = [1, 1]} : vector<2x192xf32> to vector<2x64xf32>
    %185 = arith.addf %183, %184 : vector<2x64xf32>
    %186 = arith.negf %185 : vector<2x64xf32>
    %187 = math.exp %186 : vector<2x64xf32>
    %cst_38 = arith.constant 1.000000e+00 : f32
    %188 = vector.broadcast %cst_38 : f32 to vector<2x64xf32>
    %189 = arith.addf %188, %187 : vector<2x64xf32>
    %190 = arith.divf %188, %189 : vector<2x64xf32>
    %191 = vector.extract_strided_slice %174 {offsets = [0, 128], sizes = [2, 64], strides = [1, 1]} : vector<2x192xf32> to vector<2x64xf32>
    %192 = vector.extract_strided_slice %173 {offsets = [0, 128], sizes = [2, 64], strides = [1, 1]} : vector<2x192xf32> to vector<2x64xf32>
    %193 = arith.mulf %182, %192 : vector<2x64xf32>
    %194 = arith.addf %191, %193 : vector<2x64xf32>
    %195 = math.tanh %194 : vector<2x64xf32>
    %cst_39 = arith.constant 1.000000e+00 : f32
    %196 = vector.broadcast %cst_39 : f32 to vector<2x64xf32>
    %197 = arith.subf %196, %190 : vector<2x64xf32>
    %198 = arith.mulf %197, %195 : vector<2x64xf32>
    %199 = arith.mulf %190, %168 : vector<2x64xf32>
    %200 = arith.addf %198, %199 : vector<2x64xf32>
    %c10 = arith.constant 10 : index
    %c0_40 = arith.constant 0 : index
    %201 = vector.load %arg5[%c10, %c0_40] : memref<16x64xf32, #tpu.memory_space<vmem>>, vector<2x64xf32>
    tpu.vector_store %arg5[%c10, %c0_40], %200 {strides = array<i32>} : memref<16x64xf32, #tpu.memory_space<vmem>>, vector<2x64xf32>,
    %202 = arith.truncf %200 : vector<2x64xf32> to vector<2x64xbf16>
    %cst_41 = arith.constant dense<0.000000e+00> : vector<2x192xf32>
    %203 = tpu.matmul %202, %1, %cst_41 {dimension_numbers = #tpu.dot_dimension_numbers<[1], [0], [0], [1], [0, 0, 1, 1], [], []>} : vector<2x64xbf16>, vector<64x192xbf16>, vector<2x192xf32> -> vector<2x192xf32>
    %204 = vector.broadcast %2 : vector<1x192xf32> to vector<2x192xf32>
    %205 = arith.addf %203, %204 : vector<2x192xf32>
    %206 = vector.extract_strided_slice %8 {offsets = [12, 0], sizes = [2, 192], strides = [1, 1]} : vector<16x192xf32> to vector<2x192xf32>
    %207 = vector.extract_strided_slice %206 {offsets = [0, 0], sizes = [2, 64], strides = [1, 1]} : vector<2x192xf32> to vector<2x64xf32>
    %208 = vector.extract_strided_slice %205 {offsets = [0, 0], sizes = [2, 64], strides = [1, 1]} : vector<2x192xf32> to vector<2x64xf32>
    %209 = arith.addf %207, %208 : vector<2x64xf32>
    %210 = arith.negf %209 : vector<2x64xf32>
    %211 = math.exp %210 : vector<2x64xf32>
    %cst_42 = arith.constant 1.000000e+00 : f32
    %212 = vector.broadcast %cst_42 : f32 to vector<2x64xf32>
    %213 = arith.addf %212, %211 : vector<2x64xf32>
    %214 = arith.divf %212, %213 : vector<2x64xf32>
    %215 = vector.extract_strided_slice %206 {offsets = [0, 64], sizes = [2, 64], strides = [1, 1]} : vector<2x192xf32> to vector<2x64xf32>
    %216 = vector.extract_strided_slice %205 {offsets = [0, 64], sizes = [2, 64], strides = [1, 1]} : vector<2x192xf32> to vector<2x64xf32>
    %217 = arith.addf %215, %216 : vector<2x64xf32>
    %218 = arith.negf %217 : vector<2x64xf32>
    %219 = math.exp %218 : vector<2x64xf32>
    %cst_43 = arith.constant 1.000000e+00 : f32
    %220 = vector.broadcast %cst_43 : f32 to vector<2x64xf32>
    %221 = arith.addf %220, %219 : vector<2x64xf32>
    %222 = arith.divf %220, %221 : vector<2x64xf32>
    %223 = vector.extract_strided_slice %206 {offsets = [0, 128], sizes = [2, 64], strides = [1, 1]} : vector<2x192xf32> to vector<2x64xf32>
    %224 = vector.extract_strided_slice %205 {offsets = [0, 128], sizes = [2, 64], strides = [1, 1]} : vector<2x192xf32> to vector<2x64xf32>
    %225 = arith.mulf %214, %224 : vector<2x64xf32>
    %226 = arith.addf %223, %225 : vector<2x64xf32>
    %227 = math.tanh %226 : vector<2x64xf32>
    %cst_44 = arith.constant 1.000000e+00 : f32
    %228 = vector.broadcast %cst_44 : f32 to vector<2x64xf32>
    %229 = arith.subf %228, %222 : vector<2x64xf32>
    %230 = arith.mulf %229, %227 : vector<2x64xf32>
    %231 = arith.mulf %222, %200 : vector<2x64xf32>
    %232 = arith.addf %230, %231 : vector<2x64xf32>
    %c12 = arith.constant 12 : index
    %c0_45 = arith.constant 0 : index
    %233 = vector.load %arg5[%c12, %c0_45] : memref<16x64xf32, #tpu.memory_space<vmem>>, vector<2x64xf32>
    tpu.vector_store %arg5[%c12, %c0_45], %232 {strides = array<i32>} : memref<16x64xf32, #tpu.memory_space<vmem>>, vector<2x64xf32>,
    %234 = arith.truncf %232 : vector<2x64xf32> to vector<2x64xbf16>
    %cst_46 = arith.constant dense<0.000000e+00> : vector<2x192xf32>
    %235 = tpu.matmul %234, %1, %cst_46 {dimension_numbers = #tpu.dot_dimension_numbers<[1], [0], [0], [1], [0, 0, 1, 1], [], []>} : vector<2x64xbf16>, vector<64x192xbf16>, vector<2x192xf32> -> vector<2x192xf32>
    %236 = vector.broadcast %2 : vector<1x192xf32> to vector<2x192xf32>
    %237 = arith.addf %235, %236 : vector<2x192xf32>
    %238 = vector.extract_strided_slice %8 {offsets = [14, 0], sizes = [2, 192], strides = [1, 1]} : vector<16x192xf32> to vector<2x192xf32>
    %239 = vector.extract_strided_slice %238 {offsets = [0, 0], sizes = [2, 64], strides = [1, 1]} : vector<2x192xf32> to vector<2x64xf32>
    %240 = vector.extract_strided_slice %237 {offsets = [0, 0], sizes = [2, 64], strides = [1, 1]} : vector<2x192xf32> to vector<2x64xf32>
    %241 = arith.addf %239, %240 : vector<2x64xf32>
    %242 = arith.negf %241 : vector<2x64xf32>
    %243 = math.exp %242 : vector<2x64xf32>
    %cst_47 = arith.constant 1.000000e+00 : f32
    %244 = vector.broadcast %cst_47 : f32 to vector<2x64xf32>
    %245 = arith.addf %244, %243 : vector<2x64xf32>
    %246 = arith.divf %244, %245 : vector<2x64xf32>
    %247 = vector.extract_strided_slice %238 {offsets = [0, 64], sizes = [2, 64], strides = [1, 1]} : vector<2x192xf32> to vector<2x64xf32>
    %248 = vector.extract_strided_slice %237 {offsets = [0, 64], sizes = [2, 64], strides = [1, 1]} : vector<2x192xf32> to vector<2x64xf32>
    %249 = arith.addf %247, %248 : vector<2x64xf32>
    %250 = arith.negf %249 : vector<2x64xf32>
    %251 = math.exp %250 : vector<2x64xf32>
    %cst_48 = arith.constant 1.000000e+00 : f32
    %252 = vector.broadcast %cst_48 : f32 to vector<2x64xf32>
    %253 = arith.addf %252, %251 : vector<2x64xf32>
    %254 = arith.divf %252, %253 : vector<2x64xf32>
    %255 = vector.extract_strided_slice %238 {offsets = [0, 128], sizes = [2, 64], strides = [1, 1]} : vector<2x192xf32> to vector<2x64xf32>
    %256 = vector.extract_strided_slice %237 {offsets = [0, 128], sizes = [2, 64], strides = [1, 1]} : vector<2x192xf32> to vector<2x64xf32>
    %257 = arith.mulf %246, %256 : vector<2x64xf32>
    %258 = arith.addf %255, %257 : vector<2x64xf32>
    %259 = math.tanh %258 : vector<2x64xf32>
    %cst_49 = arith.constant 1.000000e+00 : f32
    %260 = vector.broadcast %cst_49 : f32 to vector<2x64xf32>
    %261 = arith.subf %260, %254 : vector<2x64xf32>
    %262 = arith.mulf %261, %259 : vector<2x64xf32>
    %263 = arith.mulf %254, %232 : vector<2x64xf32>
    %264 = arith.addf %262, %263 : vector<2x64xf32>
    %c14 = arith.constant 14 : index
    %c0_50 = arith.constant 0 : index
    %265 = vector.load %arg5[%c14, %c0_50] : memref<16x64xf32, #tpu.memory_space<vmem>>, vector<2x64xf32>
    tpu.vector_store %arg5[%c14, %c0_50], %264 {strides = array<i32>} : memref<16x64xf32, #tpu.memory_space<vmem>>, vector<2x64xf32>,
    return
  }
}

module attributes {stable_mosaic.version = 11 : i64} {
  func.func @_encoder_kernel(%arg0: memref<16x64xf32, #tpu.memory_space<vmem>>, %arg1: memref<2x1xi32, #tpu.memory_space<vmem>>, %arg2: memref<2x64x192xbf16, #tpu.memory_space<vmem>>, %arg3: memref<2x64x192xbf16, #tpu.memory_space<vmem>>, %arg4: memref<2x1x192xf32, #tpu.memory_space<vmem>>, %arg5: memref<2x1x192xf32, #tpu.memory_space<vmem>>, %arg6: memref<64x64xbf16, #tpu.memory_space<vmem>>, %arg7: memref<64x64xbf16, #tpu.memory_space<vmem>>, %arg8: memref<1x64xf32, #tpu.memory_space<vmem>>, %arg9: memref<2x16x64xf32, #tpu.memory_space<vmem>>, %arg10: memref<2x16x64xf32, #tpu.memory_space<vmem>>) attributes {dimension_semantics = [], scalar_prefetch = 0 : i64, scratch_operands = 1 : i64, tpu.core_type = #tpu.core_type<tc>} {
    %c0 = arith.constant 0 : index
    %c0_0 = arith.constant 0 : index
    %0 = vector.load %arg1[%c0, %c0_0] : memref<2x1xi32, #tpu.memory_space<vmem>>, vector<2x1xi32>
    %c0_1 = arith.constant 0 : index
    %c0_2 = arith.constant 0 : index
    %1 = vector.load %arg0[%c0_1, %c0_2] : memref<16x64xf32, #tpu.memory_space<vmem>>, vector<16x64xf32>
    %c0_3 = arith.constant 0 : index
    %c0_4 = arith.constant 0 : index
    %c0_5 = arith.constant 0 : index
    %2 = vector.load %arg2[%c0_3, %c0_4, %c0_5] : memref<2x64x192xbf16, #tpu.memory_space<vmem>>, vector<1x64x192xbf16>
    %3 = vector.shape_cast %2 : vector<1x64x192xbf16> to vector<64x192xbf16>
    %c0_6 = arith.constant 0 : index
    %c0_7 = arith.constant 0 : index
    %c0_8 = arith.constant 0 : index
    %4 = vector.load %arg3[%c0_6, %c0_7, %c0_8] : memref<2x64x192xbf16, #tpu.memory_space<vmem>>, vector<1x64x192xbf16>
    %5 = vector.shape_cast %4 : vector<1x64x192xbf16> to vector<64x192xbf16>
    %c0_9 = arith.constant 0 : index
    %c0_10 = arith.constant 0 : index
    %c0_11 = arith.constant 0 : index
    %6 = vector.load %arg5[%c0_9, %c0_10, %c0_11] : memref<2x1x192xf32, #tpu.memory_space<vmem>>, vector<1x1x192xf32>
    %7 = vector.shape_cast %6 : vector<1x1x192xf32> to vector<1x192xf32>
    %8 = arith.truncf %1 : vector<16x64xf32> to vector<16x64xbf16>
    %cst = arith.constant dense<0.000000e+00> : vector<16x192xf32>
    %9 = tpu.matmul %8, %3, %cst {dimension_numbers = #tpu.dot_dimension_numbers<[1], [0], [0], [1], [0, 0, 1, 1], [], []>} : vector<16x64xbf16>, vector<64x192xbf16>, vector<16x192xf32> -> vector<16x192xf32>
    %c0_12 = arith.constant 0 : index
    %c0_13 = arith.constant 0 : index
    %c0_14 = arith.constant 0 : index
    %10 = vector.load %arg4[%c0_12, %c0_13, %c0_14] : memref<2x1x192xf32, #tpu.memory_space<vmem>>, vector<1x1x192xf32>
    %11 = vector.shape_cast %10 : vector<1x1x192xf32> to vector<1x192xf32>
    %12 = vector.broadcast %11 : vector<1x192xf32> to vector<16x192xf32>
    %13 = arith.addf %9, %12 : vector<16x192xf32>
    %cst_15 = arith.constant 0.000000e+00 : f32
    %14 = vector.broadcast %cst_15 : f32 to vector<2x64xf32>
    %15 = arith.truncf %14 : vector<2x64xf32> to vector<2x64xbf16>
    %cst_16 = arith.constant dense<0.000000e+00> : vector<2x192xf32>
    %16 = tpu.matmul %15, %5, %cst_16 {dimension_numbers = #tpu.dot_dimension_numbers<[1], [0], [0], [1], [0, 0, 1, 1], [], []>} : vector<2x64xbf16>, vector<64x192xbf16>, vector<2x192xf32> -> vector<2x192xf32>
    %17 = vector.broadcast %7 : vector<1x192xf32> to vector<2x192xf32>
    %18 = arith.addf %16, %17 : vector<2x192xf32>
    %19 = vector.extract_strided_slice %13 {offsets = [0, 0], sizes = [2, 192], strides = [1, 1]} : vector<16x192xf32> to vector<2x192xf32>
    %20 = vector.extract_strided_slice %19 {offsets = [0, 0], sizes = [2, 64], strides = [1, 1]} : vector<2x192xf32> to vector<2x64xf32>
    %21 = vector.extract_strided_slice %18 {offsets = [0, 0], sizes = [2, 64], strides = [1, 1]} : vector<2x192xf32> to vector<2x64xf32>
    %22 = arith.addf %20, %21 : vector<2x64xf32>
    %23 = arith.negf %22 : vector<2x64xf32>
    %24 = math.exp %23 : vector<2x64xf32>
    %cst_17 = arith.constant 1.000000e+00 : f32
    %25 = vector.broadcast %cst_17 : f32 to vector<2x64xf32>
    %26 = arith.addf %25, %24 : vector<2x64xf32>
    %27 = arith.divf %25, %26 : vector<2x64xf32>
    %28 = vector.extract_strided_slice %19 {offsets = [0, 64], sizes = [2, 64], strides = [1, 1]} : vector<2x192xf32> to vector<2x64xf32>
    %29 = vector.extract_strided_slice %18 {offsets = [0, 64], sizes = [2, 64], strides = [1, 1]} : vector<2x192xf32> to vector<2x64xf32>
    %30 = arith.addf %28, %29 : vector<2x64xf32>
    %31 = arith.negf %30 : vector<2x64xf32>
    %32 = math.exp %31 : vector<2x64xf32>
    %cst_18 = arith.constant 1.000000e+00 : f32
    %33 = vector.broadcast %cst_18 : f32 to vector<2x64xf32>
    %34 = arith.addf %33, %32 : vector<2x64xf32>
    %35 = arith.divf %33, %34 : vector<2x64xf32>
    %36 = vector.extract_strided_slice %19 {offsets = [0, 128], sizes = [2, 64], strides = [1, 1]} : vector<2x192xf32> to vector<2x64xf32>
    %37 = vector.extract_strided_slice %18 {offsets = [0, 128], sizes = [2, 64], strides = [1, 1]} : vector<2x192xf32> to vector<2x64xf32>
    %38 = arith.mulf %27, %37 : vector<2x64xf32>
    %39 = arith.addf %36, %38 : vector<2x64xf32>
    %40 = math.tanh %39 : vector<2x64xf32>
    %cst_19 = arith.constant 1.000000e+00 : f32
    %41 = vector.broadcast %cst_19 : f32 to vector<2x64xf32>
    %42 = arith.subf %41, %35 : vector<2x64xf32>
    %43 = arith.mulf %42, %40 : vector<2x64xf32>
    %44 = arith.mulf %35, %14 : vector<2x64xf32>
    %45 = arith.addf %43, %44 : vector<2x64xf32>
    %c0_i32 = arith.constant 0 : i32
    %46 = vector.broadcast %c0_i32 : i32 to vector<2x1xi32>
    %47 = arith.cmpi sgt, %0, %46 : vector<2x1xi32>
    %48 = vector.shape_cast %47 : vector<2x1xi1> to vector<2x1xi1>
    %49 = vector.broadcast %48 : vector<2x1xi1> to vector<2x64xi1>
    %50 = arith.select %49, %45, %14 : vector<2x64xi1>, vector<2x64xf32>
    %cst_20 = arith.constant 0.000000e+00 : f32
    %51 = vector.shape_cast %47 : vector<2x1xi1> to vector<2x1xi1>
    %52 = vector.broadcast %51 : vector<2x1xi1> to vector<2x64xi1>
    %53 = vector.broadcast %cst_20 : f32 to vector<2x64xf32>
    %54 = arith.select %52, %45, %53 : vector<2x64xi1>, vector<2x64xf32>
    %c0_21 = arith.constant 0 : index
    %c0_22 = arith.constant 0 : index
    %c0_23 = arith.constant 0 : index
    %55 = vector.load %arg10[%c0_21, %c0_22, %c0_23] : memref<2x16x64xf32, #tpu.memory_space<vmem>>, vector<1x2x64xf32>
    %56 = vector.shape_cast %55 : vector<1x2x64xf32> to vector<2x64xf32>
    %57 = vector.shape_cast %54 : vector<2x64xf32> to vector<1x2x64xf32>
    tpu.vector_store %arg10[%c0_21, %c0_22, %c0_23], %57 {strides = array<i32>} : memref<2x16x64xf32, #tpu.memory_space<vmem>>, vector<1x2x64xf32>,
    %58 = arith.truncf %50 : vector<2x64xf32> to vector<2x64xbf16>
    %cst_24 = arith.constant dense<0.000000e+00> : vector<2x192xf32>
    %59 = tpu.matmul %58, %5, %cst_24 {dimension_numbers = #tpu.dot_dimension_numbers<[1], [0], [0], [1], [0, 0, 1, 1], [], []>} : vector<2x64xbf16>, vector<64x192xbf16>, vector<2x192xf32> -> vector<2x192xf32>
    %60 = vector.broadcast %7 : vector<1x192xf32> to vector<2x192xf32>
    %61 = arith.addf %59, %60 : vector<2x192xf32>
    %62 = vector.extract_strided_slice %13 {offsets = [2, 0], sizes = [2, 192], strides = [1, 1]} : vector<16x192xf32> to vector<2x192xf32>
    %63 = vector.extract_strided_slice %62 {offsets = [0, 0], sizes = [2, 64], strides = [1, 1]} : vector<2x192xf32> to vector<2x64xf32>
    %64 = vector.extract_strided_slice %61 {offsets = [0, 0], sizes = [2, 64], strides = [1, 1]} : vector<2x192xf32> to vector<2x64xf32>
    %65 = arith.addf %63, %64 : vector<2x64xf32>
    %66 = arith.negf %65 : vector<2x64xf32>
    %67 = math.exp %66 : vector<2x64xf32>
    %cst_25 = arith.constant 1.000000e+00 : f32
    %68 = vector.broadcast %cst_25 : f32 to vector<2x64xf32>
    %69 = arith.addf %68, %67 : vector<2x64xf32>
    %70 = arith.divf %68, %69 : vector<2x64xf32>
    %71 = vector.extract_strided_slice %62 {offsets = [0, 64], sizes = [2, 64], strides = [1, 1]} : vector<2x192xf32> to vector<2x64xf32>
    %72 = vector.extract_strided_slice %61 {offsets = [0, 64], sizes = [2, 64], strides = [1, 1]} : vector<2x192xf32> to vector<2x64xf32>
    %73 = arith.addf %71, %72 : vector<2x64xf32>
    %74 = arith.negf %73 : vector<2x64xf32>
    %75 = math.exp %74 : vector<2x64xf32>
    %cst_26 = arith.constant 1.000000e+00 : f32
    %76 = vector.broadcast %cst_26 : f32 to vector<2x64xf32>
    %77 = arith.addf %76, %75 : vector<2x64xf32>
    %78 = arith.divf %76, %77 : vector<2x64xf32>
    %79 = vector.extract_strided_slice %62 {offsets = [0, 128], sizes = [2, 64], strides = [1, 1]} : vector<2x192xf32> to vector<2x64xf32>
    %80 = vector.extract_strided_slice %61 {offsets = [0, 128], sizes = [2, 64], strides = [1, 1]} : vector<2x192xf32> to vector<2x64xf32>
    %81 = arith.mulf %70, %80 : vector<2x64xf32>
    %82 = arith.addf %79, %81 : vector<2x64xf32>
    %83 = math.tanh %82 : vector<2x64xf32>
    %cst_27 = arith.constant 1.000000e+00 : f32
    %84 = vector.broadcast %cst_27 : f32 to vector<2x64xf32>
    %85 = arith.subf %84, %78 : vector<2x64xf32>
    %86 = arith.mulf %85, %83 : vector<2x64xf32>
    %87 = arith.mulf %78, %50 : vector<2x64xf32>
    %88 = arith.addf %86, %87 : vector<2x64xf32>
    %c1_i32 = arith.constant 1 : i32
    %89 = vector.broadcast %c1_i32 : i32 to vector<2x1xi32>
    %90 = arith.cmpi sgt, %0, %89 : vector<2x1xi32>
    %91 = vector.shape_cast %90 : vector<2x1xi1> to vector<2x1xi1>
    %92 = vector.broadcast %91 : vector<2x1xi1> to vector<2x64xi1>
    %93 = arith.select %92, %88, %50 : vector<2x64xi1>, vector<2x64xf32>
    %cst_28 = arith.constant 0.000000e+00 : f32
    %94 = vector.shape_cast %90 : vector<2x1xi1> to vector<2x1xi1>
    %95 = vector.broadcast %94 : vector<2x1xi1> to vector<2x64xi1>
    %96 = vector.broadcast %cst_28 : f32 to vector<2x64xf32>
    %97 = arith.select %95, %88, %96 : vector<2x64xi1>, vector<2x64xf32>
    %c0_29 = arith.constant 0 : index
    %c2 = arith.constant 2 : index
    %c0_30 = arith.constant 0 : index
    %98 = vector.load %arg10[%c0_29, %c2, %c0_30] : memref<2x16x64xf32, #tpu.memory_space<vmem>>, vector<1x2x64xf32>
    %99 = vector.shape_cast %98 : vector<1x2x64xf32> to vector<2x64xf32>
    %100 = vector.shape_cast %97 : vector<2x64xf32> to vector<1x2x64xf32>
    tpu.vector_store %arg10[%c0_29, %c2, %c0_30], %100 {strides = array<i32>} : memref<2x16x64xf32, #tpu.memory_space<vmem>>, vector<1x2x64xf32>,
    %101 = arith.truncf %93 : vector<2x64xf32> to vector<2x64xbf16>
    %cst_31 = arith.constant dense<0.000000e+00> : vector<2x192xf32>
    %102 = tpu.matmul %101, %5, %cst_31 {dimension_numbers = #tpu.dot_dimension_numbers<[1], [0], [0], [1], [0, 0, 1, 1], [], []>} : vector<2x64xbf16>, vector<64x192xbf16>, vector<2x192xf32> -> vector<2x192xf32>
    %103 = vector.broadcast %7 : vector<1x192xf32> to vector<2x192xf32>
    %104 = arith.addf %102, %103 : vector<2x192xf32>
    %105 = vector.extract_strided_slice %13 {offsets = [4, 0], sizes = [2, 192], strides = [1, 1]} : vector<16x192xf32> to vector<2x192xf32>
    %106 = vector.extract_strided_slice %105 {offsets = [0, 0], sizes = [2, 64], strides = [1, 1]} : vector<2x192xf32> to vector<2x64xf32>
    %107 = vector.extract_strided_slice %104 {offsets = [0, 0], sizes = [2, 64], strides = [1, 1]} : vector<2x192xf32> to vector<2x64xf32>
    %108 = arith.addf %106, %107 : vector<2x64xf32>
    %109 = arith.negf %108 : vector<2x64xf32>
    %110 = math.exp %109 : vector<2x64xf32>
    %cst_32 = arith.constant 1.000000e+00 : f32
    %111 = vector.broadcast %cst_32 : f32 to vector<2x64xf32>
    %112 = arith.addf %111, %110 : vector<2x64xf32>
    %113 = arith.divf %111, %112 : vector<2x64xf32>
    %114 = vector.extract_strided_slice %105 {offsets = [0, 64], sizes = [2, 64], strides = [1, 1]} : vector<2x192xf32> to vector<2x64xf32>
    %115 = vector.extract_strided_slice %104 {offsets = [0, 64], sizes = [2, 64], strides = [1, 1]} : vector<2x192xf32> to vector<2x64xf32>
    %116 = arith.addf %114, %115 : vector<2x64xf32>
    %117 = arith.negf %116 : vector<2x64xf32>
    %118 = math.exp %117 : vector<2x64xf32>
    %cst_33 = arith.constant 1.000000e+00 : f32
    %119 = vector.broadcast %cst_33 : f32 to vector<2x64xf32>
    %120 = arith.addf %119, %118 : vector<2x64xf32>
    %121 = arith.divf %119, %120 : vector<2x64xf32>
    %122 = vector.extract_strided_slice %105 {offsets = [0, 128], sizes = [2, 64], strides = [1, 1]} : vector<2x192xf32> to vector<2x64xf32>
    %123 = vector.extract_strided_slice %104 {offsets = [0, 128], sizes = [2, 64], strides = [1, 1]} : vector<2x192xf32> to vector<2x64xf32>
    %124 = arith.mulf %113, %123 : vector<2x64xf32>
    %125 = arith.addf %122, %124 : vector<2x64xf32>
    %126 = math.tanh %125 : vector<2x64xf32>
    %cst_34 = arith.constant 1.000000e+00 : f32
    %127 = vector.broadcast %cst_34 : f32 to vector<2x64xf32>
    %128 = arith.subf %127, %121 : vector<2x64xf32>
    %129 = arith.mulf %128, %126 : vector<2x64xf32>
    %130 = arith.mulf %121, %93 : vector<2x64xf32>
    %131 = arith.addf %129, %130 : vector<2x64xf32>
    %c2_i32 = arith.constant 2 : i32
    %132 = vector.broadcast %c2_i32 : i32 to vector<2x1xi32>
    %133 = arith.cmpi sgt, %0, %132 : vector<2x1xi32>
    %134 = vector.shape_cast %133 : vector<2x1xi1> to vector<2x1xi1>
    %135 = vector.broadcast %134 : vector<2x1xi1> to vector<2x64xi1>
    %136 = arith.select %135, %131, %93 : vector<2x64xi1>, vector<2x64xf32>
    %cst_35 = arith.constant 0.000000e+00 : f32
    %137 = vector.shape_cast %133 : vector<2x1xi1> to vector<2x1xi1>
    %138 = vector.broadcast %137 : vector<2x1xi1> to vector<2x64xi1>
    %139 = vector.broadcast %cst_35 : f32 to vector<2x64xf32>
    %140 = arith.select %138, %131, %139 : vector<2x64xi1>, vector<2x64xf32>
    %c0_36 = arith.constant 0 : index
    %c4 = arith.constant 4 : index
    %c0_37 = arith.constant 0 : index
    %141 = vector.load %arg10[%c0_36, %c4, %c0_37] : memref<2x16x64xf32, #tpu.memory_space<vmem>>, vector<1x2x64xf32>
    %142 = vector.shape_cast %141 : vector<1x2x64xf32> to vector<2x64xf32>
    %143 = vector.shape_cast %140 : vector<2x64xf32> to vector<1x2x64xf32>
    tpu.vector_store %arg10[%c0_36, %c4, %c0_37], %143 {strides = array<i32>} : memref<2x16x64xf32, #tpu.memory_space<vmem>>, vector<1x2x64xf32>,
    %144 = arith.truncf %136 : vector<2x64xf32> to vector<2x64xbf16>
    %cst_38 = arith.constant dense<0.000000e+00> : vector<2x192xf32>
    %145 = tpu.matmul %144, %5, %cst_38 {dimension_numbers = #tpu.dot_dimension_numbers<[1], [0], [0], [1], [0, 0, 1, 1], [], []>} : vector<2x64xbf16>, vector<64x192xbf16>, vector<2x192xf32> -> vector<2x192xf32>
    %146 = vector.broadcast %7 : vector<1x192xf32> to vector<2x192xf32>
    %147 = arith.addf %145, %146 : vector<2x192xf32>
    %148 = vector.extract_strided_slice %13 {offsets = [6, 0], sizes = [2, 192], strides = [1, 1]} : vector<16x192xf32> to vector<2x192xf32>
    %149 = vector.extract_strided_slice %148 {offsets = [0, 0], sizes = [2, 64], strides = [1, 1]} : vector<2x192xf32> to vector<2x64xf32>
    %150 = vector.extract_strided_slice %147 {offsets = [0, 0], sizes = [2, 64], strides = [1, 1]} : vector<2x192xf32> to vector<2x64xf32>
    %151 = arith.addf %149, %150 : vector<2x64xf32>
    %152 = arith.negf %151 : vector<2x64xf32>
    %153 = math.exp %152 : vector<2x64xf32>
    %cst_39 = arith.constant 1.000000e+00 : f32
    %154 = vector.broadcast %cst_39 : f32 to vector<2x64xf32>
    %155 = arith.addf %154, %153 : vector<2x64xf32>
    %156 = arith.divf %154, %155 : vector<2x64xf32>
    %157 = vector.extract_strided_slice %148 {offsets = [0, 64], sizes = [2, 64], strides = [1, 1]} : vector<2x192xf32> to vector<2x64xf32>
    %158 = vector.extract_strided_slice %147 {offsets = [0, 64], sizes = [2, 64], strides = [1, 1]} : vector<2x192xf32> to vector<2x64xf32>
    %159 = arith.addf %157, %158 : vector<2x64xf32>
    %160 = arith.negf %159 : vector<2x64xf32>
    %161 = math.exp %160 : vector<2x64xf32>
    %cst_40 = arith.constant 1.000000e+00 : f32
    %162 = vector.broadcast %cst_40 : f32 to vector<2x64xf32>
    %163 = arith.addf %162, %161 : vector<2x64xf32>
    %164 = arith.divf %162, %163 : vector<2x64xf32>
    %165 = vector.extract_strided_slice %148 {offsets = [0, 128], sizes = [2, 64], strides = [1, 1]} : vector<2x192xf32> to vector<2x64xf32>
    %166 = vector.extract_strided_slice %147 {offsets = [0, 128], sizes = [2, 64], strides = [1, 1]} : vector<2x192xf32> to vector<2x64xf32>
    %167 = arith.mulf %156, %166 : vector<2x64xf32>
    %168 = arith.addf %165, %167 : vector<2x64xf32>
    %169 = math.tanh %168 : vector<2x64xf32>
    %cst_41 = arith.constant 1.000000e+00 : f32
    %170 = vector.broadcast %cst_41 : f32 to vector<2x64xf32>
    %171 = arith.subf %170, %164 : vector<2x64xf32>
    %172 = arith.mulf %171, %169 : vector<2x64xf32>
    %173 = arith.mulf %164, %136 : vector<2x64xf32>
    %174 = arith.addf %172, %173 : vector<2x64xf32>
    %c3_i32 = arith.constant 3 : i32
    %175 = vector.broadcast %c3_i32 : i32 to vector<2x1xi32>
    %176 = arith.cmpi sgt, %0, %175 : vector<2x1xi32>
    %177 = vector.shape_cast %176 : vector<2x1xi1> to vector<2x1xi1>
    %178 = vector.broadcast %177 : vector<2x1xi1> to vector<2x64xi1>
    %179 = arith.select %178, %174, %136 : vector<2x64xi1>, vector<2x64xf32>
    %cst_42 = arith.constant 0.000000e+00 : f32
    %180 = vector.shape_cast %176 : vector<2x1xi1> to vector<2x1xi1>
    %181 = vector.broadcast %180 : vector<2x1xi1> to vector<2x64xi1>
    %182 = vector.broadcast %cst_42 : f32 to vector<2x64xf32>
    %183 = arith.select %181, %174, %182 : vector<2x64xi1>, vector<2x64xf32>
    %c0_43 = arith.constant 0 : index
    %c6 = arith.constant 6 : index
    %c0_44 = arith.constant 0 : index
    %184 = vector.load %arg10[%c0_43, %c6, %c0_44] : memref<2x16x64xf32, #tpu.memory_space<vmem>>, vector<1x2x64xf32>
    %185 = vector.shape_cast %184 : vector<1x2x64xf32> to vector<2x64xf32>
    %186 = vector.shape_cast %183 : vector<2x64xf32> to vector<1x2x64xf32>
    tpu.vector_store %arg10[%c0_43, %c6, %c0_44], %186 {strides = array<i32>} : memref<2x16x64xf32, #tpu.memory_space<vmem>>, vector<1x2x64xf32>,
    %187 = arith.truncf %179 : vector<2x64xf32> to vector<2x64xbf16>
    %cst_45 = arith.constant dense<0.000000e+00> : vector<2x192xf32>
    %188 = tpu.matmul %187, %5, %cst_45 {dimension_numbers = #tpu.dot_dimension_numbers<[1], [0], [0], [1], [0, 0, 1, 1], [], []>} : vector<2x64xbf16>, vector<64x192xbf16>, vector<2x192xf32> -> vector<2x192xf32>
    %189 = vector.broadcast %7 : vector<1x192xf32> to vector<2x192xf32>
    %190 = arith.addf %188, %189 : vector<2x192xf32>
    %191 = vector.extract_strided_slice %13 {offsets = [8, 0], sizes = [2, 192], strides = [1, 1]} : vector<16x192xf32> to vector<2x192xf32>
    %192 = vector.extract_strided_slice %191 {offsets = [0, 0], sizes = [2, 64], strides = [1, 1]} : vector<2x192xf32> to vector<2x64xf32>
    %193 = vector.extract_strided_slice %190 {offsets = [0, 0], sizes = [2, 64], strides = [1, 1]} : vector<2x192xf32> to vector<2x64xf32>
    %194 = arith.addf %192, %193 : vector<2x64xf32>
    %195 = arith.negf %194 : vector<2x64xf32>
    %196 = math.exp %195 : vector<2x64xf32>
    %cst_46 = arith.constant 1.000000e+00 : f32
    %197 = vector.broadcast %cst_46 : f32 to vector<2x64xf32>
    %198 = arith.addf %197, %196 : vector<2x64xf32>
    %199 = arith.divf %197, %198 : vector<2x64xf32>
    %200 = vector.extract_strided_slice %191 {offsets = [0, 64], sizes = [2, 64], strides = [1, 1]} : vector<2x192xf32> to vector<2x64xf32>
    %201 = vector.extract_strided_slice %190 {offsets = [0, 64], sizes = [2, 64], strides = [1, 1]} : vector<2x192xf32> to vector<2x64xf32>
    %202 = arith.addf %200, %201 : vector<2x64xf32>
    %203 = arith.negf %202 : vector<2x64xf32>
    %204 = math.exp %203 : vector<2x64xf32>
    %cst_47 = arith.constant 1.000000e+00 : f32
    %205 = vector.broadcast %cst_47 : f32 to vector<2x64xf32>
    %206 = arith.addf %205, %204 : vector<2x64xf32>
    %207 = arith.divf %205, %206 : vector<2x64xf32>
    %208 = vector.extract_strided_slice %191 {offsets = [0, 128], sizes = [2, 64], strides = [1, 1]} : vector<2x192xf32> to vector<2x64xf32>
    %209 = vector.extract_strided_slice %190 {offsets = [0, 128], sizes = [2, 64], strides = [1, 1]} : vector<2x192xf32> to vector<2x64xf32>
    %210 = arith.mulf %199, %209 : vector<2x64xf32>
    %211 = arith.addf %208, %210 : vector<2x64xf32>
    %212 = math.tanh %211 : vector<2x64xf32>
    %cst_48 = arith.constant 1.000000e+00 : f32
    %213 = vector.broadcast %cst_48 : f32 to vector<2x64xf32>
    %214 = arith.subf %213, %207 : vector<2x64xf32>
    %215 = arith.mulf %214, %212 : vector<2x64xf32>
    %216 = arith.mulf %207, %179 : vector<2x64xf32>
    %217 = arith.addf %215, %216 : vector<2x64xf32>
    %c4_i32 = arith.constant 4 : i32
    %218 = vector.broadcast %c4_i32 : i32 to vector<2x1xi32>
    %219 = arith.cmpi sgt, %0, %218 : vector<2x1xi32>
    %220 = vector.shape_cast %219 : vector<2x1xi1> to vector<2x1xi1>
    %221 = vector.broadcast %220 : vector<2x1xi1> to vector<2x64xi1>
    %222 = arith.select %221, %217, %179 : vector<2x64xi1>, vector<2x64xf32>
    %cst_49 = arith.constant 0.000000e+00 : f32
    %223 = vector.shape_cast %219 : vector<2x1xi1> to vector<2x1xi1>
    %224 = vector.broadcast %223 : vector<2x1xi1> to vector<2x64xi1>
    %225 = vector.broadcast %cst_49 : f32 to vector<2x64xf32>
    %226 = arith.select %224, %217, %225 : vector<2x64xi1>, vector<2x64xf32>
    %c0_50 = arith.constant 0 : index
    %c8 = arith.constant 8 : index
    %c0_51 = arith.constant 0 : index
    %227 = vector.load %arg10[%c0_50, %c8, %c0_51] : memref<2x16x64xf32, #tpu.memory_space<vmem>>, vector<1x2x64xf32>
    %228 = vector.shape_cast %227 : vector<1x2x64xf32> to vector<2x64xf32>
    %229 = vector.shape_cast %226 : vector<2x64xf32> to vector<1x2x64xf32>
    tpu.vector_store %arg10[%c0_50, %c8, %c0_51], %229 {strides = array<i32>} : memref<2x16x64xf32, #tpu.memory_space<vmem>>, vector<1x2x64xf32>,
    %230 = arith.truncf %222 : vector<2x64xf32> to vector<2x64xbf16>
    %cst_52 = arith.constant dense<0.000000e+00> : vector<2x192xf32>
    %231 = tpu.matmul %230, %5, %cst_52 {dimension_numbers = #tpu.dot_dimension_numbers<[1], [0], [0], [1], [0, 0, 1, 1], [], []>} : vector<2x64xbf16>, vector<64x192xbf16>, vector<2x192xf32> -> vector<2x192xf32>
    %232 = vector.broadcast %7 : vector<1x192xf32> to vector<2x192xf32>
    %233 = arith.addf %231, %232 : vector<2x192xf32>
    %234 = vector.extract_strided_slice %13 {offsets = [10, 0], sizes = [2, 192], strides = [1, 1]} : vector<16x192xf32> to vector<2x192xf32>
    %235 = vector.extract_strided_slice %234 {offsets = [0, 0], sizes = [2, 64], strides = [1, 1]} : vector<2x192xf32> to vector<2x64xf32>
    %236 = vector.extract_strided_slice %233 {offsets = [0, 0], sizes = [2, 64], strides = [1, 1]} : vector<2x192xf32> to vector<2x64xf32>
    %237 = arith.addf %235, %236 : vector<2x64xf32>
    %238 = arith.negf %237 : vector<2x64xf32>
    %239 = math.exp %238 : vector<2x64xf32>
    %cst_53 = arith.constant 1.000000e+00 : f32
    %240 = vector.broadcast %cst_53 : f32 to vector<2x64xf32>
    %241 = arith.addf %240, %239 : vector<2x64xf32>
    %242 = arith.divf %240, %241 : vector<2x64xf32>
    %243 = vector.extract_strided_slice %234 {offsets = [0, 64], sizes = [2, 64], strides = [1, 1]} : vector<2x192xf32> to vector<2x64xf32>
    %244 = vector.extract_strided_slice %233 {offsets = [0, 64], sizes = [2, 64], strides = [1, 1]} : vector<2x192xf32> to vector<2x64xf32>
    %245 = arith.addf %243, %244 : vector<2x64xf32>
    %246 = arith.negf %245 : vector<2x64xf32>
    %247 = math.exp %246 : vector<2x64xf32>
    %cst_54 = arith.constant 1.000000e+00 : f32
    %248 = vector.broadcast %cst_54 : f32 to vector<2x64xf32>
    %249 = arith.addf %248, %247 : vector<2x64xf32>
    %250 = arith.divf %248, %249 : vector<2x64xf32>
    %251 = vector.extract_strided_slice %234 {offsets = [0, 128], sizes = [2, 64], strides = [1, 1]} : vector<2x192xf32> to vector<2x64xf32>
    %252 = vector.extract_strided_slice %233 {offsets = [0, 128], sizes = [2, 64], strides = [1, 1]} : vector<2x192xf32> to vector<2x64xf32>
    %253 = arith.mulf %242, %252 : vector<2x64xf32>
    %254 = arith.addf %251, %253 : vector<2x64xf32>
    %255 = math.tanh %254 : vector<2x64xf32>
    %cst_55 = arith.constant 1.000000e+00 : f32
    %256 = vector.broadcast %cst_55 : f32 to vector<2x64xf32>
    %257 = arith.subf %256, %250 : vector<2x64xf32>
    %258 = arith.mulf %257, %255 : vector<2x64xf32>
    %259 = arith.mulf %250, %222 : vector<2x64xf32>
    %260 = arith.addf %258, %259 : vector<2x64xf32>
    %c5_i32 = arith.constant 5 : i32
    %261 = vector.broadcast %c5_i32 : i32 to vector<2x1xi32>
    %262 = arith.cmpi sgt, %0, %261 : vector<2x1xi32>
    %263 = vector.shape_cast %262 : vector<2x1xi1> to vector<2x1xi1>
    %264 = vector.broadcast %263 : vector<2x1xi1> to vector<2x64xi1>
    %265 = arith.select %264, %260, %222 : vector<2x64xi1>, vector<2x64xf32>
    %cst_56 = arith.constant 0.000000e+00 : f32
    %266 = vector.shape_cast %262 : vector<2x1xi1> to vector<2x1xi1>
    %267 = vector.broadcast %266 : vector<2x1xi1> to vector<2x64xi1>
    %268 = vector.broadcast %cst_56 : f32 to vector<2x64xf32>
    %269 = arith.select %267, %260, %268 : vector<2x64xi1>, vector<2x64xf32>
    %c0_57 = arith.constant 0 : index
    %c10 = arith.constant 10 : index
    %c0_58 = arith.constant 0 : index
    %270 = vector.load %arg10[%c0_57, %c10, %c0_58] : memref<2x16x64xf32, #tpu.memory_space<vmem>>, vector<1x2x64xf32>
    %271 = vector.shape_cast %270 : vector<1x2x64xf32> to vector<2x64xf32>
    %272 = vector.shape_cast %269 : vector<2x64xf32> to vector<1x2x64xf32>
    tpu.vector_store %arg10[%c0_57, %c10, %c0_58], %272 {strides = array<i32>} : memref<2x16x64xf32, #tpu.memory_space<vmem>>, vector<1x2x64xf32>,
    %273 = arith.truncf %265 : vector<2x64xf32> to vector<2x64xbf16>
    %cst_59 = arith.constant dense<0.000000e+00> : vector<2x192xf32>
    %274 = tpu.matmul %273, %5, %cst_59 {dimension_numbers = #tpu.dot_dimension_numbers<[1], [0], [0], [1], [0, 0, 1, 1], [], []>} : vector<2x64xbf16>, vector<64x192xbf16>, vector<2x192xf32> -> vector<2x192xf32>
    %275 = vector.broadcast %7 : vector<1x192xf32> to vector<2x192xf32>
    %276 = arith.addf %274, %275 : vector<2x192xf32>
    %277 = vector.extract_strided_slice %13 {offsets = [12, 0], sizes = [2, 192], strides = [1, 1]} : vector<16x192xf32> to vector<2x192xf32>
    %278 = vector.extract_strided_slice %277 {offsets = [0, 0], sizes = [2, 64], strides = [1, 1]} : vector<2x192xf32> to vector<2x64xf32>
    %279 = vector.extract_strided_slice %276 {offsets = [0, 0], sizes = [2, 64], strides = [1, 1]} : vector<2x192xf32> to vector<2x64xf32>
    %280 = arith.addf %278, %279 : vector<2x64xf32>
    %281 = arith.negf %280 : vector<2x64xf32>
    %282 = math.exp %281 : vector<2x64xf32>
    %cst_60 = arith.constant 1.000000e+00 : f32
    %283 = vector.broadcast %cst_60 : f32 to vector<2x64xf32>
    %284 = arith.addf %283, %282 : vector<2x64xf32>
    %285 = arith.divf %283, %284 : vector<2x64xf32>
    %286 = vector.extract_strided_slice %277 {offsets = [0, 64], sizes = [2, 64], strides = [1, 1]} : vector<2x192xf32> to vector<2x64xf32>
    %287 = vector.extract_strided_slice %276 {offsets = [0, 64], sizes = [2, 64], strides = [1, 1]} : vector<2x192xf32> to vector<2x64xf32>
    %288 = arith.addf %286, %287 : vector<2x64xf32>
    %289 = arith.negf %288 : vector<2x64xf32>
    %290 = math.exp %289 : vector<2x64xf32>
    %cst_61 = arith.constant 1.000000e+00 : f32
    %291 = vector.broadcast %cst_61 : f32 to vector<2x64xf32>
    %292 = arith.addf %291, %290 : vector<2x64xf32>
    %293 = arith.divf %291, %292 : vector<2x64xf32>
    %294 = vector.extract_strided_slice %277 {offsets = [0, 128], sizes = [2, 64], strides = [1, 1]} : vector<2x192xf32> to vector<2x64xf32>
    %295 = vector.extract_strided_slice %276 {offsets = [0, 128], sizes = [2, 64], strides = [1, 1]} : vector<2x192xf32> to vector<2x64xf32>
    %296 = arith.mulf %285, %295 : vector<2x64xf32>
    %297 = arith.addf %294, %296 : vector<2x64xf32>
    %298 = math.tanh %297 : vector<2x64xf32>
    %cst_62 = arith.constant 1.000000e+00 : f32
    %299 = vector.broadcast %cst_62 : f32 to vector<2x64xf32>
    %300 = arith.subf %299, %293 : vector<2x64xf32>
    %301 = arith.mulf %300, %298 : vector<2x64xf32>
    %302 = arith.mulf %293, %265 : vector<2x64xf32>
    %303 = arith.addf %301, %302 : vector<2x64xf32>
    %c6_i32 = arith.constant 6 : i32
    %304 = vector.broadcast %c6_i32 : i32 to vector<2x1xi32>
    %305 = arith.cmpi sgt, %0, %304 : vector<2x1xi32>
    %306 = vector.shape_cast %305 : vector<2x1xi1> to vector<2x1xi1>
    %307 = vector.broadcast %306 : vector<2x1xi1> to vector<2x64xi1>
    %308 = arith.select %307, %303, %265 : vector<2x64xi1>, vector<2x64xf32>
    %cst_63 = arith.constant 0.000000e+00 : f32
    %309 = vector.shape_cast %305 : vector<2x1xi1> to vector<2x1xi1>
    %310 = vector.broadcast %309 : vector<2x1xi1> to vector<2x64xi1>
    %311 = vector.broadcast %cst_63 : f32 to vector<2x64xf32>
    %312 = arith.select %310, %303, %311 : vector<2x64xi1>, vector<2x64xf32>
    %c0_64 = arith.constant 0 : index
    %c12 = arith.constant 12 : index
    %c0_65 = arith.constant 0 : index
    %313 = vector.load %arg10[%c0_64, %c12, %c0_65] : memref<2x16x64xf32, #tpu.memory_space<vmem>>, vector<1x2x64xf32>
    %314 = vector.shape_cast %313 : vector<1x2x64xf32> to vector<2x64xf32>
    %315 = vector.shape_cast %312 : vector<2x64xf32> to vector<1x2x64xf32>
    tpu.vector_store %arg10[%c0_64, %c12, %c0_65], %315 {strides = array<i32>} : memref<2x16x64xf32, #tpu.memory_space<vmem>>, vector<1x2x64xf32>,
    %316 = arith.truncf %308 : vector<2x64xf32> to vector<2x64xbf16>
    %cst_66 = arith.constant dense<0.000000e+00> : vector<2x192xf32>
    %317 = tpu.matmul %316, %5, %cst_66 {dimension_numbers = #tpu.dot_dimension_numbers<[1], [0], [0], [1], [0, 0, 1, 1], [], []>} : vector<2x64xbf16>, vector<64x192xbf16>, vector<2x192xf32> -> vector<2x192xf32>
    %318 = vector.broadcast %7 : vector<1x192xf32> to vector<2x192xf32>
    %319 = arith.addf %317, %318 : vector<2x192xf32>
    %320 = vector.extract_strided_slice %13 {offsets = [14, 0], sizes = [2, 192], strides = [1, 1]} : vector<16x192xf32> to vector<2x192xf32>
    %321 = vector.extract_strided_slice %320 {offsets = [0, 0], sizes = [2, 64], strides = [1, 1]} : vector<2x192xf32> to vector<2x64xf32>
    %322 = vector.extract_strided_slice %319 {offsets = [0, 0], sizes = [2, 64], strides = [1, 1]} : vector<2x192xf32> to vector<2x64xf32>
    %323 = arith.addf %321, %322 : vector<2x64xf32>
    %324 = arith.negf %323 : vector<2x64xf32>
    %325 = math.exp %324 : vector<2x64xf32>
    %cst_67 = arith.constant 1.000000e+00 : f32
    %326 = vector.broadcast %cst_67 : f32 to vector<2x64xf32>
    %327 = arith.addf %326, %325 : vector<2x64xf32>
    %328 = arith.divf %326, %327 : vector<2x64xf32>
    %329 = vector.extract_strided_slice %320 {offsets = [0, 64], sizes = [2, 64], strides = [1, 1]} : vector<2x192xf32> to vector<2x64xf32>
    %330 = vector.extract_strided_slice %319 {offsets = [0, 64], sizes = [2, 64], strides = [1, 1]} : vector<2x192xf32> to vector<2x64xf32>
    %331 = arith.addf %329, %330 : vector<2x64xf32>
    %332 = arith.negf %331 : vector<2x64xf32>
    %333 = math.exp %332 : vector<2x64xf32>
    %cst_68 = arith.constant 1.000000e+00 : f32
    %334 = vector.broadcast %cst_68 : f32 to vector<2x64xf32>
    %335 = arith.addf %334, %333 : vector<2x64xf32>
    %336 = arith.divf %334, %335 : vector<2x64xf32>
    %337 = vector.extract_strided_slice %320 {offsets = [0, 128], sizes = [2, 64], strides = [1, 1]} : vector<2x192xf32> to vector<2x64xf32>
    %338 = vector.extract_strided_slice %319 {offsets = [0, 128], sizes = [2, 64], strides = [1, 1]} : vector<2x192xf32> to vector<2x64xf32>
    %339 = arith.mulf %328, %338 : vector<2x64xf32>
    %340 = arith.addf %337, %339 : vector<2x64xf32>
    %341 = math.tanh %340 : vector<2x64xf32>
    %cst_69 = arith.constant 1.000000e+00 : f32
    %342 = vector.broadcast %cst_69 : f32 to vector<2x64xf32>
    %343 = arith.subf %342, %336 : vector<2x64xf32>
    %344 = arith.mulf %343, %341 : vector<2x64xf32>
    %345 = arith.mulf %336, %308 : vector<2x64xf32>
    %346 = arith.addf %344, %345 : vector<2x64xf32>
    %c7_i32 = arith.constant 7 : i32
    %347 = vector.broadcast %c7_i32 : i32 to vector<2x1xi32>
    %348 = arith.cmpi sgt, %0, %347 : vector<2x1xi32>
    %cst_70 = arith.constant 0.000000e+00 : f32
    %349 = vector.shape_cast %348 : vector<2x1xi1> to vector<2x1xi1>
    %350 = vector.broadcast %349 : vector<2x1xi1> to vector<2x64xi1>
    %351 = vector.broadcast %cst_70 : f32 to vector<2x64xf32>
    %352 = arith.select %350, %346, %351 : vector<2x64xi1>, vector<2x64xf32>
    %c0_71 = arith.constant 0 : index
    %c14 = arith.constant 14 : index
    %c0_72 = arith.constant 0 : index
    %353 = vector.load %arg10[%c0_71, %c14, %c0_72] : memref<2x16x64xf32, #tpu.memory_space<vmem>>, vector<1x2x64xf32>
    %354 = vector.shape_cast %353 : vector<1x2x64xf32> to vector<2x64xf32>
    %355 = vector.shape_cast %352 : vector<2x64xf32> to vector<1x2x64xf32>
    tpu.vector_store %arg10[%c0_71, %c14, %c0_72], %355 {strides = array<i32>} : memref<2x16x64xf32, #tpu.memory_space<vmem>>, vector<1x2x64xf32>,
    %c0_73 = arith.constant 0 : index
    %c0_74 = arith.constant 0 : index
    %c0_75 = arith.constant 0 : index
    %356 = vector.load %arg10[%c0_73, %c0_74, %c0_75] : memref<2x16x64xf32, #tpu.memory_space<vmem>>, vector<1x16x64xf32>
    %357 = vector.shape_cast %356 : vector<1x16x64xf32> to vector<16x64xf32>
    %c1 = arith.constant 1 : index
    %c0_76 = arith.constant 0 : index
    %c0_77 = arith.constant 0 : index
    %358 = vector.load %arg2[%c1, %c0_76, %c0_77] : memref<2x64x192xbf16, #tpu.memory_space<vmem>>, vector<1x64x192xbf16>
    %359 = vector.shape_cast %358 : vector<1x64x192xbf16> to vector<64x192xbf16>
    %c1_78 = arith.constant 1 : index
    %c0_79 = arith.constant 0 : index
    %c0_80 = arith.constant 0 : index
    %360 = vector.load %arg3[%c1_78, %c0_79, %c0_80] : memref<2x64x192xbf16, #tpu.memory_space<vmem>>, vector<1x64x192xbf16>
    %361 = vector.shape_cast %360 : vector<1x64x192xbf16> to vector<64x192xbf16>
    %c1_81 = arith.constant 1 : index
    %c0_82 = arith.constant 0 : index
    %c0_83 = arith.constant 0 : index
    %362 = vector.load %arg5[%c1_81, %c0_82, %c0_83] : memref<2x1x192xf32, #tpu.memory_space<vmem>>, vector<1x1x192xf32>
    %363 = vector.shape_cast %362 : vector<1x1x192xf32> to vector<1x192xf32>
    %364 = arith.truncf %357 : vector<16x64xf32> to vector<16x64xbf16>
    %cst_84 = arith.constant dense<0.000000e+00> : vector<16x192xf32>
    %365 = tpu.matmul %364, %359, %cst_84 {dimension_numbers = #tpu.dot_dimension_numbers<[1], [0], [0], [1], [0, 0, 1, 1], [], []>} : vector<16x64xbf16>, vector<64x192xbf16>, vector<16x192xf32> -> vector<16x192xf32>
    %c1_85 = arith.constant 1 : index
    %c0_86 = arith.constant 0 : index
    %c0_87 = arith.constant 0 : index
    %366 = vector.load %arg4[%c1_85, %c0_86, %c0_87] : memref<2x1x192xf32, #tpu.memory_space<vmem>>, vector<1x1x192xf32>
    %367 = vector.shape_cast %366 : vector<1x1x192xf32> to vector<1x192xf32>
    %368 = vector.broadcast %367 : vector<1x192xf32> to vector<16x192xf32>
    %369 = arith.addf %365, %368 : vector<16x192xf32>
    %cst_88 = arith.constant 0.000000e+00 : f32
    %370 = vector.broadcast %cst_88 : f32 to vector<2x64xf32>
    %371 = arith.truncf %370 : vector<2x64xf32> to vector<2x64xbf16>
    %cst_89 = arith.constant dense<0.000000e+00> : vector<2x192xf32>
    %372 = tpu.matmul %371, %361, %cst_89 {dimension_numbers = #tpu.dot_dimension_numbers<[1], [0], [0], [1], [0, 0, 1, 1], [], []>} : vector<2x64xbf16>, vector<64x192xbf16>, vector<2x192xf32> -> vector<2x192xf32>
    %373 = vector.broadcast %363 : vector<1x192xf32> to vector<2x192xf32>
    %374 = arith.addf %372, %373 : vector<2x192xf32>
    %375 = vector.extract_strided_slice %369 {offsets = [0, 0], sizes = [2, 192], strides = [1, 1]} : vector<16x192xf32> to vector<2x192xf32>
    %376 = vector.extract_strided_slice %375 {offsets = [0, 0], sizes = [2, 64], strides = [1, 1]} : vector<2x192xf32> to vector<2x64xf32>
    %377 = vector.extract_strided_slice %374 {offsets = [0, 0], sizes = [2, 64], strides = [1, 1]} : vector<2x192xf32> to vector<2x64xf32>
    %378 = arith.addf %376, %377 : vector<2x64xf32>
    %379 = arith.negf %378 : vector<2x64xf32>
    %380 = math.exp %379 : vector<2x64xf32>
    %cst_90 = arith.constant 1.000000e+00 : f32
    %381 = vector.broadcast %cst_90 : f32 to vector<2x64xf32>
    %382 = arith.addf %381, %380 : vector<2x64xf32>
    %383 = arith.divf %381, %382 : vector<2x64xf32>
    %384 = vector.extract_strided_slice %375 {offsets = [0, 64], sizes = [2, 64], strides = [1, 1]} : vector<2x192xf32> to vector<2x64xf32>
    %385 = vector.extract_strided_slice %374 {offsets = [0, 64], sizes = [2, 64], strides = [1, 1]} : vector<2x192xf32> to vector<2x64xf32>
    %386 = arith.addf %384, %385 : vector<2x64xf32>
    %387 = arith.negf %386 : vector<2x64xf32>
    %388 = math.exp %387 : vector<2x64xf32>
    %cst_91 = arith.constant 1.000000e+00 : f32
    %389 = vector.broadcast %cst_91 : f32 to vector<2x64xf32>
    %390 = arith.addf %389, %388 : vector<2x64xf32>
    %391 = arith.divf %389, %390 : vector<2x64xf32>
    %392 = vector.extract_strided_slice %375 {offsets = [0, 128], sizes = [2, 64], strides = [1, 1]} : vector<2x192xf32> to vector<2x64xf32>
    %393 = vector.extract_strided_slice %374 {offsets = [0, 128], sizes = [2, 64], strides = [1, 1]} : vector<2x192xf32> to vector<2x64xf32>
    %394 = arith.mulf %383, %393 : vector<2x64xf32>
    %395 = arith.addf %392, %394 : vector<2x64xf32>
    %396 = math.tanh %395 : vector<2x64xf32>
    %cst_92 = arith.constant 1.000000e+00 : f32
    %397 = vector.broadcast %cst_92 : f32 to vector<2x64xf32>
    %398 = arith.subf %397, %391 : vector<2x64xf32>
    %399 = arith.mulf %398, %396 : vector<2x64xf32>
    %400 = arith.mulf %391, %370 : vector<2x64xf32>
    %401 = arith.addf %399, %400 : vector<2x64xf32>
    %c0_i32_93 = arith.constant 0 : i32
    %402 = vector.broadcast %c0_i32_93 : i32 to vector<2x1xi32>
    %403 = arith.cmpi sgt, %0, %402 : vector<2x1xi32>
    %404 = vector.shape_cast %403 : vector<2x1xi1> to vector<2x1xi1>
    %405 = vector.broadcast %404 : vector<2x1xi1> to vector<2x64xi1>
    %406 = arith.select %405, %401, %370 : vector<2x64xi1>, vector<2x64xf32>
    %cst_94 = arith.constant 0.000000e+00 : f32
    %407 = vector.shape_cast %403 : vector<2x1xi1> to vector<2x1xi1>
    %408 = vector.broadcast %407 : vector<2x1xi1> to vector<2x64xi1>
    %409 = vector.broadcast %cst_94 : f32 to vector<2x64xf32>
    %410 = arith.select %408, %401, %409 : vector<2x64xi1>, vector<2x64xf32>
    %c1_95 = arith.constant 1 : index
    %c0_96 = arith.constant 0 : index
    %c0_97 = arith.constant 0 : index
    %411 = vector.load %arg10[%c1_95, %c0_96, %c0_97] : memref<2x16x64xf32, #tpu.memory_space<vmem>>, vector<1x2x64xf32>
    %412 = vector.shape_cast %411 : vector<1x2x64xf32> to vector<2x64xf32>
    %413 = vector.shape_cast %410 : vector<2x64xf32> to vector<1x2x64xf32>
    tpu.vector_store %arg10[%c1_95, %c0_96, %c0_97], %413 {strides = array<i32>} : memref<2x16x64xf32, #tpu.memory_space<vmem>>, vector<1x2x64xf32>,
    %414 = arith.truncf %406 : vector<2x64xf32> to vector<2x64xbf16>
    %cst_98 = arith.constant dense<0.000000e+00> : vector<2x192xf32>
    %415 = tpu.matmul %414, %361, %cst_98 {dimension_numbers = #tpu.dot_dimension_numbers<[1], [0], [0], [1], [0, 0, 1, 1], [], []>} : vector<2x64xbf16>, vector<64x192xbf16>, vector<2x192xf32> -> vector<2x192xf32>
    %416 = vector.broadcast %363 : vector<1x192xf32> to vector<2x192xf32>
    %417 = arith.addf %415, %416 : vector<2x192xf32>
    %418 = vector.extract_strided_slice %369 {offsets = [2, 0], sizes = [2, 192], strides = [1, 1]} : vector<16x192xf32> to vector<2x192xf32>
    %419 = vector.extract_strided_slice %418 {offsets = [0, 0], sizes = [2, 64], strides = [1, 1]} : vector<2x192xf32> to vector<2x64xf32>
    %420 = vector.extract_strided_slice %417 {offsets = [0, 0], sizes = [2, 64], strides = [1, 1]} : vector<2x192xf32> to vector<2x64xf32>
    %421 = arith.addf %419, %420 : vector<2x64xf32>
    %422 = arith.negf %421 : vector<2x64xf32>
    %423 = math.exp %422 : vector<2x64xf32>
    %cst_99 = arith.constant 1.000000e+00 : f32
    %424 = vector.broadcast %cst_99 : f32 to vector<2x64xf32>
    %425 = arith.addf %424, %423 : vector<2x64xf32>
    %426 = arith.divf %424, %425 : vector<2x64xf32>
    %427 = vector.extract_strided_slice %418 {offsets = [0, 64], sizes = [2, 64], strides = [1, 1]} : vector<2x192xf32> to vector<2x64xf32>
    %428 = vector.extract_strided_slice %417 {offsets = [0, 64], sizes = [2, 64], strides = [1, 1]} : vector<2x192xf32> to vector<2x64xf32>
    %429 = arith.addf %427, %428 : vector<2x64xf32>
    %430 = arith.negf %429 : vector<2x64xf32>
    %431 = math.exp %430 : vector<2x64xf32>
    %cst_100 = arith.constant 1.000000e+00 : f32
    %432 = vector.broadcast %cst_100 : f32 to vector<2x64xf32>
    %433 = arith.addf %432, %431 : vector<2x64xf32>
    %434 = arith.divf %432, %433 : vector<2x64xf32>
    %435 = vector.extract_strided_slice %418 {offsets = [0, 128], sizes = [2, 64], strides = [1, 1]} : vector<2x192xf32> to vector<2x64xf32>
    %436 = vector.extract_strided_slice %417 {offsets = [0, 128], sizes = [2, 64], strides = [1, 1]} : vector<2x192xf32> to vector<2x64xf32>
    %437 = arith.mulf %426, %436 : vector<2x64xf32>
    %438 = arith.addf %435, %437 : vector<2x64xf32>
    %439 = math.tanh %438 : vector<2x64xf32>
    %cst_101 = arith.constant 1.000000e+00 : f32
    %440 = vector.broadcast %cst_101 : f32 to vector<2x64xf32>
    %441 = arith.subf %440, %434 : vector<2x64xf32>
    %442 = arith.mulf %441, %439 : vector<2x64xf32>
    %443 = arith.mulf %434, %406 : vector<2x64xf32>
    %444 = arith.addf %442, %443 : vector<2x64xf32>
    %c1_i32_102 = arith.constant 1 : i32
    %445 = vector.broadcast %c1_i32_102 : i32 to vector<2x1xi32>
    %446 = arith.cmpi sgt, %0, %445 : vector<2x1xi32>
    %447 = vector.shape_cast %446 : vector<2x1xi1> to vector<2x1xi1>
    %448 = vector.broadcast %447 : vector<2x1xi1> to vector<2x64xi1>
    %449 = arith.select %448, %444, %406 : vector<2x64xi1>, vector<2x64xf32>
    %cst_103 = arith.constant 0.000000e+00 : f32
    %450 = vector.shape_cast %446 : vector<2x1xi1> to vector<2x1xi1>
    %451 = vector.broadcast %450 : vector<2x1xi1> to vector<2x64xi1>
    %452 = vector.broadcast %cst_103 : f32 to vector<2x64xf32>
    %453 = arith.select %451, %444, %452 : vector<2x64xi1>, vector<2x64xf32>
    %c1_104 = arith.constant 1 : index
    %c2_105 = arith.constant 2 : index
    %c0_106 = arith.constant 0 : index
    %454 = vector.load %arg10[%c1_104, %c2_105, %c0_106] : memref<2x16x64xf32, #tpu.memory_space<vmem>>, vector<1x2x64xf32>
    %455 = vector.shape_cast %454 : vector<1x2x64xf32> to vector<2x64xf32>
    %456 = vector.shape_cast %453 : vector<2x64xf32> to vector<1x2x64xf32>
    tpu.vector_store %arg10[%c1_104, %c2_105, %c0_106], %456 {strides = array<i32>} : memref<2x16x64xf32, #tpu.memory_space<vmem>>, vector<1x2x64xf32>,
    %457 = arith.truncf %449 : vector<2x64xf32> to vector<2x64xbf16>
    %cst_107 = arith.constant dense<0.000000e+00> : vector<2x192xf32>
    %458 = tpu.matmul %457, %361, %cst_107 {dimension_numbers = #tpu.dot_dimension_numbers<[1], [0], [0], [1], [0, 0, 1, 1], [], []>} : vector<2x64xbf16>, vector<64x192xbf16>, vector<2x192xf32> -> vector<2x192xf32>
    %459 = vector.broadcast %363 : vector<1x192xf32> to vector<2x192xf32>
    %460 = arith.addf %458, %459 : vector<2x192xf32>
    %461 = vector.extract_strided_slice %369 {offsets = [4, 0], sizes = [2, 192], strides = [1, 1]} : vector<16x192xf32> to vector<2x192xf32>
    %462 = vector.extract_strided_slice %461 {offsets = [0, 0], sizes = [2, 64], strides = [1, 1]} : vector<2x192xf32> to vector<2x64xf32>
    %463 = vector.extract_strided_slice %460 {offsets = [0, 0], sizes = [2, 64], strides = [1, 1]} : vector<2x192xf32> to vector<2x64xf32>
    %464 = arith.addf %462, %463 : vector<2x64xf32>
    %465 = arith.negf %464 : vector<2x64xf32>
    %466 = math.exp %465 : vector<2x64xf32>
    %cst_108 = arith.constant 1.000000e+00 : f32
    %467 = vector.broadcast %cst_108 : f32 to vector<2x64xf32>
    %468 = arith.addf %467, %466 : vector<2x64xf32>
    %469 = arith.divf %467, %468 : vector<2x64xf32>
    %470 = vector.extract_strided_slice %461 {offsets = [0, 64], sizes = [2, 64], strides = [1, 1]} : vector<2x192xf32> to vector<2x64xf32>
    %471 = vector.extract_strided_slice %460 {offsets = [0, 64], sizes = [2, 64], strides = [1, 1]} : vector<2x192xf32> to vector<2x64xf32>
    %472 = arith.addf %470, %471 : vector<2x64xf32>
    %473 = arith.negf %472 : vector<2x64xf32>
    %474 = math.exp %473 : vector<2x64xf32>
    %cst_109 = arith.constant 1.000000e+00 : f32
    %475 = vector.broadcast %cst_109 : f32 to vector<2x64xf32>
    %476 = arith.addf %475, %474 : vector<2x64xf32>
    %477 = arith.divf %475, %476 : vector<2x64xf32>
    %478 = vector.extract_strided_slice %461 {offsets = [0, 128], sizes = [2, 64], strides = [1, 1]} : vector<2x192xf32> to vector<2x64xf32>
    %479 = vector.extract_strided_slice %460 {offsets = [0, 128], sizes = [2, 64], strides = [1, 1]} : vector<2x192xf32> to vector<2x64xf32>
    %480 = arith.mulf %469, %479 : vector<2x64xf32>
    %481 = arith.addf %478, %480 : vector<2x64xf32>
    %482 = math.tanh %481 : vector<2x64xf32>
    %cst_110 = arith.constant 1.000000e+00 : f32
    %483 = vector.broadcast %cst_110 : f32 to vector<2x64xf32>
    %484 = arith.subf %483, %477 : vector<2x64xf32>
    %485 = arith.mulf %484, %482 : vector<2x64xf32>
    %486 = arith.mulf %477, %449 : vector<2x64xf32>
    %487 = arith.addf %485, %486 : vector<2x64xf32>
    %c2_i32_111 = arith.constant 2 : i32
    %488 = vector.broadcast %c2_i32_111 : i32 to vector<2x1xi32>
    %489 = arith.cmpi sgt, %0, %488 : vector<2x1xi32>
    %490 = vector.shape_cast %489 : vector<2x1xi1> to vector<2x1xi1>
    %491 = vector.broadcast %490 : vector<2x1xi1> to vector<2x64xi1>
    %492 = arith.select %491, %487, %449 : vector<2x64xi1>, vector<2x64xf32>
    %cst_112 = arith.constant 0.000000e+00 : f32
    %493 = vector.shape_cast %489 : vector<2x1xi1> to vector<2x1xi1>
    %494 = vector.broadcast %493 : vector<2x1xi1> to vector<2x64xi1>
    %495 = vector.broadcast %cst_112 : f32 to vector<2x64xf32>
    %496 = arith.select %494, %487, %495 : vector<2x64xi1>, vector<2x64xf32>
    %c1_113 = arith.constant 1 : index
    %c4_114 = arith.constant 4 : index
    %c0_115 = arith.constant 0 : index
    %497 = vector.load %arg10[%c1_113, %c4_114, %c0_115] : memref<2x16x64xf32, #tpu.memory_space<vmem>>, vector<1x2x64xf32>
    %498 = vector.shape_cast %497 : vector<1x2x64xf32> to vector<2x64xf32>
    %499 = vector.shape_cast %496 : vector<2x64xf32> to vector<1x2x64xf32>
    tpu.vector_store %arg10[%c1_113, %c4_114, %c0_115], %499 {strides = array<i32>} : memref<2x16x64xf32, #tpu.memory_space<vmem>>, vector<1x2x64xf32>,
    %500 = arith.truncf %492 : vector<2x64xf32> to vector<2x64xbf16>
    %cst_116 = arith.constant dense<0.000000e+00> : vector<2x192xf32>
    %501 = tpu.matmul %500, %361, %cst_116 {dimension_numbers = #tpu.dot_dimension_numbers<[1], [0], [0], [1], [0, 0, 1, 1], [], []>} : vector<2x64xbf16>, vector<64x192xbf16>, vector<2x192xf32> -> vector<2x192xf32>
    %502 = vector.broadcast %363 : vector<1x192xf32> to vector<2x192xf32>
    %503 = arith.addf %501, %502 : vector<2x192xf32>
    %504 = vector.extract_strided_slice %369 {offsets = [6, 0], sizes = [2, 192], strides = [1, 1]} : vector<16x192xf32> to vector<2x192xf32>
    %505 = vector.extract_strided_slice %504 {offsets = [0, 0], sizes = [2, 64], strides = [1, 1]} : vector<2x192xf32> to vector<2x64xf32>
    %506 = vector.extract_strided_slice %503 {offsets = [0, 0], sizes = [2, 64], strides = [1, 1]} : vector<2x192xf32> to vector<2x64xf32>
    %507 = arith.addf %505, %506 : vector<2x64xf32>
    %508 = arith.negf %507 : vector<2x64xf32>
    %509 = math.exp %508 : vector<2x64xf32>
    %cst_117 = arith.constant 1.000000e+00 : f32
    %510 = vector.broadcast %cst_117 : f32 to vector<2x64xf32>
    %511 = arith.addf %510, %509 : vector<2x64xf32>
    %512 = arith.divf %510, %511 : vector<2x64xf32>
    %513 = vector.extract_strided_slice %504 {offsets = [0, 64], sizes = [2, 64], strides = [1, 1]} : vector<2x192xf32> to vector<2x64xf32>
    %514 = vector.extract_strided_slice %503 {offsets = [0, 64], sizes = [2, 64], strides = [1, 1]} : vector<2x192xf32> to vector<2x64xf32>
    %515 = arith.addf %513, %514 : vector<2x64xf32>
    %516 = arith.negf %515 : vector<2x64xf32>
    %517 = math.exp %516 : vector<2x64xf32>
    %cst_118 = arith.constant 1.000000e+00 : f32
    %518 = vector.broadcast %cst_118 : f32 to vector<2x64xf32>
    %519 = arith.addf %518, %517 : vector<2x64xf32>
    %520 = arith.divf %518, %519 : vector<2x64xf32>
    %521 = vector.extract_strided_slice %504 {offsets = [0, 128], sizes = [2, 64], strides = [1, 1]} : vector<2x192xf32> to vector<2x64xf32>
    %522 = vector.extract_strided_slice %503 {offsets = [0, 128], sizes = [2, 64], strides = [1, 1]} : vector<2x192xf32> to vector<2x64xf32>
    %523 = arith.mulf %512, %522 : vector<2x64xf32>
    %524 = arith.addf %521, %523 : vector<2x64xf32>
    %525 = math.tanh %524 : vector<2x64xf32>
    %cst_119 = arith.constant 1.000000e+00 : f32
    %526 = vector.broadcast %cst_119 : f32 to vector<2x64xf32>
    %527 = arith.subf %526, %520 : vector<2x64xf32>
    %528 = arith.mulf %527, %525 : vector<2x64xf32>
    %529 = arith.mulf %520, %492 : vector<2x64xf32>
    %530 = arith.addf %528, %529 : vector<2x64xf32>
    %c3_i32_120 = arith.constant 3 : i32
    %531 = vector.broadcast %c3_i32_120 : i32 to vector<2x1xi32>
    %532 = arith.cmpi sgt, %0, %531 : vector<2x1xi32>
    %533 = vector.shape_cast %532 : vector<2x1xi1> to vector<2x1xi1>
    %534 = vector.broadcast %533 : vector<2x1xi1> to vector<2x64xi1>
    %535 = arith.select %534, %530, %492 : vector<2x64xi1>, vector<2x64xf32>
    %cst_121 = arith.constant 0.000000e+00 : f32
    %536 = vector.shape_cast %532 : vector<2x1xi1> to vector<2x1xi1>
    %537 = vector.broadcast %536 : vector<2x1xi1> to vector<2x64xi1>
    %538 = vector.broadcast %cst_121 : f32 to vector<2x64xf32>
    %539 = arith.select %537, %530, %538 : vector<2x64xi1>, vector<2x64xf32>
    %c1_122 = arith.constant 1 : index
    %c6_123 = arith.constant 6 : index
    %c0_124 = arith.constant 0 : index
    %540 = vector.load %arg10[%c1_122, %c6_123, %c0_124] : memref<2x16x64xf32, #tpu.memory_space<vmem>>, vector<1x2x64xf32>
    %541 = vector.shape_cast %540 : vector<1x2x64xf32> to vector<2x64xf32>
    %542 = vector.shape_cast %539 : vector<2x64xf32> to vector<1x2x64xf32>
    tpu.vector_store %arg10[%c1_122, %c6_123, %c0_124], %542 {strides = array<i32>} : memref<2x16x64xf32, #tpu.memory_space<vmem>>, vector<1x2x64xf32>,
    %543 = arith.truncf %535 : vector<2x64xf32> to vector<2x64xbf16>
    %cst_125 = arith.constant dense<0.000000e+00> : vector<2x192xf32>
    %544 = tpu.matmul %543, %361, %cst_125 {dimension_numbers = #tpu.dot_dimension_numbers<[1], [0], [0], [1], [0, 0, 1, 1], [], []>} : vector<2x64xbf16>, vector<64x192xbf16>, vector<2x192xf32> -> vector<2x192xf32>
    %545 = vector.broadcast %363 : vector<1x192xf32> to vector<2x192xf32>
    %546 = arith.addf %544, %545 : vector<2x192xf32>
    %547 = vector.extract_strided_slice %369 {offsets = [8, 0], sizes = [2, 192], strides = [1, 1]} : vector<16x192xf32> to vector<2x192xf32>
    %548 = vector.extract_strided_slice %547 {offsets = [0, 0], sizes = [2, 64], strides = [1, 1]} : vector<2x192xf32> to vector<2x64xf32>
    %549 = vector.extract_strided_slice %546 {offsets = [0, 0], sizes = [2, 64], strides = [1, 1]} : vector<2x192xf32> to vector<2x64xf32>
    %550 = arith.addf %548, %549 : vector<2x64xf32>
    %551 = arith.negf %550 : vector<2x64xf32>
    %552 = math.exp %551 : vector<2x64xf32>
    %cst_126 = arith.constant 1.000000e+00 : f32
    %553 = vector.broadcast %cst_126 : f32 to vector<2x64xf32>
    %554 = arith.addf %553, %552 : vector<2x64xf32>
    %555 = arith.divf %553, %554 : vector<2x64xf32>
    %556 = vector.extract_strided_slice %547 {offsets = [0, 64], sizes = [2, 64], strides = [1, 1]} : vector<2x192xf32> to vector<2x64xf32>
    %557 = vector.extract_strided_slice %546 {offsets = [0, 64], sizes = [2, 64], strides = [1, 1]} : vector<2x192xf32> to vector<2x64xf32>
    %558 = arith.addf %556, %557 : vector<2x64xf32>
    %559 = arith.negf %558 : vector<2x64xf32>
    %560 = math.exp %559 : vector<2x64xf32>
    %cst_127 = arith.constant 1.000000e+00 : f32
    %561 = vector.broadcast %cst_127 : f32 to vector<2x64xf32>
    %562 = arith.addf %561, %560 : vector<2x64xf32>
    %563 = arith.divf %561, %562 : vector<2x64xf32>
    %564 = vector.extract_strided_slice %547 {offsets = [0, 128], sizes = [2, 64], strides = [1, 1]} : vector<2x192xf32> to vector<2x64xf32>
    %565 = vector.extract_strided_slice %546 {offsets = [0, 128], sizes = [2, 64], strides = [1, 1]} : vector<2x192xf32> to vector<2x64xf32>
    %566 = arith.mulf %555, %565 : vector<2x64xf32>
    %567 = arith.addf %564, %566 : vector<2x64xf32>
    %568 = math.tanh %567 : vector<2x64xf32>
    %cst_128 = arith.constant 1.000000e+00 : f32
    %569 = vector.broadcast %cst_128 : f32 to vector<2x64xf32>
    %570 = arith.subf %569, %563 : vector<2x64xf32>
    %571 = arith.mulf %570, %568 : vector<2x64xf32>
    %572 = arith.mulf %563, %535 : vector<2x64xf32>
    %573 = arith.addf %571, %572 : vector<2x64xf32>
    %c4_i32_129 = arith.constant 4 : i32
    %574 = vector.broadcast %c4_i32_129 : i32 to vector<2x1xi32>
    %575 = arith.cmpi sgt, %0, %574 : vector<2x1xi32>
    %576 = vector.shape_cast %575 : vector<2x1xi1> to vector<2x1xi1>
    %577 = vector.broadcast %576 : vector<2x1xi1> to vector<2x64xi1>
    %578 = arith.select %577, %573, %535 : vector<2x64xi1>, vector<2x64xf32>
    %cst_130 = arith.constant 0.000000e+00 : f32
    %579 = vector.shape_cast %575 : vector<2x1xi1> to vector<2x1xi1>
    %580 = vector.broadcast %579 : vector<2x1xi1> to vector<2x64xi1>
    %581 = vector.broadcast %cst_130 : f32 to vector<2x64xf32>
    %582 = arith.select %580, %573, %581 : vector<2x64xi1>, vector<2x64xf32>
    %c1_131 = arith.constant 1 : index
    %c8_132 = arith.constant 8 : index
    %c0_133 = arith.constant 0 : index
    %583 = vector.load %arg10[%c1_131, %c8_132, %c0_133] : memref<2x16x64xf32, #tpu.memory_space<vmem>>, vector<1x2x64xf32>
    %584 = vector.shape_cast %583 : vector<1x2x64xf32> to vector<2x64xf32>
    %585 = vector.shape_cast %582 : vector<2x64xf32> to vector<1x2x64xf32>
    tpu.vector_store %arg10[%c1_131, %c8_132, %c0_133], %585 {strides = array<i32>} : memref<2x16x64xf32, #tpu.memory_space<vmem>>, vector<1x2x64xf32>,
    %586 = arith.truncf %578 : vector<2x64xf32> to vector<2x64xbf16>
    %cst_134 = arith.constant dense<0.000000e+00> : vector<2x192xf32>
    %587 = tpu.matmul %586, %361, %cst_134 {dimension_numbers = #tpu.dot_dimension_numbers<[1], [0], [0], [1], [0, 0, 1, 1], [], []>} : vector<2x64xbf16>, vector<64x192xbf16>, vector<2x192xf32> -> vector<2x192xf32>
    %588 = vector.broadcast %363 : vector<1x192xf32> to vector<2x192xf32>
    %589 = arith.addf %587, %588 : vector<2x192xf32>
    %590 = vector.extract_strided_slice %369 {offsets = [10, 0], sizes = [2, 192], strides = [1, 1]} : vector<16x192xf32> to vector<2x192xf32>
    %591 = vector.extract_strided_slice %590 {offsets = [0, 0], sizes = [2, 64], strides = [1, 1]} : vector<2x192xf32> to vector<2x64xf32>
    %592 = vector.extract_strided_slice %589 {offsets = [0, 0], sizes = [2, 64], strides = [1, 1]} : vector<2x192xf32> to vector<2x64xf32>
    %593 = arith.addf %591, %592 : vector<2x64xf32>
    %594 = arith.negf %593 : vector<2x64xf32>
    %595 = math.exp %594 : vector<2x64xf32>
    %cst_135 = arith.constant 1.000000e+00 : f32
    %596 = vector.broadcast %cst_135 : f32 to vector<2x64xf32>
    %597 = arith.addf %596, %595 : vector<2x64xf32>
    %598 = arith.divf %596, %597 : vector<2x64xf32>
    %599 = vector.extract_strided_slice %590 {offsets = [0, 64], sizes = [2, 64], strides = [1, 1]} : vector<2x192xf32> to vector<2x64xf32>
    %600 = vector.extract_strided_slice %589 {offsets = [0, 64], sizes = [2, 64], strides = [1, 1]} : vector<2x192xf32> to vector<2x64xf32>
    %601 = arith.addf %599, %600 : vector<2x64xf32>
    %602 = arith.negf %601 : vector<2x64xf32>
    %603 = math.exp %602 : vector<2x64xf32>
    %cst_136 = arith.constant 1.000000e+00 : f32
    %604 = vector.broadcast %cst_136 : f32 to vector<2x64xf32>
    %605 = arith.addf %604, %603 : vector<2x64xf32>
    %606 = arith.divf %604, %605 : vector<2x64xf32>
    %607 = vector.extract_strided_slice %590 {offsets = [0, 128], sizes = [2, 64], strides = [1, 1]} : vector<2x192xf32> to vector<2x64xf32>
    %608 = vector.extract_strided_slice %589 {offsets = [0, 128], sizes = [2, 64], strides = [1, 1]} : vector<2x192xf32> to vector<2x64xf32>
    %609 = arith.mulf %598, %608 : vector<2x64xf32>
    %610 = arith.addf %607, %609 : vector<2x64xf32>
    %611 = math.tanh %610 : vector<2x64xf32>
    %cst_137 = arith.constant 1.000000e+00 : f32
    %612 = vector.broadcast %cst_137 : f32 to vector<2x64xf32>
    %613 = arith.subf %612, %606 : vector<2x64xf32>
    %614 = arith.mulf %613, %611 : vector<2x64xf32>
    %615 = arith.mulf %606, %578 : vector<2x64xf32>
    %616 = arith.addf %614, %615 : vector<2x64xf32>
    %c5_i32_138 = arith.constant 5 : i32
    %617 = vector.broadcast %c5_i32_138 : i32 to vector<2x1xi32>
    %618 = arith.cmpi sgt, %0, %617 : vector<2x1xi32>
    %619 = vector.shape_cast %618 : vector<2x1xi1> to vector<2x1xi1>
    %620 = vector.broadcast %619 : vector<2x1xi1> to vector<2x64xi1>
    %621 = arith.select %620, %616, %578 : vector<2x64xi1>, vector<2x64xf32>
    %cst_139 = arith.constant 0.000000e+00 : f32
    %622 = vector.shape_cast %618 : vector<2x1xi1> to vector<2x1xi1>
    %623 = vector.broadcast %622 : vector<2x1xi1> to vector<2x64xi1>
    %624 = vector.broadcast %cst_139 : f32 to vector<2x64xf32>
    %625 = arith.select %623, %616, %624 : vector<2x64xi1>, vector<2x64xf32>
    %c1_140 = arith.constant 1 : index
    %c10_141 = arith.constant 10 : index
    %c0_142 = arith.constant 0 : index
    %626 = vector.load %arg10[%c1_140, %c10_141, %c0_142] : memref<2x16x64xf32, #tpu.memory_space<vmem>>, vector<1x2x64xf32>
    %627 = vector.shape_cast %626 : vector<1x2x64xf32> to vector<2x64xf32>
    %628 = vector.shape_cast %625 : vector<2x64xf32> to vector<1x2x64xf32>
    tpu.vector_store %arg10[%c1_140, %c10_141, %c0_142], %628 {strides = array<i32>} : memref<2x16x64xf32, #tpu.memory_space<vmem>>, vector<1x2x64xf32>,
    %629 = arith.truncf %621 : vector<2x64xf32> to vector<2x64xbf16>
    %cst_143 = arith.constant dense<0.000000e+00> : vector<2x192xf32>
    %630 = tpu.matmul %629, %361, %cst_143 {dimension_numbers = #tpu.dot_dimension_numbers<[1], [0], [0], [1], [0, 0, 1, 1], [], []>} : vector<2x64xbf16>, vector<64x192xbf16>, vector<2x192xf32> -> vector<2x192xf32>
    %631 = vector.broadcast %363 : vector<1x192xf32> to vector<2x192xf32>
    %632 = arith.addf %630, %631 : vector<2x192xf32>
    %633 = vector.extract_strided_slice %369 {offsets = [12, 0], sizes = [2, 192], strides = [1, 1]} : vector<16x192xf32> to vector<2x192xf32>
    %634 = vector.extract_strided_slice %633 {offsets = [0, 0], sizes = [2, 64], strides = [1, 1]} : vector<2x192xf32> to vector<2x64xf32>
    %635 = vector.extract_strided_slice %632 {offsets = [0, 0], sizes = [2, 64], strides = [1, 1]} : vector<2x192xf32> to vector<2x64xf32>
    %636 = arith.addf %634, %635 : vector<2x64xf32>
    %637 = arith.negf %636 : vector<2x64xf32>
    %638 = math.exp %637 : vector<2x64xf32>
    %cst_144 = arith.constant 1.000000e+00 : f32
    %639 = vector.broadcast %cst_144 : f32 to vector<2x64xf32>
    %640 = arith.addf %639, %638 : vector<2x64xf32>
    %641 = arith.divf %639, %640 : vector<2x64xf32>
    %642 = vector.extract_strided_slice %633 {offsets = [0, 64], sizes = [2, 64], strides = [1, 1]} : vector<2x192xf32> to vector<2x64xf32>
    %643 = vector.extract_strided_slice %632 {offsets = [0, 64], sizes = [2, 64], strides = [1, 1]} : vector<2x192xf32> to vector<2x64xf32>
    %644 = arith.addf %642, %643 : vector<2x64xf32>
    %645 = arith.negf %644 : vector<2x64xf32>
    %646 = math.exp %645 : vector<2x64xf32>
    %cst_145 = arith.constant 1.000000e+00 : f32
    %647 = vector.broadcast %cst_145 : f32 to vector<2x64xf32>
    %648 = arith.addf %647, %646 : vector<2x64xf32>
    %649 = arith.divf %647, %648 : vector<2x64xf32>
    %650 = vector.extract_strided_slice %633 {offsets = [0, 128], sizes = [2, 64], strides = [1, 1]} : vector<2x192xf32> to vector<2x64xf32>
    %651 = vector.extract_strided_slice %632 {offsets = [0, 128], sizes = [2, 64], strides = [1, 1]} : vector<2x192xf32> to vector<2x64xf32>
    %652 = arith.mulf %641, %651 : vector<2x64xf32>
    %653 = arith.addf %650, %652 : vector<2x64xf32>
    %654 = math.tanh %653 : vector<2x64xf32>
    %cst_146 = arith.constant 1.000000e+00 : f32
    %655 = vector.broadcast %cst_146 : f32 to vector<2x64xf32>
    %656 = arith.subf %655, %649 : vector<2x64xf32>
    %657 = arith.mulf %656, %654 : vector<2x64xf32>
    %658 = arith.mulf %649, %621 : vector<2x64xf32>
    %659 = arith.addf %657, %658 : vector<2x64xf32>
    %c6_i32_147 = arith.constant 6 : i32
    %660 = vector.broadcast %c6_i32_147 : i32 to vector<2x1xi32>
    %661 = arith.cmpi sgt, %0, %660 : vector<2x1xi32>
    %662 = vector.shape_cast %661 : vector<2x1xi1> to vector<2x1xi1>
    %663 = vector.broadcast %662 : vector<2x1xi1> to vector<2x64xi1>
    %664 = arith.select %663, %659, %621 : vector<2x64xi1>, vector<2x64xf32>
    %cst_148 = arith.constant 0.000000e+00 : f32
    %665 = vector.shape_cast %661 : vector<2x1xi1> to vector<2x1xi1>
    %666 = vector.broadcast %665 : vector<2x1xi1> to vector<2x64xi1>
    %667 = vector.broadcast %cst_148 : f32 to vector<2x64xf32>
    %668 = arith.select %666, %659, %667 : vector<2x64xi1>, vector<2x64xf32>
    %c1_149 = arith.constant 1 : index
    %c12_150 = arith.constant 12 : index
    %c0_151 = arith.constant 0 : index
    %669 = vector.load %arg10[%c1_149, %c12_150, %c0_151] : memref<2x16x64xf32, #tpu.memory_space<vmem>>, vector<1x2x64xf32>
    %670 = vector.shape_cast %669 : vector<1x2x64xf32> to vector<2x64xf32>
    %671 = vector.shape_cast %668 : vector<2x64xf32> to vector<1x2x64xf32>
    tpu.vector_store %arg10[%c1_149, %c12_150, %c0_151], %671 {strides = array<i32>} : memref<2x16x64xf32, #tpu.memory_space<vmem>>, vector<1x2x64xf32>,
    %672 = arith.truncf %664 : vector<2x64xf32> to vector<2x64xbf16>
    %cst_152 = arith.constant dense<0.000000e+00> : vector<2x192xf32>
    %673 = tpu.matmul %672, %361, %cst_152 {dimension_numbers = #tpu.dot_dimension_numbers<[1], [0], [0], [1], [0, 0, 1, 1], [], []>} : vector<2x64xbf16>, vector<64x192xbf16>, vector<2x192xf32> -> vector<2x192xf32>
    %674 = vector.broadcast %363 : vector<1x192xf32> to vector<2x192xf32>
    %675 = arith.addf %673, %674 : vector<2x192xf32>
    %676 = vector.extract_strided_slice %369 {offsets = [14, 0], sizes = [2, 192], strides = [1, 1]} : vector<16x192xf32> to vector<2x192xf32>
    %677 = vector.extract_strided_slice %676 {offsets = [0, 0], sizes = [2, 64], strides = [1, 1]} : vector<2x192xf32> to vector<2x64xf32>
    %678 = vector.extract_strided_slice %675 {offsets = [0, 0], sizes = [2, 64], strides = [1, 1]} : vector<2x192xf32> to vector<2x64xf32>
    %679 = arith.addf %677, %678 : vector<2x64xf32>
    %680 = arith.negf %679 : vector<2x64xf32>
    %681 = math.exp %680 : vector<2x64xf32>
    %cst_153 = arith.constant 1.000000e+00 : f32
    %682 = vector.broadcast %cst_153 : f32 to vector<2x64xf32>
    %683 = arith.addf %682, %681 : vector<2x64xf32>
    %684 = arith.divf %682, %683 : vector<2x64xf32>
    %685 = vector.extract_strided_slice %676 {offsets = [0, 64], sizes = [2, 64], strides = [1, 1]} : vector<2x192xf32> to vector<2x64xf32>
    %686 = vector.extract_strided_slice %675 {offsets = [0, 64], sizes = [2, 64], strides = [1, 1]} : vector<2x192xf32> to vector<2x64xf32>
    %687 = arith.addf %685, %686 : vector<2x64xf32>
    %688 = arith.negf %687 : vector<2x64xf32>
    %689 = math.exp %688 : vector<2x64xf32>
    %cst_154 = arith.constant 1.000000e+00 : f32
    %690 = vector.broadcast %cst_154 : f32 to vector<2x64xf32>
    %691 = arith.addf %690, %689 : vector<2x64xf32>
    %692 = arith.divf %690, %691 : vector<2x64xf32>
    %693 = vector.extract_strided_slice %676 {offsets = [0, 128], sizes = [2, 64], strides = [1, 1]} : vector<2x192xf32> to vector<2x64xf32>
    %694 = vector.extract_strided_slice %675 {offsets = [0, 128], sizes = [2, 64], strides = [1, 1]} : vector<2x192xf32> to vector<2x64xf32>
    %695 = arith.mulf %684, %694 : vector<2x64xf32>
    %696 = arith.addf %693, %695 : vector<2x64xf32>
    %697 = math.tanh %696 : vector<2x64xf32>
    %cst_155 = arith.constant 1.000000e+00 : f32
    %698 = vector.broadcast %cst_155 : f32 to vector<2x64xf32>
    %699 = arith.subf %698, %692 : vector<2x64xf32>
    %700 = arith.mulf %699, %697 : vector<2x64xf32>
    %701 = arith.mulf %692, %664 : vector<2x64xf32>
    %702 = arith.addf %700, %701 : vector<2x64xf32>
    %c7_i32_156 = arith.constant 7 : i32
    %703 = vector.broadcast %c7_i32_156 : i32 to vector<2x1xi32>
    %704 = arith.cmpi sgt, %0, %703 : vector<2x1xi32>
    %cst_157 = arith.constant 0.000000e+00 : f32
    %705 = vector.shape_cast %704 : vector<2x1xi1> to vector<2x1xi1>
    %706 = vector.broadcast %705 : vector<2x1xi1> to vector<2x64xi1>
    %707 = vector.broadcast %cst_157 : f32 to vector<2x64xf32>
    %708 = arith.select %706, %702, %707 : vector<2x64xi1>, vector<2x64xf32>
    %c1_158 = arith.constant 1 : index
    %c14_159 = arith.constant 14 : index
    %c0_160 = arith.constant 0 : index
    %709 = vector.load %arg10[%c1_158, %c14_159, %c0_160] : memref<2x16x64xf32, #tpu.memory_space<vmem>>, vector<1x2x64xf32>
    %710 = vector.shape_cast %709 : vector<1x2x64xf32> to vector<2x64xf32>
    %711 = vector.shape_cast %708 : vector<2x64xf32> to vector<1x2x64xf32>
    tpu.vector_store %arg10[%c1_158, %c14_159, %c0_160], %711 {strides = array<i32>} : memref<2x16x64xf32, #tpu.memory_space<vmem>>, vector<1x2x64xf32>,
    %c0_161 = arith.constant 0 : index
    %c0_162 = arith.constant 0 : index
    %c0_163 = arith.constant 0 : index
    %712 = vector.load %arg10[%c0_161, %c0_162, %c0_163] : memref<2x16x64xf32, #tpu.memory_space<vmem>>, vector<1x16x64xf32>
    %713 = vector.shape_cast %712 : vector<1x16x64xf32> to vector<16x64xf32>
    %714 = arith.truncf %713 : vector<16x64xf32> to vector<16x64xbf16>
    %c1_164 = arith.constant 1 : index
    %c0_165 = arith.constant 0 : index
    %c0_166 = arith.constant 0 : index
    %715 = vector.load %arg10[%c1_164, %c0_165, %c0_166] : memref<2x16x64xf32, #tpu.memory_space<vmem>>, vector<1x16x64xf32>
    %716 = vector.shape_cast %715 : vector<1x16x64xf32> to vector<16x64xf32>
    %717 = arith.truncf %716 : vector<16x64xf32> to vector<16x64xbf16>
    %c0_167 = arith.constant 0 : index
    %c0_168 = arith.constant 0 : index
    %718 = vector.load %arg6[%c0_167, %c0_168] : memref<64x64xbf16, #tpu.memory_space<vmem>>, vector<64x64xbf16>
    %cst_169 = arith.constant dense<0.000000e+00> : vector<16x64xf32>
    %719 = tpu.matmul %714, %718, %cst_169 {dimension_numbers = #tpu.dot_dimension_numbers<[1], [0], [0], [1], [0, 0, 1, 1], [], []>} : vector<16x64xbf16>, vector<64x64xbf16>, vector<16x64xf32> -> vector<16x64xf32>
    %c0_170 = arith.constant 0 : index
    %c0_171 = arith.constant 0 : index
    %720 = vector.load %arg7[%c0_170, %c0_171] : memref<64x64xbf16, #tpu.memory_space<vmem>>, vector<64x64xbf16>
    %cst_172 = arith.constant dense<0.000000e+00> : vector<16x64xf32>
    %721 = tpu.matmul %717, %720, %cst_172 {dimension_numbers = #tpu.dot_dimension_numbers<[1], [0], [0], [1], [0, 0, 1, 1], [], []>} : vector<16x64xbf16>, vector<64x64xbf16>, vector<16x64xf32> -> vector<16x64xf32>
    %722 = arith.addf %719, %721 : vector<16x64xf32>
    %c0_173 = arith.constant 0 : index
    %c0_174 = arith.constant 0 : index
    %723 = vector.load %arg8[%c0_173, %c0_174] : memref<1x64xf32, #tpu.memory_space<vmem>>, vector<1x64xf32>
    %724 = vector.broadcast %723 : vector<1x64xf32> to vector<16x64xf32>
    %725 = arith.addf %722, %724 : vector<16x64xf32>
    %c0_175 = arith.constant 0 : index
    %c0_176 = arith.constant 0 : index
    %c0_177 = arith.constant 0 : index
    %726 = vector.load %arg9[%c0_175, %c0_176, %c0_177] : memref<2x16x64xf32, #tpu.memory_space<vmem>>, vector<1x16x64xf32>
    %727 = vector.shape_cast %726 : vector<1x16x64xf32> to vector<16x64xf32>
    %728 = vector.shape_cast %725 : vector<16x64xf32> to vector<1x16x64xf32>
    tpu.vector_store %arg9[%c0_175, %c0_176, %c0_177], %728 {strides = array<i32>} : memref<2x16x64xf32, #tpu.memory_space<vmem>>, vector<1x16x64xf32>,
    %c1_178 = arith.constant 1 : index
    %c0_179 = arith.constant 0 : index
    %c0_180 = arith.constant 0 : index
    %729 = vector.load %arg10[%c1_178, %c0_179, %c0_180] : memref<2x16x64xf32, #tpu.memory_space<vmem>>, vector<1x16x64xf32>
    %730 = vector.shape_cast %729 : vector<1x16x64xf32> to vector<16x64xf32>
    %731 = arith.truncf %730 : vector<16x64xf32> to vector<16x64xbf16>
    %c0_181 = arith.constant 0 : index
    %c0_182 = arith.constant 0 : index
    %c0_183 = arith.constant 0 : index
    %732 = vector.load %arg10[%c0_181, %c0_182, %c0_183] : memref<2x16x64xf32, #tpu.memory_space<vmem>>, vector<1x16x64xf32>
    %733 = vector.shape_cast %732 : vector<1x16x64xf32> to vector<16x64xf32>
    %734 = arith.truncf %733 : vector<16x64xf32> to vector<16x64xbf16>
    %c0_184 = arith.constant 0 : index
    %c0_185 = arith.constant 0 : index
    %735 = vector.load %arg6[%c0_184, %c0_185] : memref<64x64xbf16, #tpu.memory_space<vmem>>, vector<64x64xbf16>
    %cst_186 = arith.constant dense<0.000000e+00> : vector<16x64xf32>
    %736 = tpu.matmul %731, %735, %cst_186 {dimension_numbers = #tpu.dot_dimension_numbers<[1], [0], [0], [1], [0, 0, 1, 1], [], []>} : vector<16x64xbf16>, vector<64x64xbf16>, vector<16x64xf32> -> vector<16x64xf32>
    %c0_187 = arith.constant 0 : index
    %c0_188 = arith.constant 0 : index
    %737 = vector.load %arg7[%c0_187, %c0_188] : memref<64x64xbf16, #tpu.memory_space<vmem>>, vector<64x64xbf16>
    %cst_189 = arith.constant dense<0.000000e+00> : vector<16x64xf32>
    %738 = tpu.matmul %734, %737, %cst_189 {dimension_numbers = #tpu.dot_dimension_numbers<[1], [0], [0], [1], [0, 0, 1, 1], [], []>} : vector<16x64xbf16>, vector<64x64xbf16>, vector<16x64xf32> -> vector<16x64xf32>
    %739 = arith.addf %736, %738 : vector<16x64xf32>
    %c0_190 = arith.constant 0 : index
    %c0_191 = arith.constant 0 : index
    %740 = vector.load %arg8[%c0_190, %c0_191] : memref<1x64xf32, #tpu.memory_space<vmem>>, vector<1x64xf32>
    %741 = vector.broadcast %740 : vector<1x64xf32> to vector<16x64xf32>
    %742 = arith.addf %739, %741 : vector<16x64xf32>
    %c1_192 = arith.constant 1 : index
    %c0_193 = arith.constant 0 : index
    %c0_194 = arith.constant 0 : index
    %743 = vector.load %arg9[%c1_192, %c0_193, %c0_194] : memref<2x16x64xf32, #tpu.memory_space<vmem>>, vector<1x16x64xf32>
    %744 = vector.shape_cast %743 : vector<1x16x64xf32> to vector<16x64xf32>
    %745 = vector.shape_cast %742 : vector<16x64xf32> to vector<1x16x64xf32>
    tpu.vector_store %arg9[%c1_192, %c0_193, %c0_194], %745 {strides = array<i32>} : memref<2x16x64xf32, #tpu.memory_space<vmem>>, vector<1x16x64xf32>,
    return
  }
}

module attributes {stable_mosaic.version = 11 : i64} {
  func.func @_attn_predict_kernel(%arg0: memref<2x8x64xf32, #tpu.memory_space<vmem>>, %arg1: memref<2x2x8x64xf32, #tpu.memory_space<vmem>>, %arg2: memref<64x128xbf16, #tpu.memory_space<vmem>>, %arg3: memref<1x128xf32, #tpu.memory_space<vmem>>, %arg4: memref<2x64x128xbf16, #tpu.memory_space<vmem>>, %arg5: memref<2x1x128xf32, #tpu.memory_space<vmem>>, %arg6: memref<2x64x64xbf16, #tpu.memory_space<vmem>>, %arg7: memref<2x1x64xf32, #tpu.memory_space<vmem>>, %arg8: memref<3x64x4xbf16, #tpu.memory_space<vmem>>, %arg9: memref<1x4xf32, #tpu.memory_space<vmem>>, %arg10: memref<16x4xf32, #tpu.memory_space<vmem>>) attributes {dimension_semantics = [], scalar_prefetch = 0 : i64, scratch_operands = 0 : i64, tpu.core_type = #tpu.core_type<tc>} {
    %c0 = arith.constant 0 : index
    %c0_0 = arith.constant 0 : index
    %c0_1 = arith.constant 0 : index
    %0 = vector.load %arg0[%c0, %c0_0, %c0_1] : memref<2x8x64xf32, #tpu.memory_space<vmem>>, vector<2x8x64xf32>
    %1 = vector.shape_cast %0 : vector<2x8x64xf32> to vector<16x64xf32>
    %2 = arith.truncf %1 : vector<16x64xf32> to vector<16x64xbf16>
    %c0_2 = arith.constant 0 : index
    %c0_3 = arith.constant 0 : index
    %3 = vector.load %arg2[%c0_2, %c0_3] : memref<64x128xbf16, #tpu.memory_space<vmem>>, vector<64x128xbf16>
    %cst = arith.constant dense<0.000000e+00> : vector<16x128xf32>
    %4 = tpu.matmul %2, %3, %cst {dimension_numbers = #tpu.dot_dimension_numbers<[1], [0], [0], [1], [0, 0, 1, 1], [], []>} : vector<16x64xbf16>, vector<64x128xbf16>, vector<16x128xf32> -> vector<16x128xf32>
    %c0_4 = arith.constant 0 : index
    %c0_5 = arith.constant 0 : index
    %5 = vector.load %arg3[%c0_4, %c0_5] : memref<1x128xf32, #tpu.memory_space<vmem>>, vector<1x128xf32>
    %6 = vector.broadcast %5 : vector<1x128xf32> to vector<16x128xf32>
    %7 = arith.addf %4, %6 : vector<16x128xf32>
    %c2 = arith.constant 2 : index
    %c0_6 = arith.constant 0 : index
    %c0_7 = arith.constant 0 : index
    %8 = vector.load %arg8[%c2, %c0_6, %c0_7] : memref<3x64x4xbf16, #tpu.memory_space<vmem>>, vector<1x64x4xbf16>
    %9 = vector.shape_cast %8 : vector<1x64x4xbf16> to vector<64x4xbf16>
    %cst_8 = arith.constant dense<0.000000e+00> : vector<16x4xf32>
    %10 = tpu.matmul %2, %9, %cst_8 {dimension_numbers = #tpu.dot_dimension_numbers<[1], [0], [0], [1], [0, 0, 1, 1], [], []>} : vector<16x64xbf16>, vector<64x4xbf16>, vector<16x4xf32> -> vector<16x4xf32>
    %c0_9 = arith.constant 0 : index
    %c0_10 = arith.constant 0 : index
    %11 = vector.load %arg9[%c0_9, %c0_10] : memref<1x4xf32, #tpu.memory_space<vmem>>, vector<1x4xf32>
    %12 = vector.broadcast %11 : vector<1x4xf32> to vector<16x4xf32>
    %13 = arith.addf %10, %12 : vector<16x4xf32>
    %c0_11 = arith.constant 0 : index
    %c0_12 = arith.constant 0 : index
    %c0_13 = arith.constant 0 : index
    %c0_14 = arith.constant 0 : index
    %14 = vector.load %arg1[%c0_11, %c0_12, %c0_13, %c0_14] : memref<2x2x8x64xf32, #tpu.memory_space<vmem>>, vector<1x2x8x64xf32>
    %15 = vector.shape_cast %14 : vector<1x2x8x64xf32> to vector<2x8x64xf32>
    %16 = vector.shape_cast %15 : vector<2x8x64xf32> to vector<16x64xf32>
    %17 = arith.truncf %16 : vector<16x64xf32> to vector<16x64xbf16>
    %c0_15 = arith.constant 0 : index
    %c0_16 = arith.constant 0 : index
    %c0_17 = arith.constant 0 : index
    %18 = vector.load %arg4[%c0_15, %c0_16, %c0_17] : memref<2x64x128xbf16, #tpu.memory_space<vmem>>, vector<1x64x128xbf16>
    %19 = vector.shape_cast %18 : vector<1x64x128xbf16> to vector<64x128xbf16>
    %cst_18 = arith.constant dense<0.000000e+00> : vector<16x128xf32>
    %20 = tpu.matmul %17, %19, %cst_18 {dimension_numbers = #tpu.dot_dimension_numbers<[1], [0], [0], [1], [0, 0, 1, 1], [], []>} : vector<16x64xbf16>, vector<64x128xbf16>, vector<16x128xf32> -> vector<16x128xf32>
    %c0_19 = arith.constant 0 : index
    %c0_20 = arith.constant 0 : index
    %c0_21 = arith.constant 0 : index
    %21 = vector.load %arg5[%c0_19, %c0_20, %c0_21] : memref<2x1x128xf32, #tpu.memory_space<vmem>>, vector<1x1x128xf32>
    %22 = vector.shape_cast %21 : vector<1x1x128xf32> to vector<1x128xf32>
    %23 = vector.broadcast %22 : vector<1x128xf32> to vector<16x128xf32>
    %24 = arith.addf %20, %23 : vector<16x128xf32>
    %25 = vector.extract_strided_slice %7 {offsets = [0, 0], sizes = [16, 16], strides = [1, 1]} : vector<16x128xf32> to vector<16x16xf32>
    %26 = vector.shape_cast %25 : vector<16x16xf32> to vector<2x8x16xf32>
    %27 = vector.extract_strided_slice %24 {offsets = [0, 0], sizes = [16, 16], strides = [1, 1]} : vector<16x128xf32> to vector<16x16xf32>
    %28 = vector.shape_cast %27 : vector<16x16xf32> to vector<2x8x16xf32>
    %29 = vector.extract_strided_slice %24 {offsets = [0, 64], sizes = [16, 16], strides = [1, 1]} : vector<16x128xf32> to vector<16x16xf32>
    %30 = vector.shape_cast %29 : vector<16x16xf32> to vector<2x8x16xf32>
    %31 = arith.truncf %26 : vector<2x8x16xf32> to vector<2x8x16xbf16>
    %32 = arith.truncf %28 : vector<2x8x16xf32> to vector<2x8x16xbf16>
    "tpu.trace_start"() <{level = 10 : i32, message = "bqd,bkd->bqk"}> : () -> ()
    %cst_22 = arith.constant dense<0.000000e+00> : vector<2x8x8xf32>
    %33 = tpu.matmul %31, %32, %cst_22 {dimension_numbers = #tpu.dot_dimension_numbers<[2], [2], [1], [1], [0, 0, 0, 1, 1, 1], [0], [0]>} : vector<2x8x16xbf16>, vector<2x8x16xbf16>, vector<2x8x8xf32> -> vector<2x8x8xf32>
    "tpu.trace_stop"() : () -> ()
    %cst_23 = arith.constant dense<0xFF800000> : vector<2x8xf32>
    %34 = vector.multi_reduction <maximumf>, %33, %cst_23 [2] : vector<2x8x8xf32> to vector<2x8xf32>
    %35 = vector.shape_cast %34 : vector<2x8xf32> to vector<2x8x1xf32>
    %36 = vector.broadcast %35 : vector<2x8x1xf32> to vector<2x8x8xf32>
    %37 = arith.subf %33, %36 : vector<2x8x8xf32>
    %38 = math.exp %37 : vector<2x8x8xf32>
    %cst_24 = arith.constant dense<0.000000e+00> : vector<2x8xf32>
    %39 = vector.multi_reduction <add>, %38, %cst_24 [2] : vector<2x8x8xf32> to vector<2x8xf32>
    %40 = vector.shape_cast %39 : vector<2x8xf32> to vector<2x8x1xf32>
    %41 = tpu.reciprocal %40 {approx = true} : vector<2x8x1xf32> -> vector<2x8x1xf32>
    %42 = vector.broadcast %41 : vector<2x8x1xf32> to vector<2x8x8xf32>
    %43 = arith.mulf %38, %42 : vector<2x8x8xf32>
    %44 = arith.truncf %43 : vector<2x8x8xf32> to vector<2x8x8xbf16>
    %45 = arith.truncf %30 : vector<2x8x16xf32> to vector<2x8x16xbf16>
    "tpu.trace_start"() <{level = 10 : i32, message = "bqk,bkd->bqd"}> : () -> ()
    %cst_25 = arith.constant dense<0.000000e+00> : vector<2x8x16xf32>
    %46 = tpu.matmul %44, %45, %cst_25 {dimension_numbers = #tpu.dot_dimension_numbers<[2], [1], [1], [2], [0, 0, 0, 1, 1, 2], [0], [0]>} : vector<2x8x8xbf16>, vector<2x8x16xbf16>, vector<2x8x16xf32> -> vector<2x8x16xf32>
    "tpu.trace_stop"() : () -> ()
    %47 = vector.extract_strided_slice %7 {offsets = [0, 16], sizes = [16, 16], strides = [1, 1]} : vector<16x128xf32> to vector<16x16xf32>
    %48 = vector.shape_cast %47 : vector<16x16xf32> to vector<2x8x16xf32>
    %49 = vector.extract_strided_slice %24 {offsets = [0, 16], sizes = [16, 16], strides = [1, 1]} : vector<16x128xf32> to vector<16x16xf32>
    %50 = vector.shape_cast %49 : vector<16x16xf32> to vector<2x8x16xf32>
    %51 = vector.extract_strided_slice %24 {offsets = [0, 80], sizes = [16, 16], strides = [1, 1]} : vector<16x128xf32> to vector<16x16xf32>
    %52 = vector.shape_cast %51 : vector<16x16xf32> to vector<2x8x16xf32>
    %53 = arith.truncf %48 : vector<2x8x16xf32> to vector<2x8x16xbf16>
    %54 = arith.truncf %50 : vector<2x8x16xf32> to vector<2x8x16xbf16>
    "tpu.trace_start"() <{level = 10 : i32, message = "bqd,bkd->bqk"}> : () -> ()
    %cst_26 = arith.constant dense<0.000000e+00> : vector<2x8x8xf32>
    %55 = tpu.matmul %53, %54, %cst_26 {dimension_numbers = #tpu.dot_dimension_numbers<[2], [2], [1], [1], [0, 0, 0, 1, 1, 1], [0], [0]>} : vector<2x8x16xbf16>, vector<2x8x16xbf16>, vector<2x8x8xf32> -> vector<2x8x8xf32>
    "tpu.trace_stop"() : () -> ()
    %cst_27 = arith.constant dense<0xFF800000> : vector<2x8xf32>
    %56 = vector.multi_reduction <maximumf>, %55, %cst_27 [2] : vector<2x8x8xf32> to vector<2x8xf32>
    %57 = vector.shape_cast %56 : vector<2x8xf32> to vector<2x8x1xf32>
    %58 = vector.broadcast %57 : vector<2x8x1xf32> to vector<2x8x8xf32>
    %59 = arith.subf %55, %58 : vector<2x8x8xf32>
    %60 = math.exp %59 : vector<2x8x8xf32>
    %cst_28 = arith.constant dense<0.000000e+00> : vector<2x8xf32>
    %61 = vector.multi_reduction <add>, %60, %cst_28 [2] : vector<2x8x8xf32> to vector<2x8xf32>
    %62 = vector.shape_cast %61 : vector<2x8xf32> to vector<2x8x1xf32>
    %63 = tpu.reciprocal %62 {approx = true} : vector<2x8x1xf32> -> vector<2x8x1xf32>
    %64 = vector.broadcast %63 : vector<2x8x1xf32> to vector<2x8x8xf32>
    %65 = arith.mulf %60, %64 : vector<2x8x8xf32>
    %66 = arith.truncf %65 : vector<2x8x8xf32> to vector<2x8x8xbf16>
    %67 = arith.truncf %52 : vector<2x8x16xf32> to vector<2x8x16xbf16>
    "tpu.trace_start"() <{level = 10 : i32, message = "bqk,bkd->bqd"}> : () -> ()
    %cst_29 = arith.constant dense<0.000000e+00> : vector<2x8x16xf32>
    %68 = tpu.matmul %66, %67, %cst_29 {dimension_numbers = #tpu.dot_dimension_numbers<[2], [1], [1], [2], [0, 0, 0, 1, 1, 2], [0], [0]>} : vector<2x8x8xbf16>, vector<2x8x16xbf16>, vector<2x8x16xf32> -> vector<2x8x16xf32>
    "tpu.trace_stop"() : () -> ()
    %69 = vector.extract_strided_slice %7 {offsets = [0, 32], sizes = [16, 16], strides = [1, 1]} : vector<16x128xf32> to vector<16x16xf32>
    %70 = vector.shape_cast %69 : vector<16x16xf32> to vector<2x8x16xf32>
    %71 = vector.extract_strided_slice %24 {offsets = [0, 32], sizes = [16, 16], strides = [1, 1]} : vector<16x128xf32> to vector<16x16xf32>
    %72 = vector.shape_cast %71 : vector<16x16xf32> to vector<2x8x16xf32>
    %73 = vector.extract_strided_slice %24 {offsets = [0, 96], sizes = [16, 16], strides = [1, 1]} : vector<16x128xf32> to vector<16x16xf32>
    %74 = vector.shape_cast %73 : vector<16x16xf32> to vector<2x8x16xf32>
    %75 = arith.truncf %70 : vector<2x8x16xf32> to vector<2x8x16xbf16>
    %76 = arith.truncf %72 : vector<2x8x16xf32> to vector<2x8x16xbf16>
    "tpu.trace_start"() <{level = 10 : i32, message = "bqd,bkd->bqk"}> : () -> ()
    %cst_30 = arith.constant dense<0.000000e+00> : vector<2x8x8xf32>
    %77 = tpu.matmul %75, %76, %cst_30 {dimension_numbers = #tpu.dot_dimension_numbers<[2], [2], [1], [1], [0, 0, 0, 1, 1, 1], [0], [0]>} : vector<2x8x16xbf16>, vector<2x8x16xbf16>, vector<2x8x8xf32> -> vector<2x8x8xf32>
    "tpu.trace_stop"() : () -> ()
    %cst_31 = arith.constant dense<0xFF800000> : vector<2x8xf32>
    %78 = vector.multi_reduction <maximumf>, %77, %cst_31 [2] : vector<2x8x8xf32> to vector<2x8xf32>
    %79 = vector.shape_cast %78 : vector<2x8xf32> to vector<2x8x1xf32>
    %80 = vector.broadcast %79 : vector<2x8x1xf32> to vector<2x8x8xf32>
    %81 = arith.subf %77, %80 : vector<2x8x8xf32>
    %82 = math.exp %81 : vector<2x8x8xf32>
    %cst_32 = arith.constant dense<0.000000e+00> : vector<2x8xf32>
    %83 = vector.multi_reduction <add>, %82, %cst_32 [2] : vector<2x8x8xf32> to vector<2x8xf32>
    %84 = vector.shape_cast %83 : vector<2x8xf32> to vector<2x8x1xf32>
    %85 = tpu.reciprocal %84 {approx = true} : vector<2x8x1xf32> -> vector<2x8x1xf32>
    %86 = vector.broadcast %85 : vector<2x8x1xf32> to vector<2x8x8xf32>
    %87 = arith.mulf %82, %86 : vector<2x8x8xf32>
    %88 = arith.truncf %87 : vector<2x8x8xf32> to vector<2x8x8xbf16>
    %89 = arith.truncf %74 : vector<2x8x16xf32> to vector<2x8x16xbf16>
    "tpu.trace_start"() <{level = 10 : i32, message = "bqk,bkd->bqd"}> : () -> ()
    %cst_33 = arith.constant dense<0.000000e+00> : vector<2x8x16xf32>
    %90 = tpu.matmul %88, %89, %cst_33 {dimension_numbers = #tpu.dot_dimension_numbers<[2], [1], [1], [2], [0, 0, 0, 1, 1, 2], [0], [0]>} : vector<2x8x8xbf16>, vector<2x8x16xbf16>, vector<2x8x16xf32> -> vector<2x8x16xf32>
    "tpu.trace_stop"() : () -> ()
    %91 = vector.extract_strided_slice %7 {offsets = [0, 48], sizes = [16, 16], strides = [1, 1]} : vector<16x128xf32> to vector<16x16xf32>
    %92 = vector.shape_cast %91 : vector<16x16xf32> to vector<2x8x16xf32>
    %93 = vector.extract_strided_slice %24 {offsets = [0, 48], sizes = [16, 16], strides = [1, 1]} : vector<16x128xf32> to vector<16x16xf32>
    %94 = vector.shape_cast %93 : vector<16x16xf32> to vector<2x8x16xf32>
    %95 = vector.extract_strided_slice %24 {offsets = [0, 112], sizes = [16, 16], strides = [1, 1]} : vector<16x128xf32> to vector<16x16xf32>
    %96 = vector.shape_cast %95 : vector<16x16xf32> to vector<2x8x16xf32>
    %97 = arith.truncf %92 : vector<2x8x16xf32> to vector<2x8x16xbf16>
    %98 = arith.truncf %94 : vector<2x8x16xf32> to vector<2x8x16xbf16>
    "tpu.trace_start"() <{level = 10 : i32, message = "bqd,bkd->bqk"}> : () -> ()
    %cst_34 = arith.constant dense<0.000000e+00> : vector<2x8x8xf32>
    %99 = tpu.matmul %97, %98, %cst_34 {dimension_numbers = #tpu.dot_dimension_numbers<[2], [2], [1], [1], [0, 0, 0, 1, 1, 1], [0], [0]>} : vector<2x8x16xbf16>, vector<2x8x16xbf16>, vector<2x8x8xf32> -> vector<2x8x8xf32>
    "tpu.trace_stop"() : () -> ()
    %cst_35 = arith.constant dense<0xFF800000> : vector<2x8xf32>
    %100 = vector.multi_reduction <maximumf>, %99, %cst_35 [2] : vector<2x8x8xf32> to vector<2x8xf32>
    %101 = vector.shape_cast %100 : vector<2x8xf32> to vector<2x8x1xf32>
    %102 = vector.broadcast %101 : vector<2x8x1xf32> to vector<2x8x8xf32>
    %103 = arith.subf %99, %102 : vector<2x8x8xf32>
    %104 = math.exp %103 : vector<2x8x8xf32>
    %cst_36 = arith.constant dense<0.000000e+00> : vector<2x8xf32>
    %105 = vector.multi_reduction <add>, %104, %cst_36 [2] : vector<2x8x8xf32> to vector<2x8xf32>
    %106 = vector.shape_cast %105 : vector<2x8xf32> to vector<2x8x1xf32>
    %107 = tpu.reciprocal %106 {approx = true} : vector<2x8x1xf32> -> vector<2x8x1xf32>
    %108 = vector.broadcast %107 : vector<2x8x1xf32> to vector<2x8x8xf32>
    %109 = arith.mulf %104, %108 : vector<2x8x8xf32>
    %110 = arith.truncf %109 : vector<2x8x8xf32> to vector<2x8x8xbf16>
    %111 = arith.truncf %96 : vector<2x8x16xf32> to vector<2x8x16xbf16>
    "tpu.trace_start"() <{level = 10 : i32, message = "bqk,bkd->bqd"}> : () -> ()
    %cst_37 = arith.constant dense<0.000000e+00> : vector<2x8x16xf32>
    %112 = tpu.matmul %110, %111, %cst_37 {dimension_numbers = #tpu.dot_dimension_numbers<[2], [1], [1], [2], [0, 0, 0, 1, 1, 2], [0], [0]>} : vector<2x8x8xbf16>, vector<2x8x16xbf16>, vector<2x8x16xf32> -> vector<2x8x16xf32>
    "tpu.trace_stop"() : () -> ()
    %113 = tpu.concatenate %46, %68, %90, %112 in 2 : vector<2x8x16xf32>, vector<2x8x16xf32>, vector<2x8x16xf32>, vector<2x8x16xf32> -> vector<2x8x64xf32>
    %114 = vector.shape_cast %113 : vector<2x8x64xf32> to vector<16x64xf32>
    %115 = arith.truncf %114 : vector<16x64xf32> to vector<16x64xbf16>
    %c0_38 = arith.constant 0 : index
    %c0_39 = arith.constant 0 : index
    %c0_40 = arith.constant 0 : index
    %116 = vector.load %arg6[%c0_38, %c0_39, %c0_40] : memref<2x64x64xbf16, #tpu.memory_space<vmem>>, vector<1x64x64xbf16>
    %117 = vector.shape_cast %116 : vector<1x64x64xbf16> to vector<64x64xbf16>
    %cst_41 = arith.constant dense<0.000000e+00> : vector<16x64xf32>
    %118 = tpu.matmul %115, %117, %cst_41 {dimension_numbers = #tpu.dot_dimension_numbers<[1], [0], [0], [1], [0, 0, 1, 1], [], []>} : vector<16x64xbf16>, vector<64x64xbf16>, vector<16x64xf32> -> vector<16x64xf32>
    %c0_42 = arith.constant 0 : index
    %c0_43 = arith.constant 0 : index
    %c0_44 = arith.constant 0 : index
    %119 = vector.load %arg7[%c0_42, %c0_43, %c0_44] : memref<2x1x64xf32, #tpu.memory_space<vmem>>, vector<1x1x64xf32>
    %120 = vector.shape_cast %119 : vector<1x1x64xf32> to vector<1x64xf32>
    %121 = vector.broadcast %120 : vector<1x64xf32> to vector<16x64xf32>
    %122 = arith.addf %118, %121 : vector<16x64xf32>
    %123 = arith.truncf %122 : vector<16x64xf32> to vector<16x64xbf16>
    %c0_45 = arith.constant 0 : index
    %c0_46 = arith.constant 0 : index
    %c0_47 = arith.constant 0 : index
    %124 = vector.load %arg8[%c0_45, %c0_46, %c0_47] : memref<3x64x4xbf16, #tpu.memory_space<vmem>>, vector<1x64x4xbf16>
    %125 = vector.shape_cast %124 : vector<1x64x4xbf16> to vector<64x4xbf16>
    %cst_48 = arith.constant dense<0.000000e+00> : vector<16x4xf32>
    %126 = tpu.matmul %123, %125, %cst_48 {dimension_numbers = #tpu.dot_dimension_numbers<[1], [0], [0], [1], [0, 0, 1, 1], [], []>} : vector<16x64xbf16>, vector<64x4xbf16>, vector<16x4xf32> -> vector<16x4xf32>
    %127 = arith.addf %13, %126 : vector<16x4xf32>
    %c1 = arith.constant 1 : index
    %c0_49 = arith.constant 0 : index
    %c0_50 = arith.constant 0 : index
    %c0_51 = arith.constant 0 : index
    %128 = vector.load %arg1[%c1, %c0_49, %c0_50, %c0_51] : memref<2x2x8x64xf32, #tpu.memory_space<vmem>>, vector<1x2x8x64xf32>
    %129 = vector.shape_cast %128 : vector<1x2x8x64xf32> to vector<2x8x64xf32>
    %130 = vector.shape_cast %129 : vector<2x8x64xf32> to vector<16x64xf32>
    %131 = arith.truncf %130 : vector<16x64xf32> to vector<16x64xbf16>
    %c1_52 = arith.constant 1 : index
    %c0_53 = arith.constant 0 : index
    %c0_54 = arith.constant 0 : index
    %132 = vector.load %arg4[%c1_52, %c0_53, %c0_54] : memref<2x64x128xbf16, #tpu.memory_space<vmem>>, vector<1x64x128xbf16>
    %133 = vector.shape_cast %132 : vector<1x64x128xbf16> to vector<64x128xbf16>
    %cst_55 = arith.constant dense<0.000000e+00> : vector<16x128xf32>
    %134 = tpu.matmul %131, %133, %cst_55 {dimension_numbers = #tpu.dot_dimension_numbers<[1], [0], [0], [1], [0, 0, 1, 1], [], []>} : vector<16x64xbf16>, vector<64x128xbf16>, vector<16x128xf32> -> vector<16x128xf32>
    %c1_56 = arith.constant 1 : index
    %c0_57 = arith.constant 0 : index
    %c0_58 = arith.constant 0 : index
    %135 = vector.load %arg5[%c1_56, %c0_57, %c0_58] : memref<2x1x128xf32, #tpu.memory_space<vmem>>, vector<1x1x128xf32>
    %136 = vector.shape_cast %135 : vector<1x1x128xf32> to vector<1x128xf32>
    %137 = vector.broadcast %136 : vector<1x128xf32> to vector<16x128xf32>
    %138 = arith.addf %134, %137 : vector<16x128xf32>
    %139 = vector.extract_strided_slice %7 {offsets = [0, 64], sizes = [16, 16], strides = [1, 1]} : vector<16x128xf32> to vector<16x16xf32>
    %140 = vector.shape_cast %139 : vector<16x16xf32> to vector<2x8x16xf32>
    %141 = vector.extract_strided_slice %138 {offsets = [0, 0], sizes = [16, 16], strides = [1, 1]} : vector<16x128xf32> to vector<16x16xf32>
    %142 = vector.shape_cast %141 : vector<16x16xf32> to vector<2x8x16xf32>
    %143 = vector.extract_strided_slice %138 {offsets = [0, 64], sizes = [16, 16], strides = [1, 1]} : vector<16x128xf32> to vector<16x16xf32>
    %144 = vector.shape_cast %143 : vector<16x16xf32> to vector<2x8x16xf32>
    %145 = arith.truncf %140 : vector<2x8x16xf32> to vector<2x8x16xbf16>
    %146 = arith.truncf %142 : vector<2x8x16xf32> to vector<2x8x16xbf16>
    "tpu.trace_start"() <{level = 10 : i32, message = "bqd,bkd->bqk"}> : () -> ()
    %cst_59 = arith.constant dense<0.000000e+00> : vector<2x8x8xf32>
    %147 = tpu.matmul %145, %146, %cst_59 {dimension_numbers = #tpu.dot_dimension_numbers<[2], [2], [1], [1], [0, 0, 0, 1, 1, 1], [0], [0]>} : vector<2x8x16xbf16>, vector<2x8x16xbf16>, vector<2x8x8xf32> -> vector<2x8x8xf32>
    "tpu.trace_stop"() : () -> ()
    %cst_60 = arith.constant dense<0xFF800000> : vector<2x8xf32>
    %148 = vector.multi_reduction <maximumf>, %147, %cst_60 [2] : vector<2x8x8xf32> to vector<2x8xf32>
    %149 = vector.shape_cast %148 : vector<2x8xf32> to vector<2x8x1xf32>
    %150 = vector.broadcast %149 : vector<2x8x1xf32> to vector<2x8x8xf32>
    %151 = arith.subf %147, %150 : vector<2x8x8xf32>
    %152 = math.exp %151 : vector<2x8x8xf32>
    %cst_61 = arith.constant dense<0.000000e+00> : vector<2x8xf32>
    %153 = vector.multi_reduction <add>, %152, %cst_61 [2] : vector<2x8x8xf32> to vector<2x8xf32>
    %154 = vector.shape_cast %153 : vector<2x8xf32> to vector<2x8x1xf32>
    %155 = tpu.reciprocal %154 {approx = true} : vector<2x8x1xf32> -> vector<2x8x1xf32>
    %156 = vector.broadcast %155 : vector<2x8x1xf32> to vector<2x8x8xf32>
    %157 = arith.mulf %152, %156 : vector<2x8x8xf32>
    %158 = arith.truncf %157 : vector<2x8x8xf32> to vector<2x8x8xbf16>
    %159 = arith.truncf %144 : vector<2x8x16xf32> to vector<2x8x16xbf16>
    "tpu.trace_start"() <{level = 10 : i32, message = "bqk,bkd->bqd"}> : () -> ()
    %cst_62 = arith.constant dense<0.000000e+00> : vector<2x8x16xf32>
    %160 = tpu.matmul %158, %159, %cst_62 {dimension_numbers = #tpu.dot_dimension_numbers<[2], [1], [1], [2], [0, 0, 0, 1, 1, 2], [0], [0]>} : vector<2x8x8xbf16>, vector<2x8x16xbf16>, vector<2x8x16xf32> -> vector<2x8x16xf32>
    "tpu.trace_stop"() : () -> ()
    %161 = vector.extract_strided_slice %7 {offsets = [0, 80], sizes = [16, 16], strides = [1, 1]} : vector<16x128xf32> to vector<16x16xf32>
    %162 = vector.shape_cast %161 : vector<16x16xf32> to vector<2x8x16xf32>
    %163 = vector.extract_strided_slice %138 {offsets = [0, 16], sizes = [16, 16], strides = [1, 1]} : vector<16x128xf32> to vector<16x16xf32>
    %164 = vector.shape_cast %163 : vector<16x16xf32> to vector<2x8x16xf32>
    %165 = vector.extract_strided_slice %138 {offsets = [0, 80], sizes = [16, 16], strides = [1, 1]} : vector<16x128xf32> to vector<16x16xf32>
    %166 = vector.shape_cast %165 : vector<16x16xf32> to vector<2x8x16xf32>
    %167 = arith.truncf %162 : vector<2x8x16xf32> to vector<2x8x16xbf16>
    %168 = arith.truncf %164 : vector<2x8x16xf32> to vector<2x8x16xbf16>
    "tpu.trace_start"() <{level = 10 : i32, message = "bqd,bkd->bqk"}> : () -> ()
    %cst_63 = arith.constant dense<0.000000e+00> : vector<2x8x8xf32>
    %169 = tpu.matmul %167, %168, %cst_63 {dimension_numbers = #tpu.dot_dimension_numbers<[2], [2], [1], [1], [0, 0, 0, 1, 1, 1], [0], [0]>} : vector<2x8x16xbf16>, vector<2x8x16xbf16>, vector<2x8x8xf32> -> vector<2x8x8xf32>
    "tpu.trace_stop"() : () -> ()
    %cst_64 = arith.constant dense<0xFF800000> : vector<2x8xf32>
    %170 = vector.multi_reduction <maximumf>, %169, %cst_64 [2] : vector<2x8x8xf32> to vector<2x8xf32>
    %171 = vector.shape_cast %170 : vector<2x8xf32> to vector<2x8x1xf32>
    %172 = vector.broadcast %171 : vector<2x8x1xf32> to vector<2x8x8xf32>
    %173 = arith.subf %169, %172 : vector<2x8x8xf32>
    %174 = math.exp %173 : vector<2x8x8xf32>
    %cst_65 = arith.constant dense<0.000000e+00> : vector<2x8xf32>
    %175 = vector.multi_reduction <add>, %174, %cst_65 [2] : vector<2x8x8xf32> to vector<2x8xf32>
    %176 = vector.shape_cast %175 : vector<2x8xf32> to vector<2x8x1xf32>
    %177 = tpu.reciprocal %176 {approx = true} : vector<2x8x1xf32> -> vector<2x8x1xf32>
    %178 = vector.broadcast %177 : vector<2x8x1xf32> to vector<2x8x8xf32>
    %179 = arith.mulf %174, %178 : vector<2x8x8xf32>
    %180 = arith.truncf %179 : vector<2x8x8xf32> to vector<2x8x8xbf16>
    %181 = arith.truncf %166 : vector<2x8x16xf32> to vector<2x8x16xbf16>
    "tpu.trace_start"() <{level = 10 : i32, message = "bqk,bkd->bqd"}> : () -> ()
    %cst_66 = arith.constant dense<0.000000e+00> : vector<2x8x16xf32>
    %182 = tpu.matmul %180, %181, %cst_66 {dimension_numbers = #tpu.dot_dimension_numbers<[2], [1], [1], [2], [0, 0, 0, 1, 1, 2], [0], [0]>} : vector<2x8x8xbf16>, vector<2x8x16xbf16>, vector<2x8x16xf32> -> vector<2x8x16xf32>
    "tpu.trace_stop"() : () -> ()
    %183 = vector.extract_strided_slice %7 {offsets = [0, 96], sizes = [16, 16], strides = [1, 1]} : vector<16x128xf32> to vector<16x16xf32>
    %184 = vector.shape_cast %183 : vector<16x16xf32> to vector<2x8x16xf32>
    %185 = vector.extract_strided_slice %138 {offsets = [0, 32], sizes = [16, 16], strides = [1, 1]} : vector<16x128xf32> to vector<16x16xf32>
    %186 = vector.shape_cast %185 : vector<16x16xf32> to vector<2x8x16xf32>
    %187 = vector.extract_strided_slice %138 {offsets = [0, 96], sizes = [16, 16], strides = [1, 1]} : vector<16x128xf32> to vector<16x16xf32>
    %188 = vector.shape_cast %187 : vector<16x16xf32> to vector<2x8x16xf32>
    %189 = arith.truncf %184 : vector<2x8x16xf32> to vector<2x8x16xbf16>
    %190 = arith.truncf %186 : vector<2x8x16xf32> to vector<2x8x16xbf16>
    "tpu.trace_start"() <{level = 10 : i32, message = "bqd,bkd->bqk"}> : () -> ()
    %cst_67 = arith.constant dense<0.000000e+00> : vector<2x8x8xf32>
    %191 = tpu.matmul %189, %190, %cst_67 {dimension_numbers = #tpu.dot_dimension_numbers<[2], [2], [1], [1], [0, 0, 0, 1, 1, 1], [0], [0]>} : vector<2x8x16xbf16>, vector<2x8x16xbf16>, vector<2x8x8xf32> -> vector<2x8x8xf32>
    "tpu.trace_stop"() : () -> ()
    %cst_68 = arith.constant dense<0xFF800000> : vector<2x8xf32>
    %192 = vector.multi_reduction <maximumf>, %191, %cst_68 [2] : vector<2x8x8xf32> to vector<2x8xf32>
    %193 = vector.shape_cast %192 : vector<2x8xf32> to vector<2x8x1xf32>
    %194 = vector.broadcast %193 : vector<2x8x1xf32> to vector<2x8x8xf32>
    %195 = arith.subf %191, %194 : vector<2x8x8xf32>
    %196 = math.exp %195 : vector<2x8x8xf32>
    %cst_69 = arith.constant dense<0.000000e+00> : vector<2x8xf32>
    %197 = vector.multi_reduction <add>, %196, %cst_69 [2] : vector<2x8x8xf32> to vector<2x8xf32>
    %198 = vector.shape_cast %197 : vector<2x8xf32> to vector<2x8x1xf32>
    %199 = tpu.reciprocal %198 {approx = true} : vector<2x8x1xf32> -> vector<2x8x1xf32>
    %200 = vector.broadcast %199 : vector<2x8x1xf32> to vector<2x8x8xf32>
    %201 = arith.mulf %196, %200 : vector<2x8x8xf32>
    %202 = arith.truncf %201 : vector<2x8x8xf32> to vector<2x8x8xbf16>
    %203 = arith.truncf %188 : vector<2x8x16xf32> to vector<2x8x16xbf16>
    "tpu.trace_start"() <{level = 10 : i32, message = "bqk,bkd->bqd"}> : () -> ()
    %cst_70 = arith.constant dense<0.000000e+00> : vector<2x8x16xf32>
    %204 = tpu.matmul %202, %203, %cst_70 {dimension_numbers = #tpu.dot_dimension_numbers<[2], [1], [1], [2], [0, 0, 0, 1, 1, 2], [0], [0]>} : vector<2x8x8xbf16>, vector<2x8x16xbf16>, vector<2x8x16xf32> -> vector<2x8x16xf32>
    "tpu.trace_stop"() : () -> ()
    %205 = vector.extract_strided_slice %7 {offsets = [0, 112], sizes = [16, 16], strides = [1, 1]} : vector<16x128xf32> to vector<16x16xf32>
    %206 = vector.shape_cast %205 : vector<16x16xf32> to vector<2x8x16xf32>
    %207 = vector.extract_strided_slice %138 {offsets = [0, 48], sizes = [16, 16], strides = [1, 1]} : vector<16x128xf32> to vector<16x16xf32>
    %208 = vector.shape_cast %207 : vector<16x16xf32> to vector<2x8x16xf32>
    %209 = vector.extract_strided_slice %138 {offsets = [0, 112], sizes = [16, 16], strides = [1, 1]} : vector<16x128xf32> to vector<16x16xf32>
    %210 = vector.shape_cast %209 : vector<16x16xf32> to vector<2x8x16xf32>
    %211 = arith.truncf %206 : vector<2x8x16xf32> to vector<2x8x16xbf16>
    %212 = arith.truncf %208 : vector<2x8x16xf32> to vector<2x8x16xbf16>
    "tpu.trace_start"() <{level = 10 : i32, message = "bqd,bkd->bqk"}> : () -> ()
    %cst_71 = arith.constant dense<0.000000e+00> : vector<2x8x8xf32>
    %213 = tpu.matmul %211, %212, %cst_71 {dimension_numbers = #tpu.dot_dimension_numbers<[2], [2], [1], [1], [0, 0, 0, 1, 1, 1], [0], [0]>} : vector<2x8x16xbf16>, vector<2x8x16xbf16>, vector<2x8x8xf32> -> vector<2x8x8xf32>
    "tpu.trace_stop"() : () -> ()
    %cst_72 = arith.constant dense<0xFF800000> : vector<2x8xf32>
    %214 = vector.multi_reduction <maximumf>, %213, %cst_72 [2] : vector<2x8x8xf32> to vector<2x8xf32>
    %215 = vector.shape_cast %214 : vector<2x8xf32> to vector<2x8x1xf32>
    %216 = vector.broadcast %215 : vector<2x8x1xf32> to vector<2x8x8xf32>
    %217 = arith.subf %213, %216 : vector<2x8x8xf32>
    %218 = math.exp %217 : vector<2x8x8xf32>
    %cst_73 = arith.constant dense<0.000000e+00> : vector<2x8xf32>
    %219 = vector.multi_reduction <add>, %218, %cst_73 [2] : vector<2x8x8xf32> to vector<2x8xf32>
    %220 = vector.shape_cast %219 : vector<2x8xf32> to vector<2x8x1xf32>
    %221 = tpu.reciprocal %220 {approx = true} : vector<2x8x1xf32> -> vector<2x8x1xf32>
    %222 = vector.broadcast %221 : vector<2x8x1xf32> to vector<2x8x8xf32>
    %223 = arith.mulf %218, %222 : vector<2x8x8xf32>
    %224 = arith.truncf %223 : vector<2x8x8xf32> to vector<2x8x8xbf16>
    %225 = arith.truncf %210 : vector<2x8x16xf32> to vector<2x8x16xbf16>
    "tpu.trace_start"() <{level = 10 : i32, message = "bqk,bkd->bqd"}> : () -> ()
    %cst_74 = arith.constant dense<0.000000e+00> : vector<2x8x16xf32>
    %226 = tpu.matmul %224, %225, %cst_74 {dimension_numbers = #tpu.dot_dimension_numbers<[2], [1], [1], [2], [0, 0, 0, 1, 1, 2], [0], [0]>} : vector<2x8x8xbf16>, vector<2x8x16xbf16>, vector<2x8x16xf32> -> vector<2x8x16xf32>
    "tpu.trace_stop"() : () -> ()
    %227 = tpu.concatenate %160, %182, %204, %226 in 2 : vector<2x8x16xf32>, vector<2x8x16xf32>, vector<2x8x16xf32>, vector<2x8x16xf32> -> vector<2x8x64xf32>
    %228 = vector.shape_cast %227 : vector<2x8x64xf32> to vector<16x64xf32>
    %229 = arith.truncf %228 : vector<16x64xf32> to vector<16x64xbf16>
    %c1_75 = arith.constant 1 : index
    %c0_76 = arith.constant 0 : index
    %c0_77 = arith.constant 0 : index
    %230 = vector.load %arg6[%c1_75, %c0_76, %c0_77] : memref<2x64x64xbf16, #tpu.memory_space<vmem>>, vector<1x64x64xbf16>
    %231 = vector.shape_cast %230 : vector<1x64x64xbf16> to vector<64x64xbf16>
    %cst_78 = arith.constant dense<0.000000e+00> : vector<16x64xf32>
    %232 = tpu.matmul %229, %231, %cst_78 {dimension_numbers = #tpu.dot_dimension_numbers<[1], [0], [0], [1], [0, 0, 1, 1], [], []>} : vector<16x64xbf16>, vector<64x64xbf16>, vector<16x64xf32> -> vector<16x64xf32>
    %c1_79 = arith.constant 1 : index
    %c0_80 = arith.constant 0 : index
    %c0_81 = arith.constant 0 : index
    %233 = vector.load %arg7[%c1_79, %c0_80, %c0_81] : memref<2x1x64xf32, #tpu.memory_space<vmem>>, vector<1x1x64xf32>
    %234 = vector.shape_cast %233 : vector<1x1x64xf32> to vector<1x64xf32>
    %235 = vector.broadcast %234 : vector<1x64xf32> to vector<16x64xf32>
    %236 = arith.addf %232, %235 : vector<16x64xf32>
    %237 = arith.truncf %236 : vector<16x64xf32> to vector<16x64xbf16>
    %c1_82 = arith.constant 1 : index
    %c0_83 = arith.constant 0 : index
    %c0_84 = arith.constant 0 : index
    %238 = vector.load %arg8[%c1_82, %c0_83, %c0_84] : memref<3x64x4xbf16, #tpu.memory_space<vmem>>, vector<1x64x4xbf16>
    %239 = vector.shape_cast %238 : vector<1x64x4xbf16> to vector<64x4xbf16>
    %cst_85 = arith.constant dense<0.000000e+00> : vector<16x4xf32>
    %240 = tpu.matmul %237, %239, %cst_85 {dimension_numbers = #tpu.dot_dimension_numbers<[1], [0], [0], [1], [0, 0, 1, 1], [], []>} : vector<16x64xbf16>, vector<64x4xbf16>, vector<16x4xf32> -> vector<16x4xf32>
    %241 = arith.addf %127, %240 : vector<16x4xf32>
    %c0_86 = arith.constant 0 : index
    %c0_87 = arith.constant 0 : index
    %242 = vector.load %arg10[%c0_86, %c0_87] : memref<16x4xf32, #tpu.memory_space<vmem>>, vector<16x4xf32>
    tpu.vector_store %arg10[%c0_86, %c0_87], %241 {strides = array<i32>} : memref<16x4xf32, #tpu.memory_space<vmem>>, vector<16x4xf32>,
    return
  }
}

</mosaic_0001>

<llo_original>
// kernel: seq2seq_forward.4
$region0: #{seq2seq_forward.4}
  #allocation0 [shape = 'u32[]', space=smem, size = 0x4, offset = 0x4, fixed_abs, tag = 'smem constant byte address 0x4 - core index']
  #allocation1 [shape = 'u32[144,128]{1,0:T(1,128)}', space=vmem, size = 0x12000, scoped, tag = 'internal scratch']
  %s0 = inlined_call_operand.vmem [shape: f32[16,64], index: 0, kind: input, shape index: {}]
  %s1 = inlined_call_operand.vmem [shape: bf16[64,192], index: 1, kind: input, shape index: {}]
  %s2 = inlined_call_operand.vmem [shape: bf16[64,192], index: 2, kind: input, shape index: {}]
  %s3 = inlined_call_operand.vmem [shape: f32[1,192], index: 3, kind: input, shape index: {}]
  %s4 = inlined_call_operand.vmem [shape: f32[1,192], index: 4, kind: input, shape index: {}]
  %s5 = inlined_call_operand.vmem [shape: f32[16,64], index: 5, kind: output, shape index: {}]
  %s6 = sld [smem:[#allocation0]]
  $region30: #{seq2seq_forward.4} parent=0
    _
  %s8 = ssub.s32 1, %s6
  %s9 = scalar_select 0, %s8, %s6
  // Predicated region
  $region2: #{seq2seq_forward.4} parent=0 // pred_check
    _
  $region3: #{seq2seq_forward.4} parent=0 // pred_check_branch
    %11 = sbr.rel (0) target = $region5
  $region4: #{seq2seq_forward.4} parent=0 // pred_region
    _
  $region5: #{seq2seq_forward.4} parent=0 // pred_fallthru
    _
  // Predicated region
  $region6: #{seq2seq_forward.4} parent=0 // pred_check
    _
  $region7: #{seq2seq_forward.4} parent=0 // pred_check_branch
    %13 = sbr.rel (0) target = $region9
  $region8: #{seq2seq_forward.4} parent=0 // pred_region
    _
  $region9: #{seq2seq_forward.4} parent=0 // pred_fallthru
    _
  // Predicated region
  $region10: #{seq2seq_forward.4} parent=0 // pred_check
    _
  $region11: #{seq2seq_forward.4} parent=0 // pred_check_branch
    %15 = sbr.rel (0) target = $region13
  $region12: #{seq2seq_forward.4} parent=0 // pred_region
    _
  $region13: #{seq2seq_forward.4} parent=0 // pred_fallthru
    _
  // Predicated region
  $region14: #{seq2seq_forward.4} parent=0 // pred_check
    _
  $region15: #{seq2seq_forward.4} parent=0 // pred_check_branch
    %17 = sbr.rel (0) target = $region17
  $region16: #{seq2seq_forward.4} parent=0 // pred_region
    _
  $region17: #{seq2seq_forward.4} parent=0 // pred_fallthru
    _
  // Predicated region
  $region18: #{seq2seq_forward.4} parent=0 // pred_check
    _
  $region19: #{seq2seq_forward.4} parent=0 // pred_check_branch
    %19 = sbr.rel (0) target = $region21
  $region20: #{seq2seq_forward.4} parent=0 // pred_region
    _
  $region21: #{seq2seq_forward.4} parent=0 // pred_fallthru
    _
  %v21 = vld [vmem:[%s1] sm:$0xff]
  %v22 = vld [vmem:[%s1 + $0x8] sm:$0xff]
  %v23 = vld [vmem:[%s1 + $0x10] sm:$0xff]
  %v24 = vld [vmem:[%s1 + $0x18] sm:$0xff]
  %v25 = vld [vmem:[%s1 + $0x20] sm:$0xff]
  %v26 = vld [vmem:[%s1 + $0x28] sm:$0xff]
  %v27 = vld [vmem:[%s1 + $0x30] sm:$0xff]
  %v28 = vld [vmem:[%s1 + $0x38] sm:$0xff]
  %v29 = vld [vmem:[%s2] sm:$0xff]
  %v30 = vld [vmem:[%s2 + $0x8] sm:$0xff]
  %v31 = vld [vmem:[%s2 + $0x10] sm:$0xff]
  %v32 = vld [vmem:[%s2 + $0x18] sm:$0xff]
  %v33 = vld [vmem:[%s2 + $0x20] sm:$0xff]
  %v34 = vld [vmem:[%s2 + $0x28] sm:$0xff]
  %v35 = vld [vmem:[%s2 + $0x30] sm:$0xff]
  %v36 = vld [vmem:[%s2 + $0x38] sm:$0xff]
  %v37 = vld [vmem:[%s4] sm:$0x3]
  %v38 = vld [vmem:[%s0] sm:$0xff]
  %v39 = vld [vmem:[%s0 + $0x8] sm:$0xff]
  %v40 = vpack.c.bf16 %v39, %v38
  %v41 = vld [vmem:[%s3] sm:$0x3]
  %v43 = vlaneseq
  %v44 = vshrl.u32 %v43, 7
  %v45 = vsub.s32 0, %v44
  %v46 = vrot.slane %v41, %v45
  %v47 = vlaneseq
  %v48 = vshrl.u32 %v47, 7
  %v49 = vsub.s32 1, %v48
  %v50 = vrot.slane %v41, %v49
  %v61 = vunpack.c.l.b16 %v21
  %v62 = vunpack.c.h.b16 %v21
  %v63 = vunpack.c.l.b16 %v22
  %v64 = vunpack.c.h.b16 %v22
  %v65 = vunpack.c.l.b16 %v23
  %v66 = vunpack.c.h.b16 %v23
  %v67 = vunpack.c.l.b16 %v24
  %v68 = vunpack.c.h.b16 %v24
  %v69 = vunpack.c.l.b16 %v25
  %v70 = vunpack.c.h.b16 %v25
  %v71 = vunpack.c.l.b16 %v26
  %v72 = vunpack.c.h.b16 %v26
  %v73 = vunpack.c.l.b16 %v27
  %v74 = vunpack.c.h.b16 %v27
  %v75 = vunpack.c.l.b16 %v28
  %v76 = vunpack.c.h.b16 %v28
  %v77 = vpack.c.b16 %v63, %v61
  %v78 = vpack.c.b16 %v64, %v62
  %v79 = vpack.c.b16 %v67, %v65
  %v80 = vpack.c.b16 %v68, %v66
  %v81 = vpack.c.b16 %v71, %v69
  %v82 = vpack.c.b16 %v72, %v70
  %v83 = vpack.c.b16 %v75, %v73
  %v84 = vpack.c.b16 %v76, %v74
  %vm93 = vcmask 523264
  %v95 = vsel %vm93, %v40, 0
  %97 = vmatprep.subr.bf16.mxu0 %v78
  %98 = vmatpush1.bf16.msra.mxu0 %v77
  %99 = vmatprep.subr.bf16.mxu0 %v80
  %100 = vmatpush1.bf16.msra.mxu0 %v79
  %101 = vmatprep.subr.bf16.mxu0 %v82
  %102 = vmatpush1.bf16.msra.mxu0 %v81
  %103 = vmatprep.subr.bf16.mxu0 %v84
  %104 = vmatpush1.bf16.msra.mxu0 %v83
  %105 = vmatprep.subr.bf16.mxu0 0
  %106 = vmatpush1.bf16.msra.mxu0 0
  %107 = vmatprep.subr.bf16.mxu0 0
  %108 = vmatpush1.bf16.msra.mxu0 0
  %109 = vmatprep.subr.bf16.mxu0 0
  %110 = vmatpush1.bf16.msra.mxu0 0
  %111 = vmatprep.subr.bf16.mxu0 0
  %112 = vmatpush1.bf16.msra.mxu0 0
  %113 = vmatprep.subr.bf16.mxu0 0
  %114 = vmatpush1.bf16.msra.mxu0 0
  %115 = vmatprep.subr.bf16.mxu0 0
  %116 = vmatpush1.bf16.msra.mxu0 0
  %117 = vmatprep.subr.bf16.mxu0 0
  %118 = vmatpush1.bf16.msra.mxu0 0
  %119 = vmatprep.subr.bf16.mxu0 0
  %120 = vmatpush1.bf16.msra.mxu0 0
  %121 = vmatprep.subr.bf16.mxu0 0
  %122 = vmatpush1.bf16.msra.mxu0 0
  %123 = vmatprep.subr.bf16.mxu0 0
  %124 = vmatpush1.bf16.msra.mxu0 0
  %125 = vmatprep.subr.bf16.mxu0 0
  %126 = vmatpush1.bf16.msra.mxu0 0
  %127 = vmatprep.subr.bf16.mxu0 0
  %128 = vmatpush1.bf16.msra.mxu0 0
  %129 = vmatprep.mubr.bf16.mxu0 0
  %130 = vmatmul.mubr.bf16.gmra.mrb[0].mxu0 %v95
  %v131 = vpop.f32.mrb[0].mxu0
  %v132 = vadd.f32 %v46, %v131
  %v133 = vpop.f32.mrb[0].mxu0
  %v134 = vadd.f32 %v50, %v133
  %v135 = vpop.f32.mrb[0].mxu0
  %v136 = vadd.f32 %v46, %v135
  %v137 = vpop.f32.mrb[0].mxu0
  %v138 = vadd.f32 %v50, %v137
  %139 = vdwg.mxu0
  %v141 = vlaneseq
  %v142 = vshrl.u32 %v141, 7
  %v143 = vsub.s32 0, %v142
  %v144 = vrot.slane %v37, %v143
  %v145 = vlaneseq
  %v146 = vshrl.u32 %v145, 7
  %v147 = vsub.s32 1, %v146
  %v148 = vrot.slane %v37, %v147
  %v159 = vunpack.c.l.b16 %v29
  %v160 = vunpack.c.h.b16 %v29
  %v161 = vunpack.c.l.b16 %v30
  %v162 = vunpack.c.h.b16 %v30
  %v163 = vunpack.c.l.b16 %v31
  %v164 = vunpack.c.h.b16 %v31
  %v165 = vunpack.c.l.b16 %v32
  %v166 = vunpack.c.h.b16 %v32
  %v167 = vunpack.c.l.b16 %v33
  %v168 = vunpack.c.h.b16 %v33
  %v169 = vunpack.c.l.b16 %v34
  %v170 = vunpack.c.h.b16 %v34
  %v171 = vunpack.c.l.b16 %v35
  %v172 = vunpack.c.h.b16 %v35
  %v173 = vunpack.c.l.b16 %v36
  %v174 = vunpack.c.h.b16 %v36
  %v175 = vpack.c.b16 %v161, %v159
  %v176 = vpack.c.b16 %v162, %v160
  %v177 = vpack.c.b16 %v165, %v163
  %v178 = vpack.c.b16 %v166, %v164
  %v179 = vpack.c.b16 %v169, %v167
  %v180 = vpack.c.b16 %v170, %v168
  %v181 = vpack.c.b16 %v173, %v171
  %v182 = vpack.c.b16 %v174, %v172
  %v192 = vsel %vm93, 0, 0
  %194 = vmatprep.subr.bf16.mxu0 %v176
  %195 = vmatpush1.bf16.msra.mxu0 %v175
  %196 = vmatprep.subr.bf16.mxu0 %v178
  %197 = vmatpush1.bf16.msra.mxu0 %v177
  %198 = vmatprep.subr.bf16.mxu0 %v180
  %199 = vmatpush1.bf16.msra.mxu0 %v179
  %200 = vmatprep.subr.bf16.mxu0 %v182
  %201 = vmatpush1.bf16.msra.mxu0 %v181
  %202 = vmatprep.subr.bf16.mxu0 0
  %203 = vmatpush1.bf16.msra.mxu0 0
  %204 = vmatprep.subr.bf16.mxu0 0
  %205 = vmatpush1.bf16.msra.mxu0 0
  %206 = vmatprep.subr.bf16.mxu0 0
  %207 = vmatpush1.bf16.msra.mxu0 0
  %208 = vmatprep.subr.bf16.mxu0 0
  %209 = vmatpush1.bf16.msra.mxu0 0
  %210 = vmatprep.subr.bf16.mxu0 0
  %211 = vmatpush1.bf16.msra.mxu0 0
  %212 = vmatprep.subr.bf16.mxu0 0
  %213 = vmatpush1.bf16.msra.mxu0 0
  %214 = vmatprep.subr.bf16.mxu0 0
  %215 = vmatpush1.bf16.msra.mxu0 0
  %216 = vmatprep.subr.bf16.mxu0 0
  %217 = vmatpush1.bf16.msra.mxu0 0
  %218 = vmatprep.subr.bf16.mxu0 0
  %219 = vmatpush1.bf16.msra.mxu0 0
  %220 = vmatprep.subr.bf16.mxu0 0
  %221 = vmatpush1.bf16.msra.mxu0 0
  %222 = vmatprep.subr.bf16.mxu0 0
  %223 = vmatpush1.bf16.msra.mxu0 0
  %224 = vmatprep.subr.bf16.mxu0 0
  %225 = vmatpush1.bf16.msra.mxu0 0
  %226 = vmatprep.mubr.bf16.mxu0 0
  %227 = vmatmul.mubr.bf16.gmra.mrb[0].mxu0 %v192
  %v228 = vpop.f32.mrb[0].mxu0
  %v229 = vadd.f32 %v144, %v228
  %v230 = vpop.f32.mrb[0].mxu0
  %v231 = vadd.f32 %v148, %v230
  %v232 = vpop.f32.mrb[0].mxu0
  %v233 = vpop.f32.mrb[0].mxu0
  %234 = vdwg.mxu0
  %v235 = vadd.f32 %v132, %v229
  %v236 = vxor.u32 %v235, 2147483648
  %v237 = vmul.f32 %v236, 1.442695
  %v238 = vpow.pop %v237
  %v239 = vadd.f32 %v238, 1.0
  %v240 = vrcp.pop %v239
  %v241 = vmul.f32 1.0, %v240
  %v242 = vmul.f32 %v241, %v231
  %v243 = vadd.f32 %v134, %v242
  %v244 = vtanh.pop %v243
  %v245 = vsub.f32 1.0, %v241
  %247 = vrot.lane.b32.xlu0 %v244, 64
  %v248 = vpop.permute.xlu0 %247
  %v250 = vmul.f32 %v245, %v248
  %v251 = vmul.f32 %v241, 0.0
  %v252 = vadd.f32 %v250, %v251
  %254 = vrot.lane.b32.xlu0 %v252, 64
  %v255 = vpop.permute.xlu0 %254
  %vm257 = vcmask 517120
  %258 = vst.msk [vmem:[%s5] sm:$0x3] %vm257, %v255
  %v259 = vpack.c.bf16 %v252, %v252
  %261 = vrot.lane.b32.xlu0 %v259, 64
  %v262 = vpop.permute.xlu0 %261
  %v264 = vsel %vm93, %v262, 0
  %266 = vmatprep.subr.bf16.mxu0 %v176
  %267 = vmatpush1.bf16.msra.mxu0 %v175
  %268 = vmatprep.subr.bf16.mxu0 %v178
  %269 = vmatpush1.bf16.msra.mxu0 %v177
  %270 = vmatprep.subr.bf16.mxu0 %v180
  %271 = vmatpush1.bf16.msra.mxu0 %v179
  %272 = vmatprep.subr.bf16.mxu0 %v182
  %273 = vmatpush1.bf16.msra.mxu0 %v181
  %274 = vmatprep.subr.bf16.mxu0 0
  %275 = vmatpush1.bf16.msra.mxu0 0
  %276 = vmatprep.subr.bf16.mxu0 0
  %277 = vmatpush1.bf16.msra.mxu0 0
  %278 = vmatprep.subr.bf16.mxu0 0
  %279 = vmatpush1.bf16.msra.mxu0 0
  %280 = vmatprep.subr.bf16.mxu0 0
  %281 = vmatpush1.bf16.msra.mxu0 0
  %282 = vmatprep.subr.bf16.mxu0 0
  %283 = vmatpush1.bf16.msra.mxu0 0
  %284 = vmatprep.subr.bf16.mxu0 0
  %285 = vmatpush1.bf16.msra.mxu0 0
  %286 = vmatprep.subr.bf16.mxu0 0
  %287 = vmatpush1.bf16.msra.mxu0 0
  %288 = vmatprep.subr.bf16.mxu0 0
  %289 = vmatpush1.bf16.msra.mxu0 0
  %290 = vmatprep.subr.bf16.mxu0 0
  %291 = vmatpush1.bf16.msra.mxu0 0
  %292 = vmatprep.subr.bf16.mxu0 0
  %293 = vmatpush1.bf16.msra.mxu0 0
  %294 = vmatprep.subr.bf16.mxu0 0
  %295 = vmatpush1.bf16.msra.mxu0 0
  %296 = vmatprep.subr.bf16.mxu0 0
  %297 = vmatpush1.bf16.msra.mxu0 0
  %298 = vmatprep.mubr.bf16.mxu0 0
  %299 = vmatmul.mubr.bf16.gmra.mrb[0].mxu0 %v264
  %v300 = vpop.f32.mrb[0].mxu0
  %v301 = vadd.f32 %v144, %v300
  %v302 = vpop.f32.mrb[0].mxu0
  %v303 = vadd.f32 %v148, %v302
  %v304 = vpop.f32.mrb[0].mxu0
  %v305 = vpop.f32.mrb[0].mxu0
  %306 = vdwg.mxu0
  %v308 = vrot.slane %v301, 6
  %v310 = vadd.f32 %v132, %v308
  %v311 = vxor.u32 %v310, 2147483648
  %v312 = vmul.f32 %v311, 1.442695
  %v313 = vpow.pop %v312
  %v314 = vadd.f32 %v313, 1.0
  %v315 = vrcp.pop %v314
  %v316 = vmul.f32 1.0, %v315
  %v318 = vrot.slane %v303, 6
  %v320 = vmul.f32 %v316, %v318
  %v321 = vadd.f32 %v134, %v320
  %v322 = vtanh.pop %v321
  %v323 = vsub.f32 1.0, %v316
  %325 = vrot.lane.b32.xlu0 %v322, 64
  %v326 = vpop.permute.xlu0 %325
  %v328 = vmul.f32 %v323, %v326
  %v329 = vrot.slane %v252, 6
  %v331 = vmul.f32 %v316, %v329
  %v332 = vadd.f32 %v328, %v331
  %334 = vrot.lane.b32.xlu0 %v332, 64
  %v335 = vpop.permute.xlu0 %334
  %vm337 = vcmask 519170
  %338 = vst.msk [vmem:[%s5] sm:$0xc] %vm337, %v335
  %v339 = vpack.c.bf16 %v332, %v332
  %v341 = vrot.slane %v339, 1
  %342 = vrot.lane.b32.xlu0 %v341, 64
  %v343 = vpop.permute.xlu0 %342
  %v345 = vsel %vm93, %v343, 0
  %347 = vmatprep.subr.bf16.mxu0 %v176
  %348 = vmatpush1.bf16.msra.mxu0 %v175
  %349 = vmatprep.subr.bf16.mxu0 %v178
  %350 = vmatpush1.bf16.msra.mxu0 %v177
  %351 = vmatprep.subr.bf16.mxu0 %v180
  %352 = vmatpush1.bf16.msra.mxu0 %v179
  %353 = vmatprep.subr.bf16.mxu0 %v182
  %354 = vmatpush1.bf16.msra.mxu0 %v181
  %355 = vmatprep.subr.bf16.mxu0 0
  %356 = vmatpush1.bf16.msra.mxu0 0
  %357 = vmatprep.subr.bf16.mxu0 0
  %358 = vmatpush1.bf16.msra.mxu0 0
  %359 = vmatprep.subr.bf16.mxu0 0
  %360 = vmatpush1.bf16.msra.mxu0 0
  %361 = vmatprep.subr.bf16.mxu0 0
  %362 = vmatpush1.bf16.msra.mxu0 0
  %363 = vmatprep.subr.bf16.mxu0 0
  %364 = vmatpush1.bf16.msra.mxu0 0
  %365 = vmatprep.subr.bf16.mxu0 0
  %366 = vmatpush1.bf16.msra.mxu0 0
  %367 = vmatprep.subr.bf16.mxu0 0
  %368 = vmatpush1.bf16.msra.mxu0 0
  %369 = vmatprep.subr.bf16.mxu0 0
  %370 = vmatpush1.bf16.msra.mxu0 0
  %371 = vmatprep.subr.bf16.mxu0 0
  %372 = vmatpush1.bf16.msra.mxu0 0
  %373 = vmatprep.subr.bf16.mxu0 0
  %374 = vmatpush1.bf16.msra.mxu0 0
  %375 = vmatprep.subr.bf16.mxu0 0
  %376 = vmatpush1.bf16.msra.mxu0 0
  %377 = vmatprep.subr.bf16.mxu0 0
  %378 = vmatpush1.bf16.msra.mxu0 0
  %379 = vmatprep.mubr.bf16.mxu0 0
  %380 = vmatmul.mubr.bf16.gmra.mrb[0].mxu0 %v345
  %v381 = vpop.f32.mrb[0].mxu0
  %v382 = vadd.f32 %v144, %v381
  %v383 = vpop.f32.mrb[0].mxu0
  %v384 = vadd.f32 %v148, %v383
  %v385 = vpop.f32.mrb[0].mxu0
  %v386 = vpop.f32.mrb[0].mxu0
  %387 = vdwg.mxu0
  %v389 = vrot.slane %v382, 4
  %v391 = vadd.f32 %v132, %v389
  %v392 = vxor.u32 %v391, 2147483648
  %v393 = vmul.f32 %v392, 1.442695
  %v394 = vpow.pop %v393
  %v395 = vadd.f32 %v394, 1.0
  %v396 = vrcp.pop %v395
  %v397 = vmul.f32 1.0, %v396
  %v399 = vrot.slane %v384, 4
  %v401 = vmul.f32 %v397, %v399
  %v402 = vadd.f32 %v134, %v401
  %v403 = vtanh.pop %v402
  %v404 = vsub.f32 1.0, %v397
  %406 = vrot.lane.b32.xlu0 %v403, 64
  %v407 = vpop.permute.xlu0 %406
  %v409 = vmul.f32 %v404, %v407
  %v410 = vrot.slane %v332, 6
  %v412 = vmul.f32 %v397, %v410
  %v413 = vadd.f32 %v409, %v412
  %415 = vrot.lane.b32.xlu0 %v413, 64
  %v416 = vpop.permute.xlu0 %415
  %vm418 = vcmask 521220
  %419 = vst.msk [vmem:[%s5] sm:$0x30] %vm418, %v416
  %v420 = vpack.c.bf16 %v413, %v413
  %v422 = vrot.slane %v420, 2
  %423 = vrot.lane.b32.xlu0 %v422, 64
  %v424 = vpop.permute.xlu0 %423
  %v426 = vsel %vm93, %v424, 0
  %428 = vmatprep.subr.bf16.mxu0 %v176
  %429 = vmatpush1.bf16.msra.mxu0 %v175
  %430 = vmatprep.subr.bf16.mxu0 %v178
  %431 = vmatpush1.bf16.msra.mxu0 %v177
  %432 = vmatprep.subr.bf16.mxu0 %v180
  %433 = vmatpush1.bf16.msra.mxu0 %v179
  %434 = vmatprep.subr.bf16.mxu0 %v182
  %435 = vmatpush1.bf16.msra.mxu0 %v181
  %436 = vmatprep.subr.bf16.mxu0 0
  %437 = vmatpush1.bf16.msra.mxu0 0
  %438 = vmatprep.subr.bf16.mxu0 0
  %439 = vmatpush1.bf16.msra.mxu0 0
  %440 = vmatprep.subr.bf16.mxu0 0
  %441 = vmatpush1.bf16.msra.mxu0 0
  %442 = vmatprep.subr.bf16.mxu0 0
  %443 = vmatpush1.bf16.msra.mxu0 0
  %444 = vmatprep.subr.bf16.mxu0 0
  %445 = vmatpush1.bf16.msra.mxu0 0
  %446 = vmatprep.subr.bf16.mxu0 0
  %447 = vmatpush1.bf16.msra.mxu0 0
  %448 = vmatprep.subr.bf16.mxu0 0
  %449 = vmatpush1.bf16.msra.mxu0 0
  %450 = vmatprep.subr.bf16.mxu0 0
  %451 = vmatpush1.bf16.msra.mxu0 0
  %452 = vmatprep.subr.bf16.mxu0 0
  %453 = vmatpush1.bf16.msra.mxu0 0
  %454 = vmatprep.subr.bf16.mxu0 0
  %455 = vmatpush1.bf16.msra.mxu0 0
  %456 = vmatprep.subr.bf16.mxu0 0
  %457 = vmatpush1.bf16.msra.mxu0 0
  %458 = vmatprep.subr.bf16.mxu0 0
  %459 = vmatpush1.bf16.msra.mxu0 0
  %460 = vmatprep.mubr.bf16.mxu0 0
  %461 = vmatmul.mubr.bf16.gmra.mrb[0].mxu0 %v426
  %v462 = vpop.f32.mrb[0].mxu0
  %v463 = vadd.f32 %v144, %v462
  %v464 = vpop.f32.mrb[0].mxu0
  %v465 = vadd.f32 %v148, %v464
  %v466 = vpop.f32.mrb[0].mxu0
  %v467 = vpop.f32.mrb[0].mxu0
  %468 = vdwg.mxu0
  %v470 = vrot.slane %v463, 2
  %v472 = vadd.f32 %v132, %v470
  %v473 = vxor.u32 %v472, 2147483648
  %v474 = vmul.f32 %v473, 1.442695
  %v475 = vpow.pop %v474
  %v476 = vadd.f32 %v475, 1.0
  %v477 = vrcp.pop %v476
  %v478 = vmul.f32 1.0, %v477
  %v480 = vrot.slane %v465, 2
  %v482 = vmul.f32 %v478, %v480
  %v483 = vadd.f32 %v134, %v482
  %v484 = vtanh.pop %v483
  %v485 = vsub.f32 1.0, %v478
  %487 = vrot.lane.b32.xlu0 %v484, 64
  %v488 = vpop.permute.xlu0 %487
  %v490 = vmul.f32 %v485, %v488
  %v491 = vrot.slane %v413, 6
  %v493 = vmul.f32 %v478, %v491
  %v494 = vadd.f32 %v490, %v493
  %496 = vrot.lane.b32.xlu0 %v494, 64
  %v497 = vpop.permute.xlu0 %496
  %vm499 = vcmask 523270
  %500 = vst.msk [vmem:[%s5] sm:$0xc0] %vm499, %v497
  %v501 = vpack.c.bf16 %v494, %v494
  %v503 = vrot.slane %v501, 3
  %504 = vrot.lane.b32.xlu0 %v503, 64
  %v505 = vpop.permute.xlu0 %504
  %v507 = vsel %vm93, %v505, 0
  %509 = vmatprep.subr.bf16.mxu0 %v176
  %510 = vmatpush1.bf16.msra.mxu0 %v175
  %511 = vmatprep.subr.bf16.mxu0 %v178
  %512 = vmatpush1.bf16.msra.mxu0 %v177
  %513 = vmatprep.subr.bf16.mxu0 %v180
  %514 = vmatpush1.bf16.msra.mxu0 %v179
  %515 = vmatprep.subr.bf16.mxu0 %v182
  %516 = vmatpush1.bf16.msra.mxu0 %v181
  %517 = vmatprep.subr.bf16.mxu0 0
  %518 = vmatpush1.bf16.msra.mxu0 0
  %519 = vmatprep.subr.bf16.mxu0 0
  %520 = vmatpush1.bf16.msra.mxu0 0
  %521 = vmatprep.subr.bf16.mxu0 0
  %522 = vmatpush1.bf16.msra.mxu0 0
  %523 = vmatprep.subr.bf16.mxu0 0
  %524 = vmatpush1.bf16.msra.mxu0 0
  %525 = vmatprep.subr.bf16.mxu0 0
  %526 = vmatpush1.bf16.msra.mxu0 0
  %527 = vmatprep.subr.bf16.mxu0 0
  %528 = vmatpush1.bf16.msra.mxu0 0
  %529 = vmatprep.subr.bf16.mxu0 0
  %530 = vmatpush1.bf16.msra.mxu0 0
  %531 = vmatprep.subr.bf16.mxu0 0
  %532 = vmatpush1.bf16.msra.mxu0 0
  %533 = vmatprep.subr.bf16.mxu0 0
  %534 = vmatpush1.bf16.msra.mxu0 0
  %535 = vmatprep.subr.bf16.mxu0 0
  %536 = vmatpush1.bf16.msra.mxu0 0
  %537 = vmatprep.subr.bf16.mxu0 0
  %538 = vmatpush1.bf16.msra.mxu0 0
  %539 = vmatprep.subr.bf16.mxu0 0
  %540 = vmatpush1.bf16.msra.mxu0 0
  %541 = vmatprep.mubr.bf16.mxu0 0
  %542 = vmatmul.mubr.bf16.gmra.mrb[0].mxu0 %v507
  %v543 = vpop.f32.mrb[0].mxu0
  %v544 = vadd.f32 %v144, %v543
  %v545 = vpop.f32.mrb[0].mxu0
  %v546 = vadd.f32 %v148, %v545
  %v547 = vpop.f32.mrb[0].mxu0
  %v548 = vpop.f32.mrb[0].mxu0
  %549 = vdwg.mxu0
  %v550 = vadd.f32 %v136, %v544
  %v551 = vxor.u32 %v550, 2147483648
  %v552 = vmul.f32 %v551, 1.442695
  %v553 = vpow.pop %v552
  %v554 = vadd.f32 %v553, 1.0
  %v555 = vrcp.pop %v554
  %v556 = vmul.f32 1.0, %v555
  %v557 = vmul.f32 %v556, %v546
  %v558 = vadd.f32 %v138, %v557
  %v559 = vtanh.pop %v558
  %v560 = vsub.f32 1.0, %v556
  %562 = vrot.lane.b32.xlu0 %v559, 64
  %v563 = vpop.permute.xlu0 %562
  %v565 = vmul.f32 %v560, %v563
  %v566 = vrot.slane %v494, 6
  %v568 = vmul.f32 %v556, %v566
  %v569 = vadd.f32 %v565, %v568
  %571 = vrot.lane.b32.xlu0 %v569, 64
  %v572 = vpop.permute.xlu0 %571
  %574 = vst.msk [vmem:[%s5 + $0x8] sm:$0x3] %vm257, %v572
  %v575 = vpack.c.bf16 %v569, %v569
  %577 = vrot.lane.b32.xlu0 %v575, 64
  %v578 = vpop.permute.xlu0 %577
  %v580 = vsel %vm93, %v578, 0
  %582 = vmatprep.subr.bf16.mxu0 %v176
  %583 = vmatpush1.bf16.msra.mxu0 %v175
  %584 = vmatprep.subr.bf16.mxu0 %v178
  %585 = vmatpush1.bf16.msra.mxu0 %v177
  %586 = vmatprep.subr.bf16.mxu0 %v180
  %587 = vmatpush1.bf16.msra.mxu0 %v179
  %588 = vmatprep.subr.bf16.mxu0 %v182
  %589 = vmatpush1.bf16.msra.mxu0 %v181
  %590 = vmatprep.subr.bf16.mxu0 0
  %591 = vmatpush1.bf16.msra.mxu0 0
  %592 = vmatprep.subr.bf16.mxu0 0
  %593 = vmatpush1.bf16.msra.mxu0 0
  %594 = vmatprep.subr.bf16.mxu0 0
  %595 = vmatpush1.bf16.msra.mxu0 0
  %596 = vmatprep.subr.bf16.mxu0 0
  %597 = vmatpush1.bf16.msra.mxu0 0
  %598 = vmatprep.subr.bf16.mxu0 0
  %599 = vmatpush1.bf16.msra.mxu0 0
  %600 = vmatprep.subr.bf16.mxu0 0
  %601 = vmatpush1.bf16.msra.mxu0 0
  %602 = vmatprep.subr.bf16.mxu0 0
  %603 = vmatpush1.bf16.msra.mxu0 0
  %604 = vmatprep.subr.bf16.mxu0 0
  %605 = vmatpush1.bf16.msra.mxu0 0
  %606 = vmatprep.subr.bf16.mxu0 0
  %607 = vmatpush1.bf16.msra.mxu0 0
  %608 = vmatprep.subr.bf16.mxu0 0
  %609 = vmatpush1.bf16.msra.mxu0 0
  %610 = vmatprep.subr.bf16.mxu0 0
  %611 = vmatpush1.bf16.msra.mxu0 0
  %612 = vmatprep.subr.bf16.mxu0 0
  %613 = vmatpush1.bf16.msra.mxu0 0
  %614 = vmatprep.mubr.bf16.mxu0 0
  %615 = vmatmul.mubr.bf16.gmra.mrb[0].mxu0 %v580
  %v616 = vpop.f32.mrb[0].mxu0
  %v617 = vadd.f32 %v144, %v616
  %v618 = vpop.f32.mrb[0].mxu0
  %v619 = vadd.f32 %v148, %v618
  %v620 = vpop.f32.mrb[0].mxu0
  %v621 = vpop.f32.mrb[0].mxu0
  %622 = vdwg.mxu0
  %v624 = vrot.slane %v617, 6
  %v626 = vadd.f32 %v136, %v624
  %v627 = vxor.u32 %v626, 2147483648
  %v628 = vmul.f32 %v627, 1.442695
  %v629 = vpow.pop %v628
  %v630 = vadd.f32 %v629, 1.0
  %v631 = vrcp.pop %v630
  %v632 = vmul.f32 1.0, %v631
  %v634 = vrot.slane %v619, 6
  %v636 = vmul.f32 %v632, %v634
  %v637 = vadd.f32 %v138, %v636
  %v638 = vtanh.pop %v637
  %v639 = vsub.f32 1.0, %v632
  %641 = vrot.lane.b32.xlu0 %v638, 64
  %v642 = vpop.permute.xlu0 %641
  %v644 = vmul.f32 %v639, %v642
  %v645 = vrot.slane %v569, 6
  %v647 = vmul.f32 %v632, %v645
  %v648 = vadd.f32 %v644, %v647
  %650 = vrot.lane.b32.xlu0 %v648, 64
  %v651 = vpop.permute.xlu0 %650
  %653 = vst.msk [vmem:[%s5 + $0x8] sm:$0xc] %vm337, %v651
  %v654 = vpack.c.bf16 %v648, %v648
  %v656 = vrot.slane %v654, 1
  %657 = vrot.lane.b32.xlu0 %v656, 64
  %v658 = vpop.permute.xlu0 %657
  %v660 = vsel %vm93, %v658, 0
  %662 = vmatprep.subr.bf16.mxu0 %v176
  %663 = vmatpush1.bf16.msra.mxu0 %v175
  %664 = vmatprep.subr.bf16.mxu0 %v178
  %665 = vmatpush1.bf16.msra.mxu0 %v177
  %666 = vmatprep.subr.bf16.mxu0 %v180
  %667 = vmatpush1.bf16.msra.mxu0 %v179
  %668 = vmatprep.subr.bf16.mxu0 %v182
  %669 = vmatpush1.bf16.msra.mxu0 %v181
  %670 = vmatprep.subr.bf16.mxu0 0
  %671 = vmatpush1.bf16.msra.mxu0 0
  %672 = vmatprep.subr.bf16.mxu0 0
  %673 = vmatpush1.bf16.msra.mxu0 0
  %674 = vmatprep.subr.bf16.mxu0 0
  %675 = vmatpush1.bf16.msra.mxu0 0
  %676 = vmatprep.subr.bf16.mxu0 0
  %677 = vmatpush1.bf16.msra.mxu0 0
  %678 = vmatprep.subr.bf16.mxu0 0
  %679 = vmatpush1.bf16.msra.mxu0 0
  %680 = vmatprep.subr.bf16.mxu0 0
  %681 = vmatpush1.bf16.msra.mxu0 0
  %682 = vmatprep.subr.bf16.mxu0 0
  %683 = vmatpush1.bf16.msra.mxu0 0
  %684 = vmatprep.subr.bf16.mxu0 0
  %685 = vmatpush1.bf16.msra.mxu0 0
  %686 = vmatprep.subr.bf16.mxu0 0
  %687 = vmatpush1.bf16.msra.mxu0 0
  %688 = vmatprep.subr.bf16.mxu0 0
  %689 = vmatpush1.bf16.msra.mxu0 0
  %690 = vmatprep.subr.bf16.mxu0 0
  %691 = vmatpush1.bf16.msra.mxu0 0
  %692 = vmatprep.subr.bf16.mxu0 0
  %693 = vmatpush1.bf16.msra.mxu0 0
  %694 = vmatprep.mubr.bf16.mxu0 0
  %695 = vmatmul.mubr.bf16.gmra.mrb[0].mxu0 %v660
  %v696 = vpop.f32.mrb[0].mxu0
  %v697 = vadd.f32 %v144, %v696
  %v698 = vpop.f32.mrb[0].mxu0
  %v699 = vadd.f32 %v148, %v698
  %v700 = vpop.f32.mrb[0].mxu0
  %v701 = vpop.f32.mrb[0].mxu0
  %702 = vdwg.mxu0
  %v704 = vrot.slane %v697, 4
  %v706 = vadd.f32 %v136, %v704
  %v707 = vxor.u32 %v706, 2147483648
  %v708 = vmul.f32 %v707, 1.442695
  %v709 = vpow.pop %v708
  %v710 = vadd.f32 %v709, 1.0
  %v711 = vrcp.pop %v710
  %v712 = vmul.f32 1.0, %v711
  %v714 = vrot.slane %v699, 4
  %v716 = vmul.f32 %v712, %v714
  %v717 = vadd.f32 %v138, %v716
  %v718 = vtanh.pop %v717
  %v719 = vsub.f32 1.0, %v712
  %721 = vrot.lane.b32.xlu0 %v718, 64
  %v722 = vpop.permute.xlu0 %721
  %v724 = vmul.f32 %v719, %v722
  %v725 = vrot.slane %v648, 6
  %v727 = vmul.f32 %v712, %v725
  %v728 = vadd.f32 %v724, %v727
  %730 = vrot.lane.b32.xlu0 %v728, 64
  %v731 = vpop.permute.xlu0 %730
  %733 = vst.msk [vmem:[%s5 + $0x8] sm:$0x30] %vm418, %v731
  %v734 = vpack.c.bf16 %v728, %v728
  %v736 = vrot.slane %v734, 2
  %737 = vrot.lane.b32.xlu0 %v736, 64
  %v738 = vpop.permute.xlu0 %737
  %v740 = vsel %vm93, %v738, 0
  %742 = vmatprep.subr.bf16.mxu0 %v176
  %743 = vmatpush1.bf16.msra.mxu0 %v175
  %744 = vmatprep.subr.bf16.mxu0 %v178
  %745 = vmatpush1.bf16.msra.mxu0 %v177
  %746 = vmatprep.subr.bf16.mxu0 %v180
  %747 = vmatpush1.bf16.msra.mxu0 %v179
  %748 = vmatprep.subr.bf16.mxu0 %v182
  %749 = vmatpush1.bf16.msra.mxu0 %v181
  %750 = vmatprep.subr.bf16.mxu0 0
  %751 = vmatpush1.bf16.msra.mxu0 0
  %752 = vmatprep.subr.bf16.mxu0 0
  %753 = vmatpush1.bf16.msra.mxu0 0
  %754 = vmatprep.subr.bf16.mxu0 0
  %755 = vmatpush1.bf16.msra.mxu0 0
  %756 = vmatprep.subr.bf16.mxu0 0
  %757 = vmatpush1.bf16.msra.mxu0 0
  %758 = vmatprep.subr.bf16.mxu0 0
  %759 = vmatpush1.bf16.msra.mxu0 0
  %760 = vmatprep.subr.bf16.mxu0 0
  %761 = vmatpush1.bf16.msra.mxu0 0
  %762 = vmatprep.subr.bf16.mxu0 0
  %763 = vmatpush1.bf16.msra.mxu0 0
  %764 = vmatprep.subr.bf16.mxu0 0
  %765 = vmatpush1.bf16.msra.mxu0 0
  %766 = vmatprep.subr.bf16.mxu0 0
  %767 = vmatpush1.bf16.msra.mxu0 0
  %768 = vmatprep.subr.bf16.mxu0 0
  %769 = vmatpush1.bf16.msra.mxu0 0
  %770 = vmatprep.subr.bf16.mxu0 0
  %771 = vmatpush1.bf16.msra.mxu0 0
  %772 = vmatprep.subr.bf16.mxu0 0
  %773 = vmatpush1.bf16.msra.mxu0 0
  %774 = vmatprep.mubr.bf16.mxu0 0
  %775 = vmatmul.mubr.bf16.gmra.mrb[0].mxu0 %v740
  %v776 = vpop.f32.mrb[0].mxu0
  %v777 = vadd.f32 %v144, %v776
  %v778 = vpop.f32.mrb[0].mxu0
  %v779 = vadd.f32 %v148, %v778
  %v780 = vpop.f32.mrb[0].mxu0
  %v781 = vpop.f32.mrb[0].mxu0
  %782 = vdwg.mxu0
  %v784 = vrot.slane %v777, 2
  %v786 = vadd.f32 %v136, %v784
  %v787 = vxor.u32 %v786, 2147483648
  %v788 = vmul.f32 %v787, 1.442695
  %v789 = vpow.pop %v788
  %v790 = vadd.f32 %v789, 1.0
  %v791 = vrcp.pop %v790
  %v792 = vmul.f32 1.0, %v791
  %v794 = vrot.slane %v779, 2
  %v796 = vmul.f32 %v792, %v794
  %v797 = vadd.f32 %v138, %v796
  %v798 = vtanh.pop %v797
  %v799 = vsub.f32 1.0, %v792
  %801 = vrot.lane.b32.xlu0 %v798, 64
  %v802 = vpop.permute.xlu0 %801
  %v804 = vmul.f32 %v799, %v802
  %v805 = vrot.slane %v728, 6
  %v807 = vmul.f32 %v792, %v805
  %v808 = vadd.f32 %v804, %v807
  %810 = vrot.lane.b32.xlu0 %v808, 64
  %v811 = vpop.permute.xlu0 %810
  %813 = vst.msk [vmem:[%s5 + $0x8] sm:$0xc0] %vm499, %v811
  // Predicated region
  $region22: #{seq2seq_forward.4} parent=0 // pred_check
    _
  $region23: #{seq2seq_forward.4} parent=0 // pred_check_branch
    %815 = sbr.rel (0) target = $region25
  $region24: #{seq2seq_forward.4} parent=0 // pred_region
    _
  $region25: #{seq2seq_forward.4} parent=0 // pred_fallthru
    _
  // Predicated region
  $region26: #{seq2seq_forward.4} parent=0 // pred_check
    _
  $region27: #{seq2seq_forward.4} parent=0 // pred_check_branch
    %817 = sbr.rel (0) target = $region29
  $region28: #{seq2seq_forward.4} parent=0 // pred_region
    _
  $region29: #{seq2seq_forward.4} parent=0 // pred_fallthru
    _

// kernel: seq2seq_forward.5
$region0: #{seq2seq_forward.5}
  #allocation0 [shape = 'u32[]', space=smem, size = 0x4, offset = 0x4, fixed_abs, tag = 'smem constant byte address 0x4 - core index']
  #allocation1 [shape = 'u32[144,128]{1,0:T(1,128)}', space=vmem, size = 0x12000, scoped, tag = 'internal scratch']
  %s0 = inlined_call_operand.vmem [shape: f32[2,8,64], index: 0, kind: input, shape index: {}]
  %s1 = inlined_call_operand.vmem [shape: f32[2,2,8,64], index: 1, kind: input, shape index: {}]
  %s2 = inlined_call_operand.vmem [shape: bf16[64,128], index: 2, kind: input, shape index: {}]
  %s3 = inlined_call_operand.vmem [shape: f32[1,128], index: 3, kind: input, shape index: {}]
  %s4 = inlined_call_operand.vmem [shape: bf16[2,64,128], index: 4, kind: input, shape index: {}]
  %s5 = inlined_call_operand.vmem [shape: f32[2,1,128], index: 5, kind: input, shape index: {}]
  %s6 = inlined_call_operand.vmem [shape: bf16[2,64,64], index: 6, kind: input, shape index: {}]
  %s7 = inlined_call_operand.vmem [shape: f32[2,1,64], index: 7, kind: input, shape index: {}]
  %s8 = inlined_call_operand.vmem [shape: bf16[3,64,4], index: 8, kind: input, shape index: {}]
  %s9 = inlined_call_operand.vmem [shape: f32[1,4], index: 9, kind: input, shape index: {}]
  %s10 = inlined_call_operand.vmem [shape: f32[16,4], index: 10, kind: output, shape index: {}]
  %s11 = sld [smem:[#allocation0]]
  $region50: #{seq2seq_forward.5} parent=0
    _
  %s13 = ssub.s32 1, %s11
  %s14 = scalar_select 0, %s13, %s11
  // Predicated region
  $region2: #{seq2seq_forward.5} parent=0 // pred_check
    _
  $region3: #{seq2seq_forward.5} parent=0 // pred_check_branch
    %16 = sbr.rel (0) target = $region5
  $region4: #{seq2seq_forward.5} parent=0 // pred_region
    _
  $region5: #{seq2seq_forward.5} parent=0 // pred_fallthru
    _
  // Predicated region
  $region6: #{seq2seq_forward.5} parent=0 // pred_check
    _
  $region7: #{seq2seq_forward.5} parent=0 // pred_check_branch
    %18 = sbr.rel (0) target = $region9
  $region8: #{seq2seq_forward.5} parent=0 // pred_region
    _
  $region9: #{seq2seq_forward.5} parent=0 // pred_fallthru
    _
  // Predicated region
  $region10: #{seq2seq_forward.5} parent=0 // pred_check
    _
  $region11: #{seq2seq_forward.5} parent=0 // pred_check_branch
    %20 = sbr.rel (0) target = $region13
  $region12: #{seq2seq_forward.5} parent=0 // pred_region
    _
  $region13: #{seq2seq_forward.5} parent=0 // pred_fallthru
    _
  // Predicated region
  $region14: #{seq2seq_forward.5} parent=0 // pred_check
    _
  $region15: #{seq2seq_forward.5} parent=0 // pred_check_branch
    %22 = sbr.rel (0) target = $region17
  $region16: #{seq2seq_forward.5} parent=0 // pred_region
    _
  $region17: #{seq2seq_forward.5} parent=0 // pred_fallthru
    _
  // Predicated region
  $region18: #{seq2seq_forward.5} parent=0 // pred_check
    _
  $region19: #{seq2seq_forward.5} parent=0 // pred_check_branch
    %24 = sbr.rel (0) target = $region21
  $region20: #{seq2seq_forward.5} parent=0 // pred_region
    _
  $region21: #{seq2seq_forward.5} parent=0 // pred_fallthru
    _
  // Predicated region
  $region22: #{seq2seq_forward.5} parent=0 // pred_check
    _
  $region23: #{seq2seq_forward.5} parent=0 // pred_check_branch
    %26 = sbr.rel (0) target = $region25
  $region24: #{seq2seq_forward.5} parent=0 // pred_region
    _
  $region25: #{seq2seq_forward.5} parent=0 // pred_fallthru
    _
  // Predicated region
  $region26: #{seq2seq_forward.5} parent=0 // pred_check
    _
  $region27: #{seq2seq_forward.5} parent=0 // pred_check_branch
    %28 = sbr.rel (0) target = $region29
  $region28: #{seq2seq_forward.5} parent=0 // pred_region
    _
  $region29: #{seq2seq_forward.5} parent=0 // pred_fallthru
    _
  // Predicated region
  $region30: #{seq2seq_forward.5} parent=0 // pred_check
    _
  $region31: #{seq2seq_forward.5} parent=0 // pred_check_branch
    %30 = sbr.rel (0) target = $region33
  $region32: #{seq2seq_forward.5} parent=0 // pred_region
    _
  $region33: #{seq2seq_forward.5} parent=0 // pred_fallthru
    _
  // Predicated region
  $region34: #{seq2seq_forward.5} parent=0 // pred_check
    _
  $region35: #{seq2seq_forward.5} parent=0 // pred_check_branch
    %32 = sbr.rel (0) target = $region37
  $region36: #{seq2seq_forward.5} parent=0 // pred_region
    _
  $region37: #{seq2seq_forward.5} parent=0 // pred_fallthru
    _
  // Predicated region
  $region38: #{seq2seq_forward.5} parent=0 // pred_check
    _
  $region39: #{seq2seq_forward.5} parent=0 // pred_check_branch
    %34 = sbr.rel (0) target = $region41
  $region40: #{seq2seq_forward.5} parent=0 // pred_region
    _
  $region41: #{seq2seq_forward.5} parent=0 // pred_fallthru
    _
  %v36 = vld [vmem:[%s0] sm:$0xff]
  %v37 = vld [vmem:[%s0 + $0x8] sm:$0xff]
  %v38 = vpack.c.bf16 %v37, %v36
  %v39 = vld [vmem:[%s2] sm:$0xf]
  %v40 = vld [vmem:[%s2 + $0x4] sm:$0xf]
  %v41 = vld [vmem:[%s2 + $0x8] sm:$0xf]
  %v42 = vld [vmem:[%s2 + $0xc] sm:$0xf]
  %v43 = vld [vmem:[%s2 + $0x10] sm:$0xf]
  %v44 = vld [vmem:[%s2 + $0x14] sm:$0xf]
  %v45 = vld [vmem:[%s2 + $0x18] sm:$0xf]
  %v46 = vld [vmem:[%s2 + $0x1c] sm:$0xf]
  %v47 = vld [vmem:[%s3] sm:$0x1]
  %v49 = vlaneseq
  %v50 = vshrl.u32 %v49, 7
  %v51 = vsub.s32 0, %v50
  %v52 = vrot.slane %v47, %v51
  %v62 = vunpack.c.l.b16 %v39
  %v63 = vunpack.c.l.b16 %v40
  %v64 = vunpack.c.l.b16 %v41
  %v65 = vunpack.c.l.b16 %v42
  %v66 = vunpack.c.l.b16 %v43
  %v67 = vunpack.c.l.b16 %v44
  %v68 = vunpack.c.l.b16 %v45
  %v69 = vunpack.c.l.b16 %v46
  %v70 = vpack.c.b16 %v63, %v62
  %v71 = vpack.c.b16 %v65, %v64
  %v72 = vpack.c.b16 %v67, %v66
  %v73 = vpack.c.b16 %v69, %v68
  %vm78 = vcmask 523264
  %v80 = vsel %vm78, %v38, 0
  %82 = vmatprep.subr.bf16.mxu0 0
  %83 = vmatpush1.bf16.msra.mxu0 %v70
  %84 = vmatprep.subr.bf16.mxu0 0
  %85 = vmatpush1.bf16.msra.mxu0 %v71
  %86 = vmatprep.subr.bf16.mxu0 0
  %87 = vmatpush1.bf16.msra.mxu0 %v72
  %88 = vmatprep.subr.bf16.mxu0 0
  %89 = vmatpush1.bf16.msra.mxu0 %v73
  %90 = vmatprep.subr.bf16.mxu0 0
  %91 = vmatpush1.bf16.msra.mxu0 0
  %92 = vmatprep.subr.bf16.mxu0 0
  %93 = vmatpush1.bf16.msra.mxu0 0
  %94 = vmatprep.subr.bf16.mxu0 0
  %95 = vmatpush1.bf16.msra.mxu0 0
  %96 = vmatprep.subr.bf16.mxu0 0
  %97 = vmatpush1.bf16.msra.mxu0 0
  %98 = vmatprep.subr.bf16.mxu0 0
  %99 = vmatpush1.bf16.msra.mxu0 0
  %100 = vmatprep.subr.bf16.mxu0 0
  %101 = vmatpush1.bf16.msra.mxu0 0
  %102 = vmatprep.subr.bf16.mxu0 0
  %103 = vmatpush1.bf16.msra.mxu0 0
  %104 = vmatprep.subr.bf16.mxu0 0
  %105 = vmatpush1.bf16.msra.mxu0 0
  %106 = vmatprep.subr.bf16.mxu0 0
  %107 = vmatpush1.bf16.msra.mxu0 0
  %108 = vmatprep.subr.bf16.mxu0 0
  %109 = vmatpush1.bf16.msra.mxu0 0
  %110 = vmatprep.subr.bf16.mxu0 0
  %111 = vmatpush1.bf16.msra.mxu0 0
  %112 = vmatprep.subr.bf16.mxu0 0
  %113 = vmatpush1.bf16.msra.mxu0 0
  %114 = vmatprep.mubr.bf16.mxu0 0
  %115 = vmatmul.mubr.bf16.gmra.mrb[0].mxu0 %v80
  %v116 = vpop.f32.mrb[0].mxu0
  %v117 = vadd.f32 %v52, %v116
  %v118 = vpop.f32.mrb[0].mxu0
  %v119 = vpop.f32.mrb[0].mxu0
  %v120 = vadd.f32 %v52, %v119
  %v121 = vpop.f32.mrb[0].mxu0
  %122 = vdwg.mxu0
  %s123 = scalar_lea.vmem %s8, 64
  %v124 = vld [vmem:[%s123] sm:$0xf]
  %v125 = vld [vmem:[%s123 + $0x4] sm:$0xf]
  %v126 = vld [vmem:[%s123 + $0x8] sm:$0xf]
  %v127 = vld [vmem:[%s123 + $0xc] sm:$0xf]
  %v128 = vld [vmem:[%s123 + $0x10] sm:$0xf]
  %v129 = vld [vmem:[%s123 + $0x14] sm:$0xf]
  %v130 = vld [vmem:[%s123 + $0x18] sm:$0xf]
  %v131 = vld [vmem:[%s123 + $0x1c] sm:$0xf]
  %v132 = vld [vmem:[%s9] sm:$0x1]
  %v134 = vlaneseq
  %v135 = vshrl.u32 %v134, 7
  %v136 = vsub.s32 0, %v135
  %v137 = vrot.slane %v132, %v136
  %v147 = vunpack.c.l.b16 %v124
  %v148 = vunpack.c.l.b16 %v125
  %v149 = vunpack.c.l.b16 %v126
  %v150 = vunpack.c.l.b16 %v127
  %v151 = vunpack.c.l.b16 %v128
  %v152 = vunpack.c.l.b16 %v129
  %v153 = vunpack.c.l.b16 %v130
  %v154 = vunpack.c.l.b16 %v131
  %v155 = vpack.c.b16 %v148, %v147
  %v156 = vpack.c.b16 %v150, %v149
  %v157 = vpack.c.b16 %v152, %v151
  %v158 = vpack.c.b16 %v154, %v153
  %163 = vmatprep.subr.bf16.mxu0 0
  %164 = vmatpush1.bf16.msra.mxu0 %v155
  %165 = vmatprep.subr.bf16.mxu0 0
  %166 = vmatpush1.bf16.msra.mxu0 %v156
  %167 = vmatprep.subr.bf16.mxu0 0
  %168 = vmatpush1.bf16.msra.mxu0 %v157
  %169 = vmatprep.subr.bf16.mxu0 0
  %170 = vmatpush1.bf16.msra.mxu0 %v158
  %171 = vmatprep.subr.bf16.mxu0 0
  %172 = vmatpush1.bf16.msra.mxu0 0
  %173 = vmatprep.subr.bf16.mxu0 0
  %174 = vmatpush1.bf16.msra.mxu0 0
  %175 = vmatprep.subr.bf16.mxu0 0
  %176 = vmatpush1.bf16.msra.mxu0 0
  %177 = vmatprep.subr.bf16.mxu0 0
  %178 = vmatpush1.bf16.msra.mxu0 0
  %179 = vmatprep.subr.bf16.mxu0 0
  %180 = vmatpush1.bf16.msra.mxu0 0
  %181 = vmatprep.subr.bf16.mxu0 0
  %182 = vmatpush1.bf16.msra.mxu0 0
  %183 = vmatprep.subr.bf16.mxu0 0
  %184 = vmatpush1.bf16.msra.mxu0 0
  %185 = vmatprep.subr.bf16.mxu0 0
  %186 = vmatpush1.bf16.msra.mxu0 0
  %187 = vmatprep.subr.bf16.mxu0 0
  %188 = vmatpush1.bf16.msra.mxu0 0
  %189 = vmatprep.subr.bf16.mxu0 0
  %190 = vmatpush1.bf16.msra.mxu0 0
  %191 = vmatprep.subr.bf16.mxu0 0
  %192 = vmatpush1.bf16.msra.mxu0 0
  %193 = vmatprep.subr.bf16.mxu0 0
  %194 = vmatpush1.bf16.msra.mxu0 0
  %195 = vmatprep.mubr.bf16.mxu0 0
  %196 = vmatmul.mubr.bf16.gmra.mrb[0].mxu0 %v80
  %v197 = vpop.f32.mrb[0].mxu0
  %v198 = vadd.f32 %v137, %v197
  %v199 = vpop.f32.mrb[0].mxu0
  %v200 = vpop.f32.mrb[0].mxu0
  %v201 = vadd.f32 %v137, %v200
  %v202 = vpop.f32.mrb[0].mxu0
  %203 = vdwg.mxu0
  %v204 = vld [vmem:[%s1] sm:$0xff]
  %v205 = vld [vmem:[%s1 + $0x8] sm:$0xff]
  %v206 = vpack.c.bf16 %v205, %v204
  %v207 = vld [vmem:[%s4] sm:$0xf]
  %v208 = vld [vmem:[%s4 + $0x4] sm:$0xf]
  %v209 = vld [vmem:[%s4 + $0x8] sm:$0xf]
  %v210 = vld [vmem:[%s4 + $0xc] sm:$0xf]
  %v211 = vld [vmem:[%s4 + $0x10] sm:$0xf]
  %v212 = vld [vmem:[%s4 + $0x14] sm:$0xf]
  %v213 = vld [vmem:[%s4 + $0x18] sm:$0xf]
  %v214 = vld [vmem:[%s4 + $0x1c] sm:$0xf]
  %v215 = vld [vmem:[%s5] sm:$0x1]
  %v217 = vlaneseq
  %v218 = vshrl.u32 %v217, 7
  %v219 = vsub.s32 0, %v218
  %v220 = vrot.slane %v215, %v219
  %v230 = vunpack.c.l.b16 %v207
  %v231 = vunpack.c.l.b16 %v208
  %v232 = vunpack.c.l.b16 %v209
  %v233 = vunpack.c.l.b16 %v210
  %v234 = vunpack.c.l.b16 %v211
  %v235 = vunpack.c.l.b16 %v212
  %v236 = vunpack.c.l.b16 %v213
  %v237 = vunpack.c.l.b16 %v214
  %v238 = vpack.c.b16 %v231, %v230
  %v239 = vpack.c.b16 %v233, %v232
  %v240 = vpack.c.b16 %v235, %v234
  %v241 = vpack.c.b16 %v237, %v236
  %v247 = vsel %vm78, %v206, 0
  %249 = vmatprep.subr.bf16.mxu0 0
  %250 = vmatpush1.bf16.msra.mxu0 %v238
  %251 = vmatprep.subr.bf16.mxu0 0
  %252 = vmatpush1.bf16.msra.mxu0 %v239
  %253 = vmatprep.subr.bf16.mxu0 0
  %254 = vmatpush1.bf16.msra.mxu0 %v240
  %255 = vmatprep.subr.bf16.mxu0 0
  %256 = vmatpush1.bf16.msra.mxu0 %v241
  %257 = vmatprep.subr.bf16.mxu0 0
  %258 = vmatpush1.bf16.msra.mxu0 0
  %259 = vmatprep.subr.bf16.mxu0 0
  %260 = vmatpush1.bf16.msra.mxu0 0
  %261 = vmatprep.subr.bf16.mxu0 0
  %262 = vmatpush1.bf16.msra.mxu0 0
  %263 = vmatprep.subr.bf16.mxu0 0
  %264 = vmatpush1.bf16.msra.mxu0 0
  %265 = vmatprep.subr.bf16.mxu0 0
  %266 = vmatpush1.bf16.msra.mxu0 0
  %267 = vmatprep.subr.bf16.mxu0 0
  %268 = vmatpush1.bf16.msra.mxu0 0
  %269 = vmatprep.subr.bf16.mxu0 0
  %270 = vmatpush1.bf16.msra.mxu0 0
  %271 = vmatprep.subr.bf16.mxu0 0
  %272 = vmatpush1.bf16.msra.mxu0 0
  %273 = vmatprep.subr.bf16.mxu0 0
  %274 = vmatpush1.bf16.msra.mxu0 0
  %275 = vmatprep.subr.bf16.mxu0 0
  %276 = vmatpush1.bf16.msra.mxu0 0
  %277 = vmatprep.subr.bf16.mxu0 0
  %278 = vmatpush1.bf16.msra.mxu0 0
  %279 = vmatprep.subr.bf16.mxu0 0
  %280 = vmatpush1.bf16.msra.mxu0 0
  %281 = vmatprep.mubr.bf16.mxu0 0
  %282 = vmatmul.mubr.bf16.gmra.mrb[0].mxu0 %v247
  %v283 = vpop.f32.mrb[0].mxu0
  %v284 = vadd.f32 %v220, %v283
  %v285 = vpop.f32.mrb[0].mxu0
  %v286 = vpop.f32.mrb[0].mxu0
  %v287 = vadd.f32 %v220, %v286
  %v288 = vpop.f32.mrb[0].mxu0
  %289 = vdwg.mxu0
  %v290 = vpack.c.bf16 %v117, %v117
  %v291 = vpack.c.bf16 %v120, %v120
  %v292 = vpack.c.bf16 %v284, %v284
  %v293 = vpack.c.bf16 %v287, %v287
  %vm294 = vcmask 130048
  %v296 = vsel %vm294, %v290, 0
  %v299 = vsel %vm294, %v292, 0
  %301 = vmatprep.subr.bf16.mxu0 0
  %302 = vmatpush1.bf16.xpose.msra.mxu0 %v299
  %303 = vmatprep.subr.bf16.mxu0 0
  %304 = vmatpush1.bf16.xpose.msra.mxu0 0
  %305 = vmatprep.subr.bf16.mxu0 0
  %306 = vmatpush1.bf16.xpose.msra.mxu0 0
  %307 = vmatprep.subr.bf16.mxu0 0
  %308 = vmatpush1.bf16.xpose.msra.mxu0 0
  %309 = vmatprep.subr.bf16.mxu0 0
  %310 = vmatpush1.bf16.xpose.msra.mxu0 0
  %311 = vmatprep.subr.bf16.mxu0 0
  %312 = vmatpush1.bf16.xpose.msra.mxu0 0
  %313 = vmatprep.subr.bf16.mxu0 0
  %314 = vmatpush1.bf16.xpose.msra.mxu0 0
  %315 = vmatprep.subr.bf16.mxu0 0
  %316 = vmatpush1.bf16.xpose.msra.mxu0 0
  %317 = vmatprep.subr.bf16.mxu0 0
  %318 = vmatpush1.bf16.xpose.msra.mxu0 0
  %319 = vmatprep.subr.bf16.mxu0 0
  %320 = vmatpush1.bf16.xpose.msra.mxu0 0
  %321 = vmatprep.subr.bf16.mxu0 0
  %322 = vmatpush1.bf16.xpose.msra.mxu0 0
  %323 = vmatprep.subr.bf16.mxu0 0
  %324 = vmatpush1.bf16.xpose.msra.mxu0 0
  %325 = vmatprep.subr.bf16.mxu0 0
  %326 = vmatpush1.bf16.xpose.msra.mxu0 0
  %327 = vmatprep.subr.bf16.mxu0 0
  %328 = vmatpush1.bf16.xpose.msra.mxu0 0
  %329 = vmatprep.subr.bf16.mxu0 0
  %330 = vmatpush1.bf16.xpose.msra.mxu0 0
  %331 = vmatprep.subr.bf16.mxu0 0
  %332 = vmatpush1.bf16.xpose.msra.mxu0 0
  %333 = vmatprep.mubr.bf16.mxu0 0
  %334 = vmatmul.mubr.bf16.gmra.mrb[0].mxu0 %v296
  %v335 = vpop.f32.mrb[0].mxu0
  %v336 = vadd.f32 0.0, %v335
  %v337 = vpop.f32.mrb[0].mxu0
  %v338 = vpop.f32.mrb[0].mxu0
  %v339 = vpop.f32.mrb[0].mxu0
  %340 = vdwg.mxu0
  %v342 = vsel %vm294, %v291, 0
  %v345 = vsel %vm294, %v293, 0
  %347 = vmatprep.subr.bf16.mxu0 0
  %348 = vmatpush1.bf16.xpose.msra.mxu0 %v345
  %349 = vmatprep.subr.bf16.mxu0 0
  %350 = vmatpush1.bf16.xpose.msra.mxu0 0
  %351 = vmatprep.subr.bf16.mxu0 0
  %352 = vmatpush1.bf16.xpose.msra.mxu0 0
  %353 = vmatprep.subr.bf16.mxu0 0
  %354 = vmatpush1.bf16.xpose.msra.mxu0 0
  %355 = vmatprep.subr.bf16.mxu0 0
  %356 = vmatpush1.bf16.xpose.msra.mxu0 0
  %357 = vmatprep.subr.bf16.mxu0 0
  %358 = vmatpush1.bf16.xpose.msra.mxu0 0
  %359 = vmatprep.subr.bf16.mxu0 0
  %360 = vmatpush1.bf16.xpose.msra.mxu0 0
  %361 = vmatprep.subr.bf16.mxu0 0
  %362 = vmatpush1.bf16.xpose.msra.mxu0 0
  %363 = vmatprep.subr.bf16.mxu0 0
  %364 = vmatpush1.bf16.xpose.msra.mxu0 0
  %365 = vmatprep.subr.bf16.mxu0 0
  %366 = vmatpush1.bf16.xpose.msra.mxu0 0
  %367 = vmatprep.subr.bf16.mxu0 0
  %368 = vmatpush1.bf16.xpose.msra.mxu0 0
  %369 = vmatprep.subr.bf16.mxu0 0
  %370 = vmatpush1.bf16.xpose.msra.mxu0 0
  %371 = vmatprep.subr.bf16.mxu0 0
  %372 = vmatpush1.bf16.xpose.msra.mxu0 0
  %373 = vmatprep.subr.bf16.mxu0 0
  %374 = vmatpush1.bf16.xpose.msra.mxu0 0
  %375 = vmatprep.subr.bf16.mxu0 0
  %376 = vmatpush1.bf16.xpose.msra.mxu0 0
  %377 = vmatprep.subr.bf16.mxu0 0
  %378 = vmatpush1.bf16.xpose.msra.mxu0 0
  %379 = vmatprep.mubr.bf16.mxu0 0
  %380 = vmatmul.mubr.bf16.gmra.mrb[0].mxu0 %v342
  %v381 = vpop.f32.mrb[0].mxu0
  %v382 = vadd.f32 0.0, %v381
  %v383 = vpop.f32.mrb[0].mxu0
  %v384 = vpop.f32.mrb[0].mxu0
  %v385 = vpop.f32.mrb[0].mxu0
  %386 = vdwg.mxu0
  %vm387 = vcmask 64512
  %v388 = vsel %vm387, %v336, -inf
  %389 = vmax.xlane.f32.xlu0 %v388
  %v390 = vpop.xlane.xlu0 %389
  %v391 = vsel %vm387, %v382, -inf
  %392 = vmax.xlane.f32.xlu0 %v391
  %v393 = vpop.xlane.xlu0 %392
  %v394 = vsub.f32 %v336, %v390
  %v395 = vsub.f32 %v382, %v393
  %v396 = vmul.f32 %v394, 1.442695
  %v397 = vpow.pop %v396
  %v398 = vmul.f32 %v395, 1.442695
  %v399 = vpow.pop %v398
  %v400 = vsel %vm387, %v397, 0.0
  %401 = vadd.xlane.f32.xlu0 %v400
  %v402 = vpop.xlane.xlu0 %401
  %v403 = vsel %vm387, %v399, 0.0
  %404 = vadd.xlane.f32.xlu0 %v403
  %v405 = vpop.xlane.xlu0 %404
  %v406 = vrcp.pop %v402
  %v407 = vrcp.pop %v405
  %v408 = vmul.f32 %v397, %v406
  %v409 = vmul.f32 %v399, %v407
  %v410 = vpack.c.bf16 %v408, %v408
  %v411 = vpack.c.bf16 %v409, %v409
  %413 = vrot.lane.b32.xlu0 %v292, 64
  %v414 = vpop.permute.xlu0 %413
  %v416 = vsel %vm387, %v410, 0
  %vm418 = vcmask 1043456
  %v420 = vsel %vm418, %v414, 0
  %422 = vmatprep.subr.bf16.mxu0 0
  %423 = vmatpush1.bf16.msra.mxu0 %v420
  %424 = vmatprep.subr.bf16.mxu0 0
  %425 = vmatpush1.bf16.msra.mxu0 0
  %426 = vmatprep.subr.bf16.mxu0 0
  %427 = vmatpush1.bf16.msra.mxu0 0
  %428 = vmatprep.subr.bf16.mxu0 0
  %429 = vmatpush1.bf16.msra.mxu0 0
  %430 = vmatprep.subr.bf16.mxu0 0
  %431 = vmatpush1.bf16.msra.mxu0 0
  %432 = vmatprep.subr.bf16.mxu0 0
  %433 = vmatpush1.bf16.msra.mxu0 0
  %434 = vmatprep.subr.bf16.mxu0 0
  %435 = vmatpush1.bf16.msra.mxu0 0
  %436 = vmatprep.subr.bf16.mxu0 0
  %437 = vmatpush1.bf16.msra.mxu0 0
  %438 = vmatprep.subr.bf16.mxu0 0
  %439 = vmatpush1.bf16.msra.mxu0 0
  %440 = vmatprep.subr.bf16.mxu0 0
  %441 = vmatpush1.bf16.msra.mxu0 0
  %442 = vmatprep.subr.bf16.mxu0 0
  %443 = vmatpush1.bf16.msra.mxu0 0
  %444 = vmatprep.subr.bf16.mxu0 0
  %445 = vmatpush1.bf16.msra.mxu0 0
  %446 = vmatprep.subr.bf16.mxu0 0
  %447 = vmatpush1.bf16.msra.mxu0 0
  %448 = vmatprep.subr.bf16.mxu0 0
  %449 = vmatpush1.bf16.msra.mxu0 0
  %450 = vmatprep.subr.bf16.mxu0 0
  %451 = vmatpush1.bf16.msra.mxu0 0
  %452 = vmatprep.subr.bf16.mxu0 0
  %453 = vmatpush1.bf16.msra.mxu0 0
  %454 = vmatprep.mubr.bf16.mxu0 0
  %455 = vmatmul.mubr.bf16.gmra.mrb[0].mxu0 %v416
  %v456 = vpop.f32.mrb[0].mxu0
  %v457 = vadd.f32 0.0, %v456
  %v458 = vpop.f32.mrb[0].mxu0
  %v459 = vpop.f32.mrb[0].mxu0
  %v460 = vpop.f32.mrb[0].mxu0
  %461 = vdwg.mxu0
  %463 = vrot.lane.b32.xlu0 %v293, 64
  %v464 = vpop.permute.xlu0 %463
  %v466 = vsel %vm387, %v411, 0
  %v469 = vsel %vm418, %v464, 0
  %471 = vmatprep.subr.bf16.mxu0 0
  %472 = vmatpush1.bf16.msra.mxu0 %v469
  %473 = vmatprep.subr.bf16.mxu0 0
  %474 = vmatpush1.bf16.msra.mxu0 0
  %475 = vmatprep.subr.bf16.mxu0 0
  %476 = vmatpush1.bf16.msra.mxu0 0
  %477 = vmatprep.subr.bf16.mxu0 0
  %478 = vmatpush1.bf16.msra.mxu0 0
  %479 = vmatprep.subr.bf16.mxu0 0
  %480 = vmatpush1.bf16.msra.mxu0 0
  %481 = vmatprep.subr.bf16.mxu0 0
  %482 = vmatpush1.bf16.msra.mxu0 0
  %483 = vmatprep.subr.bf16.mxu0 0
  %484 = vmatpush1.bf16.msra.mxu0 0
  %485 = vmatprep.subr.bf16.mxu0 0
  %486 = vmatpush1.bf16.msra.mxu0 0
  %487 = vmatprep.subr.bf16.mxu0 0
  %488 = vmatpush1.bf16.msra.mxu0 0
  %489 = vmatprep.subr.bf16.mxu0 0
  %490 = vmatpush1.bf16.msra.mxu0 0
  %491 = vmatprep.subr.bf16.mxu0 0
  %492 = vmatpush1.bf16.msra.mxu0 0
  %493 = vmatprep.subr.bf16.mxu0 0
  %494 = vmatpush1.bf16.msra.mxu0 0
  %495 = vmatprep.subr.bf16.mxu0 0
  %496 = vmatpush1.bf16.msra.mxu0 0
  %497 = vmatprep.subr.bf16.mxu0 0
  %498 = vmatpush1.bf16.msra.mxu0 0
  %499 = vmatprep.subr.bf16.mxu0 0
  %500 = vmatpush1.bf16.msra.mxu0 0
  %501 = vmatprep.subr.bf16.mxu0 0
  %502 = vmatpush1.bf16.msra.mxu0 0
  %503 = vmatprep.mubr.bf16.mxu0 0
  %504 = vmatmul.mubr.bf16.gmra.mrb[0].mxu0 %v466
  %v505 = vpop.f32.mrb[0].mxu0
  %v506 = vadd.f32 0.0, %v505
  %v507 = vpop.f32.mrb[0].mxu0
  %v508 = vpop.f32.mrb[0].mxu0
  %v509 = vpop.f32.mrb[0].mxu0
  %510 = vdwg.mxu0
  %512 = vrot.lane.b32.xlu0 %v290, 112
  %v513 = vpop.permute.xlu0 %512
  %514 = vrot.lane.b32.xlu0 %v292, 112
  %v515 = vpop.permute.xlu0 %514
  %v517 = vsel %vm294, %v513, 0
  %v520 = vsel %vm294, %v515, 0
  %522 = vmatprep.subr.bf16.mxu0 0
  %523 = vmatpush1.bf16.xpose.msra.mxu0 %v520
  %524 = vmatprep.subr.bf16.mxu0 0
  %525 = vmatpush1.bf16.xpose.msra.mxu0 0
  %526 = vmatprep.subr.bf16.mxu0 0
  %527 = vmatpush1.bf16.xpose.msra.mxu0 0
  %528 = vmatprep.subr.bf16.mxu0 0
  %529 = vmatpush1.bf16.xpose.msra.mxu0 0
  %530 = vmatprep.subr.bf16.mxu0 0
  %531 = vmatpush1.bf16.xpose.msra.mxu0 0
  %532 = vmatprep.subr.bf16.mxu0 0
  %533 = vmatpush1.bf16.xpose.msra.mxu0 0
  %534 = vmatprep.subr.bf16.mxu0 0
  %535 = vmatpush1.bf16.xpose.msra.mxu0 0
  %536 = vmatprep.subr.bf16.mxu0 0
  %537 = vmatpush1.bf16.xpose.msra.mxu0 0
  %538 = vmatprep.subr.bf16.mxu0 0
  %539 = vmatpush1.bf16.xpose.msra.mxu0 0
  %540 = vmatprep.subr.bf16.mxu0 0
  %541 = vmatpush1.bf16.xpose.msra.mxu0 0
  %542 = vmatprep.subr.bf16.mxu0 0
  %543 = vmatpush1.bf16.xpose.msra.mxu0 0
  %544 = vmatprep.subr.bf16.mxu0 0
  %545 = vmatpush1.bf16.xpose.msra.mxu0 0
  %546 = vmatprep.subr.bf16.mxu0 0
  %547 = vmatpush1.bf16.xpose.msra.mxu0 0
  %548 = vmatprep.subr.bf16.mxu0 0
  %549 = vmatpush1.bf16.xpose.msra.mxu0 0
  %550 = vmatprep.subr.bf16.mxu0 0
  %551 = vmatpush1.bf16.xpose.msra.mxu0 0
  %552 = vmatprep.subr.bf16.mxu0 0
  %553 = vmatpush1.bf16.xpose.msra.mxu0 0
  %554 = vmatprep.mubr.bf16.mxu0 0
  %555 = vmatmul.mubr.bf16.gmra.mrb[0].mxu0 %v517
  %v556 = vpop.f32.mrb[0].mxu0
  %v557 = vadd.f32 0.0, %v556
  %v558 = vpop.f32.mrb[0].mxu0
  %v559 = vpop.f32.mrb[0].mxu0
  %v560 = vpop.f32.mrb[0].mxu0
  %561 = vdwg.mxu0
  %563 = vrot.lane.b32.xlu0 %v291, 112
  %v564 = vpop.permute.xlu0 %563
  %565 = vrot.lane.b32.xlu0 %v293, 112
  %v566 = vpop.permute.xlu0 %565
  %v568 = vsel %vm294, %v564, 0
  %v571 = vsel %vm294, %v566, 0
  %573 = vmatprep.subr.bf16.mxu0 0
  %574 = vmatpush1.bf16.xpose.msra.mxu0 %v571
  %575 = vmatprep.subr.bf16.mxu0 0
  %576 = vmatpush1.bf16.xpose.msra.mxu0 0
  %577 = vmatprep.subr.bf16.mxu0 0
  %578 = vmatpush1.bf16.xpose.msra.mxu0 0
  %579 = vmatprep.subr.bf16.mxu0 0
  %580 = vmatpush1.bf16.xpose.msra.mxu0 0
  %581 = vmatprep.subr.bf16.mxu0 0
  %582 = vmatpush1.bf16.xpose.msra.mxu0 0
  %583 = vmatprep.subr.bf16.mxu0 0
  %584 = vmatpush1.bf16.xpose.msra.mxu0 0
  %585 = vmatprep.subr.bf16.mxu0 0
  %586 = vmatpush1.bf16.xpose.msra.mxu0 0
  %587 = vmatprep.subr.bf16.mxu0 0
  %588 = vmatpush1.bf16.xpose.msra.mxu0 0
  %589 = vmatprep.subr.bf16.mxu0 0
  %590 = vmatpush1.bf16.xpose.msra.mxu0 0
  %591 = vmatprep.subr.bf16.mxu0 0
  %592 = vmatpush1.bf16.xpose.msra.mxu0 0
  %593 = vmatprep.subr.bf16.mxu0 0
  %594 = vmatpush1.bf16.xpose.msra.mxu0 0
  %595 = vmatprep.subr.bf16.mxu0 0
  %596 = vmatpush1.bf16.xpose.msra.mxu0 0
  %597 = vmatprep.subr.bf16.mxu0 0
  %598 = vmatpush1.bf16.xpose.msra.mxu0 0
  %599 = vmatprep.subr.bf16.mxu0 0
  %600 = vmatpush1.bf16.xpose.msra.mxu0 0
  %601 = vmatprep.subr.bf16.mxu0 0
  %602 = vmatpush1.bf16.xpose.msra.mxu0 0
  %603 = vmatprep.subr.bf16.mxu0 0
  %604 = vmatpush1.bf16.xpose.msra.mxu0 0
  %605 = vmatprep.mubr.bf16.mxu0 0
  %606 = vmatmul.mubr.bf16.gmra.mrb[0].mxu0 %v568
  %v607 = vpop.f32.mrb[0].mxu0
  %v608 = vadd.f32 0.0, %v607
  %v609 = vpop.f32.mrb[0].mxu0
  %v610 = vpop.f32.mrb[0].mxu0
  %v611 = vpop.f32.mrb[0].mxu0
  %612 = vdwg.mxu0
  %v613 = vsel %vm387, %v557, -inf
  %614 = vmax.xlane.f32.xlu0 %v613
  %v615 = vpop.xlane.xlu0 %614
  %v616 = vsel %vm387, %v608, -inf
  %617 = vmax.xlane.f32.xlu0 %v616
  %v618 = vpop.xlane.xlu0 %617
  %v619 = vsub.f32 %v557, %v615
  %v620 = vsub.f32 %v608, %v618
  %v621 = vmul.f32 %v619, 1.442695
  %v622 = vpow.pop %v621
  %v623 = vmul.f32 %v620, 1.442695
  %v624 = vpow.pop %v623
  %v625 = vsel %vm387, %v622, 0.0
  %626 = vadd.xlane.f32.xlu0 %v625
  %v627 = vpop.xlane.xlu0 %626
  %v628 = vsel %vm387, %v624, 0.0
  %629 = vadd.xlane.f32.xlu0 %v628
  %v630 = vpop.xlane.xlu0 %629
  %v631 = vrcp.pop %v627
  %v632 = vrcp.pop %v630
  %v633 = vmul.f32 %v622, %v631
  %v634 = vmul.f32 %v624, %v632
  %v635 = vpack.c.bf16 %v633, %v633
  %v636 = vpack.c.bf16 %v634, %v634
  %637 = vrot.lane.b32.xlu0 %v292, 48
  %v638 = vpop.permute.xlu0 %637
  %v640 = vsel %vm387, %v635, 0
  %v643 = vsel %vm418, %v638, 0
  %645 = vmatprep.subr.bf16.mxu0 0
  %646 = vmatpush1.bf16.msra.mxu0 %v643
  %647 = vmatprep.subr.bf16.mxu0 0
  %648 = vmatpush1.bf16.msra.mxu0 0
  %649 = vmatprep.subr.bf16.mxu0 0
  %650 = vmatpush1.bf16.msra.mxu0 0
  %651 = vmatprep.subr.bf16.mxu0 0
  %652 = vmatpush1.bf16.msra.mxu0 0
  %653 = vmatprep.subr.bf16.mxu0 0
  %654 = vmatpush1.bf16.msra.mxu0 0
  %655 = vmatprep.subr.bf16.mxu0 0
  %656 = vmatpush1.bf16.msra.mxu0 0
  %657 = vmatprep.subr.bf16.mxu0 0
  %658 = vmatpush1.bf16.msra.mxu0 0
  %659 = vmatprep.subr.bf16.mxu0 0
  %660 = vmatpush1.bf16.msra.mxu0 0
  %661 = vmatprep.subr.bf16.mxu0 0
  %662 = vmatpush1.bf16.msra.mxu0 0
  %663 = vmatprep.subr.bf16.mxu0 0
  %664 = vmatpush1.bf16.msra.mxu0 0
  %665 = vmatprep.subr.bf16.mxu0 0
  %666 = vmatpush1.bf16.msra.mxu0 0
  %667 = vmatprep.subr.bf16.mxu0 0
  %668 = vmatpush1.bf16.msra.mxu0 0
  %669 = vmatprep.subr.bf16.mxu0 0
  %670 = vmatpush1.bf16.msra.mxu0 0
  %671 = vmatprep.subr.bf16.mxu0 0
  %672 = vmatpush1.bf16.msra.mxu0 0
  %673 = vmatprep.subr.bf16.mxu0 0
  %674 = vmatpush1.bf16.msra.mxu0 0
  %675 = vmatprep.subr.bf16.mxu0 0
  %676 = vmatpush1.bf16.msra.mxu0 0
  %677 = vmatprep.mubr.bf16.mxu0 0
  %678 = vmatmul.mubr.bf16.gmra.mrb[0].mxu0 %v640
  %v679 = vpop.f32.mrb[0].mxu0
  %v680 = vadd.f32 0.0, %v679
  %v681 = vpop.f32.mrb[0].mxu0
  %v682 = vpop.f32.mrb[0].mxu0
  %v683 = vpop.f32.mrb[0].mxu0
  %684 = vdwg.mxu0
  %685 = vrot.lane.b32.xlu0 %v293, 48
  %v686 = vpop.permute.xlu0 %685
  %v688 = vsel %vm387, %v636, 0
  %v691 = vsel %vm418, %v686, 0
  %693 = vmatprep.subr.bf16.mxu0 0
  %694 = vmatpush1.bf16.msra.mxu0 %v691
  %695 = vmatprep.subr.bf16.mxu0 0
  %696 = vmatpush1.bf16.msra.mxu0 0
  %697 = vmatprep.subr.bf16.mxu0 0
  %698 = vmatpush1.bf16.msra.mxu0 0
  %699 = vmatprep.subr.bf16.mxu0 0
  %700 = vmatpush1.bf16.msra.mxu0 0
  %701 = vmatprep.subr.bf16.mxu0 0
  %702 = vmatpush1.bf16.msra.mxu0 0
  %703 = vmatprep.subr.bf16.mxu0 0
  %704 = vmatpush1.bf16.msra.mxu0 0
  %705 = vmatprep.subr.bf16.mxu0 0
  %706 = vmatpush1.bf16.msra.mxu0 0
  %707 = vmatprep.subr.bf16.mxu0 0
  %708 = vmatpush1.bf16.msra.mxu0 0
  %709 = vmatprep.subr.bf16.mxu0 0
  %710 = vmatpush1.bf16.msra.mxu0 0
  %711 = vmatprep.subr.bf16.mxu0 0
  %712 = vmatpush1.bf16.msra.mxu0 0
  %713 = vmatprep.subr.bf16.mxu0 0
  %714 = vmatpush1.bf16.msra.mxu0 0
  %715 = vmatprep.subr.bf16.mxu0 0
  %716 = vmatpush1.bf16.msra.mxu0 0
  %717 = vmatprep.subr.bf16.mxu0 0
  %718 = vmatpush1.bf16.msra.mxu0 0
  %719 = vmatprep.subr.bf16.mxu0 0
  %720 = vmatpush1.bf16.msra.mxu0 0
  %721 = vmatprep.subr.bf16.mxu0 0
  %722 = vmatpush1.bf16.msra.mxu0 0
  %723 = vmatprep.subr.bf16.mxu0 0
  %724 = vmatpush1.bf16.msra.mxu0 0
  %725 = vmatprep.mubr.bf16.mxu0 0
  %726 = vmatmul.mubr.bf16.gmra.mrb[0].mxu0 %v688
  %v727 = vpop.f32.mrb[0].mxu0
  %v728 = vadd.f32 0.0, %v727
  %v729 = vpop.f32.mrb[0].mxu0
  %v730 = vpop.f32.mrb[0].mxu0
  %v731 = vpop.f32.mrb[0].mxu0
  %732 = vdwg.mxu0
  %733 = vrot.lane.b32.xlu0 %v290, 96
  %v734 = vpop.permute.xlu0 %733
  %735 = vrot.lane.b32.xlu0 %v292, 96
  %v736 = vpop.permute.xlu0 %735
  %v738 = vsel %vm294, %v734, 0
  %v741 = vsel %vm294, %v736, 0
  %743 = vmatprep.subr.bf16.mxu0 0
  %744 = vmatpush1.bf16.xpose.msra.mxu0 %v741
  %745 = vmatprep.subr.bf16.mxu0 0
  %746 = vmatpush1.bf16.xpose.msra.mxu0 0
  %747 = vmatprep.subr.bf16.mxu0 0
  %748 = vmatpush1.bf16.xpose.msra.mxu0 0
  %749 = vmatprep.subr.bf16.mxu0 0
  %750 = vmatpush1.bf16.xpose.msra.mxu0 0
  %751 = vmatprep.subr.bf16.mxu0 0
  %752 = vmatpush1.bf16.xpose.msra.mxu0 0
  %753 = vmatprep.subr.bf16.mxu0 0
  %754 = vmatpush1.bf16.xpose.msra.mxu0 0
  %755 = vmatprep.subr.bf16.mxu0 0
  %756 = vmatpush1.bf16.xpose.msra.mxu0 0
  %757 = vmatprep.subr.bf16.mxu0 0
  %758 = vmatpush1.bf16.xpose.msra.mxu0 0
  %759 = vmatprep.subr.bf16.mxu0 0
  %760 = vmatpush1.bf16.xpose.msra.mxu0 0
  %761 = vmatprep.subr.bf16.mxu0 0
  %762 = vmatpush1.bf16.xpose.msra.mxu0 0
  %763 = vmatprep.subr.bf16.mxu0 0
  %764 = vmatpush1.bf16.xpose.msra.mxu0 0
  %765 = vmatprep.subr.bf16.mxu0 0
  %766 = vmatpush1.bf16.xpose.msra.mxu0 0
  %767 = vmatprep.subr.bf16.mxu0 0
  %768 = vmatpush1.bf16.xpose.msra.mxu0 0
  %769 = vmatprep.subr.bf16.mxu0 0
  %770 = vmatpush1.bf16.xpose.msra.mxu0 0
  %771 = vmatprep.subr.bf16.mxu0 0
  %772 = vmatpush1.bf16.xpose.msra.mxu0 0
  %773 = vmatprep.subr.bf16.mxu0 0
  %774 = vmatpush1.bf16.xpose.msra.mxu0 0
  %775 = vmatprep.mubr.bf16.mxu0 0
  %776 = vmatmul.mubr.bf16.gmra.mrb[0].mxu0 %v738
  %v777 = vpop.f32.mrb[0].mxu0
  %v778 = vadd.f32 0.0, %v777
  %v779 = vpop.f32.mrb[0].mxu0
  %v780 = vpop.f32.mrb[0].mxu0
  %v781 = vpop.f32.mrb[0].mxu0
  %782 = vdwg.mxu0
  %783 = vrot.lane.b32.xlu0 %v291, 96
  %v784 = vpop.permute.xlu0 %783
  %785 = vrot.lane.b32.xlu0 %v293, 96
  %v786 = vpop.permute.xlu0 %785
  %v788 = vsel %vm294, %v784, 0
  %v791 = vsel %vm294, %v786, 0
  %793 = vmatprep.subr.bf16.mxu0 0
  %794 = vmatpush1.bf16.xpose.msra.mxu0 %v791
  %795 = vmatprep.subr.bf16.mxu0 0
  %796 = vmatpush1.bf16.xpose.msra.mxu0 0
  %797 = vmatprep.subr.bf16.mxu0 0
  %798 = vmatpush1.bf16.xpose.msra.mxu0 0
  %799 = vmatprep.subr.bf16.mxu0 0
  %800 = vmatpush1.bf16.xpose.msra.mxu0 0
  %801 = vmatprep.subr.bf16.mxu0 0
  %802 = vmatpush1.bf16.xpose.msra.mxu0 0
  %803 = vmatprep.subr.bf16.mxu0 0
  %804 = vmatpush1.bf16.xpose.msra.mxu0 0
  %805 = vmatprep.subr.bf16.mxu0 0
  %806 = vmatpush1.bf16.xpose.msra.mxu0 0
  %807 = vmatprep.subr.bf16.mxu0 0
  %808 = vmatpush1.bf16.xpose.msra.mxu0 0
  %809 = vmatprep.subr.bf16.mxu0 0
  %810 = vmatpush1.bf16.xpose.msra.mxu0 0
  %811 = vmatprep.subr.bf16.mxu0 0
  %812 = vmatpush1.bf16.xpose.msra.mxu0 0
  %813 = vmatprep.subr.bf16.mxu0 0
  %814 = vmatpush1.bf16.xpose.msra.mxu0 0
  %815 = vmatprep.subr.bf16.mxu0 0
  %816 = vmatpush1.bf16.xpose.msra.mxu0 0
  %817 = vmatprep.subr.bf16.mxu0 0
  %818 = vmatpush1.bf16.xpose.msra.mxu0 0
  %819 = vmatprep.subr.bf16.mxu0 0
  %820 = vmatpush1.bf16.xpose.msra.mxu0 0
  %821 = vmatprep.subr.bf16.mxu0 0
  %822 = vmatpush1.bf16.xpose.msra.mxu0 0
  %823 = vmatprep.subr.bf16.mxu0 0
  %824 = vmatpush1.bf16.xpose.msra.mxu0 0
  %825 = vmatprep.mubr.bf16.mxu0 0
  %826 = vmatmul.mubr.bf16.gmra.mrb[0].mxu0 %v788
  %v827 = vpop.f32.mrb[0].mxu0
  %v828 = vadd.f32 0.0, %v827
  %v829 = vpop.f32.mrb[0].mxu0
  %v830 = vpop.f32.mrb[0].mxu0
  %v831 = vpop.f32.mrb[0].mxu0
  %832 = vdwg.mxu0
  %v833 = vsel %vm387, %v778, -inf
  %834 = vmax.xlane.f32.xlu0 %v833
  %v835 = vpop.xlane.xlu0 %834
  %v836 = vsel %vm387, %v828, -inf
  %837 = vmax.xlane.f32.xlu0 %v836
  %v838 = vpop.xlane.xlu0 %837
  %v839 = vsub.f32 %v778, %v835
  %v840 = vsub.f32 %v828, %v838
  %v841 = vmul.f32 %v839, 1.442695
  %v842 = vpow.pop %v841
  %v843 = vmul.f32 %v840, 1.442695
  %v844 = vpow.pop %v843
  %v845 = vsel %vm387, %v842, 0.0
  %846 = vadd.xlane.f32.xlu0 %v845
  %v847 = vpop.xlane.xlu0 %846
  %v848 = vsel %vm387, %v844, 0.0
  %849 = vadd.xlane.f32.xlu0 %v848
  %v850 = vpop.xlane.xlu0 %849
  %v851 = vrcp.pop %v847
  %v852 = vrcp.pop %v850
  %v853 = vmul.f32 %v842, %v851
  %v854 = vmul.f32 %v844, %v852
  %v855 = vpack.c.bf16 %v853, %v853
  %v856 = vpack.c.bf16 %v854, %v854
  %857 = vrot.lane.b32.xlu0 %v292, 32
  %v858 = vpop.permute.xlu0 %857
  %v860 = vsel %vm387, %v855, 0
  %v863 = vsel %vm418, %v858, 0
  %865 = vmatprep.subr.bf16.mxu0 0
  %866 = vmatpush1.bf16.msra.mxu0 %v863
  %867 = vmatprep.subr.bf16.mxu0 0
  %868 = vmatpush1.bf16.msra.mxu0 0
  %869 = vmatprep.subr.bf16.mxu0 0
  %870 = vmatpush1.bf16.msra.mxu0 0
  %871 = vmatprep.subr.bf16.mxu0 0
  %872 = vmatpush1.bf16.msra.mxu0 0
  %873 = vmatprep.subr.bf16.mxu0 0
  %874 = vmatpush1.bf16.msra.mxu0 0
  %875 = vmatprep.subr.bf16.mxu0 0
  %876 = vmatpush1.bf16.msra.mxu0 0
  %877 = vmatprep.subr.bf16.mxu0 0
  %878 = vmatpush1.bf16.msra.mxu0 0
  %879 = vmatprep.subr.bf16.mxu0 0
  %880 = vmatpush1.bf16.msra.mxu0 0
  %881 = vmatprep.subr.bf16.mxu0 0
  %882 = vmatpush1.bf16.msra.mxu0 0
  %883 = vmatprep.subr.bf16.mxu0 0
  %884 = vmatpush1.bf16.msra.mxu0 0
  %885 = vmatprep.subr.bf16.mxu0 0
  %886 = vmatpush1.bf16.msra.mxu0 0
  %887 = vmatprep.subr.bf16.mxu0 0
  %888 = vmatpush1.bf16.msra.mxu0 0
  %889 = vmatprep.subr.bf16.mxu0 0
  %890 = vmatpush1.bf16.msra.mxu0 0
  %891 = vmatprep.subr.bf16.mxu0 0
  %892 = vmatpush1.bf16.msra.mxu0 0
  %893 = vmatprep.subr.bf16.mxu0 0
  %894 = vmatpush1.bf16.msra.mxu0 0
  %895 = vmatprep.subr.bf16.mxu0 0
  %896 = vmatpush1.bf16.msra.mxu0 0
  %897 = vmatprep.mubr.bf16.mxu0 0
  %898 = vmatmul.mubr.bf16.gmra.mrb[0].mxu0 %v860
  %v899 = vpop.f32.mrb[0].mxu0
  %v900 = vadd.f32 0.0, %v899
  %v901 = vpop.f32.mrb[0].mxu0
  %v902 = vpop.f32.mrb[0].mxu0
  %v903 = vpop.f32.mrb[0].mxu0
  %904 = vdwg.mxu0
  %905 = vrot.lane.b32.xlu0 %v293, 32
  %v906 = vpop.permute.xlu0 %905
  %v908 = vsel %vm387, %v856, 0
  %v911 = vsel %vm418, %v906, 0
  %913 = vmatprep.subr.bf16.mxu0 0
  %914 = vmatpush1.bf16.msra.mxu0 %v911
  %915 = vmatprep.subr.bf16.mxu0 0
  %916 = vmatpush1.bf16.msra.mxu0 0
  %917 = vmatprep.subr.bf16.mxu0 0
  %918 = vmatpush1.bf16.msra.mxu0 0
  %919 = vmatprep.subr.bf16.mxu0 0
  %920 = vmatpush1.bf16.msra.mxu0 0
  %921 = vmatprep.subr.bf16.mxu0 0
  %922 = vmatpush1.bf16.msra.mxu0 0
  %923 = vmatprep.subr.bf16.mxu0 0
  %924 = vmatpush1.bf16.msra.mxu0 0
  %925 = vmatprep.subr.bf16.mxu0 0
  %926 = vmatpush1.bf16.msra.mxu0 0
  %927 = vmatprep.subr.bf16.mxu0 0
  %928 = vmatpush1.bf16.msra.mxu0 0
  %929 = vmatprep.subr.bf16.mxu0 0
  %930 = vmatpush1.bf16.msra.mxu0 0
  %931 = vmatprep.subr.bf16.mxu0 0
  %932 = vmatpush1.bf16.msra.mxu0 0
  %933 = vmatprep.subr.bf16.mxu0 0
  %934 = vmatpush1.bf16.msra.mxu0 0
  %935 = vmatprep.subr.bf16.mxu0 0
  %936 = vmatpush1.bf16.msra.mxu0 0
  %937 = vmatprep.subr.bf16.mxu0 0
  %938 = vmatpush1.bf16.msra.mxu0 0
  %939 = vmatprep.subr.bf16.mxu0 0
  %940 = vmatpush1.bf16.msra.mxu0 0
  %941 = vmatprep.subr.bf16.mxu0 0
  %942 = vmatpush1.bf16.msra.mxu0 0
  %943 = vmatprep.subr.bf16.mxu0 0
  %944 = vmatpush1.bf16.msra.mxu0 0
  %945 = vmatprep.mubr.bf16.mxu0 0
  %946 = vmatmul.mubr.bf16.gmra.mrb[0].mxu0 %v908
  %v947 = vpop.f32.mrb[0].mxu0
  %v948 = vadd.f32 0.0, %v947
  %v949 = vpop.f32.mrb[0].mxu0
  %v950 = vpop.f32.mrb[0].mxu0
  %v951 = vpop.f32.mrb[0].mxu0
  %952 = vdwg.mxu0
  %953 = vrot.lane.b32.xlu0 %v290, 80
  %v954 = vpop.permute.xlu0 %953
  %955 = vrot.lane.b32.xlu0 %v292, 80
  %v956 = vpop.permute.xlu0 %955
  %v958 = vsel %vm294, %v954, 0
  %v961 = vsel %vm294, %v956, 0
  %963 = vmatprep.subr.bf16.mxu0 0
  %964 = vmatpush1.bf16.xpose.msra.mxu0 %v961
  %965 = vmatprep.subr.bf16.mxu0 0
  %966 = vmatpush1.bf16.xpose.msra.mxu0 0
  %967 = vmatprep.subr.bf16.mxu0 0
  %968 = vmatpush1.bf16.xpose.msra.mxu0 0
  %969 = vmatprep.subr.bf16.mxu0 0
  %970 = vmatpush1.bf16.xpose.msra.mxu0 0
  %971 = vmatprep.subr.bf16.mxu0 0
  %972 = vmatpush1.bf16.xpose.msra.mxu0 0
  %973 = vmatprep.subr.bf16.mxu0 0
  %974 = vmatpush1.bf16.xpose.msra.mxu0 0
  %975 = vmatprep.subr.bf16.mxu0 0
  %976 = vmatpush1.bf16.xpose.msra.mxu0 0
  %977 = vmatprep.subr.bf16.mxu0 0
  %978 = vmatpush1.bf16.xpose.msra.mxu0 0
  %979 = vmatprep.subr.bf16.mxu0 0
  %980 = vmatpush1.bf16.xpose.msra.mxu0 0
  %981 = vmatprep.subr.bf16.mxu0 0
  %982 = vmatpush1.bf16.xpose.msra.mxu0 0
  %983 = vmatprep.subr.bf16.mxu0 0
  %984 = vmatpush1.bf16.xpose.msra.mxu0 0
  %985 = vmatprep.subr.bf16.mxu0 0
  %986 = vmatpush1.bf16.xpose.msra.mxu0 0
  %987 = vmatprep.subr.bf16.mxu0 0
  %988 = vmatpush1.bf16.xpose.msra.mxu0 0
  %989 = vmatprep.subr.bf16.mxu0 0
  %990 = vmatpush1.bf16.xpose.msra.mxu0 0
  %991 = vmatprep.subr.bf16.mxu0 0
  %992 = vmatpush1.bf16.xpose.msra.mxu0 0
  %993 = vmatprep.subr.bf16.mxu0 0
  %994 = vmatpush1.bf16.xpose.msra.mxu0 0
  %995 = vmatprep.mubr.bf16.mxu0 0
  %996 = vmatmul.mubr.bf16.gmra.mrb[0].mxu0 %v958
  %v997 = vpop.f32.mrb[0].mxu0
  %v998 = vadd.f32 0.0, %v997
  %v999 = vpop.f32.mrb[0].mxu0
  %v1000 = vpop.f32.mrb[0].mxu0
  %v1001 = vpop.f32.mrb[0].mxu0
  %1002 = vdwg.mxu0
  %1003 = vrot.lane.b32.xlu0 %v291, 80
  %v1004 = vpop.permute.xlu0 %1003
  %1005 = vrot.lane.b32.xlu0 %v293, 80
  %v1006 = vpop.permute.xlu0 %1005
  %v1008 = vsel %vm294, %v1004, 0
  %v1011 = vsel %vm294, %v1006, 0
  %1013 = vmatprep.subr.bf16.mxu0 0
  %1014 = vmatpush1.bf16.xpose.msra.mxu0 %v1011
  %1015 = vmatprep.subr.bf16.mxu0 0
  %1016 = vmatpush1.bf16.xpose.msra.mxu0 0
  %1017 = vmatprep.subr.bf16.mxu0 0
  %1018 = vmatpush1.bf16.xpose.msra.mxu0 0
  %1019 = vmatprep.subr.bf16.mxu0 0
  %1020 = vmatpush1.bf16.xpose.msra.mxu0 0
  %1021 = vmatprep.subr.bf16.mxu0 0
  %1022 = vmatpush1.bf16.xpose.msra.mxu0 0
  %1023 = vmatprep.subr.bf16.mxu0 0
  %1024 = vmatpush1.bf16.xpose.msra.mxu0 0
  %1025 = vmatprep.subr.bf16.mxu0 0
  %1026 = vmatpush1.bf16.xpose.msra.mxu0 0
  %1027 = vmatprep.subr.bf16.mxu0 0
  %1028 = vmatpush1.bf16.xpose.msra.mxu0 0
  %1029 = vmatprep.subr.bf16.mxu0 0
  %1030 = vmatpush1.bf16.xpose.msra.mxu0 0
  %1031 = vmatprep.subr.bf16.mxu0 0
  %1032 = vmatpush1.bf16.xpose.msra.mxu0 0
  %1033 = vmatprep.subr.bf16.mxu0 0
  %1034 = vmatpush1.bf16.xpose.msra.mxu0 0
  %1035 = vmatprep.subr.bf16.mxu0 0
  %1036 = vmatpush1.bf16.xpose.msra.mxu0 0
  %1037 = vmatprep.subr.bf16.mxu0 0
  %1038 = vmatpush1.bf16.xpose.msra.mxu0 0
  %1039 = vmatprep.subr.bf16.mxu0 0
  %1040 = vmatpush1.bf16.xpose.msra.mxu0 0
  %1041 = vmatprep.subr.bf16.mxu0 0
  %1042 = vmatpush1.bf16.xpose.msra.mxu0 0
  %1043 = vmatprep.subr.bf16.mxu0 0
  %1044 = vmatpush1.bf16.xpose.msra.mxu0 0
  %1045 = vmatprep.mubr.bf16.mxu0 0
  %1046 = vmatmul.mubr.bf16.gmra.mrb[0].mxu0 %v1008
  %v1047 = vpop.f32.mrb[0].mxu0
  %v1048 = vadd.f32 0.0, %v1047
  %v1049 = vpop.f32.mrb[0].mxu0
  %v1050 = vpop.f32.mrb[0].mxu0
  %v1051 = vpop.f32.mrb[0].mxu0
  %1052 = vdwg.mxu0
  %v1053 = vsel %vm387, %v998, -inf
  %1054 = vmax.xlane.f32.xlu0 %v1053
  %v1055 = vpop.xlane.xlu0 %1054
  %v1056 = vsel %vm387, %v1048, -inf
  %1057 = vmax.xlane.f32.xlu0 %v1056
  %v1058 = vpop.xlane.xlu0 %1057
  %v1059 = vsub.f32 %v998, %v1055
  %v1060 = vsub.f32 %v1048, %v1058
  %v1061 = vmul.f32 %v1059, 1.442695
  %v1062 = vpow.pop %v1061
  %v1063 = vmul.f32 %v1060, 1.442695
  %v1064 = vpow.pop %v1063
  %v1065 = vsel %vm387, %v1062, 0.0
  %1066 = vadd.xlane.f32.xlu0 %v1065
  %v1067 = vpop.xlane.xlu0 %1066
  %v1068 = vsel %vm387, %v1064, 0.0
  %1069 = vadd.xlane.f32.xlu0 %v1068
  %v1070 = vpop.xlane.xlu0 %1069
  %v1071 = vrcp.pop %v1067
  %v1072 = vrcp.pop %v1070
  %v1073 = vmul.f32 %v1062, %v1071
  %v1074 = vmul.f32 %v1064, %v1072
  %v1075 = vpack.c.bf16 %v1073, %v1073
  %v1076 = vpack.c.bf16 %v1074, %v1074
  %1077 = vrot.lane.b32.xlu0 %v292, 16
  %v1078 = vpop.permute.xlu0 %1077
  %v1080 = vsel %vm387, %v1075, 0
  %v1083 = vsel %vm418, %v1078, 0
  %1085 = vmatprep.subr.bf16.mxu0 0
  %1086 = vmatpush1.bf16.msra.mxu0 %v1083
  %1087 = vmatprep.subr.bf16.mxu0 0
  %1088 = vmatpush1.bf16.msra.mxu0 0
  %1089 = vmatprep.subr.bf16.mxu0 0
  %1090 = vmatpush1.bf16.msra.mxu0 0
  %1091 = vmatprep.subr.bf16.mxu0 0
  %1092 = vmatpush1.bf16.msra.mxu0 0
  %1093 = vmatprep.subr.bf16.mxu0 0
  %1094 = vmatpush1.bf16.msra.mxu0 0
  %1095 = vmatprep.subr.bf16.mxu0 0
  %1096 = vmatpush1.bf16.msra.mxu0 0
  %1097 = vmatprep.subr.bf16.mxu0 0
  %1098 = vmatpush1.bf16.msra.mxu0 0
  %1099 = vmatprep.subr.bf16.mxu0 0
  %1100 = vmatpush1.bf16.msra.mxu0 0
  %1101 = vmatprep.subr.bf16.mxu0 0
  %1102 = vmatpush1.bf16.msra.mxu0 0
  %1103 = vmatprep.subr.bf16.mxu0 0
  %1104 = vmatpush1.bf16.msra.mxu0 0
  %1105 = vmatprep.subr.bf16.mxu0 0
  %1106 = vmatpush1.bf16.msra.mxu0 0
  %1107 = vmatprep.subr.bf16.mxu0 0
  %1108 = vmatpush1.bf16.msra.mxu0 0
  %1109 = vmatprep.subr.bf16.mxu0 0
  %1110 = vmatpush1.bf16.msra.mxu0 0
  %1111 = vmatprep.subr.bf16.mxu0 0
  %1112 = vmatpush1.bf16.msra.mxu0 0
  %1113 = vmatprep.subr.bf16.mxu0 0
  %1114 = vmatpush1.bf16.msra.mxu0 0
  %1115 = vmatprep.subr.bf16.mxu0 0
  %1116 = vmatpush1.bf16.msra.mxu0 0
  %1117 = vmatprep.mubr.bf16.mxu0 0
  %1118 = vmatmul.mubr.bf16.gmra.mrb[0].mxu0 %v1080
  %v1119 = vpop.f32.mrb[0].mxu0
  %v1120 = vadd.f32 0.0, %v1119
  %v1121 = vpop.f32.mrb[0].mxu0
  %v1122 = vpop.f32.mrb[0].mxu0
  %v1123 = vpop.f32.mrb[0].mxu0
  %1124 = vdwg.mxu0
  %1125 = vrot.lane.b32.xlu0 %v293, 16
  %v1126 = vpop.permute.xlu0 %1125
  %v1128 = vsel %vm387, %v1076, 0
  %v1131 = vsel %vm418, %v1126, 0
  %1133 = vmatprep.subr.bf16.mxu0 0
  %1134 = vmatpush1.bf16.msra.mxu0 %v1131
  %1135 = vmatprep.subr.bf16.mxu0 0
  %1136 = vmatpush1.bf16.msra.mxu0 0
  %1137 = vmatprep.subr.bf16.mxu0 0
  %1138 = vmatpush1.bf16.msra.mxu0 0
  %1139 = vmatprep.subr.bf16.mxu0 0
  %1140 = vmatpush1.bf16.msra.mxu0 0
  %1141 = vmatprep.subr.bf16.mxu0 0
  %1142 = vmatpush1.bf16.msra.mxu0 0
  %1143 = vmatprep.subr.bf16.mxu0 0
  %1144 = vmatpush1.bf16.msra.mxu0 0
  %1145 = vmatprep.subr.bf16.mxu0 0
  %1146 = vmatpush1.bf16.msra.mxu0 0
  %1147 = vmatprep.subr.bf16.mxu0 0
  %1148 = vmatpush1.bf16.msra.mxu0 0
  %1149 = vmatprep.subr.bf16.mxu0 0
  %1150 = vmatpush1.bf16.msra.mxu0 0
  %1151 = vmatprep.subr.bf16.mxu0 0
  %1152 = vmatpush1.bf16.msra.mxu0 0
  %1153 = vmatprep.subr.bf16.mxu0 0
  %1154 = vmatpush1.bf16.msra.mxu0 0
  %1155 = vmatprep.subr.bf16.mxu0 0
  %1156 = vmatpush1.bf16.msra.mxu0 0
  %1157 = vmatprep.subr.bf16.mxu0 0
  %1158 = vmatpush1.bf16.msra.mxu0 0
  %1159 = vmatprep.subr.bf16.mxu0 0
  %1160 = vmatpush1.bf16.msra.mxu0 0
  %1161 = vmatprep.subr.bf16.mxu0 0
  %1162 = vmatpush1.bf16.msra.mxu0 0
  %1163 = vmatprep.subr.bf16.mxu0 0
  %1164 = vmatpush1.bf16.msra.mxu0 0
  %1165 = vmatprep.mubr.bf16.mxu0 0
  %1166 = vmatmul.mubr.bf16.gmra.mrb[0].mxu0 %v1128
  %v1167 = vpop.f32.mrb[0].mxu0
  %v1168 = vadd.f32 0.0, %v1167
  %v1169 = vpop.f32.mrb[0].mxu0
  %v1170 = vpop.f32.mrb[0].mxu0
  %v1171 = vpop.f32.mrb[0].mxu0
  %1172 = vdwg.mxu0
  %1175 = vrot.lane.b32.xlu0 %v680, 16
  %v1176 = vpop.permute.xlu0 %1175
  %1177 = vrot.lane.b32.xlu0 %v728, 16
  %v1178 = vpop.permute.xlu0 %1177
  %1183 = vrot.lane.b32.xlu0 %v900, 32
  %v1184 = vpop.permute.xlu0 %1183
  %1185 = vrot.lane.b32.xlu0 %v948, 32
  %v1186 = vpop.permute.xlu0 %1185
  %1191 = vrot.lane.b32.xlu0 %v1120, 48
  %v1192 = vpop.permute.xlu0 %1191
  %1193 = vrot.lane.b32.xlu0 %v1168, 48
  %v1194 = vpop.permute.xlu0 %1193
  %v1197 = vsel %vm294, %v457, %v1176
  %v1198 = vsel %vm294, %v506, %v1178
  %vm1199 = vcmask 261120
  %v1200 = vsel %vm1199, %v1197, %v1184
  %v1201 = vsel %vm1199, %v1198, %v1186
  %vm1202 = vcmask 392192
  %v1203 = vsel %vm1202, %v1200, %v1192
  %v1204 = vsel %vm1202, %v1201, %v1194
  %v1205 = vpack.c.bf16 %v1204, %v1203
  %v1206 = vld [vmem:[%s6] sm:$0xf]
  %v1207 = vld [vmem:[%s6 + $0x4] sm:$0xf]
  %v1208 = vld [vmem:[%s6 + $0x8] sm:$0xf]
  %v1209 = vld [vmem:[%s6 + $0xc] sm:$0xf]
  %v1210 = vld [vmem:[%s6 + $0x10] sm:$0xf]
  %v1211 = vld [vmem:[%s6 + $0x14] sm:$0xf]
  %v1212 = vld [vmem:[%s6 + $0x18] sm:$0xf]
  %v1213 = vld [vmem:[%s6 + $0x1c] sm:$0xf]
  %v1214 = vld [vmem:[%s7] sm:$0x1]
  %v1216 = vlaneseq
  %v1217 = vshrl.u32 %v1216, 7
  %v1218 = vsub.s32 0, %v1217
  %v1219 = vrot.slane %v1214, %v1218
  %v1229 = vunpack.c.l.b16 %v1206
  %v1230 = vunpack.c.l.b16 %v1207
  %v1231 = vunpack.c.l.b16 %v1208
  %v1232 = vunpack.c.l.b16 %v1209
  %v1233 = vunpack.c.l.b16 %v1210
  %v1234 = vunpack.c.l.b16 %v1211
  %v1235 = vunpack.c.l.b16 %v1212
  %v1236 = vunpack.c.l.b16 %v1213
  %v1237 = vpack.c.b16 %v1230, %v1229
  %v1238 = vpack.c.b16 %v1232, %v1231
  %v1239 = vpack.c.b16 %v1234, %v1233
  %v1240 = vpack.c.b16 %v1236, %v1235
  %v1246 = vsel %vm78, %v1205, 0
  %1248 = vmatprep.subr.bf16.mxu0 0
  %1249 = vmatpush1.bf16.msra.mxu0 %v1237
  %1250 = vmatprep.subr.bf16.mxu0 0
  %1251 = vmatpush1.bf16.msra.mxu0 %v1238
  %1252 = vmatprep.subr.bf16.mxu0 0
  %1253 = vmatpush1.bf16.msra.mxu0 %v1239
  %1254 = vmatprep.subr.bf16.mxu0 0
  %1255 = vmatpush1.bf16.msra.mxu0 %v1240
  %1256 = vmatprep.subr.bf16.mxu0 0
  %1257 = vmatpush1.bf16.msra.mxu0 0
  %1258 = vmatprep.subr.bf16.mxu0 0
  %1259 = vmatpush1.bf16.msra.mxu0 0
  %1260 = vmatprep.subr.bf16.mxu0 0
  %1261 = vmatpush1.bf16.msra.mxu0 0
  %1262 = vmatprep.subr.bf16.mxu0 0
  %1263 = vmatpush1.bf16.msra.mxu0 0
  %1264 = vmatprep.subr.bf16.mxu0 0
  %1265 = vmatpush1.bf16.msra.mxu0 0
  %1266 = vmatprep.subr.bf16.mxu0 0
  %1267 = vmatpush1.bf16.msra.mxu0 0
  %1268 = vmatprep.subr.bf16.mxu0 0
  %1269 = vmatpush1.bf16.msra.mxu0 0
  %1270 = vmatprep.subr.bf16.mxu0 0
  %1271 = vmatpush1.bf16.msra.mxu0 0
  %1272 = vmatprep.subr.bf16.mxu0 0
  %1273 = vmatpush1.bf16.msra.mxu0 0
  %1274 = vmatprep.subr.bf16.mxu0 0
  %1275 = vmatpush1.bf16.msra.mxu0 0
  %1276 = vmatprep.subr.bf16.mxu0 0
  %1277 = vmatpush1.bf16.msra.mxu0 0
  %1278 = vmatprep.subr.bf16.mxu0 0
  %1279 = vmatpush1.bf16.msra.mxu0 0
  %1280 = vmatprep.mubr.bf16.mxu0 0
  %1281 = vmatmul.mubr.bf16.gmra.mrb[0].mxu0 %v1246
  %v1282 = vpop.f32.mrb[0].mxu0
  %v1283 = vadd.f32 %v1219, %v1282
  %v1284 = vpop.f32.mrb[0].mxu0
  %v1285 = vpop.f32.mrb[0].mxu0
  %v1286 = vadd.f32 %v1219, %v1285
  %v1287 = vpop.f32.mrb[0].mxu0
  %1288 = vdwg.mxu0
  %v1289 = vpack.c.bf16 %v1286, %v1283
  %v1290 = vld [vmem:[%s8] sm:$0xf]
  %v1291 = vld [vmem:[%s8 + $0x4] sm:$0xf]
  %v1292 = vld [vmem:[%s8 + $0x8] sm:$0xf]
  %v1293 = vld [vmem:[%s8 + $0xc] sm:$0xf]
  %v1294 = vld [vmem:[%s8 + $0x10] sm:$0xf]
  %v1295 = vld [vmem:[%s8 + $0x14] sm:$0xf]
  %v1296 = vld [vmem:[%s8 + $0x18] sm:$0xf]
  %v1297 = vld [vmem:[%s8 + $0x1c] sm:$0xf]
  %v1306 = vunpack.c.l.b16 %v1290
  %v1307 = vunpack.c.l.b16 %v1291
  %v1308 = vunpack.c.l.b16 %v1292
  %v1309 = vunpack.c.l.b16 %v1293
  %v1310 = vunpack.c.l.b16 %v1294
  %v1311 = vunpack.c.l.b16 %v1295
  %v1312 = vunpack.c.l.b16 %v1296
  %v1313 = vunpack.c.l.b16 %v1297
  %v1314 = vpack.c.b16 %v1307, %v1306
  %v1315 = vpack.c.b16 %v1309, %v1308
  %v1316 = vpack.c.b16 %v1311, %v1310
  %v1317 = vpack.c.b16 %v1313, %v1312
  %v1323 = vsel %vm78, %v1289, 0
  %1325 = vmatprep.subr.bf16.mxu0 0
  %1326 = vmatpush1.bf16.msra.mxu0 %v1314
  %1327 = vmatprep.subr.bf16.mxu0 0
  %1328 = vmatpush1.bf16.msra.mxu0 %v1315
  %1329 = vmatprep.subr.bf16.mxu0 0
  %1330 = vmatpush1.bf16.msra.mxu0 %v1316
  %1331 = vmatprep.subr.bf16.mxu0 0
  %1332 = vmatpush1.bf16.msra.mxu0 %v1317
  %1333 = vmatprep.subr.bf16.mxu0 0
  %1334 = vmatpush1.bf16.msra.mxu0 0
  %1335 = vmatprep.subr.bf16.mxu0 0
  %1336 = vmatpush1.bf16.msra.mxu0 0
  %1337 = vmatprep.subr.bf16.mxu0 0
  %1338 = vmatpush1.bf16.msra.mxu0 0
  %1339 = vmatprep.subr.bf16.mxu0 0
  %1340 = vmatpush1.bf16.msra.mxu0 0
  %1341 = vmatprep.subr.bf16.mxu0 0
  %1342 = vmatpush1.bf16.msra.mxu0 0
  %1343 = vmatprep.subr.bf16.mxu0 0
  %1344 = vmatpush1.bf16.msra.mxu0 0
  %1345 = vmatprep.subr.bf16.mxu0 0
  %1346 = vmatpush1.bf16.msra.mxu0 0
  %1347 = vmatprep.subr.bf16.mxu0 0
  %1348 = vmatpush1.bf16.msra.mxu0 0
  %1349 = vmatprep.subr.bf16.mxu0 0
  %1350 = vmatpush1.bf16.msra.mxu0 0
  %1351 = vmatprep.subr.bf16.mxu0 0
  %1352 = vmatpush1.bf16.msra.mxu0 0
  %1353 = vmatprep.subr.bf16.mxu0 0
  %1354 = vmatpush1.bf16.msra.mxu0 0
  %1355 = vmatprep.subr.bf16.mxu0 0
  %1356 = vmatpush1.bf16.msra.mxu0 0
  %1357 = vmatprep.mubr.bf16.mxu0 0
  %1358 = vmatmul.mubr.bf16.gmra.mrb[0].mxu0 %v1323
  %v1359 = vpop.f32.mrb[0].mxu0
  %v1360 = vadd.f32 0.0, %v1359
  %v1361 = vpop.f32.mrb[0].mxu0
  %v1362 = vpop.f32.mrb[0].mxu0
  %v1363 = vadd.f32 0.0, %v1362
  %v1364 = vpop.f32.mrb[0].mxu0
  %1365 = vdwg.mxu0
  %v1366 = vadd.f32 %v198, %v1360
  %v1367 = vadd.f32 %v201, %v1363
  %s1368 = scalar_lea.vmem %s1, 16
  %v1369 = vld [vmem:[%s1368] sm:$0xff]
  %v1370 = vld [vmem:[%s1368 + $0x8] sm:$0xff]
  %v1371 = vpack.c.bf16 %v1370, %v1369
  %s1372 = scalar_lea.vmem %s4, 32
  %v1373 = vld [vmem:[%s1372] sm:$0xf]
  %v1374 = vld [vmem:[%s1372 + $0x4] sm:$0xf]
  %v1375 = vld [vmem:[%s1372 + $0x8] sm:$0xf]
  %v1376 = vld [vmem:[%s1372 + $0xc] sm:$0xf]
  %v1377 = vld [vmem:[%s1372 + $0x10] sm:$0xf]
  %v1378 = vld [vmem:[%s1372 + $0x14] sm:$0xf]
  %v1379 = vld [vmem:[%s1372 + $0x18] sm:$0xf]
  %v1380 = vld [vmem:[%s1372 + $0x1c] sm:$0xf]
  %s1381 = scalar_lea.vmem %s5, 1
  %v1382 = vld [vmem:[%s1381] sm:$0x1]
  %v1384 = vlaneseq
  %v1385 = vshrl.u32 %v1384, 7
  %v1386 = vsub.s32 0, %v1385
  %v1387 = vrot.slane %v1382, %v1386
  %v1397 = vunpack.c.l.b16 %v1373
  %v1398 = vunpack.c.l.b16 %v1374
  %v1399 = vunpack.c.l.b16 %v1375
  %v1400 = vunpack.c.l.b16 %v1376
  %v1401 = vunpack.c.l.b16 %v1377
  %v1402 = vunpack.c.l.b16 %v1378
  %v1403 = vunpack.c.l.b16 %v1379
  %v1404 = vunpack.c.l.b16 %v1380
  %v1405 = vpack.c.b16 %v1398, %v1397
  %v1406 = vpack.c.b16 %v1400, %v1399
  %v1407 = vpack.c.b16 %v1402, %v1401
  %v1408 = vpack.c.b16 %v1404, %v1403
  %v1414 = vsel %vm78, %v1371, 0
  %1416 = vmatprep.subr.bf16.mxu0 0
  %1417 = vmatpush1.bf16.msra.mxu0 %v1405
  %1418 = vmatprep.subr.bf16.mxu0 0
  %1419 = vmatpush1.bf16.msra.mxu0 %v1406
  %1420 = vmatprep.subr.bf16.mxu0 0
  %1421 = vmatpush1.bf16.msra.mxu0 %v1407
  %1422 = vmatprep.subr.bf16.mxu0 0
  %1423 = vmatpush1.bf16.msra.mxu0 %v1408
  %1424 = vmatprep.subr.bf16.mxu0 0
  %1425 = vmatpush1.bf16.msra.mxu0 0
  %1426 = vmatprep.subr.bf16.mxu0 0
  %1427 = vmatpush1.bf16.msra.mxu0 0
  %1428 = vmatprep.subr.bf16.mxu0 0
  %1429 = vmatpush1.bf16.msra.mxu0 0
  %1430 = vmatprep.subr.bf16.mxu0 0
  %1431 = vmatpush1.bf16.msra.mxu0 0
  %1432 = vmatprep.subr.bf16.mxu0 0
  %1433 = vmatpush1.bf16.msra.mxu0 0
  %1434 = vmatprep.subr.bf16.mxu0 0
  %1435 = vmatpush1.bf16.msra.mxu0 0
  %1436 = vmatprep.subr.bf16.mxu0 0
  %1437 = vmatpush1.bf16.msra.mxu0 0
  %1438 = vmatprep.subr.bf16.mxu0 0
  %1439 = vmatpush1.bf16.msra.mxu0 0
  %1440 = vmatprep.subr.bf16.mxu0 0
  %1441 = vmatpush1.bf16.msra.mxu0 0
  %1442 = vmatprep.subr.bf16.mxu0 0
  %1443 = vmatpush1.bf16.msra.mxu0 0
  %1444 = vmatprep.subr.bf16.mxu0 0
  %1445 = vmatpush1.bf16.msra.mxu0 0
  %1446 = vmatprep.subr.bf16.mxu0 0
  %1447 = vmatpush1.bf16.msra.mxu0 0
  %1448 = vmatprep.mubr.bf16.mxu0 0
  %1449 = vmatmul.mubr.bf16.gmra.mrb[0].mxu0 %v1414
  %v1450 = vpop.f32.mrb[0].mxu0
  %v1451 = vadd.f32 %v1387, %v1450
  %v1452 = vpop.f32.mrb[0].mxu0
  %v1453 = vpop.f32.mrb[0].mxu0
  %v1454 = vadd.f32 %v1387, %v1453
  %v1455 = vpop.f32.mrb[0].mxu0
  %1456 = vdwg.mxu0
  %v1457 = vpack.c.bf16 %v1451, %v1451
  %v1458 = vpack.c.bf16 %v1454, %v1454
  %1459 = vrot.lane.b32.xlu0 %v290, 64
  %v1460 = vpop.permute.xlu0 %1459
  %v1462 = vsel %vm294, %v1460, 0
  %v1465 = vsel %vm294, %v1457, 0
  %1467 = vmatprep.subr.bf16.mxu0 0
  %1468 = vmatpush1.bf16.xpose.msra.mxu0 %v1465
  %1469 = vmatprep.subr.bf16.mxu0 0
  %1470 = vmatpush1.bf16.xpose.msra.mxu0 0
  %1471 = vmatprep.subr.bf16.mxu0 0
  %1472 = vmatpush1.bf16.xpose.msra.mxu0 0
  %1473 = vmatprep.subr.bf16.mxu0 0
  %1474 = vmatpush1.bf16.xpose.msra.mxu0 0
  %1475 = vmatprep.subr.bf16.mxu0 0
  %1476 = vmatpush1.bf16.xpose.msra.mxu0 0
  %1477 = vmatprep.subr.bf16.mxu0 0
  %1478 = vmatpush1.bf16.xpose.msra.mxu0 0
  %1479 = vmatprep.subr.bf16.mxu0 0
  %1480 = vmatpush1.bf16.xpose.msra.mxu0 0
  %1481 = vmatprep.subr.bf16.mxu0 0
  %1482 = vmatpush1.bf16.xpose.msra.mxu0 0
  %1483 = vmatprep.subr.bf16.mxu0 0
  %1484 = vmatpush1.bf16.xpose.msra.mxu0 0
  %1485 = vmatprep.subr.bf16.mxu0 0
  %1486 = vmatpush1.bf16.xpose.msra.mxu0 0
  %1487 = vmatprep.subr.bf16.mxu0 0
  %1488 = vmatpush1.bf16.xpose.msra.mxu0 0
  %1489 = vmatprep.subr.bf16.mxu0 0
  %1490 = vmatpush1.bf16.xpose.msra.mxu0 0
  %1491 = vmatprep.subr.bf16.mxu0 0
  %1492 = vmatpush1.bf16.xpose.msra.mxu0 0
  %1493 = vmatprep.subr.bf16.mxu0 0
  %1494 = vmatpush1.bf16.xpose.msra.mxu0 0
  %1495 = vmatprep.subr.bf16.mxu0 0
  %1496 = vmatpush1.bf16.xpose.msra.mxu0 0
  %1497 = vmatprep.subr.bf16.mxu0 0
  %1498 = vmatpush1.bf16.xpose.msra.mxu0 0
  %1499 = vmatprep.mubr.bf16.mxu0 0
  %1500 = vmatmul.mubr.bf16.gmra.mrb[0].mxu0 %v1462
  %v1501 = vpop.f32.mrb[0].mxu0
  %v1502 = vadd.f32 0.0, %v1501
  %v1503 = vpop.f32.mrb[0].mxu0
  %v1504 = vpop.f32.mrb[0].mxu0
  %v1505 = vpop.f32.mrb[0].mxu0
  %1506 = vdwg.mxu0
  %1507 = vrot.lane.b32.xlu0 %v291, 64
  %v1508 = vpop.permute.xlu0 %1507
  %v1510 = vsel %vm294, %v1508, 0
  %v1513 = vsel %vm294, %v1458, 0
  %1515 = vmatprep.subr.bf16.mxu0 0
  %1516 = vmatpush1.bf16.xpose.msra.mxu0 %v1513
  %1517 = vmatprep.subr.bf16.mxu0 0
  %1518 = vmatpush1.bf16.xpose.msra.mxu0 0
  %1519 = vmatprep.subr.bf16.mxu0 0
  %1520 = vmatpush1.bf16.xpose.msra.mxu0 0
  %1521 = vmatprep.subr.bf16.mxu0 0
  %1522 = vmatpush1.bf16.xpose.msra.mxu0 0
  %1523 = vmatprep.subr.bf16.mxu0 0
  %1524 = vmatpush1.bf16.xpose.msra.mxu0 0
  %1525 = vmatprep.subr.bf16.mxu0 0
  %1526 = vmatpush1.bf16.xpose.msra.mxu0 0
  %1527 = vmatprep.subr.bf16.mxu0 0
  %1528 = vmatpush1.bf16.xpose.msra.mxu0 0
  %1529 = vmatprep.subr.bf16.mxu0 0
  %1530 = vmatpush1.bf16.xpose.msra.mxu0 0
  %1531 = vmatprep.subr.bf16.mxu0 0
  %1532 = vmatpush1.bf16.xpose.msra.mxu0 0
  %1533 = vmatprep.subr.bf16.mxu0 0
  %1534 = vmatpush1.bf16.xpose.msra.mxu0 0
  %1535 = vmatprep.subr.bf16.mxu0 0
  %1536 = vmatpush1.bf16.xpose.msra.mxu0 0
  %1537 = vmatprep.subr.bf16.mxu0 0
  %1538 = vmatpush1.bf16.xpose.msra.mxu0 0
  %1539 = vmatprep.subr.bf16.mxu0 0
  %1540 = vmatpush1.bf16.xpose.msra.mxu0 0
  %1541 = vmatprep.subr.bf16.mxu0 0
  %1542 = vmatpush1.bf16.xpose.msra.mxu0 0
  %1543 = vmatprep.subr.bf16.mxu0 0
  %1544 = vmatpush1.bf16.xpose.msra.mxu0 0
  %1545 = vmatprep.subr.bf16.mxu0 0
  %1546 = vmatpush1.bf16.xpose.msra.mxu0 0
  %1547 = vmatprep.mubr.bf16.mxu0 0
  %1548 = vmatmul.mubr.bf16.gmra.mrb[0].mxu0 %v1510
  %v1549 = vpop.f32.mrb[0].mxu0
  %v1550 = vadd.f32 0.0, %v1549
  %v1551 = vpop.f32.mrb[0].mxu0
  %v1552 = vpop.f32.mrb[0].mxu0
  %v1553 = vpop.f32.mrb[0].mxu0
  %1554 = vdwg.mxu0
  %v1555 = vsel %vm387, %v1502, -inf
  %1556 = vmax.xlane.f32.xlu0 %v1555
  %v1557 = vpop.xlane.xlu0 %1556
  %v1558 = vsel %vm387, %v1550, -inf
  %1559 = vmax.xlane.f32.xlu0 %v1558
  %v1560 = vpop.xlane.xlu0 %1559
  %v1561 = vsub.f32 %v1502, %v1557
  %v1562 = vsub.f32 %v1550, %v1560
  %v1563 = vmul.f32 %v1561, 1.442695
  %v1564 = vpow.pop %v1563
  %v1565 = vmul.f32 %v1562, 1.442695
  %v1566 = vpow.pop %v1565
  %v1567 = vsel %vm387, %v1564, 0.0
  %1568 = vadd.xlane.f32.xlu0 %v1567
  %v1569 = vpop.xlane.xlu0 %1568
  %v1570 = vsel %vm387, %v1566, 0.0
  %1571 = vadd.xlane.f32.xlu0 %v1570
  %v1572 = vpop.xlane.xlu0 %1571
  %v1573 = vrcp.pop %v1569
  %v1574 = vrcp.pop %v1572
  %v1575 = vmul.f32 %v1564, %v1573
  %v1576 = vmul.f32 %v1566, %v1574
  %v1577 = vpack.c.bf16 %v1575, %v1575
  %v1578 = vpack.c.bf16 %v1576, %v1576
  %1580 = vrot.lane.b32.xlu0 %v1457, 64
  %v1581 = vpop.permute.xlu0 %1580
  %v1583 = vsel %vm387, %v1577, 0
  %v1586 = vsel %vm418, %v1581, 0
  %1588 = vmatprep.subr.bf16.mxu0 0
  %1589 = vmatpush1.bf16.msra.mxu0 %v1586
  %1590 = vmatprep.subr.bf16.mxu0 0
  %1591 = vmatpush1.bf16.msra.mxu0 0
  %1592 = vmatprep.subr.bf16.mxu0 0
  %1593 = vmatpush1.bf16.msra.mxu0 0
  %1594 = vmatprep.subr.bf16.mxu0 0
  %1595 = vmatpush1.bf16.msra.mxu0 0
  %1596 = vmatprep.subr.bf16.mxu0 0
  %1597 = vmatpush1.bf16.msra.mxu0 0
  %1598 = vmatprep.subr.bf16.mxu0 0
  %1599 = vmatpush1.bf16.msra.mxu0 0
  %1600 = vmatprep.subr.bf16.mxu0 0
  %1601 = vmatpush1.bf16.msra.mxu0 0
  %1602 = vmatprep.subr.bf16.mxu0 0
  %1603 = vmatpush1.bf16.msra.mxu0 0
  %1604 = vmatprep.subr.bf16.mxu0 0
  %1605 = vmatpush1.bf16.msra.mxu0 0
  %1606 = vmatprep.subr.bf16.mxu0 0
  %1607 = vmatpush1.bf16.msra.mxu0 0
  %1608 = vmatprep.subr.bf16.mxu0 0
  %1609 = vmatpush1.bf16.msra.mxu0 0
  %1610 = vmatprep.subr.bf16.mxu0 0
  %1611 = vmatpush1.bf16.msra.mxu0 0
  %1612 = vmatprep.subr.bf16.mxu0 0
  %1613 = vmatpush1.bf16.msra.mxu0 0
  %1614 = vmatprep.subr.bf16.mxu0 0
  %1615 = vmatpush1.bf16.msra.mxu0 0
  %1616 = vmatprep.subr.bf16.mxu0 0
  %1617 = vmatpush1.bf16.msra.mxu0 0
  %1618 = vmatprep.subr.bf16.mxu0 0
  %1619 = vmatpush1.bf16.msra.mxu0 0
  %1620 = vmatprep.mubr.bf16.mxu0 0
  %1621 = vmatmul.mubr.bf16.gmra.mrb[0].mxu0 %v1583
  %v1622 = vpop.f32.mrb[0].mxu0
  %v1623 = vadd.f32 0.0, %v1622
  %v1624 = vpop.f32.mrb[0].mxu0
  %v1625 = vpop.f32.mrb[0].mxu0
  %v1626 = vpop.f32.mrb[0].mxu0
  %1627 = vdwg.mxu0
  %1629 = vrot.lane.b32.xlu0 %v1458, 64
  %v1630 = vpop.permute.xlu0 %1629
  %v1632 = vsel %vm387, %v1578, 0
  %v1635 = vsel %vm418, %v1630, 0
  %1637 = vmatprep.subr.bf16.mxu0 0
  %1638 = vmatpush1.bf16.msra.mxu0 %v1635
  %1639 = vmatprep.subr.bf16.mxu0 0
  %1640 = vmatpush1.bf16.msra.mxu0 0
  %1641 = vmatprep.subr.bf16.mxu0 0
  %1642 = vmatpush1.bf16.msra.mxu0 0
  %1643 = vmatprep.subr.bf16.mxu0 0
  %1644 = vmatpush1.bf16.msra.mxu0 0
  %1645 = vmatprep.subr.bf16.mxu0 0
  %1646 = vmatpush1.bf16.msra.mxu0 0
  %1647 = vmatprep.subr.bf16.mxu0 0
  %1648 = vmatpush1.bf16.msra.mxu0 0
  %1649 = vmatprep.subr.bf16.mxu0 0
  %1650 = vmatpush1.bf16.msra.mxu0 0
  %1651 = vmatprep.subr.bf16.mxu0 0
  %1652 = vmatpush1.bf16.msra.mxu0 0
  %1653 = vmatprep.subr.bf16.mxu0 0
  %1654 = vmatpush1.bf16.msra.mxu0 0
  %1655 = vmatprep.subr.bf16.mxu0 0
  %1656 = vmatpush1.bf16.msra.mxu0 0
  %1657 = vmatprep.subr.bf16.mxu0 0
  %1658 = vmatpush1.bf16.msra.mxu0 0
  %1659 = vmatprep.subr.bf16.mxu0 0
  %1660 = vmatpush1.bf16.msra.mxu0 0
  %1661 = vmatprep.subr.bf16.mxu0 0
  %1662 = vmatpush1.bf16.msra.mxu0 0
  %1663 = vmatprep.subr.bf16.mxu0 0
  %1664 = vmatpush1.bf16.msra.mxu0 0
  %1665 = vmatprep.subr.bf16.mxu0 0
  %1666 = vmatpush1.bf16.msra.mxu0 0
  %1667 = vmatprep.subr.bf16.mxu0 0
  %1668 = vmatpush1.bf16.msra.mxu0 0
  %1669 = vmatprep.mubr.bf16.mxu0 0
  %1670 = vmatmul.mubr.bf16.gmra.mrb[0].mxu0 %v1632
  %v1671 = vpop.f32.mrb[0].mxu0
  %v1672 = vadd.f32 0.0, %v1671
  %v1673 = vpop.f32.mrb[0].mxu0
  %v1674 = vpop.f32.mrb[0].mxu0
  %v1675 = vpop.f32.mrb[0].mxu0
  %1676 = vdwg.mxu0
  %1677 = vrot.lane.b32.xlu0 %v290, 48
  %v1678 = vpop.permute.xlu0 %1677
  %1679 = vrot.lane.b32.xlu0 %v1457, 112
  %v1680 = vpop.permute.xlu0 %1679
  %v1682 = vsel %vm294, %v1678, 0
  %v1685 = vsel %vm294, %v1680, 0
  %1687 = vmatprep.subr.bf16.mxu0 0
  %1688 = vmatpush1.bf16.xpose.msra.mxu0 %v1685
  %1689 = vmatprep.subr.bf16.mxu0 0
  %1690 = vmatpush1.bf16.xpose.msra.mxu0 0
  %1691 = vmatprep.subr.bf16.mxu0 0
  %1692 = vmatpush1.bf16.xpose.msra.mxu0 0
  %1693 = vmatprep.subr.bf16.mxu0 0
  %1694 = vmatpush1.bf16.xpose.msra.mxu0 0
  %1695 = vmatprep.subr.bf16.mxu0 0
  %1696 = vmatpush1.bf16.xpose.msra.mxu0 0
  %1697 = vmatprep.subr.bf16.mxu0 0
  %1698 = vmatpush1.bf16.xpose.msra.mxu0 0
  %1699 = vmatprep.subr.bf16.mxu0 0
  %1700 = vmatpush1.bf16.xpose.msra.mxu0 0
  %1701 = vmatprep.subr.bf16.mxu0 0
  %1702 = vmatpush1.bf16.xpose.msra.mxu0 0
  %1703 = vmatprep.subr.bf16.mxu0 0
  %1704 = vmatpush1.bf16.xpose.msra.mxu0 0
  %1705 = vmatprep.subr.bf16.mxu0 0
  %1706 = vmatpush1.bf16.xpose.msra.mxu0 0
  %1707 = vmatprep.subr.bf16.mxu0 0
  %1708 = vmatpush1.bf16.xpose.msra.mxu0 0
  %1709 = vmatprep.subr.bf16.mxu0 0
  %1710 = vmatpush1.bf16.xpose.msra.mxu0 0
  %1711 = vmatprep.subr.bf16.mxu0 0
  %1712 = vmatpush1.bf16.xpose.msra.mxu0 0
  %1713 = vmatprep.subr.bf16.mxu0 0
  %1714 = vmatpush1.bf16.xpose.msra.mxu0 0
  %1715 = vmatprep.subr.bf16.mxu0 0
  %1716 = vmatpush1.bf16.xpose.msra.mxu0 0
  %1717 = vmatprep.subr.bf16.mxu0 0
  %1718 = vmatpush1.bf16.xpose.msra.mxu0 0
  %1719 = vmatprep.mubr.bf16.mxu0 0
  %1720 = vmatmul.mubr.bf16.gmra.mrb[0].mxu0 %v1682
  %v1721 = vpop.f32.mrb[0].mxu0
  %v1722 = vadd.f32 0.0, %v1721
  %v1723 = vpop.f32.mrb[0].mxu0
  %v1724 = vpop.f32.mrb[0].mxu0
  %v1725 = vpop.f32.mrb[0].mxu0
  %1726 = vdwg.mxu0
  %1727 = vrot.lane.b32.xlu0 %v291, 48
  %v1728 = vpop.permute.xlu0 %1727
  %1729 = vrot.lane.b32.xlu0 %v1458, 112
  %v1730 = vpop.permute.xlu0 %1729
  %v1732 = vsel %vm294, %v1728, 0
  %v1735 = vsel %vm294, %v1730, 0
  %1737 = vmatprep.subr.bf16.mxu0 0
  %1738 = vmatpush1.bf16.xpose.msra.mxu0 %v1735
  %1739 = vmatprep.subr.bf16.mxu0 0
  %1740 = vmatpush1.bf16.xpose.msra.mxu0 0
  %1741 = vmatprep.subr.bf16.mxu0 0
  %1742 = vmatpush1.bf16.xpose.msra.mxu0 0
  %1743 = vmatprep.subr.bf16.mxu0 0
  %1744 = vmatpush1.bf16.xpose.msra.mxu0 0
  %1745 = vmatprep.subr.bf16.mxu0 0
  %1746 = vmatpush1.bf16.xpose.msra.mxu0 0
  %1747 = vmatprep.subr.bf16.mxu0 0
  %1748 = vmatpush1.bf16.xpose.msra.mxu0 0
  %1749 = vmatprep.subr.bf16.mxu0 0
  %1750 = vmatpush1.bf16.xpose.msra.mxu0 0
  %1751 = vmatprep.subr.bf16.mxu0 0
  %1752 = vmatpush1.bf16.xpose.msra.mxu0 0
  %1753 = vmatprep.subr.bf16.mxu0 0
  %1754 = vmatpush1.bf16.xpose.msra.mxu0 0
  %1755 = vmatprep.subr.bf16.mxu0 0
  %1756 = vmatpush1.bf16.xpose.msra.mxu0 0
  %1757 = vmatprep.subr.bf16.mxu0 0
  %1758 = vmatpush1.bf16.xpose.msra.mxu0 0
  %1759 = vmatprep.subr.bf16.mxu0 0
  %1760 = vmatpush1.bf16.xpose.msra.mxu0 0
  %1761 = vmatprep.subr.bf16.mxu0 0
  %1762 = vmatpush1.bf16.xpose.msra.mxu0 0
  %1763 = vmatprep.subr.bf16.mxu0 0
  %1764 = vmatpush1.bf16.xpose.msra.mxu0 0
  %1765 = vmatprep.subr.bf16.mxu0 0
  %1766 = vmatpush1.bf16.xpose.msra.mxu0 0
  %1767 = vmatprep.subr.bf16.mxu0 0
  %1768 = vmatpush1.bf16.xpose.msra.mxu0 0
  %1769 = vmatprep.mubr.bf16.mxu0 0
  %1770 = vmatmul.mubr.bf16.gmra.mrb[0].mxu0 %v1732
  %v1771 = vpop.f32.mrb[0].mxu0
  %v1772 = vadd.f32 0.0, %v1771
  %v1773 = vpop.f32.mrb[0].mxu0
  %v1774 = vpop.f32.mrb[0].mxu0
  %v1775 = vpop.f32.mrb[0].mxu0
  %1776 = vdwg.mxu0
  %v1777 = vsel %vm387, %v1722, -inf
  %1778 = vmax.xlane.f32.xlu0 %v1777
  %v1779 = vpop.xlane.xlu0 %1778
  %v1780 = vsel %vm387, %v1772, -inf
  %1781 = vmax.xlane.f32.xlu0 %v1780
  %v1782 = vpop.xlane.xlu0 %1781
  %v1783 = vsub.f32 %v1722, %v1779
  %v1784 = vsub.f32 %v1772, %v1782
  %v1785 = vmul.f32 %v1783, 1.442695
  %v1786 = vpow.pop %v1785
  %v1787 = vmul.f32 %v1784, 1.442695
  %v1788 = vpow.pop %v1787
  %v1789 = vsel %vm387, %v1786, 0.0
  %1790 = vadd.xlane.f32.xlu0 %v1789
  %v1791 = vpop.xlane.xlu0 %1790
  %v1792 = vsel %vm387, %v1788, 0.0
  %1793 = vadd.xlane.f32.xlu0 %v1792
  %v1794 = vpop.xlane.xlu0 %1793
  %v1795 = vrcp.pop %v1791
  %v1796 = vrcp.pop %v1794
  %v1797 = vmul.f32 %v1786, %v1795
  %v1798 = vmul.f32 %v1788, %v1796
  %v1799 = vpack.c.bf16 %v1797, %v1797
  %v1800 = vpack.c.bf16 %v1798, %v1798
  %1801 = vrot.lane.b32.xlu0 %v1457, 48
  %v1802 = vpop.permute.xlu0 %1801
  %v1804 = vsel %vm387, %v1799, 0
  %v1807 = vsel %vm418, %v1802, 0
  %1809 = vmatprep.subr.bf16.mxu0 0
  %1810 = vmatpush1.bf16.msra.mxu0 %v1807
  %1811 = vmatprep.subr.bf16.mxu0 0
  %1812 = vmatpush1.bf16.msra.mxu0 0
  %1813 = vmatprep.subr.bf16.mxu0 0
  %1814 = vmatpush1.bf16.msra.mxu0 0
  %1815 = vmatprep.subr.bf16.mxu0 0
  %1816 = vmatpush1.bf16.msra.mxu0 0
  %1817 = vmatprep.subr.bf16.mxu0 0
  %1818 = vmatpush1.bf16.msra.mxu0 0
  %1819 = vmatprep.subr.bf16.mxu0 0
  %1820 = vmatpush1.bf16.msra.mxu0 0
  %1821 = vmatprep.subr.bf16.mxu0 0
  %1822 = vmatpush1.bf16.msra.mxu0 0
  %1823 = vmatprep.subr.bf16.mxu0 0
  %1824 = vmatpush1.bf16.msra.mxu0 0
  %1825 = vmatprep.subr.bf16.mxu0 0
  %1826 = vmatpush1.bf16.msra.mxu0 0
  %1827 = vmatprep.subr.bf16.mxu0 0
  %1828 = vmatpush1.bf16.msra.mxu0 0
  %1829 = vmatprep.subr.bf16.mxu0 0
  %1830 = vmatpush1.bf16.msra.mxu0 0
  %1831 = vmatprep.subr.bf16.mxu0 0
  %1832 = vmatpush1.bf16.msra.mxu0 0
  %1833 = vmatprep.subr.bf16.mxu0 0
  %1834 = vmatpush1.bf16.msra.mxu0 0
  %1835 = vmatprep.subr.bf16.mxu0 0
  %1836 = vmatpush1.bf16.msra.mxu0 0
  %1837 = vmatprep.subr.bf16.mxu0 0
  %1838 = vmatpush1.bf16.msra.mxu0 0
  %1839 = vmatprep.subr.bf16.mxu0 0
  %1840 = vmatpush1.bf16.msra.mxu0 0
  %1841 = vmatprep.mubr.bf16.mxu0 0
  %1842 = vmatmul.mubr.bf16.gmra.mrb[0].mxu0 %v1804
  %v1843 = vpop.f32.mrb[0].mxu0
  %v1844 = vadd.f32 0.0, %v1843
  %v1845 = vpop.f32.mrb[0].mxu0
  %v1846 = vpop.f32.mrb[0].mxu0
  %v1847 = vpop.f32.mrb[0].mxu0
  %1848 = vdwg.mxu0
  %1849 = vrot.lane.b32.xlu0 %v1458, 48
  %v1850 = vpop.permute.xlu0 %1849
  %v1852 = vsel %vm387, %v1800, 0
  %v1855 = vsel %vm418, %v1850, 0
  %1857 = vmatprep.subr.bf16.mxu0 0
  %1858 = vmatpush1.bf16.msra.mxu0 %v1855
  %1859 = vmatprep.subr.bf16.mxu0 0
  %1860 = vmatpush1.bf16.msra.mxu0 0
  %1861 = vmatprep.subr.bf16.mxu0 0
  %1862 = vmatpush1.bf16.msra.mxu0 0
  %1863 = vmatprep.subr.bf16.mxu0 0
  %1864 = vmatpush1.bf16.msra.mxu0 0
  %1865 = vmatprep.subr.bf16.mxu0 0
  %1866 = vmatpush1.bf16.msra.mxu0 0
  %1867 = vmatprep.subr.bf16.mxu0 0
  %1868 = vmatpush1.bf16.msra.mxu0 0
  %1869 = vmatprep.subr.bf16.mxu0 0
  %1870 = vmatpush1.bf16.msra.mxu0 0
  %1871 = vmatprep.subr.bf16.mxu0 0
  %1872 = vmatpush1.bf16.msra.mxu0 0
  %1873 = vmatprep.subr.bf16.mxu0 0
  %1874 = vmatpush1.bf16.msra.mxu0 0
  %1875 = vmatprep.subr.bf16.mxu0 0
  %1876 = vmatpush1.bf16.msra.mxu0 0
  %1877 = vmatprep.subr.bf16.mxu0 0
  %1878 = vmatpush1.bf16.msra.mxu0 0
  %1879 = vmatprep.subr.bf16.mxu0 0
  %1880 = vmatpush1.bf16.msra.mxu0 0
  %1881 = vmatprep.subr.bf16.mxu0 0
  %1882 = vmatpush1.bf16.msra.mxu0 0
  %1883 = vmatprep.subr.bf16.mxu0 0
  %1884 = vmatpush1.bf16.msra.mxu0 0
  %1885 = vmatprep.subr.bf16.mxu0 0
  %1886 = vmatpush1.bf16.msra.mxu0 0
  %1887 = vmatprep.subr.bf16.mxu0 0
  %1888 = vmatpush1.bf16.msra.mxu0 0
  %1889 = vmatprep.mubr.bf16.mxu0 0
  %1890 = vmatmul.mubr.bf16.gmra.mrb[0].mxu0 %v1852
  %v1891 = vpop.f32.mrb[0].mxu0
  %v1892 = vadd.f32 0.0, %v1891
  %v1893 = vpop.f32.mrb[0].mxu0
  %v1894 = vpop.f32.mrb[0].mxu0
  %v1895 = vpop.f32.mrb[0].mxu0
  %1896 = vdwg.mxu0
  %1897 = vrot.lane.b32.xlu0 %v290, 32
  %v1898 = vpop.permute.xlu0 %1897
  %1899 = vrot.lane.b32.xlu0 %v1457, 96
  %v1900 = vpop.permute.xlu0 %1899
  %v1902 = vsel %vm294, %v1898, 0
  %v1905 = vsel %vm294, %v1900, 0
  %1907 = vmatprep.subr.bf16.mxu0 0
  %1908 = vmatpush1.bf16.xpose.msra.mxu0 %v1905
  %1909 = vmatprep.subr.bf16.mxu0 0
  %1910 = vmatpush1.bf16.xpose.msra.mxu0 0
  %1911 = vmatprep.subr.bf16.mxu0 0
  %1912 = vmatpush1.bf16.xpose.msra.mxu0 0
  %1913 = vmatprep.subr.bf16.mxu0 0
  %1914 = vmatpush1.bf16.xpose.msra.mxu0 0
  %1915 = vmatprep.subr.bf16.mxu0 0
  %1916 = vmatpush1.bf16.xpose.msra.mxu0 0
  %1917 = vmatprep.subr.bf16.mxu0 0
  %1918 = vmatpush1.bf16.xpose.msra.mxu0 0
  %1919 = vmatprep.subr.bf16.mxu0 0
  %1920 = vmatpush1.bf16.xpose.msra.mxu0 0
  %1921 = vmatprep.subr.bf16.mxu0 0
  %1922 = vmatpush1.bf16.xpose.msra.mxu0 0
  %1923 = vmatprep.subr.bf16.mxu0 0
  %1924 = vmatpush1.bf16.xpose.msra.mxu0 0
  %1925 = vmatprep.subr.bf16.mxu0 0
  %1926 = vmatpush1.bf16.xpose.msra.mxu0 0
  %1927 = vmatprep.subr.bf16.mxu0 0
  %1928 = vmatpush1.bf16.xpose.msra.mxu0 0
  %1929 = vmatprep.subr.bf16.mxu0 0
  %1930 = vmatpush1.bf16.xpose.msra.mxu0 0
  %1931 = vmatprep.subr.bf16.mxu0 0
  %1932 = vmatpush1.bf16.xpose.msra.mxu0 0
  %1933 = vmatprep.subr.bf16.mxu0 0
  %1934 = vmatpush1.bf16.xpose.msra.mxu0 0
  %1935 = vmatprep.subr.bf16.mxu0 0
  %1936 = vmatpush1.bf16.xpose.msra.mxu0 0
  %1937 = vmatprep.subr.bf16.mxu0 0
  %1938 = vmatpush1.bf16.xpose.msra.mxu0 0
  %1939 = vmatprep.mubr.bf16.mxu0 0
  %1940 = vmatmul.mubr.bf16.gmra.mrb[0].mxu0 %v1902
  %v1941 = vpop.f32.mrb[0].mxu0
  %v1942 = vadd.f32 0.0, %v1941
  %v1943 = vpop.f32.mrb[0].mxu0
  %v1944 = vpop.f32.mrb[0].mxu0
  %v1945 = vpop.f32.mrb[0].mxu0
  %1946 = vdwg.mxu0
  %1947 = vrot.lane.b32.xlu0 %v291, 32
  %v1948 = vpop.permute.xlu0 %1947
  %1949 = vrot.lane.b32.xlu0 %v1458, 96
  %v1950 = vpop.permute.xlu0 %1949
  %v1952 = vsel %vm294, %v1948, 0
  %v1955 = vsel %vm294, %v1950, 0
  %1957 = vmatprep.subr.bf16.mxu0 0
  %1958 = vmatpush1.bf16.xpose.msra.mxu0 %v1955
  %1959 = vmatprep.subr.bf16.mxu0 0
  %1960 = vmatpush1.bf16.xpose.msra.mxu0 0
  %1961 = vmatprep.subr.bf16.mxu0 0
  %1962 = vmatpush1.bf16.xpose.msra.mxu0 0
  %1963 = vmatprep.subr.bf16.mxu0 0
  %1964 = vmatpush1.bf16.xpose.msra.mxu0 0
  %1965 = vmatprep.subr.bf16.mxu0 0
  %1966 = vmatpush1.bf16.xpose.msra.mxu0 0
  %1967 = vmatprep.subr.bf16.mxu0 0
  %1968 = vmatpush1.bf16.xpose.msra.mxu0 0
  %1969 = vmatprep.subr.bf16.mxu0 0
  %1970 = vmatpush1.bf16.xpose.msra.mxu0 0
  %1971 = vmatprep.subr.bf16.mxu0 0
  %1972 = vmatpush1.bf16.xpose.msra.mxu0 0
  %1973 = vmatprep.subr.bf16.mxu0 0
  %1974 = vmatpush1.bf16.xpose.msra.mxu0 0
  %1975 = vmatprep.subr.bf16.mxu0 0
  %1976 = vmatpush1.bf16.xpose.msra.mxu0 0
  %1977 = vmatprep.subr.bf16.mxu0 0
  %1978 = vmatpush1.bf16.xpose.msra.mxu0 0
  %1979 = vmatprep.subr.bf16.mxu0 0
  %1980 = vmatpush1.bf16.xpose.msra.mxu0 0
  %1981 = vmatprep.subr.bf16.mxu0 0
  %1982 = vmatpush1.bf16.xpose.msra.mxu0 0
  %1983 = vmatprep.subr.bf16.mxu0 0
  %1984 = vmatpush1.bf16.xpose.msra.mxu0 0
  %1985 = vmatprep.subr.bf16.mxu0 0
  %1986 = vmatpush1.bf16.xpose.msra.mxu0 0
  %1987 = vmatprep.subr.bf16.mxu0 0
  %1988 = vmatpush1.bf16.xpose.msra.mxu0 0
  %1989 = vmatprep.mubr.bf16.mxu0 0
  %1990 = vmatmul.mubr.bf16.gmra.mrb[0].mxu0 %v1952
  %v1991 = vpop.f32.mrb[0].mxu0
  %v1992 = vadd.f32 0.0, %v1991
  %v1993 = vpop.f32.mrb[0].mxu0
  %v1994 = vpop.f32.mrb[0].mxu0
  %v1995 = vpop.f32.mrb[0].mxu0
  %1996 = vdwg.mxu0
  %v1997 = vsel %vm387, %v1942, -inf
  %1998 = vmax.xlane.f32.xlu0 %v1997
  %v1999 = vpop.xlane.xlu0 %1998
  %v2000 = vsel %vm387, %v1992, -inf
  %2001 = vmax.xlane.f32.xlu0 %v2000
  %v2002 = vpop.xlane.xlu0 %2001
  %v2003 = vsub.f32 %v1942, %v1999
  %v2004 = vsub.f32 %v1992, %v2002
  %v2005 = vmul.f32 %v2003, 1.442695
  %v2006 = vpow.pop %v2005
  %v2007 = vmul.f32 %v2004, 1.442695
  %v2008 = vpow.pop %v2007
  %v2009 = vsel %vm387, %v2006, 0.0
  %2010 = vadd.xlane.f32.xlu0 %v2009
  %v2011 = vpop.xlane.xlu0 %2010
  %v2012 = vsel %vm387, %v2008, 0.0
  %2013 = vadd.xlane.f32.xlu0 %v2012
  %v2014 = vpop.xlane.xlu0 %2013
  %v2015 = vrcp.pop %v2011
  %v2016 = vrcp.pop %v2014
  %v2017 = vmul.f32 %v2006, %v2015
  %v2018 = vmul.f32 %v2008, %v2016
  %v2019 = vpack.c.bf16 %v2017, %v2017
  %v2020 = vpack.c.bf16 %v2018, %v2018
  %2021 = vrot.lane.b32.xlu0 %v1457, 32
  %v2022 = vpop.permute.xlu0 %2021
  %v2024 = vsel %vm387, %v2019, 0
  %v2027 = vsel %vm418, %v2022, 0
  %2029 = vmatprep.subr.bf16.mxu0 0
  %2030 = vmatpush1.bf16.msra.mxu0 %v2027
  %2031 = vmatprep.subr.bf16.mxu0 0
  %2032 = vmatpush1.bf16.msra.mxu0 0
  %2033 = vmatprep.subr.bf16.mxu0 0
  %2034 = vmatpush1.bf16.msra.mxu0 0
  %2035 = vmatprep.subr.bf16.mxu0 0
  %2036 = vmatpush1.bf16.msra.mxu0 0
  %2037 = vmatprep.subr.bf16.mxu0 0
  %2038 = vmatpush1.bf16.msra.mxu0 0
  %2039 = vmatprep.subr.bf16.mxu0 0
  %2040 = vmatpush1.bf16.msra.mxu0 0
  %2041 = vmatprep.subr.bf16.mxu0 0
  %2042 = vmatpush1.bf16.msra.mxu0 0
  %2043 = vmatprep.subr.bf16.mxu0 0
  %2044 = vmatpush1.bf16.msra.mxu0 0
  %2045 = vmatprep.subr.bf16.mxu0 0
  %2046 = vmatpush1.bf16.msra.mxu0 0
  %2047 = vmatprep.subr.bf16.mxu0 0
  %2048 = vmatpush1.bf16.msra.mxu0 0
  %2049 = vmatprep.subr.bf16.mxu0 0
  %2050 = vmatpush1.bf16.msra.mxu0 0
  %2051 = vmatprep.subr.bf16.mxu0 0
  %2052 = vmatpush1.bf16.msra.mxu0 0
  %2053 = vmatprep.subr.bf16.mxu0 0
  %2054 = vmatpush1.bf16.msra.mxu0 0
  %2055 = vmatprep.subr.bf16.mxu0 0
  %2056 = vmatpush1.bf16.msra.mxu0 0
  %2057 = vmatprep.subr.bf16.mxu0 0
  %2058 = vmatpush1.bf16.msra.mxu0 0
  %2059 = vmatprep.subr.bf16.mxu0 0
  %2060 = vmatpush1.bf16.msra.mxu0 0
  %2061 = vmatprep.mubr.bf16.mxu0 0
  %2062 = vmatmul.mubr.bf16.gmra.mrb[0].mxu0 %v2024
  %v2063 = vpop.f32.mrb[0].mxu0
  %v2064 = vadd.f32 0.0, %v2063
  %v2065 = vpop.f32.mrb[0].mxu0
  %v2066 = vpop.f32.mrb[0].mxu0
  %v2067 = vpop.f32.mrb[0].mxu0
  %2068 = vdwg.mxu0
  %2069 = vrot.lane.b32.xlu0 %v1458, 32
  %v2070 = vpop.permute.xlu0 %2069
  %v2072 = vsel %vm387, %v2020, 0
  %v2075 = vsel %vm418, %v2070, 0
  %2077 = vmatprep.subr.bf16.mxu0 0
  %2078 = vmatpush1.bf16.msra.mxu0 %v2075
  %2079 = vmatprep.subr.bf16.mxu0 0
  %2080 = vmatpush1.bf16.msra.mxu0 0
  %2081 = vmatprep.subr.bf16.mxu0 0
  %2082 = vmatpush1.bf16.msra.mxu0 0
  %2083 = vmatprep.subr.bf16.mxu0 0
  %2084 = vmatpush1.bf16.msra.mxu0 0
  %2085 = vmatprep.subr.bf16.mxu0 0
  %2086 = vmatpush1.bf16.msra.mxu0 0
  %2087 = vmatprep.subr.bf16.mxu0 0
  %2088 = vmatpush1.bf16.msra.mxu0 0
  %2089 = vmatprep.subr.bf16.mxu0 0
  %2090 = vmatpush1.bf16.msra.mxu0 0
  %2091 = vmatprep.subr.bf16.mxu0 0
  %2092 = vmatpush1.bf16.msra.mxu0 0
  %2093 = vmatprep.subr.bf16.mxu0 0
  %2094 = vmatpush1.bf16.msra.mxu0 0
  %2095 = vmatprep.subr.bf16.mxu0 0
  %2096 = vmatpush1.bf16.msra.mxu0 0
  %2097 = vmatprep.subr.bf16.mxu0 0
  %2098 = vmatpush1.bf16.msra.mxu0 0
  %2099 = vmatprep.subr.bf16.mxu0 0
  %2100 = vmatpush1.bf16.msra.mxu0 0
  %2101 = vmatprep.subr.bf16.mxu0 0
  %2102 = vmatpush1.bf16.msra.mxu0 0
  %2103 = vmatprep.subr.bf16.mxu0 0
  %2104 = vmatpush1.bf16.msra.mxu0 0
  %2105 = vmatprep.subr.bf16.mxu0 0
  %2106 = vmatpush1.bf16.msra.mxu0 0
  %2107 = vmatprep.subr.bf16.mxu0 0
  %2108 = vmatpush1.bf16.msra.mxu0 0
  %2109 = vmatprep.mubr.bf16.mxu0 0
  %2110 = vmatmul.mubr.bf16.gmra.mrb[0].mxu0 %v2072
  %v2111 = vpop.f32.mrb[0].mxu0
  %v2112 = vadd.f32 0.0, %v2111
  %v2113 = vpop.f32.mrb[0].mxu0
  %v2114 = vpop.f32.mrb[0].mxu0
  %v2115 = vpop.f32.mrb[0].mxu0
  %2116 = vdwg.mxu0
  %2117 = vrot.lane.b32.xlu0 %v290, 16
  %v2118 = vpop.permute.xlu0 %2117
  %2119 = vrot.lane.b32.xlu0 %v1457, 80
  %v2120 = vpop.permute.xlu0 %2119
  %v2122 = vsel %vm294, %v2118, 0
  %v2125 = vsel %vm294, %v2120, 0
  %2127 = vmatprep.subr.bf16.mxu0 0
  %2128 = vmatpush1.bf16.xpose.msra.mxu0 %v2125
  %2129 = vmatprep.subr.bf16.mxu0 0
  %2130 = vmatpush1.bf16.xpose.msra.mxu0 0
  %2131 = vmatprep.subr.bf16.mxu0 0
  %2132 = vmatpush1.bf16.xpose.msra.mxu0 0
  %2133 = vmatprep.subr.bf16.mxu0 0
  %2134 = vmatpush1.bf16.xpose.msra.mxu0 0
  %2135 = vmatprep.subr.bf16.mxu0 0
  %2136 = vmatpush1.bf16.xpose.msra.mxu0 0
  %2137 = vmatprep.subr.bf16.mxu0 0
  %2138 = vmatpush1.bf16.xpose.msra.mxu0 0
  %2139 = vmatprep.subr.bf16.mxu0 0
  %2140 = vmatpush1.bf16.xpose.msra.mxu0 0
  %2141 = vmatprep.subr.bf16.mxu0 0
  %2142 = vmatpush1.bf16.xpose.msra.mxu0 0
  %2143 = vmatprep.subr.bf16.mxu0 0
  %2144 = vmatpush1.bf16.xpose.msra.mxu0 0
  %2145 = vmatprep.subr.bf16.mxu0 0
  %2146 = vmatpush1.bf16.xpose.msra.mxu0 0
  %2147 = vmatprep.subr.bf16.mxu0 0
  %2148 = vmatpush1.bf16.xpose.msra.mxu0 0
  %2149 = vmatprep.subr.bf16.mxu0 0
  %2150 = vmatpush1.bf16.xpose.msra.mxu0 0
  %2151 = vmatprep.subr.bf16.mxu0 0
  %2152 = vmatpush1.bf16.xpose.msra.mxu0 0
  %2153 = vmatprep.subr.bf16.mxu0 0
  %2154 = vmatpush1.bf16.xpose.msra.mxu0 0
  %2155 = vmatprep.subr.bf16.mxu0 0
  %2156 = vmatpush1.bf16.xpose.msra.mxu0 0
  %2157 = vmatprep.subr.bf16.mxu0 0
  %2158 = vmatpush1.bf16.xpose.msra.mxu0 0
  %2159 = vmatprep.mubr.bf16.mxu0 0
  %2160 = vmatmul.mubr.bf16.gmra.mrb[0].mxu0 %v2122
  %v2161 = vpop.f32.mrb[0].mxu0
  %v2162 = vadd.f32 0.0, %v2161
  %v2163 = vpop.f32.mrb[0].mxu0
  %v2164 = vpop.f32.mrb[0].mxu0
  %v2165 = vpop.f32.mrb[0].mxu0
  %2166 = vdwg.mxu0
  %2167 = vrot.lane.b32.xlu0 %v291, 16
  %v2168 = vpop.permute.xlu0 %2167
  %2169 = vrot.lane.b32.xlu0 %v1458, 80
  %v2170 = vpop.permute.xlu0 %2169
  %v2172 = vsel %vm294, %v2168, 0
  %v2175 = vsel %vm294, %v2170, 0
  %2177 = vmatprep.subr.bf16.mxu0 0
  %2178 = vmatpush1.bf16.xpose.msra.mxu0 %v2175
  %2179 = vmatprep.subr.bf16.mxu0 0
  %2180 = vmatpush1.bf16.xpose.msra.mxu0 0
  %2181 = vmatprep.subr.bf16.mxu0 0
  %2182 = vmatpush1.bf16.xpose.msra.mxu0 0
  %2183 = vmatprep.subr.bf16.mxu0 0
  %2184 = vmatpush1.bf16.xpose.msra.mxu0 0
  %2185 = vmatprep.subr.bf16.mxu0 0
  %2186 = vmatpush1.bf16.xpose.msra.mxu0 0
  %2187 = vmatprep.subr.bf16.mxu0 0
  %2188 = vmatpush1.bf16.xpose.msra.mxu0 0
  %2189 = vmatprep.subr.bf16.mxu0 0
  %2190 = vmatpush1.bf16.xpose.msra.mxu0 0
  %2191 = vmatprep.subr.bf16.mxu0 0
  %2192 = vmatpush1.bf16.xpose.msra.mxu0 0
  %2193 = vmatprep.subr.bf16.mxu0 0
  %2194 = vmatpush1.bf16.xpose.msra.mxu0 0
  %2195 = vmatprep.subr.bf16.mxu0 0
  %2196 = vmatpush1.bf16.xpose.msra.mxu0 0
  %2197 = vmatprep.subr.bf16.mxu0 0
  %2198 = vmatpush1.bf16.xpose.msra.mxu0 0
  %2199 = vmatprep.subr.bf16.mxu0 0
  %2200 = vmatpush1.bf16.xpose.msra.mxu0 0
  %2201 = vmatprep.subr.bf16.mxu0 0
  %2202 = vmatpush1.bf16.xpose.msra.mxu0 0
  %2203 = vmatprep.subr.bf16.mxu0 0
  %2204 = vmatpush1.bf16.xpose.msra.mxu0 0
  %2205 = vmatprep.subr.bf16.mxu0 0
  %2206 = vmatpush1.bf16.xpose.msra.mxu0 0
  %2207 = vmatprep.subr.bf16.mxu0 0
  %2208 = vmatpush1.bf16.xpose.msra.mxu0 0
  %2209 = vmatprep.mubr.bf16.mxu0 0
  %2210 = vmatmul.mubr.bf16.gmra.mrb[0].mxu0 %v2172
  %v2211 = vpop.f32.mrb[0].mxu0
  %v2212 = vadd.f32 0.0, %v2211
  %v2213 = vpop.f32.mrb[0].mxu0
  %v2214 = vpop.f32.mrb[0].mxu0
  %v2215 = vpop.f32.mrb[0].mxu0
  %2216 = vdwg.mxu0
  %v2217 = vsel %vm387, %v2162, -inf
  %2218 = vmax.xlane.f32.xlu0 %v2217
  %v2219 = vpop.xlane.xlu0 %2218
  %v2220 = vsel %vm387, %v2212, -inf
  %2221 = vmax.xlane.f32.xlu0 %v2220
  %v2222 = vpop.xlane.xlu0 %2221
  %v2223 = vsub.f32 %v2162, %v2219
  %v2224 = vsub.f32 %v2212, %v2222
  %v2225 = vmul.f32 %v2223, 1.442695
  %v2226 = vpow.pop %v2225
  %v2227 = vmul.f32 %v2224, 1.442695
  %v2228 = vpow.pop %v2227
  %v2229 = vsel %vm387, %v2226, 0.0
  %2230 = vadd.xlane.f32.xlu0 %v2229
  %v2231 = vpop.xlane.xlu0 %2230
  %v2232 = vsel %vm387, %v2228, 0.0
  %2233 = vadd.xlane.f32.xlu0 %v2232
  %v2234 = vpop.xlane.xlu0 %2233
  %v2235 = vrcp.pop %v2231
  %v2236 = vrcp.pop %v2234
  %v2237 = vmul.f32 %v2226, %v2235
  %v2238 = vmul.f32 %v2228, %v2236
  %v2239 = vpack.c.bf16 %v2237, %v2237
  %v2240 = vpack.c.bf16 %v2238, %v2238
  %2241 = vrot.lane.b32.xlu0 %v1457, 16
  %v2242 = vpop.permute.xlu0 %2241
  %v2244 = vsel %vm387, %v2239, 0
  %v2247 = vsel %vm418, %v2242, 0
  %2249 = vmatprep.subr.bf16.mxu0 0
  %2250 = vmatpush1.bf16.msra.mxu0 %v2247
  %2251 = vmatprep.subr.bf16.mxu0 0
  %2252 = vmatpush1.bf16.msra.mxu0 0
  %2253 = vmatprep.subr.bf16.mxu0 0
  %2254 = vmatpush1.bf16.msra.mxu0 0
  %2255 = vmatprep.subr.bf16.mxu0 0
  %2256 = vmatpush1.bf16.msra.mxu0 0
  %2257 = vmatprep.subr.bf16.mxu0 0
  %2258 = vmatpush1.bf16.msra.mxu0 0
  %2259 = vmatprep.subr.bf16.mxu0 0
  %2260 = vmatpush1.bf16.msra.mxu0 0
  %2261 = vmatprep.subr.bf16.mxu0 0
  %2262 = vmatpush1.bf16.msra.mxu0 0
  %2263 = vmatprep.subr.bf16.mxu0 0
  %2264 = vmatpush1.bf16.msra.mxu0 0
  %2265 = vmatprep.subr.bf16.mxu0 0
  %2266 = vmatpush1.bf16.msra.mxu0 0
  %2267 = vmatprep.subr.bf16.mxu0 0
  %2268 = vmatpush1.bf16.msra.mxu0 0
  %2269 = vmatprep.subr.bf16.mxu0 0
  %2270 = vmatpush1.bf16.msra.mxu0 0
  %2271 = vmatprep.subr.bf16.mxu0 0
  %2272 = vmatpush1.bf16.msra.mxu0 0
  %2273 = vmatprep.subr.bf16.mxu0 0
  %2274 = vmatpush1.bf16.msra.mxu0 0
  %2275 = vmatprep.subr.bf16.mxu0 0
  %2276 = vmatpush1.bf16.msra.mxu0 0
  %2277 = vmatprep.subr.bf16.mxu0 0
  %2278 = vmatpush1.bf16.msra.mxu0 0
  %2279 = vmatprep.subr.bf16.mxu0 0
  %2280 = vmatpush1.bf16.msra.mxu0 0
  %2281 = vmatprep.mubr.bf16.mxu0 0
  %2282 = vmatmul.mubr.bf16.gmra.mrb[0].mxu0 %v2244
  %v2283 = vpop.f32.mrb[0].mxu0
  %v2284 = vadd.f32 0.0, %v2283
  %v2285 = vpop.f32.mrb[0].mxu0
  %v2286 = vpop.f32.mrb[0].mxu0
  %v2287 = vpop.f32.mrb[0].mxu0
  %2288 = vdwg.mxu0
  %2289 = vrot.lane.b32.xlu0 %v1458, 16
  %v2290 = vpop.permute.xlu0 %2289
  %v2292 = vsel %vm387, %v2240, 0
  %v2295 = vsel %vm418, %v2290, 0
  %2297 = vmatprep.subr.bf16.mxu0 0
  %2298 = vmatpush1.bf16.msra.mxu0 %v2295
  %2299 = vmatprep.subr.bf16.mxu0 0
  %2300 = vmatpush1.bf16.msra.mxu0 0
  %2301 = vmatprep.subr.bf16.mxu0 0
  %2302 = vmatpush1.bf16.msra.mxu0 0
  %2303 = vmatprep.subr.bf16.mxu0 0
  %2304 = vmatpush1.bf16.msra.mxu0 0
  %2305 = vmatprep.subr.bf16.mxu0 0
  %2306 = vmatpush1.bf16.msra.mxu0 0
  %2307 = vmatprep.subr.bf16.mxu0 0
  %2308 = vmatpush1.bf16.msra.mxu0 0
  %2309 = vmatprep.subr.bf16.mxu0 0
  %2310 = vmatpush1.bf16.msra.mxu0 0
  %2311 = vmatprep.subr.bf16.mxu0 0
  %2312 = vmatpush1.bf16.msra.mxu0 0
  %2313 = vmatprep.subr.bf16.mxu0 0
  %2314 = vmatpush1.bf16.msra.mxu0 0
  %2315 = vmatprep.subr.bf16.mxu0 0
  %2316 = vmatpush1.bf16.msra.mxu0 0
  %2317 = vmatprep.subr.bf16.mxu0 0
  %2318 = vmatpush1.bf16.msra.mxu0 0
  %2319 = vmatprep.subr.bf16.mxu0 0
  %2320 = vmatpush1.bf16.msra.mxu0 0
  %2321 = vmatprep.subr.bf16.mxu0 0
  %2322 = vmatpush1.bf16.msra.mxu0 0
  %2323 = vmatprep.subr.bf16.mxu0 0
  %2324 = vmatpush1.bf16.msra.mxu0 0
  %2325 = vmatprep.subr.bf16.mxu0 0
  %2326 = vmatpush1.bf16.msra.mxu0 0
  %2327 = vmatprep.subr.bf16.mxu0 0
  %2328 = vmatpush1.bf16.msra.mxu0 0
  %2329 = vmatprep.mubr.bf16.mxu0 0
  %2330 = vmatmul.mubr.bf16.gmra.mrb[0].mxu0 %v2292
  %v2331 = vpop.f32.mrb[0].mxu0
  %v2332 = vadd.f32 0.0, %v2331
  %v2333 = vpop.f32.mrb[0].mxu0
  %v2334 = vpop.f32.mrb[0].mxu0
  %v2335 = vpop.f32.mrb[0].mxu0
  %2336 = vdwg.mxu0
  %2339 = vrot.lane.b32.xlu0 %v1844, 16
  %v2340 = vpop.permute.xlu0 %2339
  %2341 = vrot.lane.b32.xlu0 %v1892, 16
  %v2342 = vpop.permute.xlu0 %2341
  %2347 = vrot.lane.b32.xlu0 %v2064, 32
  %v2348 = vpop.permute.xlu0 %2347
  %2349 = vrot.lane.b32.xlu0 %v2112, 32
  %v2350 = vpop.permute.xlu0 %2349
  %2355 = vrot.lane.b32.xlu0 %v2284, 48
  %v2356 = vpop.permute.xlu0 %2355
  %2357 = vrot.lane.b32.xlu0 %v2332, 48
  %v2358 = vpop.permute.xlu0 %2357
  %v2361 = vsel %vm294, %v1623, %v2340
  %v2362 = vsel %vm294, %v1672, %v2342
  %v2363 = vsel %vm1199, %v2361, %v2348
  %v2364 = vsel %vm1199, %v2362, %v2350
  %v2365 = vsel %vm1202, %v2363, %v2356
  %v2366 = vsel %vm1202, %v2364, %v2358
  %v2367 = vpack.c.bf16 %v2366, %v2365
  %s2368 = scalar_lea.vmem %s6, 32
  %v2369 = vld [vmem:[%s2368] sm:$0xf]
  %v2370 = vld [vmem:[%s2368 + $0x4] sm:$0xf]
  %v2371 = vld [vmem:[%s2368 + $0x8] sm:$0xf]
  %v2372 = vld [vmem:[%s2368 + $0xc] sm:$0xf]
  %v2373 = vld [vmem:[%s2368 + $0x10] sm:$0xf]
  %v2374 = vld [vmem:[%s2368 + $0x14] sm:$0xf]
  %v2375 = vld [vmem:[%s2368 + $0x18] sm:$0xf]
  %v2376 = vld [vmem:[%s2368 + $0x1c] sm:$0xf]
  %s2377 = scalar_lea.vmem %s7, 1
  %v2378 = vld [vmem:[%s2377] sm:$0x1]
  %v2380 = vlaneseq
  %v2381 = vshrl.u32 %v2380, 7
  %v2382 = vsub.s32 0, %v2381
  %v2383 = vrot.slane %v2378, %v2382
  %v2393 = vunpack.c.l.b16 %v2369
  %v2394 = vunpack.c.l.b16 %v2370
  %v2395 = vunpack.c.l.b16 %v2371
  %v2396 = vunpack.c.l.b16 %v2372
  %v2397 = vunpack.c.l.b16 %v2373
  %v2398 = vunpack.c.l.b16 %v2374
  %v2399 = vunpack.c.l.b16 %v2375
  %v2400 = vunpack.c.l.b16 %v2376
  %v2401 = vpack.c.b16 %v2394, %v2393
  %v2402 = vpack.c.b16 %v2396, %v2395
  %v2403 = vpack.c.b16 %v2398, %v2397
  %v2404 = vpack.c.b16 %v2400, %v2399
  %v2410 = vsel %vm78, %v2367, 0
  %2412 = vmatprep.subr.bf16.mxu0 0
  %2413 = vmatpush1.bf16.msra.mxu0 %v2401
  %2414 = vmatprep.subr.bf16.mxu0 0
  %2415 = vmatpush1.bf16.msra.mxu0 %v2402
  %2416 = vmatprep.subr.bf16.mxu0 0
  %2417 = vmatpush1.bf16.msra.mxu0 %v2403
  %2418 = vmatprep.subr.bf16.mxu0 0
  %2419 = vmatpush1.bf16.msra.mxu0 %v2404
  %2420 = vmatprep.subr.bf16.mxu0 0
  %2421 = vmatpush1.bf16.msra.mxu0 0
  %2422 = vmatprep.subr.bf16.mxu0 0
  %2423 = vmatpush1.bf16.msra.mxu0 0
  %2424 = vmatprep.subr.bf16.mxu0 0
  %2425 = vmatpush1.bf16.msra.mxu0 0
  %2426 = vmatprep.subr.bf16.mxu0 0
  %2427 = vmatpush1.bf16.msra.mxu0 0
  %2428 = vmatprep.subr.bf16.mxu0 0
  %2429 = vmatpush1.bf16.msra.mxu0 0
  %2430 = vmatprep.subr.bf16.mxu0 0
  %2431 = vmatpush1.bf16.msra.mxu0 0
  %2432 = vmatprep.subr.bf16.mxu0 0
  %2433 = vmatpush1.bf16.msra.mxu0 0
  %2434 = vmatprep.subr.bf16.mxu0 0
  %2435 = vmatpush1.bf16.msra.mxu0 0
  %2436 = vmatprep.subr.bf16.mxu0 0
  %2437 = vmatpush1.bf16.msra.mxu0 0
  %2438 = vmatprep.subr.bf16.mxu0 0
  %2439 = vmatpush1.bf16.msra.mxu0 0
  %2440 = vmatprep.subr.bf16.mxu0 0
  %2441 = vmatpush1.bf16.msra.mxu0 0
  %2442 = vmatprep.subr.bf16.mxu0 0
  %2443 = vmatpush1.bf16.msra.mxu0 0
  %2444 = vmatprep.mubr.bf16.mxu0 0
  %2445 = vmatmul.mubr.bf16.gmra.mrb[0].mxu0 %v2410
  %v2446 = vpop.f32.mrb[0].mxu0
  %v2447 = vadd.f32 %v2383, %v2446
  %v2448 = vpop.f32.mrb[0].mxu0
  %v2449 = vpop.f32.mrb[0].mxu0
  %v2450 = vadd.f32 %v2383, %v2449
  %v2451 = vpop.f32.mrb[0].mxu0
  %2452 = vdwg.mxu0
  %v2453 = vpack.c.bf16 %v2450, %v2447
  %s2454 = scalar_lea.vmem %s8, 32
  %v2455 = vld [vmem:[%s2454] sm:$0xf]
  %v2456 = vld [vmem:[%s2454 + $0x4] sm:$0xf]
  %v2457 = vld [vmem:[%s2454 + $0x8] sm:$0xf]
  %v2458 = vld [vmem:[%s2454 + $0xc] sm:$0xf]
  %v2459 = vld [vmem:[%s2454 + $0x10] sm:$0xf]
  %v2460 = vld [vmem:[%s2454 + $0x14] sm:$0xf]
  %v2461 = vld [vmem:[%s2454 + $0x18] sm:$0xf]
  %v2462 = vld [vmem:[%s2454 + $0x1c] sm:$0xf]
  %v2471 = vunpack.c.l.b16 %v2455
  %v2472 = vunpack.c.l.b16 %v2456
  %v2473 = vunpack.c.l.b16 %v2457
  %v2474 = vunpack.c.l.b16 %v2458
  %v2475 = vunpack.c.l.b16 %v2459
  %v2476 = vunpack.c.l.b16 %v2460
  %v2477 = vunpack.c.l.b16 %v2461
  %v2478 = vunpack.c.l.b16 %v2462
  %v2479 = vpack.c.b16 %v2472, %v2471
  %v2480 = vpack.c.b16 %v2474, %v2473
  %v2481 = vpack.c.b16 %v2476, %v2475
  %v2482 = vpack.c.b16 %v2478, %v2477
  %v2488 = vsel %vm78, %v2453, 0
  %2490 = vmatprep.subr.bf16.mxu0 0
  %2491 = vmatpush1.bf16.msra.mxu0 %v2479
  %2492 = vmatprep.subr.bf16.mxu0 0
  %2493 = vmatpush1.bf16.msra.mxu0 %v2480
  %2494 = vmatprep.subr.bf16.mxu0 0
  %2495 = vmatpush1.bf16.msra.mxu0 %v2481
  %2496 = vmatprep.subr.bf16.mxu0 0
  %2497 = vmatpush1.bf16.msra.mxu0 %v2482
  %2498 = vmatprep.subr.bf16.mxu0 0
  %2499 = vmatpush1.bf16.msra.mxu0 0
  %2500 = vmatprep.subr.bf16.mxu0 0
  %2501 = vmatpush1.bf16.msra.mxu0 0
  %2502 = vmatprep.subr.bf16.mxu0 0
  %2503 = vmatpush1.bf16.msra.mxu0 0
  %2504 = vmatprep.subr.bf16.mxu0 0
  %2505 = vmatpush1.bf16.msra.mxu0 0
  %2506 = vmatprep.subr.bf16.mxu0 0
  %2507 = vmatpush1.bf16.msra.mxu0 0
  %2508 = vmatprep.subr.bf16.mxu0 0
  %2509 = vmatpush1.bf16.msra.mxu0 0
  %2510 = vmatprep.subr.bf16.mxu0 0
  %2511 = vmatpush1.bf16.msra.mxu0 0
  %2512 = vmatprep.subr.bf16.mxu0 0
  %2513 = vmatpush1.bf16.msra.mxu0 0
  %2514 = vmatprep.subr.bf16.mxu0 0
  %2515 = vmatpush1.bf16.msra.mxu0 0
  %2516 = vmatprep.subr.bf16.mxu0 0
  %2517 = vmatpush1.bf16.msra.mxu0 0
  %2518 = vmatprep.subr.bf16.mxu0 0
  %2519 = vmatpush1.bf16.msra.mxu0 0
  %2520 = vmatprep.subr.bf16.mxu0 0
  %2521 = vmatpush1.bf16.msra.mxu0 0
  %2522 = vmatprep.mubr.bf16.mxu0 0
  %2523 = vmatmul.mubr.bf16.gmra.mrb[0].mxu0 %v2488
  %v2524 = vpop.f32.mrb[0].mxu0
  %v2525 = vadd.f32 0.0, %v2524
  %v2526 = vpop.f32.mrb[0].mxu0
  %v2527 = vpop.f32.mrb[0].mxu0
  %v2528 = vadd.f32 0.0, %v2527
  %v2529 = vpop.f32.mrb[0].mxu0
  %2530 = vdwg.mxu0
  %v2531 = vadd.f32 %v1366, %v2525
  %v2532 = vadd.f32 %v1367, %v2528
  %vm2533 = vcmask 31744
  %2534 = vst.msk [vmem:[%s10] sm:$0xff] %vm2533, %v2531
  %2535 = vst.msk [vmem:[%s10 + $0x8] sm:$0xff] %vm2533, %v2532
  // Predicated region
  $region42: #{seq2seq_forward.5} parent=0 // pred_check
    _
  $region43: #{seq2seq_forward.5} parent=0 // pred_check_branch
    %2537 = sbr.rel (0) target = $region45
  $region44: #{seq2seq_forward.5} parent=0 // pred_region
    _
  $region45: #{seq2seq_forward.5} parent=0 // pred_fallthru
    _
  // Predicated region
  $region46: #{seq2seq_forward.5} parent=0 // pred_check
    _
  $region47: #{seq2seq_forward.5} parent=0 // pred_check_branch
    %2539 = sbr.rel (0) target = $region49
  $region48: #{seq2seq_forward.5} parent=0 // pred_region
    _
  $region49: #{seq2seq_forward.5} parent=0 // pred_fallthru
    _

// kernel: seq2seq_forward.3
$region0: #{seq2seq_forward.3}
  #allocation0 [shape = 'u32[]', space=smem, size = 0x4, offset = 0x4, fixed_abs, tag = 'smem constant byte address 0x4 - core index']
  #allocation1 [shape = 'u32[144,128]{1,0:T(1,128)}', space=vmem, size = 0x12000, scoped, tag = 'internal scratch']
  #allocation2 [shape = 'f32[2,16,64]{2,1,0:T(8,128)}', space=vmem, size = 0x4000, scoped, tag = 'scratch operand']
  %s0 = inlined_call_operand.vmem [shape: f32[16,64], index: 0, kind: input, shape index: {}]
  %s1 = inlined_call_operand.vmem [shape: s32[2,1], index: 1, kind: input, shape index: {}]
  %s2 = inlined_call_operand.vmem [shape: bf16[2,64,192], index: 2, kind: input, shape index: {}]
  %s3 = inlined_call_operand.vmem [shape: bf16[2,64,192], index: 3, kind: input, shape index: {}]
  %s4 = inlined_call_operand.vmem [shape: f32[2,1,192], index: 4, kind: input, shape index: {}]
  %s5 = inlined_call_operand.vmem [shape: f32[2,1,192], index: 5, kind: input, shape index: {}]
  %s6 = inlined_call_operand.vmem [shape: bf16[64,64], index: 6, kind: input, shape index: {}]
  %s7 = inlined_call_operand.vmem [shape: bf16[64,64], index: 7, kind: input, shape index: {}]
  %s8 = inlined_call_operand.vmem [shape: f32[1,64], index: 8, kind: input, shape index: {}]
  %s9 = inlined_call_operand.vmem [shape: f32[2,16,64], index: 9, kind: output, shape index: {}]
  %s10 = sld [smem:[#allocation0]]
  $region46: #{seq2seq_forward.3} parent=0
    _
  %s12 = ssub.s32 1, %s10
  %s13 = scalar_select 0, %s12, %s10
  // Predicated region
  $region2: #{seq2seq_forward.3} parent=0 // pred_check
    _
  $region3: #{seq2seq_forward.3} parent=0 // pred_check_branch
    %15 = sbr.rel (0) target = $region5
  $region4: #{seq2seq_forward.3} parent=0 // pred_region
    _
  $region5: #{seq2seq_forward.3} parent=0 // pred_fallthru
    _
  // Predicated region
  $region6: #{seq2seq_forward.3} parent=0 // pred_check
    _
  $region7: #{seq2seq_forward.3} parent=0 // pred_check_branch
    %17 = sbr.rel (0) target = $region9
  $region8: #{seq2seq_forward.3} parent=0 // pred_region
    _
  $region9: #{seq2seq_forward.3} parent=0 // pred_fallthru
    _
  // Predicated region
  $region10: #{seq2seq_forward.3} parent=0 // pred_check
    _
  $region11: #{seq2seq_forward.3} parent=0 // pred_check_branch
    %19 = sbr.rel (0) target = $region13
  $region12: #{seq2seq_forward.3} parent=0 // pred_region
    _
  $region13: #{seq2seq_forward.3} parent=0 // pred_fallthru
    _
  // Predicated region
  $region14: #{seq2seq_forward.3} parent=0 // pred_check
    _
  $region15: #{seq2seq_forward.3} parent=0 // pred_check_branch
    %21 = sbr.rel (0) target = $region17
  $region16: #{seq2seq_forward.3} parent=0 // pred_region
    _
  $region17: #{seq2seq_forward.3} parent=0 // pred_fallthru
    _
  // Predicated region
  $region18: #{seq2seq_forward.3} parent=0 // pred_check
    _
  $region19: #{seq2seq_forward.3} parent=0 // pred_check_branch
    %23 = sbr.rel (0) target = $region21
  $region20: #{seq2seq_forward.3} parent=0 // pred_region
    _
  $region21: #{seq2seq_forward.3} parent=0 // pred_fallthru
    _
  // Predicated region
  $region22: #{seq2seq_forward.3} parent=0 // pred_check
    _
  $region23: #{seq2seq_forward.3} parent=0 // pred_check_branch
    %25 = sbr.rel (0) target = $region25
  $region24: #{seq2seq_forward.3} parent=0 // pred_region
    _
  $region25: #{seq2seq_forward.3} parent=0 // pred_fallthru
    _
  // Predicated region
  $region26: #{seq2seq_forward.3} parent=0 // pred_check
    _
  $region27: #{seq2seq_forward.3} parent=0 // pred_check_branch
    %27 = sbr.rel (0) target = $region29
  $region28: #{seq2seq_forward.3} parent=0 // pred_region
    _
  $region29: #{seq2seq_forward.3} parent=0 // pred_fallthru
    _
  // Predicated region
  $region30: #{seq2seq_forward.3} parent=0 // pred_check
    _
  $region31: #{seq2seq_forward.3} parent=0 // pred_check_branch
    %29 = sbr.rel (0) target = $region33
  $region32: #{seq2seq_forward.3} parent=0 // pred_region
    _
  $region33: #{seq2seq_forward.3} parent=0 // pred_fallthru
    _
  // Predicated region
  $region34: #{seq2seq_forward.3} parent=0 // pred_check
    _
  $region35: #{seq2seq_forward.3} parent=0 // pred_check_branch
    %31 = sbr.rel (0) target = $region37
  $region36: #{seq2seq_forward.3} parent=0 // pred_region
    _
  $region37: #{seq2seq_forward.3} parent=0 // pred_fallthru
    _
  %v33 = vld [vmem:[%s1] sm:$0x3]
  %v34 = vld [vmem:[%s0] sm:$0xff]
  %v35 = vld [vmem:[%s0 + $0x8] sm:$0xff]
  %v36 = vld [vmem:[%s2] sm:$0xff]
  %v37 = vld [vmem:[%s2 + $0x8] sm:$0xff]
  %v38 = vld [vmem:[%s2 + $0x10] sm:$0xff]
  %v39 = vld [vmem:[%s2 + $0x18] sm:$0xff]
  %v40 = vld [vmem:[%s2 + $0x20] sm:$0xff]
  %v41 = vld [vmem:[%s2 + $0x28] sm:$0xff]
  %v42 = vld [vmem:[%s2 + $0x30] sm:$0xff]
  %v43 = vld [vmem:[%s2 + $0x38] sm:$0xff]
  %v44 = vld [vmem:[%s3] sm:$0xff]
  %v45 = vld [vmem:[%s3 + $0x8] sm:$0xff]
  %v46 = vld [vmem:[%s3 + $0x10] sm:$0xff]
  %v47 = vld [vmem:[%s3 + $0x18] sm:$0xff]
  %v48 = vld [vmem:[%s3 + $0x20] sm:$0xff]
  %v49 = vld [vmem:[%s3 + $0x28] sm:$0xff]
  %v50 = vld [vmem:[%s3 + $0x30] sm:$0xff]
  %v51 = vld [vmem:[%s3 + $0x38] sm:$0xff]
  %v52 = vld [vmem:[%s5] sm:$0x3]
  %v53 = vpack.c.bf16 %v35, %v34
  %v54 = vld [vmem:[%s4] sm:$0x3]
  %v56 = vlaneseq
  %v57 = vshrl.u32 %v56, 7
  %v58 = vsub.s32 0, %v57
  %v59 = vrot.slane %v54, %v58
  %v60 = vlaneseq
  %v61 = vshrl.u32 %v60, 7
  %v62 = vsub.s32 1, %v61
  %v63 = vrot.slane %v54, %v62
  %v74 = vunpack.c.l.b16 %v36
  %v75 = vunpack.c.h.b16 %v36
  %v76 = vunpack.c.l.b16 %v37
  %v77 = vunpack.c.h.b16 %v37
  %v78 = vunpack.c.l.b16 %v38
  %v79 = vunpack.c.h.b16 %v38
  %v80 = vunpack.c.l.b16 %v39
  %v81 = vunpack.c.h.b16 %v39
  %v82 = vunpack.c.l.b16 %v40
  %v83 = vunpack.c.h.b16 %v40
  %v84 = vunpack.c.l.b16 %v41
  %v85 = vunpack.c.h.b16 %v41
  %v86 = vunpack.c.l.b16 %v42
  %v87 = vunpack.c.h.b16 %v42
  %v88 = vunpack.c.l.b16 %v43
  %v89 = vunpack.c.h.b16 %v43
  %v90 = vpack.c.b16 %v76, %v74
  %v91 = vpack.c.b16 %v77, %v75
  %v92 = vpack.c.b16 %v80, %v78
  %v93 = vpack.c.b16 %v81, %v79
  %v94 = vpack.c.b16 %v84, %v82
  %v95 = vpack.c.b16 %v85, %v83
  %v96 = vpack.c.b16 %v88, %v86
  %v97 = vpack.c.b16 %v89, %v87
  %vm106 = vcmask 523264
  %v108 = vsel %vm106, %v53, 0
  %110 = vmatprep.subr.bf16.mxu0 %v91
  %111 = vmatpush1.bf16.msra.mxu0 %v90
  %112 = vmatprep.subr.bf16.mxu0 %v93
  %113 = vmatpush1.bf16.msra.mxu0 %v92
  %114 = vmatprep.subr.bf16.mxu0 %v95
  %115 = vmatpush1.bf16.msra.mxu0 %v94
  %116 = vmatprep.subr.bf16.mxu0 %v97
  %117 = vmatpush1.bf16.msra.mxu0 %v96
  %118 = vmatprep.subr.bf16.mxu0 0
  %119 = vmatpush1.bf16.msra.mxu0 0
  %120 = vmatprep.subr.bf16.mxu0 0
  %121 = vmatpush1.bf16.msra.mxu0 0
  %122 = vmatprep.subr.bf16.mxu0 0
  %123 = vmatpush1.bf16.msra.mxu0 0
  %124 = vmatprep.subr.bf16.mxu0 0
  %125 = vmatpush1.bf16.msra.mxu0 0
  %126 = vmatprep.subr.bf16.mxu0 0
  %127 = vmatpush1.bf16.msra.mxu0 0
  %128 = vmatprep.subr.bf16.mxu0 0
  %129 = vmatpush1.bf16.msra.mxu0 0
  %130 = vmatprep.subr.bf16.mxu0 0
  %131 = vmatpush1.bf16.msra.mxu0 0
  %132 = vmatprep.subr.bf16.mxu0 0
  %133 = vmatpush1.bf16.msra.mxu0 0
  %134 = vmatprep.subr.bf16.mxu0 0
  %135 = vmatpush1.bf16.msra.mxu0 0
  %136 = vmatprep.subr.bf16.mxu0 0
  %137 = vmatpush1.bf16.msra.mxu0 0
  %138 = vmatprep.subr.bf16.mxu0 0
  %139 = vmatpush1.bf16.msra.mxu0 0
  %140 = vmatprep.subr.bf16.mxu0 0
  %141 = vmatpush1.bf16.msra.mxu0 0
  %142 = vmatprep.mubr.bf16.mxu0 0
  %143 = vmatmul.mubr.bf16.gmra.mrb[0].mxu0 %v108
  %v144 = vpop.f32.mrb[0].mxu0
  %v145 = vadd.f32 %v59, %v144
  %v146 = vpop.f32.mrb[0].mxu0
  %v147 = vadd.f32 %v63, %v146
  %v148 = vpop.f32.mrb[0].mxu0
  %v149 = vadd.f32 %v59, %v148
  %v150 = vpop.f32.mrb[0].mxu0
  %v151 = vadd.f32 %v63, %v150
  %152 = vdwg.mxu0
  %v154 = vlaneseq
  %v155 = vshrl.u32 %v154, 7
  %v156 = vsub.s32 0, %v155
  %v157 = vrot.slane %v52, %v156
  %v158 = vlaneseq
  %v159 = vshrl.u32 %v158, 7
  %v160 = vsub.s32 1, %v159
  %v161 = vrot.slane %v52, %v160
  %v172 = vunpack.c.l.b16 %v44
  %v173 = vunpack.c.h.b16 %v44
  %v174 = vunpack.c.l.b16 %v45
  %v175 = vunpack.c.h.b16 %v45
  %v176 = vunpack.c.l.b16 %v46
  %v177 = vunpack.c.h.b16 %v46
  %v178 = vunpack.c.l.b16 %v47
  %v179 = vunpack.c.h.b16 %v47
  %v180 = vunpack.c.l.b16 %v48
  %v181 = vunpack.c.h.b16 %v48
  %v182 = vunpack.c.l.b16 %v49
  %v183 = vunpack.c.h.b16 %v49
  %v184 = vunpack.c.l.b16 %v50
  %v185 = vunpack.c.h.b16 %v50
  %v186 = vunpack.c.l.b16 %v51
  %v187 = vunpack.c.h.b16 %v51
  %v188 = vpack.c.b16 %v174, %v172
  %v189 = vpack.c.b16 %v175, %v173
  %v190 = vpack.c.b16 %v178, %v176
  %v191 = vpack.c.b16 %v179, %v177
  %v192 = vpack.c.b16 %v182, %v180
  %v193 = vpack.c.b16 %v183, %v181
  %v194 = vpack.c.b16 %v186, %v184
  %v195 = vpack.c.b16 %v187, %v185
  %v205 = vsel %vm106, 0, 0
  %207 = vmatprep.subr.bf16.mxu0 %v189
  %208 = vmatpush1.bf16.msra.mxu0 %v188
  %209 = vmatprep.subr.bf16.mxu0 %v191
  %210 = vmatpush1.bf16.msra.mxu0 %v190
  %211 = vmatprep.subr.bf16.mxu0 %v193
  %212 = vmatpush1.bf16.msra.mxu0 %v192
  %213 = vmatprep.subr.bf16.mxu0 %v195
  %214 = vmatpush1.bf16.msra.mxu0 %v194
  %215 = vmatprep.subr.bf16.mxu0 0
  %216 = vmatpush1.bf16.msra.mxu0 0
  %217 = vmatprep.subr.bf16.mxu0 0
  %218 = vmatpush1.bf16.msra.mxu0 0
  %219 = vmatprep.subr.bf16.mxu0 0
  %220 = vmatpush1.bf16.msra.mxu0 0
  %221 = vmatprep.subr.bf16.mxu0 0
  %222 = vmatpush1.bf16.msra.mxu0 0
  %223 = vmatprep.subr.bf16.mxu0 0
  %224 = vmatpush1.bf16.msra.mxu0 0
  %225 = vmatprep.subr.bf16.mxu0 0
  %226 = vmatpush1.bf16.msra.mxu0 0
  %227 = vmatprep.subr.bf16.mxu0 0
  %228 = vmatpush1.bf16.msra.mxu0 0
  %229 = vmatprep.subr.bf16.mxu0 0
  %230 = vmatpush1.bf16.msra.mxu0 0
  %231 = vmatprep.subr.bf16.mxu0 0
  %232 = vmatpush1.bf16.msra.mxu0 0
  %233 = vmatprep.subr.bf16.mxu0 0
  %234 = vmatpush1.bf16.msra.mxu0 0
  %235 = vmatprep.subr.bf16.mxu0 0
  %236 = vmatpush1.bf16.msra.mxu0 0
  %237 = vmatprep.subr.bf16.mxu0 0
  %238 = vmatpush1.bf16.msra.mxu0 0
  %239 = vmatprep.mubr.bf16.mxu0 0
  %240 = vmatmul.mubr.bf16.gmra.mrb[0].mxu0 %v205
  %v241 = vpop.f32.mrb[0].mxu0
  %v242 = vadd.f32 %v157, %v241
  %v243 = vpop.f32.mrb[0].mxu0
  %v244 = vadd.f32 %v161, %v243
  %v245 = vpop.f32.mrb[0].mxu0
  %v246 = vpop.f32.mrb[0].mxu0
  %247 = vdwg.mxu0
  %v248 = vadd.f32 %v145, %v242
  %v249 = vxor.u32 %v248, 2147483648
  %v250 = vmul.f32 %v249, 1.442695
  %v251 = vpow.pop %v250
  %v252 = vadd.f32 %v251, 1.0
  %v253 = vrcp.pop %v252
  %v254 = vmul.f32 1.0, %v253
  %v255 = vmul.f32 %v254, %v244
  %v256 = vadd.f32 %v147, %v255
  %v257 = vtanh.pop %v256
  %v258 = vsub.f32 1.0, %v254
  %260 = vrot.lane.b32.xlu0 %v257, 64
  %v261 = vpop.permute.xlu0 %260
  %v263 = vmul.f32 %v258, %v261
  %v264 = vmul.f32 %v254, 0.0
  %v265 = vadd.f32 %v263, %v264
  %vm266 = vcmp.gt.s32.totalorder %v33, 0
  %v267 = vsel %vm266, 1, 0
  %268 = vset.pattern.permute.xlu0 0
  %269 = vperm.xlu0 %268, %v267
  %v270 = vpop.permute.xlu0 %269
  %vm271 = vcmp.eq.s32.totalorder %v270, 1
  %v272 = vsel %vm271, %v265, 0.0
  %274 = vrot.lane.b32.xlu0 %v272, 64
  %v275 = vpop.permute.xlu0 %274
  %vm277 = vcmask 517120
  %278 = vst.msk [vmem:[#allocation2] sm:$0x3] %vm277, %v275
  %v279 = vpack.c.bf16 %v272, %v272
  %281 = vrot.lane.b32.xlu0 %v279, 64
  %v282 = vpop.permute.xlu0 %281
  %v284 = vsel %vm106, %v282, 0
  %286 = vmatprep.subr.bf16.mxu0 %v189
  %287 = vmatpush1.bf16.msra.mxu0 %v188
  %288 = vmatprep.subr.bf16.mxu0 %v191
  %289 = vmatpush1.bf16.msra.mxu0 %v190
  %290 = vmatprep.subr.bf16.mxu0 %v193
  %291 = vmatpush1.bf16.msra.mxu0 %v192
  %292 = vmatprep.subr.bf16.mxu0 %v195
  %293 = vmatpush1.bf16.msra.mxu0 %v194
  %294 = vmatprep.subr.bf16.mxu0 0
  %295 = vmatpush1.bf16.msra.mxu0 0
  %296 = vmatprep.subr.bf16.mxu0 0
  %297 = vmatpush1.bf16.msra.mxu0 0
  %298 = vmatprep.subr.bf16.mxu0 0
  %299 = vmatpush1.bf16.msra.mxu0 0
  %300 = vmatprep.subr.bf16.mxu0 0
  %301 = vmatpush1.bf16.msra.mxu0 0
  %302 = vmatprep.subr.bf16.mxu0 0
  %303 = vmatpush1.bf16.msra.mxu0 0
  %304 = vmatprep.subr.bf16.mxu0 0
  %305 = vmatpush1.bf16.msra.mxu0 0
  %306 = vmatprep.subr.bf16.mxu0 0
  %307 = vmatpush1.bf16.msra.mxu0 0
  %308 = vmatprep.subr.bf16.mxu0 0
  %309 = vmatpush1.bf16.msra.mxu0 0
  %310 = vmatprep.subr.bf16.mxu0 0
  %311 = vmatpush1.bf16.msra.mxu0 0
  %312 = vmatprep.subr.bf16.mxu0 0
  %313 = vmatpush1.bf16.msra.mxu0 0
  %314 = vmatprep.subr.bf16.mxu0 0
  %315 = vmatpush1.bf16.msra.mxu0 0
  %316 = vmatprep.subr.bf16.mxu0 0
  %317 = vmatpush1.bf16.msra.mxu0 0
  %318 = vmatprep.mubr.bf16.mxu0 0
  %319 = vmatmul.mubr.bf16.gmra.mrb[0].mxu0 %v284
  %v320 = vpop.f32.mrb[0].mxu0
  %v321 = vadd.f32 %v157, %v320
  %v322 = vpop.f32.mrb[0].mxu0
  %v323 = vadd.f32 %v161, %v322
  %v324 = vpop.f32.mrb[0].mxu0
  %v325 = vpop.f32.mrb[0].mxu0
  %326 = vdwg.mxu0
  %v328 = vrot.slane %v321, 6
  %v330 = vadd.f32 %v145, %v328
  %v331 = vxor.u32 %v330, 2147483648
  %v332 = vmul.f32 %v331, 1.442695
  %v333 = vpow.pop %v332
  %v334 = vadd.f32 %v333, 1.0
  %v335 = vrcp.pop %v334
  %v336 = vmul.f32 1.0, %v335
  %v338 = vrot.slane %v323, 6
  %v340 = vmul.f32 %v336, %v338
  %v341 = vadd.f32 %v147, %v340
  %v342 = vtanh.pop %v341
  %v343 = vsub.f32 1.0, %v336
  %345 = vrot.lane.b32.xlu0 %v342, 64
  %v346 = vpop.permute.xlu0 %345
  %v348 = vmul.f32 %v343, %v346
  %v349 = vrot.slane %v272, 6
  %v351 = vmul.f32 %v336, %v349
  %v352 = vadd.f32 %v348, %v351
  %vm353 = vcmp.gt.s32.totalorder %v33, 1
  %v354 = vsel %vm353, 1, 0
  %355 = vset.pattern.permute.xlu0 0
  %356 = vperm.xlu0 %355, %v354
  %v357 = vpop.permute.xlu0 %356
  %vm358 = vcmp.eq.s32.totalorder %v357, 1
  %v360 = vrot.slane %v352, 2
  %361 = vrot.lane.b32.xlu0 %v360, 64
  %v362 = vpop.permute.xlu0 %361
  %v364 = vsel %vm358, %v362, %v275
  %v365 = vsel %vm358, %v362, 0.0
  %366 = vst.msk [vmem:[#allocation2 + $0x2] sm:$0x3] %vm277, %v365
  %v367 = vpack.c.bf16 %v364, %v364
  %v369 = vsel %vm106, %v367, 0
  %371 = vmatprep.subr.bf16.mxu0 %v189
  %372 = vmatpush1.bf16.msra.mxu0 %v188
  %373 = vmatprep.subr.bf16.mxu0 %v191
  %374 = vmatpush1.bf16.msra.mxu0 %v190
  %375 = vmatprep.subr.bf16.mxu0 %v193
  %376 = vmatpush1.bf16.msra.mxu0 %v192
  %377 = vmatprep.subr.bf16.mxu0 %v195
  %378 = vmatpush1.bf16.msra.mxu0 %v194
  %379 = vmatprep.subr.bf16.mxu0 0
  %380 = vmatpush1.bf16.msra.mxu0 0
  %381 = vmatprep.subr.bf16.mxu0 0
  %382 = vmatpush1.bf16.msra.mxu0 0
  %383 = vmatprep.subr.bf16.mxu0 0
  %384 = vmatpush1.bf16.msra.mxu0 0
  %385 = vmatprep.subr.bf16.mxu0 0
  %386 = vmatpush1.bf16.msra.mxu0 0
  %387 = vmatprep.subr.bf16.mxu0 0
  %388 = vmatpush1.bf16.msra.mxu0 0
  %389 = vmatprep.subr.bf16.mxu0 0
  %390 = vmatpush1.bf16.msra.mxu0 0
  %391 = vmatprep.subr.bf16.mxu0 0
  %392 = vmatpush1.bf16.msra.mxu0 0
  %393 = vmatprep.subr.bf16.mxu0 0
  %394 = vmatpush1.bf16.msra.mxu0 0
  %395 = vmatprep.subr.bf16.mxu0 0
  %396 = vmatpush1.bf16.msra.mxu0 0
  %397 = vmatprep.subr.bf16.mxu0 0
  %398 = vmatpush1.bf16.msra.mxu0 0
  %399 = vmatprep.subr.bf16.mxu0 0
  %400 = vmatpush1.bf16.msra.mxu0 0
  %401 = vmatprep.subr.bf16.mxu0 0
  %402 = vmatpush1.bf16.msra.mxu0 0
  %403 = vmatprep.mubr.bf16.mxu0 0
  %404 = vmatmul.mubr.bf16.gmra.mrb[0].mxu0 %v369
  %v405 = vpop.f32.mrb[0].mxu0
  %v406 = vadd.f32 %v157, %v405
  %v407 = vpop.f32.mrb[0].mxu0
  %v408 = vadd.f32 %v161, %v407
  %v409 = vpop.f32.mrb[0].mxu0
  %v410 = vpop.f32.mrb[0].mxu0
  %411 = vdwg.mxu0
  %v413 = vrot.slane %v406, 4
  %v415 = vadd.f32 %v145, %v413
  %v416 = vxor.u32 %v415, 2147483648
  %v417 = vmul.f32 %v416, 1.442695
  %v418 = vpow.pop %v417
  %v419 = vadd.f32 %v418, 1.0
  %v420 = vrcp.pop %v419
  %v421 = vmul.f32 1.0, %v420
  %v423 = vrot.slane %v408, 4
  %v425 = vmul.f32 %v421, %v423
  %v426 = vadd.f32 %v147, %v425
  %v427 = vtanh.pop %v426
  %v428 = vsub.f32 1.0, %v421
  %430 = vrot.lane.b32.xlu0 %v427, 64
  %v431 = vpop.permute.xlu0 %430
  %v433 = vmul.f32 %v428, %v431
  %v435 = vrot.slane %v364, 4
  %436 = vrot.lane.b32.xlu0 %v435, 64
  %v437 = vpop.permute.xlu0 %436
  %v439 = vmul.f32 %v421, %v437
  %v440 = vadd.f32 %v433, %v439
  %vm441 = vcmp.gt.s32.totalorder %v33, 2
  %v442 = vsel %vm441, 1, 0
  %443 = vset.pattern.permute.xlu0 0
  %444 = vperm.xlu0 %443, %v442
  %v445 = vpop.permute.xlu0 %444
  %vm446 = vcmp.eq.s32.totalorder %v445, 1
  %v448 = vrot.slane %v440, 4
  %449 = vrot.lane.b32.xlu0 %v448, 64
  %v450 = vpop.permute.xlu0 %449
  %v452 = vsel %vm446, %v450, %v364
  %v453 = vsel %vm446, %v450, 0.0
  %454 = vst.msk [vmem:[#allocation2 + $0x4] sm:$0x3] %vm277, %v453
  %v455 = vpack.c.bf16 %v452, %v452
  %v457 = vsel %vm106, %v455, 0
  %459 = vmatprep.subr.bf16.mxu0 %v189
  %460 = vmatpush1.bf16.msra.mxu0 %v188
  %461 = vmatprep.subr.bf16.mxu0 %v191
  %462 = vmatpush1.bf16.msra.mxu0 %v190
  %463 = vmatprep.subr.bf16.mxu0 %v193
  %464 = vmatpush1.bf16.msra.mxu0 %v192
  %465 = vmatprep.subr.bf16.mxu0 %v195
  %466 = vmatpush1.bf16.msra.mxu0 %v194
  %467 = vmatprep.subr.bf16.mxu0 0
  %468 = vmatpush1.bf16.msra.mxu0 0
  %469 = vmatprep.subr.bf16.mxu0 0
  %470 = vmatpush1.bf16.msra.mxu0 0
  %471 = vmatprep.subr.bf16.mxu0 0
  %472 = vmatpush1.bf16.msra.mxu0 0
  %473 = vmatprep.subr.bf16.mxu0 0
  %474 = vmatpush1.bf16.msra.mxu0 0
  %475 = vmatprep.subr.bf16.mxu0 0
  %476 = vmatpush1.bf16.msra.mxu0 0
  %477 = vmatprep.subr.bf16.mxu0 0
  %478 = vmatpush1.bf16.msra.mxu0 0
  %479 = vmatprep.subr.bf16.mxu0 0
  %480 = vmatpush1.bf16.msra.mxu0 0
  %481 = vmatprep.subr.bf16.mxu0 0
  %482 = vmatpush1.bf16.msra.mxu0 0
  %483 = vmatprep.subr.bf16.mxu0 0
  %484 = vmatpush1.bf16.msra.mxu0 0
  %485 = vmatprep.subr.bf16.mxu0 0
  %486 = vmatpush1.bf16.msra.mxu0 0
  %487 = vmatprep.subr.bf16.mxu0 0
  %488 = vmatpush1.bf16.msra.mxu0 0
  %489 = vmatprep.subr.bf16.mxu0 0
  %490 = vmatpush1.bf16.msra.mxu0 0
  %491 = vmatprep.mubr.bf16.mxu0 0
  %492 = vmatmul.mubr.bf16.gmra.mrb[0].mxu0 %v457
  %v493 = vpop.f32.mrb[0].mxu0
  %v494 = vadd.f32 %v157, %v493
  %v495 = vpop.f32.mrb[0].mxu0
  %v496 = vadd.f32 %v161, %v495
  %v497 = vpop.f32.mrb[0].mxu0
  %v498 = vpop.f32.mrb[0].mxu0
  %499 = vdwg.mxu0
  %v501 = vrot.slane %v494, 2
  %v503 = vadd.f32 %v145, %v501
  %v504 = vxor.u32 %v503, 2147483648
  %v505 = vmul.f32 %v504, 1.442695
  %v506 = vpow.pop %v505
  %v507 = vadd.f32 %v506, 1.0
  %v508 = vrcp.pop %v507
  %v509 = vmul.f32 1.0, %v508
  %v511 = vrot.slane %v496, 2
  %v513 = vmul.f32 %v509, %v511
  %v514 = vadd.f32 %v147, %v513
  %v515 = vtanh.pop %v514
  %v516 = vsub.f32 1.0, %v509
  %518 = vrot.lane.b32.xlu0 %v515, 64
  %v519 = vpop.permute.xlu0 %518
  %v521 = vmul.f32 %v516, %v519
  %v523 = vrot.slane %v452, 2
  %524 = vrot.lane.b32.xlu0 %v523, 64
  %v525 = vpop.permute.xlu0 %524
  %v527 = vmul.f32 %v509, %v525
  %v528 = vadd.f32 %v521, %v527
  %vm529 = vcmp.gt.s32.totalorder %v33, 3
  %v530 = vsel %vm529, 1, 0
  %531 = vset.pattern.permute.xlu0 0
  %532 = vperm.xlu0 %531, %v530
  %v533 = vpop.permute.xlu0 %532
  %vm534 = vcmp.eq.s32.totalorder %v533, 1
  %v536 = vrot.slane %v528, 6
  %537 = vrot.lane.b32.xlu0 %v536, 64
  %v538 = vpop.permute.xlu0 %537
  %v540 = vsel %vm534, %v538, %v452
  %v541 = vsel %vm534, %v538, 0.0
  %542 = vst.msk [vmem:[#allocation2 + $0x6] sm:$0x3] %vm277, %v541
  %v543 = vpack.c.bf16 %v540, %v540
  %v545 = vsel %vm106, %v543, 0
  %547 = vmatprep.subr.bf16.mxu0 %v189
  %548 = vmatpush1.bf16.msra.mxu0 %v188
  %549 = vmatprep.subr.bf16.mxu0 %v191
  %550 = vmatpush1.bf16.msra.mxu0 %v190
  %551 = vmatprep.subr.bf16.mxu0 %v193
  %552 = vmatpush1.bf16.msra.mxu0 %v192
  %553 = vmatprep.subr.bf16.mxu0 %v195
  %554 = vmatpush1.bf16.msra.mxu0 %v194
  %555 = vmatprep.subr.bf16.mxu0 0
  %556 = vmatpush1.bf16.msra.mxu0 0
  %557 = vmatprep.subr.bf16.mxu0 0
  %558 = vmatpush1.bf16.msra.mxu0 0
  %559 = vmatprep.subr.bf16.mxu0 0
  %560 = vmatpush1.bf16.msra.mxu0 0
  %561 = vmatprep.subr.bf16.mxu0 0
  %562 = vmatpush1.bf16.msra.mxu0 0
  %563 = vmatprep.subr.bf16.mxu0 0
  %564 = vmatpush1.bf16.msra.mxu0 0
  %565 = vmatprep.subr.bf16.mxu0 0
  %566 = vmatpush1.bf16.msra.mxu0 0
  %567 = vmatprep.subr.bf16.mxu0 0
  %568 = vmatpush1.bf16.msra.mxu0 0
  %569 = vmatprep.subr.bf16.mxu0 0
  %570 = vmatpush1.bf16.msra.mxu0 0
  %571 = vmatprep.subr.bf16.mxu0 0
  %572 = vmatpush1.bf16.msra.mxu0 0
  %573 = vmatprep.subr.bf16.mxu0 0
  %574 = vmatpush1.bf16.msra.mxu0 0
  %575 = vmatprep.subr.bf16.mxu0 0
  %576 = vmatpush1.bf16.msra.mxu0 0
  %577 = vmatprep.subr.bf16.mxu0 0
  %578 = vmatpush1.bf16.msra.mxu0 0
  %579 = vmatprep.mubr.bf16.mxu0 0
  %580 = vmatmul.mubr.bf16.gmra.mrb[0].mxu0 %v545
  %v581 = vpop.f32.mrb[0].mxu0
  %v582 = vadd.f32 %v157, %v581
  %v583 = vpop.f32.mrb[0].mxu0
  %v584 = vadd.f32 %v161, %v583
  %v585 = vpop.f32.mrb[0].mxu0
  %v586 = vpop.f32.mrb[0].mxu0
  %587 = vdwg.mxu0
  %v588 = vadd.f32 %v149, %v582
  %v589 = vxor.u32 %v588, 2147483648
  %v590 = vmul.f32 %v589, 1.442695
  %v591 = vpow.pop %v590
  %v592 = vadd.f32 %v591, 1.0
  %v593 = vrcp.pop %v592
  %v594 = vmul.f32 1.0, %v593
  %v595 = vmul.f32 %v594, %v584
  %v596 = vadd.f32 %v151, %v595
  %v597 = vtanh.pop %v596
  %v598 = vsub.f32 1.0, %v594
  %600 = vrot.lane.b32.xlu0 %v597, 64
  %v601 = vpop.permute.xlu0 %600
  %v603 = vmul.f32 %v598, %v601
  %605 = vrot.lane.b32.xlu0 %v540, 64
  %v606 = vpop.permute.xlu0 %605
  %v608 = vmul.f32 %v594, %v606
  %v609 = vadd.f32 %v603, %v608
  %vm610 = vcmp.gt.s32.totalorder %v33, 4
  %v611 = vsel %vm610, 1, 0
  %612 = vset.pattern.permute.xlu0 0
  %613 = vperm.xlu0 %612, %v611
  %v614 = vpop.permute.xlu0 %613
  %vm615 = vcmp.eq.s32.totalorder %v614, 1
  %v616 = vsel %vm615, %v609, %v606
  %v617 = vsel %vm615, %v609, 0.0
  %619 = vrot.lane.b32.xlu0 %v617, 64
  %v620 = vpop.permute.xlu0 %619
  %622 = vst.msk [vmem:[#allocation2 + $0x8] sm:$0x3] %vm277, %v620
  %v623 = vpack.c.bf16 %v616, %v616
  %625 = vrot.lane.b32.xlu0 %v623, 64
  %v626 = vpop.permute.xlu0 %625
  %v628 = vsel %vm106, %v626, 0
  %630 = vmatprep.subr.bf16.mxu0 %v189
  %631 = vmatpush1.bf16.msra.mxu0 %v188
  %632 = vmatprep.subr.bf16.mxu0 %v191
  %633 = vmatpush1.bf16.msra.mxu0 %v190
  %634 = vmatprep.subr.bf16.mxu0 %v193
  %635 = vmatpush1.bf16.msra.mxu0 %v192
  %636 = vmatprep.subr.bf16.mxu0 %v195
  %637 = vmatpush1.bf16.msra.mxu0 %v194
  %638 = vmatprep.subr.bf16.mxu0 0
  %639 = vmatpush1.bf16.msra.mxu0 0
  %640 = vmatprep.subr.bf16.mxu0 0
  %641 = vmatpush1.bf16.msra.mxu0 0
  %642 = vmatprep.subr.bf16.mxu0 0
  %643 = vmatpush1.bf16.msra.mxu0 0
  %644 = vmatprep.subr.bf16.mxu0 0
  %645 = vmatpush1.bf16.msra.mxu0 0
  %646 = vmatprep.subr.bf16.mxu0 0
  %647 = vmatpush1.bf16.msra.mxu0 0
  %648 = vmatprep.subr.bf16.mxu0 0
  %649 = vmatpush1.bf16.msra.mxu0 0
  %650 = vmatprep.subr.bf16.mxu0 0
  %651 = vmatpush1.bf16.msra.mxu0 0
  %652 = vmatprep.subr.bf16.mxu0 0
  %653 = vmatpush1.bf16.msra.mxu0 0
  %654 = vmatprep.subr.bf16.mxu0 0
  %655 = vmatpush1.bf16.msra.mxu0 0
  %656 = vmatprep.subr.bf16.mxu0 0
  %657 = vmatpush1.bf16.msra.mxu0 0
  %658 = vmatprep.subr.bf16.mxu0 0
  %659 = vmatpush1.bf16.msra.mxu0 0
  %660 = vmatprep.subr.bf16.mxu0 0
  %661 = vmatpush1.bf16.msra.mxu0 0
  %662 = vmatprep.mubr.bf16.mxu0 0
  %663 = vmatmul.mubr.bf16.gmra.mrb[0].mxu0 %v628
  %v664 = vpop.f32.mrb[0].mxu0
  %v665 = vadd.f32 %v157, %v664
  %v666 = vpop.f32.mrb[0].mxu0
  %v667 = vadd.f32 %v161, %v666
  %v668 = vpop.f32.mrb[0].mxu0
  %v669 = vpop.f32.mrb[0].mxu0
  %670 = vdwg.mxu0
  %v672 = vrot.slane %v665, 6
  %v674 = vadd.f32 %v149, %v672
  %v675 = vxor.u32 %v674, 2147483648
  %v676 = vmul.f32 %v675, 1.442695
  %v677 = vpow.pop %v676
  %v678 = vadd.f32 %v677, 1.0
  %v679 = vrcp.pop %v678
  %v680 = vmul.f32 1.0, %v679
  %v682 = vrot.slane %v667, 6
  %v684 = vmul.f32 %v680, %v682
  %v685 = vadd.f32 %v151, %v684
  %v686 = vtanh.pop %v685
  %v687 = vsub.f32 1.0, %v680
  %689 = vrot.lane.b32.xlu0 %v686, 64
  %v690 = vpop.permute.xlu0 %689
  %v692 = vmul.f32 %v687, %v690
  %v694 = vrot.slane %v616, 6
  %v696 = vmul.f32 %v680, %v694
  %v697 = vadd.f32 %v692, %v696
  %vm698 = vcmp.gt.s32.totalorder %v33, 5
  %v699 = vsel %vm698, 1, 0
  %700 = vset.pattern.permute.xlu0 0
  %701 = vperm.xlu0 %700, %v699
  %v702 = vpop.permute.xlu0 %701
  %vm703 = vcmp.eq.s32.totalorder %v702, 1
  %v705 = vrot.slane %v697, 2
  %706 = vrot.lane.b32.xlu0 %v705, 64
  %v707 = vpop.permute.xlu0 %706
  %709 = vrot.lane.b32.xlu0 %v616, 64
  %v710 = vpop.permute.xlu0 %709
  %v712 = vsel %vm703, %v707, %v710
  %v713 = vsel %vm703, %v707, 0.0
  %714 = vst.msk [vmem:[#allocation2 + $0xa] sm:$0x3] %vm277, %v713
  %v715 = vpack.c.bf16 %v712, %v712
  %v717 = vsel %vm106, %v715, 0
  %719 = vmatprep.subr.bf16.mxu0 %v189
  %720 = vmatpush1.bf16.msra.mxu0 %v188
  %721 = vmatprep.subr.bf16.mxu0 %v191
  %722 = vmatpush1.bf16.msra.mxu0 %v190
  %723 = vmatprep.subr.bf16.mxu0 %v193
  %724 = vmatpush1.bf16.msra.mxu0 %v192
  %725 = vmatprep.subr.bf16.mxu0 %v195
  %726 = vmatpush1.bf16.msra.mxu0 %v194
  %727 = vmatprep.subr.bf16.mxu0 0
  %728 = vmatpush1.bf16.msra.mxu0 0
  %729 = vmatprep.subr.bf16.mxu0 0
  %730 = vmatpush1.bf16.msra.mxu0 0
  %731 = vmatprep.subr.bf16.mxu0 0
  %732 = vmatpush1.bf16.msra.mxu0 0
  %733 = vmatprep.subr.bf16.mxu0 0
  %734 = vmatpush1.bf16.msra.mxu0 0
  %735 = vmatprep.subr.bf16.mxu0 0
  %736 = vmatpush1.bf16.msra.mxu0 0
  %737 = vmatprep.subr.bf16.mxu0 0
  %738 = vmatpush1.bf16.msra.mxu0 0
  %739 = vmatprep.subr.bf16.mxu0 0
  %740 = vmatpush1.bf16.msra.mxu0 0
  %741 = vmatprep.subr.bf16.mxu0 0
  %742 = vmatpush1.bf16.msra.mxu0 0
  %743 = vmatprep.subr.bf16.mxu0 0
  %744 = vmatpush1.bf16.msra.mxu0 0
  %745 = vmatprep.subr.bf16.mxu0 0
  %746 = vmatpush1.bf16.msra.mxu0 0
  %747 = vmatprep.subr.bf16.mxu0 0
  %748 = vmatpush1.bf16.msra.mxu0 0
  %749 = vmatprep.subr.bf16.mxu0 0
  %750 = vmatpush1.bf16.msra.mxu0 0
  %751 = vmatprep.mubr.bf16.mxu0 0
  %752 = vmatmul.mubr.bf16.gmra.mrb[0].mxu0 %v717
  %v753 = vpop.f32.mrb[0].mxu0
  %v754 = vadd.f32 %v157, %v753
  %v755 = vpop.f32.mrb[0].mxu0
  %v756 = vadd.f32 %v161, %v755
  %v757 = vpop.f32.mrb[0].mxu0
  %v758 = vpop.f32.mrb[0].mxu0
  %759 = vdwg.mxu0
  %v761 = vrot.slane %v754, 4
  %v763 = vadd.f32 %v149, %v761
  %v764 = vxor.u32 %v763, 2147483648
  %v765 = vmul.f32 %v764, 1.442695
  %v766 = vpow.pop %v765
  %v767 = vadd.f32 %v766, 1.0
  %v768 = vrcp.pop %v767
  %v769 = vmul.f32 1.0, %v768
  %v771 = vrot.slane %v756, 4
  %v773 = vmul.f32 %v769, %v771
  %v774 = vadd.f32 %v151, %v773
  %v775 = vtanh.pop %v774
  %v776 = vsub.f32 1.0, %v769
  %778 = vrot.lane.b32.xlu0 %v775, 64
  %v779 = vpop.permute.xlu0 %778
  %v781 = vmul.f32 %v776, %v779
  %v783 = vrot.slane %v712, 4
  %784 = vrot.lane.b32.xlu0 %v783, 64
  %v785 = vpop.permute.xlu0 %784
  %v787 = vmul.f32 %v769, %v785
  %v788 = vadd.f32 %v781, %v787
  %vm789 = vcmp.gt.s32.totalorder %v33, 6
  %v790 = vsel %vm789, 1, 0
  %791 = vset.pattern.permute.xlu0 0
  %792 = vperm.xlu0 %791, %v790
  %v793 = vpop.permute.xlu0 %792
  %vm794 = vcmp.eq.s32.totalorder %v793, 1
  %v796 = vrot.slane %v788, 4
  %797 = vrot.lane.b32.xlu0 %v796, 64
  %v798 = vpop.permute.xlu0 %797
  %v800 = vsel %vm794, %v798, %v712
  %v801 = vsel %vm794, %v798, 0.0
  %802 = vst.msk [vmem:[#allocation2 + $0xc] sm:$0x3] %vm277, %v801
  %v803 = vpack.c.bf16 %v800, %v800
  %v805 = vsel %vm106, %v803, 0
  %807 = vmatprep.subr.bf16.mxu0 %v189
  %808 = vmatpush1.bf16.msra.mxu0 %v188
  %809 = vmatprep.subr.bf16.mxu0 %v191
  %810 = vmatpush1.bf16.msra.mxu0 %v190
  %811 = vmatprep.subr.bf16.mxu0 %v193
  %812 = vmatpush1.bf16.msra.mxu0 %v192
  %813 = vmatprep.subr.bf16.mxu0 %v195
  %814 = vmatpush1.bf16.msra.mxu0 %v194
  %815 = vmatprep.subr.bf16.mxu0 0
  %816 = vmatpush1.bf16.msra.mxu0 0
  %817 = vmatprep.subr.bf16.mxu0 0
  %818 = vmatpush1.bf16.msra.mxu0 0
  %819 = vmatprep.subr.bf16.mxu0 0
  %820 = vmatpush1.bf16.msra.mxu0 0
  %821 = vmatprep.subr.bf16.mxu0 0
  %822 = vmatpush1.bf16.msra.mxu0 0
  %823 = vmatprep.subr.bf16.mxu0 0
  %824 = vmatpush1.bf16.msra.mxu0 0
  %825 = vmatprep.subr.bf16.mxu0 0
  %826 = vmatpush1.bf16.msra.mxu0 0
  %827 = vmatprep.subr.bf16.mxu0 0
  %828 = vmatpush1.bf16.msra.mxu0 0
  %829 = vmatprep.subr.bf16.mxu0 0
  %830 = vmatpush1.bf16.msra.mxu0 0
  %831 = vmatprep.subr.bf16.mxu0 0
  %832 = vmatpush1.bf16.msra.mxu0 0
  %833 = vmatprep.subr.bf16.mxu0 0
  %834 = vmatpush1.bf16.msra.mxu0 0
  %835 = vmatprep.subr.bf16.mxu0 0
  %836 = vmatpush1.bf16.msra.mxu0 0
  %837 = vmatprep.subr.bf16.mxu0 0
  %838 = vmatpush1.bf16.msra.mxu0 0
  %839 = vmatprep.mubr.bf16.mxu0 0
  %840 = vmatmul.mubr.bf16.gmra.mrb[0].mxu0 %v805
  %v841 = vpop.f32.mrb[0].mxu0
  %v842 = vadd.f32 %v157, %v841
  %v843 = vpop.f32.mrb[0].mxu0
  %v844 = vadd.f32 %v161, %v843
  %v845 = vpop.f32.mrb[0].mxu0
  %v846 = vpop.f32.mrb[0].mxu0
  %847 = vdwg.mxu0
  %v849 = vrot.slane %v842, 2
  %v851 = vadd.f32 %v149, %v849
  %v852 = vxor.u32 %v851, 2147483648
  %v853 = vmul.f32 %v852, 1.442695
  %v854 = vpow.pop %v853
  %v855 = vadd.f32 %v854, 1.0
  %v856 = vrcp.pop %v855
  %v857 = vmul.f32 1.0, %v856
  %v859 = vrot.slane %v844, 2
  %v861 = vmul.f32 %v857, %v859
  %v862 = vadd.f32 %v151, %v861
  %v863 = vtanh.pop %v862
  %v864 = vsub.f32 1.0, %v857
  %866 = vrot.lane.b32.xlu0 %v863, 64
  %v867 = vpop.permute.xlu0 %866
  %v869 = vmul.f32 %v864, %v867
  %v871 = vrot.slane %v800, 2
  %872 = vrot.lane.b32.xlu0 %v871, 64
  %v873 = vpop.permute.xlu0 %872
  %v875 = vmul.f32 %v857, %v873
  %v876 = vadd.f32 %v869, %v875
  %vm877 = vcmp.gt.s32.totalorder %v33, 7
  %v878 = vsel %vm877, 1, 0
  %879 = vset.pattern.permute.xlu0 0
  %880 = vperm.xlu0 %879, %v878
  %v881 = vpop.permute.xlu0 %880
  %vm882 = vcmp.eq.s32.totalorder %v881, 1
  %v884 = vrot.slane %v876, 6
  %885 = vrot.lane.b32.xlu0 %v884, 64
  %v886 = vpop.permute.xlu0 %885
  %v888 = vsel %vm882, %v886, 0.0
  %889 = vst.msk [vmem:[#allocation2 + $0xe] sm:$0x3] %vm277, %v888
  %v890 = vld [vmem:[#allocation2] sm:$0xff]
  %v891 = vld [vmem:[#allocation2 + $0x8] sm:$0xff]
  %s892 = scalar_lea.vmem %s2, 64
  %v893 = vld [vmem:[%s892] sm:$0xff]
  %v894 = vld [vmem:[%s892 + $0x8] sm:$0xff]
  %v895 = vld [vmem:[%s892 + $0x10] sm:$0xff]
  %v896 = vld [vmem:[%s892 + $0x18] sm:$0xff]
  %v897 = vld [vmem:[%s892 + $0x20] sm:$0xff]
  %v898 = vld [vmem:[%s892 + $0x28] sm:$0xff]
  %v899 = vld [vmem:[%s892 + $0x30] sm:$0xff]
  %v900 = vld [vmem:[%s892 + $0x38] sm:$0xff]
  %s901 = scalar_lea.vmem %s3, 64
  %v902 = vld [vmem:[%s901] sm:$0xff]
  %v903 = vld [vmem:[%s901 + $0x8] sm:$0xff]
  %v904 = vld [vmem:[%s901 + $0x10] sm:$0xff]
  %v905 = vld [vmem:[%s901 + $0x18] sm:$0xff]
  %v906 = vld [vmem:[%s901 + $0x20] sm:$0xff]
  %v907 = vld [vmem:[%s901 + $0x28] sm:$0xff]
  %v908 = vld [vmem:[%s901 + $0x30] sm:$0xff]
  %v909 = vld [vmem:[%s901 + $0x38] sm:$0xff]
  %s910 = scalar_lea.vmem %s5, 2
  %v911 = vld [vmem:[%s910] sm:$0x3]
  %v912 = vpack.c.bf16 %v891, %v890
  %s913 = scalar_lea.vmem %s4, 2
  %v914 = vld [vmem:[%s913] sm:$0x3]
  %v916 = vlaneseq
  %v917 = vshrl.u32 %v916, 7
  %v918 = vsub.s32 0, %v917
  %v919 = vrot.slane %v914, %v918
  %v920 = vlaneseq
  %v921 = vshrl.u32 %v920, 7
  %v922 = vsub.s32 1, %v921
  %v923 = vrot.slane %v914, %v922
  %v934 = vunpack.c.l.b16 %v893
  %v935 = vunpack.c.h.b16 %v893
  %v936 = vunpack.c.l.b16 %v894
  %v937 = vunpack.c.h.b16 %v894
  %v938 = vunpack.c.l.b16 %v895
  %v939 = vunpack.c.h.b16 %v895
  %v940 = vunpack.c.l.b16 %v896
  %v941 = vunpack.c.h.b16 %v896
  %v942 = vunpack.c.l.b16 %v897
  %v943 = vunpack.c.h.b16 %v897
  %v944 = vunpack.c.l.b16 %v898
  %v945 = vunpack.c.h.b16 %v898
  %v946 = vunpack.c.l.b16 %v899
  %v947 = vunpack.c.h.b16 %v899
  %v948 = vunpack.c.l.b16 %v900
  %v949 = vunpack.c.h.b16 %v900
  %v950 = vpack.c.b16 %v936, %v934
  %v951 = vpack.c.b16 %v937, %v935
  %v952 = vpack.c.b16 %v940, %v938
  %v953 = vpack.c.b16 %v941, %v939
  %v954 = vpack.c.b16 %v944, %v942
  %v955 = vpack.c.b16 %v945, %v943
  %v956 = vpack.c.b16 %v948, %v946
  %v957 = vpack.c.b16 %v949, %v947
  %v967 = vsel %vm106, %v912, 0
  %969 = vmatprep.subr.bf16.mxu0 %v951
  %970 = vmatpush1.bf16.msra.mxu0 %v950
  %971 = vmatprep.subr.bf16.mxu0 %v953
  %972 = vmatpush1.bf16.msra.mxu0 %v952
  %973 = vmatprep.subr.bf16.mxu0 %v955
  %974 = vmatpush1.bf16.msra.mxu0 %v954
  %975 = vmatprep.subr.bf16.mxu0 %v957
  %976 = vmatpush1.bf16.msra.mxu0 %v956
  %977 = vmatprep.subr.bf16.mxu0 0
  %978 = vmatpush1.bf16.msra.mxu0 0
  %979 = vmatprep.subr.bf16.mxu0 0
  %980 = vmatpush1.bf16.msra.mxu0 0
  %981 = vmatprep.subr.bf16.mxu0 0
  %982 = vmatpush1.bf16.msra.mxu0 0
  %983 = vmatprep.subr.bf16.mxu0 0
  %984 = vmatpush1.bf16.msra.mxu0 0
  %985 = vmatprep.subr.bf16.mxu0 0
  %986 = vmatpush1.bf16.msra.mxu0 0
  %987 = vmatprep.subr.bf16.mxu0 0
  %988 = vmatpush1.bf16.msra.mxu0 0
  %989 = vmatprep.subr.bf16.mxu0 0
  %990 = vmatpush1.bf16.msra.mxu0 0
  %991 = vmatprep.subr.bf16.mxu0 0
  %992 = vmatpush1.bf16.msra.mxu0 0
  %993 = vmatprep.subr.bf16.mxu0 0
  %994 = vmatpush1.bf16.msra.mxu0 0
  %995 = vmatprep.subr.bf16.mxu0 0
  %996 = vmatpush1.bf16.msra.mxu0 0
  %997 = vmatprep.subr.bf16.mxu0 0
  %998 = vmatpush1.bf16.msra.mxu0 0
  %999 = vmatprep.subr.bf16.mxu0 0
  %1000 = vmatpush1.bf16.msra.mxu0 0
  %1001 = vmatprep.mubr.bf16.mxu0 0
  %1002 = vmatmul.mubr.bf16.gmra.mrb[0].mxu0 %v967
  %v1003 = vpop.f32.mrb[0].mxu0
  %v1004 = vadd.f32 %v919, %v1003
  %v1005 = vpop.f32.mrb[0].mxu0
  %v1006 = vadd.f32 %v923, %v1005
  %v1007 = vpop.f32.mrb[0].mxu0
  %v1008 = vadd.f32 %v919, %v1007
  %v1009 = vpop.f32.mrb[0].mxu0
  %v1010 = vadd.f32 %v923, %v1009
  %1011 = vdwg.mxu0
  %v1013 = vlaneseq
  %v1014 = vshrl.u32 %v1013, 7
  %v1015 = vsub.s32 0, %v1014
  %v1016 = vrot.slane %v911, %v1015
  %v1017 = vlaneseq
  %v1018 = vshrl.u32 %v1017, 7
  %v1019 = vsub.s32 1, %v1018
  %v1020 = vrot.slane %v911, %v1019
  %v1031 = vunpack.c.l.b16 %v902
  %v1032 = vunpack.c.h.b16 %v902
  %v1033 = vunpack.c.l.b16 %v903
  %v1034 = vunpack.c.h.b16 %v903
  %v1035 = vunpack.c.l.b16 %v904
  %v1036 = vunpack.c.h.b16 %v904
  %v1037 = vunpack.c.l.b16 %v905
  %v1038 = vunpack.c.h.b16 %v905
  %v1039 = vunpack.c.l.b16 %v906
  %v1040 = vunpack.c.h.b16 %v906
  %v1041 = vunpack.c.l.b16 %v907
  %v1042 = vunpack.c.h.b16 %v907
  %v1043 = vunpack.c.l.b16 %v908
  %v1044 = vunpack.c.h.b16 %v908
  %v1045 = vunpack.c.l.b16 %v909
  %v1046 = vunpack.c.h.b16 %v909
  %v1047 = vpack.c.b16 %v1033, %v1031
  %v1048 = vpack.c.b16 %v1034, %v1032
  %v1049 = vpack.c.b16 %v1037, %v1035
  %v1050 = vpack.c.b16 %v1038, %v1036
  %v1051 = vpack.c.b16 %v1041, %v1039
  %v1052 = vpack.c.b16 %v1042, %v1040
  %v1053 = vpack.c.b16 %v1045, %v1043
  %v1054 = vpack.c.b16 %v1046, %v1044
  %1063 = vmatprep.subr.bf16.mxu0 %v1048
  %1064 = vmatpush1.bf16.msra.mxu0 %v1047
  %1065 = vmatprep.subr.bf16.mxu0 %v1050
  %1066 = vmatpush1.bf16.msra.mxu0 %v1049
  %1067 = vmatprep.subr.bf16.mxu0 %v1052
  %1068 = vmatpush1.bf16.msra.mxu0 %v1051
  %1069 = vmatprep.subr.bf16.mxu0 %v1054
  %1070 = vmatpush1.bf16.msra.mxu0 %v1053
  %1071 = vmatprep.subr.bf16.mxu0 0
  %1072 = vmatpush1.bf16.msra.mxu0 0
  %1073 = vmatprep.subr.bf16.mxu0 0
  %1074 = vmatpush1.bf16.msra.mxu0 0
  %1075 = vmatprep.subr.bf16.mxu0 0
  %1076 = vmatpush1.bf16.msra.mxu0 0
  %1077 = vmatprep.subr.bf16.mxu0 0
  %1078 = vmatpush1.bf16.msra.mxu0 0
  %1079 = vmatprep.subr.bf16.mxu0 0
  %1080 = vmatpush1.bf16.msra.mxu0 0
  %1081 = vmatprep.subr.bf16.mxu0 0
  %1082 = vmatpush1.bf16.msra.mxu0 0
  %1083 = vmatprep.subr.bf16.mxu0 0
  %1084 = vmatpush1.bf16.msra.mxu0 0
  %1085 = vmatprep.subr.bf16.mxu0 0
  %1086 = vmatpush1.bf16.msra.mxu0 0
  %1087 = vmatprep.subr.bf16.mxu0 0
  %1088 = vmatpush1.bf16.msra.mxu0 0
  %1089 = vmatprep.subr.bf16.mxu0 0
  %1090 = vmatpush1.bf16.msra.mxu0 0
  %1091 = vmatprep.subr.bf16.mxu0 0
  %1092 = vmatpush1.bf16.msra.mxu0 0
  %1093 = vmatprep.subr.bf16.mxu0 0
  %1094 = vmatpush1.bf16.msra.mxu0 0
  %1095 = vmatprep.mubr.bf16.mxu0 0
  %1096 = vmatmul.mubr.bf16.gmra.mrb[0].mxu0 %v205
  %v1097 = vpop.f32.mrb[0].mxu0
  %v1098 = vadd.f32 %v1016, %v1097
  %v1099 = vpop.f32.mrb[0].mxu0
  %v1100 = vadd.f32 %v1020, %v1099
  %v1101 = vpop.f32.mrb[0].mxu0
  %v1102 = vpop.f32.mrb[0].mxu0
  %1103 = vdwg.mxu0
  %v1104 = vadd.f32 %v1004, %v1098
  %v1105 = vxor.u32 %v1104, 2147483648
  %v1106 = vmul.f32 %v1105, 1.442695
  %v1107 = vpow.pop %v1106
  %v1108 = vadd.f32 %v1107, 1.0
  %v1109 = vrcp.pop %v1108
  %v1110 = vmul.f32 1.0, %v1109
  %v1111 = vmul.f32 %v1110, %v1100
  %v1112 = vadd.f32 %v1006, %v1111
  %v1113 = vtanh.pop %v1112
  %v1114 = vsub.f32 1.0, %v1110
  %1116 = vrot.lane.b32.xlu0 %v1113, 64
  %v1117 = vpop.permute.xlu0 %1116
  %v1119 = vmul.f32 %v1114, %v1117
  %v1120 = vmul.f32 %v1110, 0.0
  %v1121 = vadd.f32 %v1119, %v1120
  %v1122 = vsel %vm271, %v1121, 0.0
  %1124 = vrot.lane.b32.xlu0 %v1122, 64
  %v1125 = vpop.permute.xlu0 %1124
  %s1127 = scalar_lea.vmem [#allocation2], 16
  %1128 = vst.msk [vmem:[%s1127] sm:$0x3] %vm277, %v1125
  %v1129 = vpack.c.bf16 %v1122, %v1122
  %1131 = vrot.lane.b32.xlu0 %v1129, 64
  %v1132 = vpop.permute.xlu0 %1131
  %v1134 = vsel %vm106, %v1132, 0
  %1136 = vmatprep.subr.bf16.mxu0 %v1048
  %1137 = vmatpush1.bf16.msra.mxu0 %v1047
  %1138 = vmatprep.subr.bf16.mxu0 %v1050
  %1139 = vmatpush1.bf16.msra.mxu0 %v1049
  %1140 = vmatprep.subr.bf16.mxu0 %v1052
  %1141 = vmatpush1.bf16.msra.mxu0 %v1051
  %1142 = vmatprep.subr.bf16.mxu0 %v1054
  %1143 = vmatpush1.bf16.msra.mxu0 %v1053
  %1144 = vmatprep.subr.bf16.mxu0 0
  %1145 = vmatpush1.bf16.msra.mxu0 0
  %1146 = vmatprep.subr.bf16.mxu0 0
  %1147 = vmatpush1.bf16.msra.mxu0 0
  %1148 = vmatprep.subr.bf16.mxu0 0
  %1149 = vmatpush1.bf16.msra.mxu0 0
  %1150 = vmatprep.subr.bf16.mxu0 0
  %1151 = vmatpush1.bf16.msra.mxu0 0
  %1152 = vmatprep.subr.bf16.mxu0 0
  %1153 = vmatpush1.bf16.msra.mxu0 0
  %1154 = vmatprep.subr.bf16.mxu0 0
  %1155 = vmatpush1.bf16.msra.mxu0 0
  %1156 = vmatprep.subr.bf16.mxu0 0
  %1157 = vmatpush1.bf16.msra.mxu0 0
  %1158 = vmatprep.subr.bf16.mxu0 0
  %1159 = vmatpush1.bf16.msra.mxu0 0
  %1160 = vmatprep.subr.bf16.mxu0 0
  %1161 = vmatpush1.bf16.msra.mxu0 0
  %1162 = vmatprep.subr.bf16.mxu0 0
  %1163 = vmatpush1.bf16.msra.mxu0 0
  %1164 = vmatprep.subr.bf16.mxu0 0
  %1165 = vmatpush1.bf16.msra.mxu0 0
  %1166 = vmatprep.subr.bf16.mxu0 0
  %1167 = vmatpush1.bf16.msra.mxu0 0
  %1168 = vmatprep.mubr.bf16.mxu0 0
  %1169 = vmatmul.mubr.bf16.gmra.mrb[0].mxu0 %v1134
  %v1170 = vpop.f32.mrb[0].mxu0
  %v1171 = vadd.f32 %v1016, %v1170
  %v1172 = vpop.f32.mrb[0].mxu0
  %v1173 = vadd.f32 %v1020, %v1172
  %v1174 = vpop.f32.mrb[0].mxu0
  %v1175 = vpop.f32.mrb[0].mxu0
  %1176 = vdwg.mxu0
  %v1178 = vrot.slane %v1171, 6
  %v1180 = vadd.f32 %v1004, %v1178
  %v1181 = vxor.u32 %v1180, 2147483648
  %v1182 = vmul.f32 %v1181, 1.442695
  %v1183 = vpow.pop %v1182
  %v1184 = vadd.f32 %v1183, 1.0
  %v1185 = vrcp.pop %v1184
  %v1186 = vmul.f32 1.0, %v1185
  %v1188 = vrot.slane %v1173, 6
  %v1190 = vmul.f32 %v1186, %v1188
  %v1191 = vadd.f32 %v1006, %v1190
  %v1192 = vtanh.pop %v1191
  %v1193 = vsub.f32 1.0, %v1186
  %1195 = vrot.lane.b32.xlu0 %v1192, 64
  %v1196 = vpop.permute.xlu0 %1195
  %v1198 = vmul.f32 %v1193, %v1196
  %v1199 = vrot.slane %v1122, 6
  %v1201 = vmul.f32 %v1186, %v1199
  %v1202 = vadd.f32 %v1198, %v1201
  %v1204 = vrot.slane %v1202, 2
  %1205 = vrot.lane.b32.xlu0 %v1204, 64
  %v1206 = vpop.permute.xlu0 %1205
  %v1208 = vsel %vm358, %v1206, %v1125
  %v1209 = vsel %vm358, %v1206, 0.0
  %1210 = vst.msk [vmem:[%s1127 + $0x2] sm:$0x3] %vm277, %v1209
  %v1211 = vpack.c.bf16 %v1208, %v1208
  %v1213 = vsel %vm106, %v1211, 0
  %1215 = vmatprep.subr.bf16.mxu0 %v1048
  %1216 = vmatpush1.bf16.msra.mxu0 %v1047
  %1217 = vmatprep.subr.bf16.mxu0 %v1050
  %1218 = vmatpush1.bf16.msra.mxu0 %v1049
  %1219 = vmatprep.subr.bf16.mxu0 %v1052
  %1220 = vmatpush1.bf16.msra.mxu0 %v1051
  %1221 = vmatprep.subr.bf16.mxu0 %v1054
  %1222 = vmatpush1.bf16.msra.mxu0 %v1053
  %1223 = vmatprep.subr.bf16.mxu0 0
  %1224 = vmatpush1.bf16.msra.mxu0 0
  %1225 = vmatprep.subr.bf16.mxu0 0
  %1226 = vmatpush1.bf16.msra.mxu0 0
  %1227 = vmatprep.subr.bf16.mxu0 0
  %1228 = vmatpush1.bf16.msra.mxu0 0
  %1229 = vmatprep.subr.bf16.mxu0 0
  %1230 = vmatpush1.bf16.msra.mxu0 0
  %1231 = vmatprep.subr.bf16.mxu0 0
  %1232 = vmatpush1.bf16.msra.mxu0 0
  %1233 = vmatprep.subr.bf16.mxu0 0
  %1234 = vmatpush1.bf16.msra.mxu0 0
  %1235 = vmatprep.subr.bf16.mxu0 0
  %1236 = vmatpush1.bf16.msra.mxu0 0
  %1237 = vmatprep.subr.bf16.mxu0 0
  %1238 = vmatpush1.bf16.msra.mxu0 0
  %1239 = vmatprep.subr.bf16.mxu0 0
  %1240 = vmatpush1.bf16.msra.mxu0 0
  %1241 = vmatprep.subr.bf16.mxu0 0
  %1242 = vmatpush1.bf16.msra.mxu0 0
  %1243 = vmatprep.subr.bf16.mxu0 0
  %1244 = vmatpush1.bf16.msra.mxu0 0
  %1245 = vmatprep.subr.bf16.mxu0 0
  %1246 = vmatpush1.bf16.msra.mxu0 0
  %1247 = vmatprep.mubr.bf16.mxu0 0
  %1248 = vmatmul.mubr.bf16.gmra.mrb[0].mxu0 %v1213
  %v1249 = vpop.f32.mrb[0].mxu0
  %v1250 = vadd.f32 %v1016, %v1249
  %v1251 = vpop.f32.mrb[0].mxu0
  %v1252 = vadd.f32 %v1020, %v1251
  %v1253 = vpop.f32.mrb[0].mxu0
  %v1254 = vpop.f32.mrb[0].mxu0
  %1255 = vdwg.mxu0
  %v1257 = vrot.slane %v1250, 4
  %v1259 = vadd.f32 %v1004, %v1257
  %v1260 = vxor.u32 %v1259, 2147483648
  %v1261 = vmul.f32 %v1260, 1.442695
  %v1262 = vpow.pop %v1261
  %v1263 = vadd.f32 %v1262, 1.0
  %v1264 = vrcp.pop %v1263
  %v1265 = vmul.f32 1.0, %v1264
  %v1267 = vrot.slane %v1252, 4
  %v1269 = vmul.f32 %v1265, %v1267
  %v1270 = vadd.f32 %v1006, %v1269
  %v1271 = vtanh.pop %v1270
  %v1272 = vsub.f32 1.0, %v1265
  %1274 = vrot.lane.b32.xlu0 %v1271, 64
  %v1275 = vpop.permute.xlu0 %1274
  %v1277 = vmul.f32 %v1272, %v1275
  %v1279 = vrot.slane %v1208, 4
  %1280 = vrot.lane.b32.xlu0 %v1279, 64
  %v1281 = vpop.permute.xlu0 %1280
  %v1283 = vmul.f32 %v1265, %v1281
  %v1284 = vadd.f32 %v1277, %v1283
  %v1286 = vrot.slane %v1284, 4
  %1287 = vrot.lane.b32.xlu0 %v1286, 64
  %v1288 = vpop.permute.xlu0 %1287
  %v1290 = vsel %vm446, %v1288, %v1208
  %v1291 = vsel %vm446, %v1288, 0.0
  %1292 = vst.msk [vmem:[%s1127 + $0x4] sm:$0x3] %vm277, %v1291
  %v1293 = vpack.c.bf16 %v1290, %v1290
  %v1295 = vsel %vm106, %v1293, 0
  %1297 = vmatprep.subr.bf16.mxu0 %v1048
  %1298 = vmatpush1.bf16.msra.mxu0 %v1047
  %1299 = vmatprep.subr.bf16.mxu0 %v1050
  %1300 = vmatpush1.bf16.msra.mxu0 %v1049
  %1301 = vmatprep.subr.bf16.mxu0 %v1052
  %1302 = vmatpush1.bf16.msra.mxu0 %v1051
  %1303 = vmatprep.subr.bf16.mxu0 %v1054
  %1304 = vmatpush1.bf16.msra.mxu0 %v1053
  %1305 = vmatprep.subr.bf16.mxu0 0
  %1306 = vmatpush1.bf16.msra.mxu0 0
  %1307 = vmatprep.subr.bf16.mxu0 0
  %1308 = vmatpush1.bf16.msra.mxu0 0
  %1309 = vmatprep.subr.bf16.mxu0 0
  %1310 = vmatpush1.bf16.msra.mxu0 0
  %1311 = vmatprep.subr.bf16.mxu0 0
  %1312 = vmatpush1.bf16.msra.mxu0 0
  %1313 = vmatprep.subr.bf16.mxu0 0
  %1314 = vmatpush1.bf16.msra.mxu0 0
  %1315 = vmatprep.subr.bf16.mxu0 0
  %1316 = vmatpush1.bf16.msra.mxu0 0
  %1317 = vmatprep.subr.bf16.mxu0 0
  %1318 = vmatpush1.bf16.msra.mxu0 0
  %1319 = vmatprep.subr.bf16.mxu0 0
  %1320 = vmatpush1.bf16.msra.mxu0 0
  %1321 = vmatprep.subr.bf16.mxu0 0
  %1322 = vmatpush1.bf16.msra.mxu0 0
  %1323 = vmatprep.subr.bf16.mxu0 0
  %1324 = vmatpush1.bf16.msra.mxu0 0
  %1325 = vmatprep.subr.bf16.mxu0 0
  %1326 = vmatpush1.bf16.msra.mxu0 0
  %1327 = vmatprep.subr.bf16.mxu0 0
  %1328 = vmatpush1.bf16.msra.mxu0 0
  %1329 = vmatprep.mubr.bf16.mxu0 0
  %1330 = vmatmul.mubr.bf16.gmra.mrb[0].mxu0 %v1295
  %v1331 = vpop.f32.mrb[0].mxu0
  %v1332 = vadd.f32 %v1016, %v1331
  %v1333 = vpop.f32.mrb[0].mxu0
  %v1334 = vadd.f32 %v1020, %v1333
  %v1335 = vpop.f32.mrb[0].mxu0
  %v1336 = vpop.f32.mrb[0].mxu0
  %1337 = vdwg.mxu0
  %v1339 = vrot.slane %v1332, 2
  %v1341 = vadd.f32 %v1004, %v1339
  %v1342 = vxor.u32 %v1341, 2147483648
  %v1343 = vmul.f32 %v1342, 1.442695
  %v1344 = vpow.pop %v1343
  %v1345 = vadd.f32 %v1344, 1.0
  %v1346 = vrcp.pop %v1345
  %v1347 = vmul.f32 1.0, %v1346
  %v1349 = vrot.slane %v1334, 2
  %v1351 = vmul.f32 %v1347, %v1349
  %v1352 = vadd.f32 %v1006, %v1351
  %v1353 = vtanh.pop %v1352
  %v1354 = vsub.f32 1.0, %v1347
  %1356 = vrot.lane.b32.xlu0 %v1353, 64
  %v1357 = vpop.permute.xlu0 %1356
  %v1359 = vmul.f32 %v1354, %v1357
  %v1361 = vrot.slane %v1290, 2
  %1362 = vrot.lane.b32.xlu0 %v1361, 64
  %v1363 = vpop.permute.xlu0 %1362
  %v1365 = vmul.f32 %v1347, %v1363
  %v1366 = vadd.f32 %v1359, %v1365
  %v1368 = vrot.slane %v1366, 6
  %1369 = vrot.lane.b32.xlu0 %v1368, 64
  %v1370 = vpop.permute.xlu0 %1369
  %v1372 = vsel %vm534, %v1370, %v1290
  %v1373 = vsel %vm534, %v1370, 0.0
  %1374 = vst.msk [vmem:[%s1127 + $0x6] sm:$0x3] %vm277, %v1373
  %v1375 = vpack.c.bf16 %v1372, %v1372
  %v1377 = vsel %vm106, %v1375, 0
  %1379 = vmatprep.subr.bf16.mxu0 %v1048
  %1380 = vmatpush1.bf16.msra.mxu0 %v1047
  %1381 = vmatprep.subr.bf16.mxu0 %v1050
  %1382 = vmatpush1.bf16.msra.mxu0 %v1049
  %1383 = vmatprep.subr.bf16.mxu0 %v1052
  %1384 = vmatpush1.bf16.msra.mxu0 %v1051
  %1385 = vmatprep.subr.bf16.mxu0 %v1054
  %1386 = vmatpush1.bf16.msra.mxu0 %v1053
  %1387 = vmatprep.subr.bf16.mxu0 0
  %1388 = vmatpush1.bf16.msra.mxu0 0
  %1389 = vmatprep.subr.bf16.mxu0 0
  %1390 = vmatpush1.bf16.msra.mxu0 0
  %1391 = vmatprep.subr.bf16.mxu0 0
  %1392 = vmatpush1.bf16.msra.mxu0 0
  %1393 = vmatprep.subr.bf16.mxu0 0
  %1394 = vmatpush1.bf16.msra.mxu0 0
  %1395 = vmatprep.subr.bf16.mxu0 0
  %1396 = vmatpush1.bf16.msra.mxu0 0
  %1397 = vmatprep.subr.bf16.mxu0 0
  %1398 = vmatpush1.bf16.msra.mxu0 0
  %1399 = vmatprep.subr.bf16.mxu0 0
  %1400 = vmatpush1.bf16.msra.mxu0 0
  %1401 = vmatprep.subr.bf16.mxu0 0
  %1402 = vmatpush1.bf16.msra.mxu0 0
  %1403 = vmatprep.subr.bf16.mxu0 0
  %1404 = vmatpush1.bf16.msra.mxu0 0
  %1405 = vmatprep.subr.bf16.mxu0 0
  %1406 = vmatpush1.bf16.msra.mxu0 0
  %1407 = vmatprep.subr.bf16.mxu0 0
  %1408 = vmatpush1.bf16.msra.mxu0 0
  %1409 = vmatprep.subr.bf16.mxu0 0
  %1410 = vmatpush1.bf16.msra.mxu0 0
  %1411 = vmatprep.mubr.bf16.mxu0 0
  %1412 = vmatmul.mubr.bf16.gmra.mrb[0].mxu0 %v1377
  %v1413 = vpop.f32.mrb[0].mxu0
  %v1414 = vadd.f32 %v1016, %v1413
  %v1415 = vpop.f32.mrb[0].mxu0
  %v1416 = vadd.f32 %v1020, %v1415
  %v1417 = vpop.f32.mrb[0].mxu0
  %v1418 = vpop.f32.mrb[0].mxu0
  %1419 = vdwg.mxu0
  %v1420 = vadd.f32 %v1008, %v1414
  %v1421 = vxor.u32 %v1420, 2147483648
  %v1422 = vmul.f32 %v1421, 1.442695
  %v1423 = vpow.pop %v1422
  %v1424 = vadd.f32 %v1423, 1.0
  %v1425 = vrcp.pop %v1424
  %v1426 = vmul.f32 1.0, %v1425
  %v1427 = vmul.f32 %v1426, %v1416
  %v1428 = vadd.f32 %v1010, %v1427
  %v1429 = vtanh.pop %v1428
  %v1430 = vsub.f32 1.0, %v1426
  %1432 = vrot.lane.b32.xlu0 %v1429, 64
  %v1433 = vpop.permute.xlu0 %1432
  %v1435 = vmul.f32 %v1430, %v1433
  %1437 = vrot.lane.b32.xlu0 %v1372, 64
  %v1438 = vpop.permute.xlu0 %1437
  %v1440 = vmul.f32 %v1426, %v1438
  %v1441 = vadd.f32 %v1435, %v1440
  %v1442 = vsel %vm615, %v1441, %v1438
  %v1443 = vsel %vm615, %v1441, 0.0
  %1445 = vrot.lane.b32.xlu0 %v1443, 64
  %v1446 = vpop.permute.xlu0 %1445
  %1448 = vst.msk [vmem:[%s1127 + $0x8] sm:$0x3] %vm277, %v1446
  %v1449 = vpack.c.bf16 %v1442, %v1442
  %1451 = vrot.lane.b32.xlu0 %v1449, 64
  %v1452 = vpop.permute.xlu0 %1451
  %v1454 = vsel %vm106, %v1452, 0
  %1456 = vmatprep.subr.bf16.mxu0 %v1048
  %1457 = vmatpush1.bf16.msra.mxu0 %v1047
  %1458 = vmatprep.subr.bf16.mxu0 %v1050
  %1459 = vmatpush1.bf16.msra.mxu0 %v1049
  %1460 = vmatprep.subr.bf16.mxu0 %v1052
  %1461 = vmatpush1.bf16.msra.mxu0 %v1051
  %1462 = vmatprep.subr.bf16.mxu0 %v1054
  %1463 = vmatpush1.bf16.msra.mxu0 %v1053
  %1464 = vmatprep.subr.bf16.mxu0 0
  %1465 = vmatpush1.bf16.msra.mxu0 0
  %1466 = vmatprep.subr.bf16.mxu0 0
  %1467 = vmatpush1.bf16.msra.mxu0 0
  %1468 = vmatprep.subr.bf16.mxu0 0
  %1469 = vmatpush1.bf16.msra.mxu0 0
  %1470 = vmatprep.subr.bf16.mxu0 0
  %1471 = vmatpush1.bf16.msra.mxu0 0
  %1472 = vmatprep.subr.bf16.mxu0 0
  %1473 = vmatpush1.bf16.msra.mxu0 0
  %1474 = vmatprep.subr.bf16.mxu0 0
  %1475 = vmatpush1.bf16.msra.mxu0 0
  %1476 = vmatprep.subr.bf16.mxu0 0
  %1477 = vmatpush1.bf16.msra.mxu0 0
  %1478 = vmatprep.subr.bf16.mxu0 0
  %1479 = vmatpush1.bf16.msra.mxu0 0
  %1480 = vmatprep.subr.bf16.mxu0 0
  %1481 = vmatpush1.bf16.msra.mxu0 0
  %1482 = vmatprep.subr.bf16.mxu0 0
  %1483 = vmatpush1.bf16.msra.mxu0 0
  %1484 = vmatprep.subr.bf16.mxu0 0
  %1485 = vmatpush1.bf16.msra.mxu0 0
  %1486 = vmatprep.subr.bf16.mxu0 0
  %1487 = vmatpush1.bf16.msra.mxu0 0
  %1488 = vmatprep.mubr.bf16.mxu0 0
  %1489 = vmatmul.mubr.bf16.gmra.mrb[0].mxu0 %v1454
  %v1490 = vpop.f32.mrb[0].mxu0
  %v1491 = vadd.f32 %v1016, %v1490
  %v1492 = vpop.f32.mrb[0].mxu0
  %v1493 = vadd.f32 %v1020, %v1492
  %v1494 = vpop.f32.mrb[0].mxu0
  %v1495 = vpop.f32.mrb[0].mxu0
  %1496 = vdwg.mxu0
  %v1498 = vrot.slane %v1491, 6
  %v1500 = vadd.f32 %v1008, %v1498
  %v1501 = vxor.u32 %v1500, 2147483648
  %v1502 = vmul.f32 %v1501, 1.442695
  %v1503 = vpow.pop %v1502
  %v1504 = vadd.f32 %v1503, 1.0
  %v1505 = vrcp.pop %v1504
  %v1506 = vmul.f32 1.0, %v1505
  %v1508 = vrot.slane %v1493, 6
  %v1510 = vmul.f32 %v1506, %v1508
  %v1511 = vadd.f32 %v1010, %v1510
  %v1512 = vtanh.pop %v1511
  %v1513 = vsub.f32 1.0, %v1506
  %1515 = vrot.lane.b32.xlu0 %v1512, 64
  %v1516 = vpop.permute.xlu0 %1515
  %v1518 = vmul.f32 %v1513, %v1516
  %v1520 = vrot.slane %v1442, 6
  %v1522 = vmul.f32 %v1506, %v1520
  %v1523 = vadd.f32 %v1518, %v1522
  %v1525 = vrot.slane %v1523, 2
  %1526 = vrot.lane.b32.xlu0 %v1525, 64
  %v1527 = vpop.permute.xlu0 %1526
  %1529 = vrot.lane.b32.xlu0 %v1442, 64
  %v1530 = vpop.permute.xlu0 %1529
  %v1532 = vsel %vm703, %v1527, %v1530
  %v1533 = vsel %vm703, %v1527, 0.0
  %1534 = vst.msk [vmem:[%s1127 + $0xa] sm:$0x3] %vm277, %v1533
  %v1535 = vpack.c.bf16 %v1532, %v1532
  %v1537 = vsel %vm106, %v1535, 0
  %1539 = vmatprep.subr.bf16.mxu0 %v1048
  %1540 = vmatpush1.bf16.msra.mxu0 %v1047
  %1541 = vmatprep.subr.bf16.mxu0 %v1050
  %1542 = vmatpush1.bf16.msra.mxu0 %v1049
  %1543 = vmatprep.subr.bf16.mxu0 %v1052
  %1544 = vmatpush1.bf16.msra.mxu0 %v1051
  %1545 = vmatprep.subr.bf16.mxu0 %v1054
  %1546 = vmatpush1.bf16.msra.mxu0 %v1053
  %1547 = vmatprep.subr.bf16.mxu0 0
  %1548 = vmatpush1.bf16.msra.mxu0 0
  %1549 = vmatprep.subr.bf16.mxu0 0
  %1550 = vmatpush1.bf16.msra.mxu0 0
  %1551 = vmatprep.subr.bf16.mxu0 0
  %1552 = vmatpush1.bf16.msra.mxu0 0
  %1553 = vmatprep.subr.bf16.mxu0 0
  %1554 = vmatpush1.bf16.msra.mxu0 0
  %1555 = vmatprep.subr.bf16.mxu0 0
  %1556 = vmatpush1.bf16.msra.mxu0 0
  %1557 = vmatprep.subr.bf16.mxu0 0
  %1558 = vmatpush1.bf16.msra.mxu0 0
  %1559 = vmatprep.subr.bf16.mxu0 0
  %1560 = vmatpush1.bf16.msra.mxu0 0
  %1561 = vmatprep.subr.bf16.mxu0 0
  %1562 = vmatpush1.bf16.msra.mxu0 0
  %1563 = vmatprep.subr.bf16.mxu0 0
  %1564 = vmatpush1.bf16.msra.mxu0 0
  %1565 = vmatprep.subr.bf16.mxu0 0
  %1566 = vmatpush1.bf16.msra.mxu0 0
  %1567 = vmatprep.subr.bf16.mxu0 0
  %1568 = vmatpush1.bf16.msra.mxu0 0
  %1569 = vmatprep.subr.bf16.mxu0 0
  %1570 = vmatpush1.bf16.msra.mxu0 0
  %1571 = vmatprep.mubr.bf16.mxu0 0
  %1572 = vmatmul.mubr.bf16.gmra.mrb[0].mxu0 %v1537
  %v1573 = vpop.f32.mrb[0].mxu0
  %v1574 = vadd.f32 %v1016, %v1573
  %v1575 = vpop.f32.mrb[0].mxu0
  %v1576 = vadd.f32 %v1020, %v1575
  %v1577 = vpop.f32.mrb[0].mxu0
  %v1578 = vpop.f32.mrb[0].mxu0
  %1579 = vdwg.mxu0
  %v1581 = vrot.slane %v1574, 4
  %v1583 = vadd.f32 %v1008, %v1581
  %v1584 = vxor.u32 %v1583, 2147483648
  %v1585 = vmul.f32 %v1584, 1.442695
  %v1586 = vpow.pop %v1585
  %v1587 = vadd.f32 %v1586, 1.0
  %v1588 = vrcp.pop %v1587
  %v1589 = vmul.f32 1.0, %v1588
  %v1591 = vrot.slane %v1576, 4
  %v1593 = vmul.f32 %v1589, %v1591
  %v1594 = vadd.f32 %v1010, %v1593
  %v1595 = vtanh.pop %v1594
  %v1596 = vsub.f32 1.0, %v1589
  %1598 = vrot.lane.b32.xlu0 %v1595, 64
  %v1599 = vpop.permute.xlu0 %1598
  %v1601 = vmul.f32 %v1596, %v1599
  %v1603 = vrot.slane %v1532, 4
  %1604 = vrot.lane.b32.xlu0 %v1603, 64
  %v1605 = vpop.permute.xlu0 %1604
  %v1607 = vmul.f32 %v1589, %v1605
  %v1608 = vadd.f32 %v1601, %v1607
  %v1610 = vrot.slane %v1608, 4
  %1611 = vrot.lane.b32.xlu0 %v1610, 64
  %v1612 = vpop.permute.xlu0 %1611
  %v1614 = vsel %vm794, %v1612, %v1532
  %v1615 = vsel %vm794, %v1612, 0.0
  %1616 = vst.msk [vmem:[%s1127 + $0xc] sm:$0x3] %vm277, %v1615
  %v1617 = vpack.c.bf16 %v1614, %v1614
  %v1619 = vsel %vm106, %v1617, 0
  %1621 = vmatprep.subr.bf16.mxu0 %v1048
  %1622 = vmatpush1.bf16.msra.mxu0 %v1047
  %1623 = vmatprep.subr.bf16.mxu0 %v1050
  %1624 = vmatpush1.bf16.msra.mxu0 %v1049
  %1625 = vmatprep.subr.bf16.mxu0 %v1052
  %1626 = vmatpush1.bf16.msra.mxu0 %v1051
  %1627 = vmatprep.subr.bf16.mxu0 %v1054
  %1628 = vmatpush1.bf16.msra.mxu0 %v1053
  %1629 = vmatprep.subr.bf16.mxu0 0
  %1630 = vmatpush1.bf16.msra.mxu0 0
  %1631 = vmatprep.subr.bf16.mxu0 0
  %1632 = vmatpush1.bf16.msra.mxu0 0
  %1633 = vmatprep.subr.bf16.mxu0 0
  %1634 = vmatpush1.bf16.msra.mxu0 0
  %1635 = vmatprep.subr.bf16.mxu0 0
  %1636 = vmatpush1.bf16.msra.mxu0 0
  %1637 = vmatprep.subr.bf16.mxu0 0
  %1638 = vmatpush1.bf16.msra.mxu0 0
  %1639 = vmatprep.subr.bf16.mxu0 0
  %1640 = vmatpush1.bf16.msra.mxu0 0
  %1641 = vmatprep.subr.bf16.mxu0 0
  %1642 = vmatpush1.bf16.msra.mxu0 0
  %1643 = vmatprep.subr.bf16.mxu0 0
  %1644 = vmatpush1.bf16.msra.mxu0 0
  %1645 = vmatprep.subr.bf16.mxu0 0
  %1646 = vmatpush1.bf16.msra.mxu0 0
  %1647 = vmatprep.subr.bf16.mxu0 0
  %1648 = vmatpush1.bf16.msra.mxu0 0
  %1649 = vmatprep.subr.bf16.mxu0 0
  %1650 = vmatpush1.bf16.msra.mxu0 0
  %1651 = vmatprep.subr.bf16.mxu0 0
  %1652 = vmatpush1.bf16.msra.mxu0 0
  %1653 = vmatprep.mubr.bf16.mxu0 0
  %1654 = vmatmul.mubr.bf16.gmra.mrb[0].mxu0 %v1619
  %v1655 = vpop.f32.mrb[0].mxu0
  %v1656 = vadd.f32 %v1016, %v1655
  %v1657 = vpop.f32.mrb[0].mxu0
  %v1658 = vadd.f32 %v1020, %v1657
  %v1659 = vpop.f32.mrb[0].mxu0
  %v1660 = vpop.f32.mrb[0].mxu0
  %1661 = vdwg.mxu0
  %v1663 = vrot.slane %v1656, 2
  %v1665 = vadd.f32 %v1008, %v1663
  %v1666 = vxor.u32 %v1665, 2147483648
  %v1667 = vmul.f32 %v1666, 1.442695
  %v1668 = vpow.pop %v1667
  %v1669 = vadd.f32 %v1668, 1.0
  %v1670 = vrcp.pop %v1669
  %v1671 = vmul.f32 1.0, %v1670
  %v1673 = vrot.slane %v1658, 2
  %v1675 = vmul.f32 %v1671, %v1673
  %v1676 = vadd.f32 %v1010, %v1675
  %v1677 = vtanh.pop %v1676
  %v1678 = vsub.f32 1.0, %v1671
  %1680 = vrot.lane.b32.xlu0 %v1677, 64
  %v1681 = vpop.permute.xlu0 %1680
  %v1683 = vmul.f32 %v1678, %v1681
  %v1685 = vrot.slane %v1614, 2
  %1686 = vrot.lane.b32.xlu0 %v1685, 64
  %v1687 = vpop.permute.xlu0 %1686
  %v1689 = vmul.f32 %v1671, %v1687
  %v1690 = vadd.f32 %v1683, %v1689
  %v1692 = vrot.slane %v1690, 6
  %1693 = vrot.lane.b32.xlu0 %v1692, 64
  %v1694 = vpop.permute.xlu0 %1693
  %v1696 = vsel %vm882, %v1694, 0.0
  %1697 = vst.msk [vmem:[%s1127 + $0xe] sm:$0x3] %vm277, %v1696
  %v1698 = vld [vmem:[#allocation2] sm:$0xff]
  %v1699 = vld [vmem:[#allocation2 + $0x8] sm:$0xff]
  %v1700 = vpack.c.bf16 %v1699, %v1698
  %v1701 = vld [vmem:[%s1127] sm:$0xff]
  %v1702 = vld [vmem:[%s1127 + $0x8] sm:$0xff]
  %v1703 = vpack.c.bf16 %v1702, %v1701
  %v1704 = vld [vmem:[%s6] sm:$0xf]
  %v1705 = vld [vmem:[%s6 + $0x4] sm:$0xf]
  %v1706 = vld [vmem:[%s6 + $0x8] sm:$0xf]
  %v1707 = vld [vmem:[%s6 + $0xc] sm:$0xf]
  %v1708 = vld [vmem:[%s6 + $0x10] sm:$0xf]
  %v1709 = vld [vmem:[%s6 + $0x14] sm:$0xf]
  %v1710 = vld [vmem:[%s6 + $0x18] sm:$0xf]
  %v1711 = vld [vmem:[%s6 + $0x1c] sm:$0xf]
  %v1712 = vld [vmem:[%s7] sm:$0xf]
  %v1713 = vld [vmem:[%s7 + $0x4] sm:$0xf]
  %v1714 = vld [vmem:[%s7 + $0x8] sm:$0xf]
  %v1715 = vld [vmem:[%s7 + $0xc] sm:$0xf]
  %v1716 = vld [vmem:[%s7 + $0x10] sm:$0xf]
  %v1717 = vld [vmem:[%s7 + $0x14] sm:$0xf]
  %v1718 = vld [vmem:[%s7 + $0x18] sm:$0xf]
  %v1719 = vld [vmem:[%s7 + $0x1c] sm:$0xf]
  %v1728 = vunpack.c.l.b16 %v1712
  %v1729 = vunpack.c.l.b16 %v1713
  %v1730 = vunpack.c.l.b16 %v1714
  %v1731 = vunpack.c.l.b16 %v1715
  %v1732 = vunpack.c.l.b16 %v1716
  %v1733 = vunpack.c.l.b16 %v1717
  %v1734 = vunpack.c.l.b16 %v1718
  %v1735 = vunpack.c.l.b16 %v1719
  %v1736 = vpack.c.b16 %v1729, %v1728
  %v1737 = vpack.c.b16 %v1731, %v1730
  %v1738 = vpack.c.b16 %v1733, %v1732
  %v1739 = vpack.c.b16 %v1735, %v1734
  %v1745 = vsel %vm106, %v1703, 0
  %1747 = vmatprep.subr.bf16.mxu0 0
  %1748 = vmatpush1.bf16.msra.mxu0 %v1736
  %1749 = vmatprep.subr.bf16.mxu0 0
  %1750 = vmatpush1.bf16.msra.mxu0 %v1737
  %1751 = vmatprep.subr.bf16.mxu0 0
  %1752 = vmatpush1.bf16.msra.mxu0 %v1738
  %1753 = vmatprep.subr.bf16.mxu0 0
  %1754 = vmatpush1.bf16.msra.mxu0 %v1739
  %1755 = vmatprep.subr.bf16.mxu0 0
  %1756 = vmatpush1.bf16.msra.mxu0 0
  %1757 = vmatprep.subr.bf16.mxu0 0
  %1758 = vmatpush1.bf16.msra.mxu0 0
  %1759 = vmatprep.subr.bf16.mxu0 0
  %1760 = vmatpush1.bf16.msra.mxu0 0
  %1761 = vmatprep.subr.bf16.mxu0 0
  %1762 = vmatpush1.bf16.msra.mxu0 0
  %1763 = vmatprep.subr.bf16.mxu0 0
  %1764 = vmatpush1.bf16.msra.mxu0 0
  %1765 = vmatprep.subr.bf16.mxu0 0
  %1766 = vmatpush1.bf16.msra.mxu0 0
  %1767 = vmatprep.subr.bf16.mxu0 0
  %1768 = vmatpush1.bf16.msra.mxu0 0
  %1769 = vmatprep.subr.bf16.mxu0 0
  %1770 = vmatpush1.bf16.msra.mxu0 0
  %1771 = vmatprep.subr.bf16.mxu0 0
  %1772 = vmatpush1.bf16.msra.mxu0 0
  %1773 = vmatprep.subr.bf16.mxu0 0
  %1774 = vmatpush1.bf16.msra.mxu0 0
  %1775 = vmatprep.subr.bf16.mxu0 0
  %1776 = vmatpush1.bf16.msra.mxu0 0
  %1777 = vmatprep.subr.bf16.mxu0 0
  %1778 = vmatpush1.bf16.msra.mxu0 0
  %1779 = vmatprep.mubr.bf16.mxu0 0
  %1780 = vmatmul.mubr.bf16.gmra.mrb[0].mxu0 %v1745
  %v1781 = vpop.f32.mrb[0].mxu0
  %v1782 = vadd.f32 0.0, %v1781
  %v1783 = vpop.f32.mrb[0].mxu0
  %v1784 = vpop.f32.mrb[0].mxu0
  %v1785 = vadd.f32 0.0, %v1784
  %v1786 = vpop.f32.mrb[0].mxu0
  %1787 = vdwg.mxu0
  %v1796 = vunpack.c.l.b16 %v1704
  %v1797 = vunpack.c.l.b16 %v1705
  %v1798 = vunpack.c.l.b16 %v1706
  %v1799 = vunpack.c.l.b16 %v1707
  %v1800 = vunpack.c.l.b16 %v1708
  %v1801 = vunpack.c.l.b16 %v1709
  %v1802 = vunpack.c.l.b16 %v1710
  %v1803 = vunpack.c.l.b16 %v1711
  %v1804 = vpack.c.b16 %v1797, %v1796
  %v1805 = vpack.c.b16 %v1799, %v1798
  %v1806 = vpack.c.b16 %v1801, %v1800
  %v1807 = vpack.c.b16 %v1803, %v1802
  %v1813 = vsel %vm106, %v1700, 0
  %1815 = vmatprep.subr.bf16.mxu0 0
  %1816 = vmatpush1.bf16.msra.mxu0 %v1804
  %1817 = vmatprep.subr.bf16.mxu0 0
  %1818 = vmatpush1.bf16.msra.mxu0 %v1805
  %1819 = vmatprep.subr.bf16.mxu0 0
  %1820 = vmatpush1.bf16.msra.mxu0 %v1806
  %1821 = vmatprep.subr.bf16.mxu0 0
  %1822 = vmatpush1.bf16.msra.mxu0 %v1807
  %1823 = vmatprep.subr.bf16.mxu0 0
  %1824 = vmatpush1.bf16.msra.mxu0 0
  %1825 = vmatprep.subr.bf16.mxu0 0
  %1826 = vmatpush1.bf16.msra.mxu0 0
  %1827 = vmatprep.subr.bf16.mxu0 0
  %1828 = vmatpush1.bf16.msra.mxu0 0
  %1829 = vmatprep.subr.bf16.mxu0 0
  %1830 = vmatpush1.bf16.msra.mxu0 0
  %1831 = vmatprep.subr.bf16.mxu0 0
  %1832 = vmatpush1.bf16.msra.mxu0 0
  %1833 = vmatprep.subr.bf16.mxu0 0
  %1834 = vmatpush1.bf16.msra.mxu0 0
  %1835 = vmatprep.subr.bf16.mxu0 0
  %1836 = vmatpush1.bf16.msra.mxu0 0
  %1837 = vmatprep.subr.bf16.mxu0 0
  %1838 = vmatpush1.bf16.msra.mxu0 0
  %1839 = vmatprep.subr.bf16.mxu0 0
  %1840 = vmatpush1.bf16.msra.mxu0 0
  %1841 = vmatprep.subr.bf16.mxu0 0
  %1842 = vmatpush1.bf16.msra.mxu0 0
  %1843 = vmatprep.subr.bf16.mxu0 0
  %1844 = vmatpush1.bf16.msra.mxu0 0
  %1845 = vmatprep.subr.bf16.mxu0 0
  %1846 = vmatpush1.bf16.msra.mxu0 0
  %1847 = vmatprep.mubr.bf16.mxu0 0
  %1848 = vmatmul.mubr.bf16.gmra.mrb[0].mxu0 %v1813
  %v1849 = vpop.f32.mrb[0].mxu0
  %v1850 = vadd.f32 %v1782, %v1849
  %v1851 = vpop.f32.mrb[0].mxu0
  %v1852 = vpop.f32.mrb[0].mxu0
  %v1853 = vadd.f32 %v1785, %v1852
  %v1854 = vpop.f32.mrb[0].mxu0
  %1855 = vdwg.mxu0
  %v1856 = vld [vmem:[%s8] sm:$0x1]
  %v1858 = vlaneseq
  %v1859 = vshrl.u32 %v1858, 7
  %v1860 = vsub.s32 0, %v1859
  %v1861 = vrot.slane %v1856, %v1860
  %v1863 = vadd.f32 %v1850, %v1861
  %v1864 = vadd.f32 %v1853, %v1861
  %1865 = vst.msk [vmem:[%s9] sm:$0xff] %vm106, %v1863
  %1866 = vst.msk [vmem:[%s9 + $0x8] sm:$0xff] %vm106, %v1864
  %v1867 = vld [vmem:[%s1127] sm:$0xff]
  %v1868 = vld [vmem:[%s1127 + $0x8] sm:$0xff]
  %v1869 = vpack.c.bf16 %v1868, %v1867
  %v1870 = vld [vmem:[#allocation2] sm:$0xff]
  %v1871 = vld [vmem:[#allocation2 + $0x8] sm:$0xff]
  %v1872 = vpack.c.bf16 %v1871, %v1870
  %v1873 = vld [vmem:[%s6] sm:$0xf]
  %v1874 = vld [vmem:[%s6 + $0x4] sm:$0xf]
  %v1875 = vld [vmem:[%s6 + $0x8] sm:$0xf]
  %v1876 = vld [vmem:[%s6 + $0xc] sm:$0xf]
  %v1877 = vld [vmem:[%s6 + $0x10] sm:$0xf]
  %v1878 = vld [vmem:[%s6 + $0x14] sm:$0xf]
  %v1879 = vld [vmem:[%s6 + $0x18] sm:$0xf]
  %v1880 = vld [vmem:[%s6 + $0x1c] sm:$0xf]
  %v1881 = vld [vmem:[%s7] sm:$0xf]
  %v1882 = vld [vmem:[%s7 + $0x4] sm:$0xf]
  %v1883 = vld [vmem:[%s7 + $0x8] sm:$0xf]
  %v1884 = vld [vmem:[%s7 + $0xc] sm:$0xf]
  %v1885 = vld [vmem:[%s7 + $0x10] sm:$0xf]
  %v1886 = vld [vmem:[%s7 + $0x14] sm:$0xf]
  %v1887 = vld [vmem:[%s7 + $0x18] sm:$0xf]
  %v1888 = vld [vmem:[%s7 + $0x1c] sm:$0xf]
  %v1897 = vunpack.c.l.b16 %v1881
  %v1898 = vunpack.c.l.b16 %v1882
  %v1899 = vunpack.c.l.b16 %v1883
  %v1900 = vunpack.c.l.b16 %v1884
  %v1901 = vunpack.c.l.b16 %v1885
  %v1902 = vunpack.c.l.b16 %v1886
  %v1903 = vunpack.c.l.b16 %v1887
  %v1904 = vunpack.c.l.b16 %v1888
  %v1905 = vpack.c.b16 %v1898, %v1897
  %v1906 = vpack.c.b16 %v1900, %v1899
  %v1907 = vpack.c.b16 %v1902, %v1901
  %v1908 = vpack.c.b16 %v1904, %v1903
  %v1914 = vsel %vm106, %v1872, 0
  %1916 = vmatprep.subr.bf16.mxu0 0
  %1917 = vmatpush1.bf16.msra.mxu0 %v1905
  %1918 = vmatprep.subr.bf16.mxu0 0
  %1919 = vmatpush1.bf16.msra.mxu0 %v1906
  %1920 = vmatprep.subr.bf16.mxu0 0
  %1921 = vmatpush1.bf16.msra.mxu0 %v1907
  %1922 = vmatprep.subr.bf16.mxu0 0
  %1923 = vmatpush1.bf16.msra.mxu0 %v1908
  %1924 = vmatprep.subr.bf16.mxu0 0
  %1925 = vmatpush1.bf16.msra.mxu0 0
  %1926 = vmatprep.subr.bf16.mxu0 0
  %1927 = vmatpush1.bf16.msra.mxu0 0
  %1928 = vmatprep.subr.bf16.mxu0 0
  %1929 = vmatpush1.bf16.msra.mxu0 0
  %1930 = vmatprep.subr.bf16.mxu0 0
  %1931 = vmatpush1.bf16.msra.mxu0 0
  %1932 = vmatprep.subr.bf16.mxu0 0
  %1933 = vmatpush1.bf16.msra.mxu0 0
  %1934 = vmatprep.subr.bf16.mxu0 0
  %1935 = vmatpush1.bf16.msra.mxu0 0
  %1936 = vmatprep.subr.bf16.mxu0 0
  %1937 = vmatpush1.bf16.msra.mxu0 0
  %1938 = vmatprep.subr.bf16.mxu0 0
  %1939 = vmatpush1.bf16.msra.mxu0 0
  %1940 = vmatprep.subr.bf16.mxu0 0
  %1941 = vmatpush1.bf16.msra.mxu0 0
  %1942 = vmatprep.subr.bf16.mxu0 0
  %1943 = vmatpush1.bf16.msra.mxu0 0
  %1944 = vmatprep.subr.bf16.mxu0 0
  %1945 = vmatpush1.bf16.msra.mxu0 0
  %1946 = vmatprep.subr.bf16.mxu0 0
  %1947 = vmatpush1.bf16.msra.mxu0 0
  %1948 = vmatprep.mubr.bf16.mxu0 0
  %1949 = vmatmul.mubr.bf16.gmra.mrb[0].mxu0 %v1914
  %v1950 = vpop.f32.mrb[0].mxu0
  %v1951 = vadd.f32 0.0, %v1950
  %v1952 = vpop.f32.mrb[0].mxu0
  %v1953 = vpop.f32.mrb[0].mxu0
  %v1954 = vadd.f32 0.0, %v1953
  %v1955 = vpop.f32.mrb[0].mxu0
  %1956 = vdwg.mxu0
  %v1965 = vunpack.c.l.b16 %v1873
  %v1966 = vunpack.c.l.b16 %v1874
  %v1967 = vunpack.c.l.b16 %v1875
  %v1968 = vunpack.c.l.b16 %v1876
  %v1969 = vunpack.c.l.b16 %v1877
  %v1970 = vunpack.c.l.b16 %v1878
  %v1971 = vunpack.c.l.b16 %v1879
  %v1972 = vunpack.c.l.b16 %v1880
  %v1973 = vpack.c.b16 %v1966, %v1965
  %v1974 = vpack.c.b16 %v1968, %v1967
  %v1975 = vpack.c.b16 %v1970, %v1969
  %v1976 = vpack.c.b16 %v1972, %v1971
  %v1982 = vsel %vm106, %v1869, 0
  %1984 = vmatprep.subr.bf16.mxu0 0
  %1985 = vmatpush1.bf16.msra.mxu0 %v1973
  %1986 = vmatprep.subr.bf16.mxu0 0
  %1987 = vmatpush1.bf16.msra.mxu0 %v1974
  %1988 = vmatprep.subr.bf16.mxu0 0
  %1989 = vmatpush1.bf16.msra.mxu0 %v1975
  %1990 = vmatprep.subr.bf16.mxu0 0
  %1991 = vmatpush1.bf16.msra.mxu0 %v1976
  %1992 = vmatprep.subr.bf16.mxu0 0
  %1993 = vmatpush1.bf16.msra.mxu0 0
  %1994 = vmatprep.subr.bf16.mxu0 0
  %1995 = vmatpush1.bf16.msra.mxu0 0
  %1996 = vmatprep.subr.bf16.mxu0 0
  %1997 = vmatpush1.bf16.msra.mxu0 0
  %1998 = vmatprep.subr.bf16.mxu0 0
  %1999 = vmatpush1.bf16.msra.mxu0 0
  %2000 = vmatprep.subr.bf16.mxu0 0
  %2001 = vmatpush1.bf16.msra.mxu0 0
  %2002 = vmatprep.subr.bf16.mxu0 0
  %2003 = vmatpush1.bf16.msra.mxu0 0
  %2004 = vmatprep.subr.bf16.mxu0 0
  %2005 = vmatpush1.bf16.msra.mxu0 0
  %2006 = vmatprep.subr.bf16.mxu0 0
  %2007 = vmatpush1.bf16.msra.mxu0 0
  %2008 = vmatprep.subr.bf16.mxu0 0
  %2009 = vmatpush1.bf16.msra.mxu0 0
  %2010 = vmatprep.subr.bf16.mxu0 0
  %2011 = vmatpush1.bf16.msra.mxu0 0
  %2012 = vmatprep.subr.bf16.mxu0 0
  %2013 = vmatpush1.bf16.msra.mxu0 0
  %2014 = vmatprep.subr.bf16.mxu0 0
  %2015 = vmatpush1.bf16.msra.mxu0 0
  %2016 = vmatprep.mubr.bf16.mxu0 0
  %2017 = vmatmul.mubr.bf16.gmra.mrb[0].mxu0 %v1982
  %v2018 = vpop.f32.mrb[0].mxu0
  %v2019 = vadd.f32 %v1951, %v2018
  %v2020 = vpop.f32.mrb[0].mxu0
  %v2021 = vpop.f32.mrb[0].mxu0
  %v2022 = vadd.f32 %v1954, %v2021
  %v2023 = vpop.f32.mrb[0].mxu0
  %2024 = vdwg.mxu0
  %v2025 = vld [vmem:[%s8] sm:$0x1]
  %v2027 = vlaneseq
  %v2028 = vshrl.u32 %v2027, 7
  %v2029 = vsub.s32 0, %v2028
  %v2030 = vrot.slane %v2025, %v2029
  %v2032 = vadd.f32 %v2019, %v2030
  %v2033 = vadd.f32 %v2022, %v2030
  %s2034 = scalar_lea.vmem %s9, 16
  %2035 = vst.msk [vmem:[%s2034] sm:$0xff] %vm106, %v2032
  %2036 = vst.msk [vmem:[%s2034 + $0x8] sm:$0xff] %vm106, %v2033
  // Predicated region
  $region38: #{seq2seq_forward.3} parent=0 // pred_check
    _
  $region39: #{seq2seq_forward.3} parent=0 // pred_check_branch
    %2038 = sbr.rel (0) target = $region41
  $region40: #{seq2seq_forward.3} parent=0 // pred_region
    _
  $region41: #{seq2seq_forward.3} parent=0 // pred_fallthru
    _
  // Predicated region
  $region42: #{seq2seq_forward.3} parent=0 // pred_check
    _
  $region43: #{seq2seq_forward.3} parent=0 // pred_check_branch
    %2040 = sbr.rel (0) target = $region45
  $region44: #{seq2seq_forward.3} parent=0 // pred_region
    _
  $region45: #{seq2seq_forward.3} parent=0 // pred_fallthru
    _

</llo_original>
